<compile_context>
chip_gen: v6e
topology: v6e:2x2x1
jax: 0.10.0
libtpu: 0.0.40
codegen_flags: <defaults>
</compile_context>

<pallas_src>
import functools

import jax
import jax.numpy as jnp
from jax import lax
from jax.experimental import pallas as pl
from jax.experimental.pallas import tpu as pltpu

EPS = 1e-5
LANE = 128


def _round_up(x, m):
    return (x + m - 1) // m * m


def _row_tile(m, target=256):
    """Largest row tile <= target that divides m and is a multiple of 8."""
    if m <= target:
        return m
    for t in range(target, 7, -1):
        if t % 8 == 0 and m % t == 0:
            return t
    return m


# ---------------------------------------------------------------------------
# 1x1 conv (matmul) [+ previous BN scale/shift + ReLU fused in], emitting the
# raw conv output and per-tile (sum, sum_sq) partial statistics.
# ---------------------------------------------------------------------------
def _make_conv1x1_kernel(apply_bn_relu, mxu_dtype):
    def _stats(st_ref, y):
        st_ref[0, 0:1, :] = jnp.sum(y, axis=0, keepdims=True)
        st_ref[0, 1:2, :] = jnp.sum(y * y, axis=0, keepdims=True)

    if apply_bn_relu:
        def kernel(x_ref, scale_ref, shift_ref, w_ref, y_ref, st_ref):
            a = jnp.maximum(x_ref[...] * scale_ref[...] + shift_ref[...], 0.0)
            y = jnp.dot(a.astype(mxu_dtype), w_ref[...],
                        preferred_element_type=jnp.float32)
            y_ref[...] = y
            _stats(st_ref, y)
    else:
        def kernel(x_ref, w_ref, y_ref, st_ref):
            y = jnp.dot(x_ref[...].astype(mxu_dtype), w_ref[...],
                        preferred_element_type=jnp.float32)
            y_ref[...] = y
            _stats(st_ref, y)
    return kernel


def conv1x1_with_stats(x, w, scale=None, shift=None, *, mxu_dtype, row_tile=256):
    m, cin = x.shape
    cout = w.shape[1]
    tm = _row_tile(m, row_tile)
    g = m // tm
    apply_bn = scale is not None
    kernel = _make_conv1x1_kernel(apply_bn, mxu_dtype)

    in_specs = [pl.BlockSpec((tm, cin), lambda i: (i, 0))]
    args = [x]
    if apply_bn:
        in_specs += [pl.BlockSpec((1, cin), lambda i: (0, 0)),
                     pl.BlockSpec((1, cin), lambda i: (0, 0))]
        args += [scale, shift]
    in_specs.append(pl.BlockSpec((cin, cout), lambda i: (0, 0)))
    args.append(w)

    y, st = pl.pallas_call(
        kernel,
        grid=(g,),
        in_specs=in_specs,
        out_specs=[pl.BlockSpec((tm, cout), lambda i: (i, 0)),
                   pl.BlockSpec((1, 2, cout), lambda i: (i, 0, 0))],
        out_shape=[jax.ShapeDtypeStruct((m, cout), jnp.float32),
                   jax.ShapeDtypeStruct((g, 2, cout), jnp.float32)],
        compiler_params=pltpu.CompilerParams(
            dimension_semantics=("parallel",)),
    )(*args)
    return y, st


# ---------------------------------------------------------------------------
# 3x3 conv (pad=1, stride=1): previous BN + ReLU fused in, then 9 shifted
# matmuls against a flat, zero-padded VMEM copy of one image (no HBM im2col).
# ---------------------------------------------------------------------------
def _make_conv3x3_kernel(h, w_sp, cp, mxu_dtype):
    hw = h * w_sp
    top = _round_up(w_sp + 1, 8)   # zero rows above the data (8-aligned start)
    bot = w_sp + 1                 # zero rows below the data

    def kernel(y1_ref, scale_ref, shift_ref, w_ref, y2_ref, st_ref, pad_ref):
        # BN1 (precomputed scale/shift) + ReLU fused, then cast for the MXU.
        a = jnp.maximum(y1_ref[0] * scale_ref[...] + shift_ref[...], 0.0)
        pad_ref[0:top, :] = jnp.zeros((top, cp), mxu_dtype)
        pad_ref[top + hw:top + hw + bot, :] = jnp.zeros((bot, cp), mxu_dtype)
        pad_ref[top:top + hw, :] = a.astype(mxu_dtype)

        # Column masks for the dw = +/-1 taps (zero padding at the W edges;
        # the H edges are handled by the zero rows of the flat scratch).
        col = lax.broadcasted_iota(jnp.int32, (hw, 1), 0) % w_sp
        keep_l = col != 0
        keep_r = col != (w_sp - 1)

        acc = jnp.zeros((hw, cp), jnp.float32)
        for kh in range(3):
            for kw in range(3):
                dh, dw = kh - 1, kw - 1
                start = top + dh * w_sp + dw
                tap = pad_ref[start:start + hw, :]
                contrib = jnp.dot(tap, w_ref[kh * 3 + kw],
                                  preferred_element_type=jnp.float32)
                if dw == -1:
                    contrib = jnp.where(keep_l, contrib, 0.0)
                elif dw == 1:
                    contrib = jnp.where(keep_r, contrib, 0.0)
                acc = acc + contrib

        y2_ref[0] = acc
        st_ref[0, 0:1, :] = jnp.sum(acc, axis=0, keepdims=True)
        st_ref[0, 1:2, :] = jnp.sum(acc * acc, axis=0, keepdims=True)

    return kernel, top + hw + bot


def conv3x3_with_stats(y1_flat, scale, shift, w9, n, h, w_sp, *, mxu_dtype):
    hw = h * w_sp
    cp = y1_flat.shape[-1]
    y1_img = y1_flat.reshape(n, hw, cp)
    kernel, scratch_rows = _make_conv3x3_kernel(h, w_sp, cp, mxu_dtype)
    # TODO(synk): for very large H*W, tile conv2 over H with a 1-row halo
    # instead of whole-image blocks.
    y2, st = pl.pallas_call(
        kernel,
        grid=(n,),
        in_specs=[pl.BlockSpec((1, hw, cp), lambda i: (i, 0, 0)),
                  pl.BlockSpec((1, cp), lambda i: (0, 0)),
                  pl.BlockSpec((1, cp), lambda i: (0, 0)),
                  pl.BlockSpec((9, cp, cp), lambda i: (0, 0, 0))],
        out_specs=[pl.BlockSpec((1, hw, cp), lambda i: (i, 0, 0)),
                   pl.BlockSpec((1, 2, cp), lambda i: (i, 0, 0))],
        out_shape=[jax.ShapeDtypeStruct((n, hw, cp), jnp.float32),
                   jax.ShapeDtypeStruct((n, 2, cp), jnp.float32)],
        scratch_shapes=[pltpu.VMEM((scratch_rows, cp), mxu_dtype)],
        compiler_params=pltpu.CompilerParams(
            dimension_semantics=("parallel",)),
    )(y1_img, scale, shift, w9)
    return y2.reshape(n * hw, cp), st


# ---------------------------------------------------------------------------
# Final stage: BN3 (scale/shift) + residual add + ReLU.
# ---------------------------------------------------------------------------
def _bn_add_relu_kernel(y_ref, res_ref, scale_ref, shift_ref, o_ref):
    o_ref[...] = jnp.maximum(
        y_ref[...] * scale_ref[...] + shift_ref[...] + res_ref[...], 0.0)


def bn_add_relu(y, residual, scale, shift, *, row_tile=256):
    m, c = y.shape
    tm = _row_tile(m, row_tile)
    return pl.pallas_call(
        _bn_add_relu_kernel,
        grid=(m // tm,),
        in_specs=[pl.BlockSpec((tm, c), lambda i: (i, 0)),
                  pl.BlockSpec((tm, c), lambda i: (i, 0)),
                  pl.BlockSpec((1, c), lambda i: (0, 0)),
                  pl.BlockSpec((1, c), lambda i: (0, 0))],
        out_specs=pl.BlockSpec((tm, c), lambda i: (i, 0)),
        out_shape=jax.ShapeDtypeStruct((m, c), jnp.float32),
        compiler_params=pltpu.CompilerParams(
            dimension_semantics=("parallel",)),
    )(y, residual, scale, shift)


# ---------------------------------------------------------------------------
# Tiny per-channel JAX glue: fold per-tile (sum, sum_sq) into BN scale/shift.
# ---------------------------------------------------------------------------
def _bn_scale_shift(stats, gamma, beta, count):
    s = jnp.sum(stats[:, 0, :], axis=0)
    ss = jnp.sum(stats[:, 1, :], axis=0)
    mean = s / count
    var = jnp.maximum(ss / count - mean * mean, 0.0)   # biased batch variance
    scale = gamma * lax.rsqrt(var + EPS)
    shift = beta - mean * scale
    return scale.reshape(1, -1), shift.reshape(1, -1)


# ---------------------------------------------------------------------------
# Bottleneck forward.
# ---------------------------------------------------------------------------
def bottleneck_forward_nhwc(x_nhwc, params, *, mxu_dtype=jnp.bfloat16):
    n, h, w_sp, cin = x_nhwc.shape
    width = params["conv1"].shape[0]
    cout = params["conv3"].shape[0]
    assert cin == cout, "downsample=None requires inplanes == planes*expansion"

    cin_p = _round_up(cin, LANE)
    wid_p = _round_up(width, LANE)
    cout_p = _round_up(cout, LANE)
    m = n * h * w_sp
    count = float(m)

    # ---- one-time parameter prep (tiny) -----------------------------------
    w1 = jnp.zeros((cin_p, wid_p), jnp.float32).at[:cin, :width].set(
        params["conv1"].reshape(width, cin).T)
    w2 = jnp.transpose(params["conv2"], (2, 3, 1, 0)).reshape(9, width, width)
    w2 = jnp.zeros((9, wid_p, wid_p), jnp.float32).at[:, :width, :width].set(w2)
    w3 = jnp.zeros((wid_p, cout_p), jnp.float32).at[:width, :cout].set(
        params["conv3"].reshape(cout, width).T)
    w1, w2, w3 = (t.astype(mxu_dtype) for t in (w1, w2, w3))

    def pad_c(v, cp):   # pad gamma/beta with 0 -> padded channels stay 0
        return jnp.zeros((cp,), jnp.float32).at[:v.shape[0]].set(v)

    g1, b1 = pad_c(params["g1"], wid_p), pad_c(params["b1"], wid_p)
    g2, b2 = pad_c(params["g2"], wid_p), pad_c(params["b2"], wid_p)
    g3, b3 = pad_c(params["g3"], cout_p), pad_c(params["b3"], cout_p)

    xf = x_nhwc.reshape(m, cin)
    if cin_p != cin:
        xf = jnp.pad(xf, ((0, 0), (0, cin_p - cin)))

    # stage 1: conv1 (1x1) + partial batch stats
    y1, st1 = conv1x1_with_stats(xf, w1, mxu_dtype=mxu_dtype)
    s1, sh1 = _bn_scale_shift(st1, g1, b1, count)

    # stage 2: BN1+ReLU fused into conv2 (3x3 via 9 in-VMEM shifted matmuls)
    y2, st2 = conv3x3_with_stats(y1, s1, sh1, w2, n, h, w_sp, mxu_dtype=mxu_dtype)
    s2, sh2 = _bn_scale_shift(st2, g2, b2, count)

    # stage 3: BN2+ReLU fused into conv3 (1x1)
    y3, st3 = conv1x1_with_stats(y2, w3, scale=s2, shift=sh2, mxu_dtype=mxu_dtype)
    s3, sh3 = _bn_scale_shift(st3, g3, b3, count)

    # stage 4: BN3 + residual + ReLU
    out = bn_add_relu(y3, xf, s3, sh3)
    return out[:, :cout].reshape(n, h, w_sp, cout)


def bottleneck_forward(x_nchw, params, *, mxu_dtype=jnp.bfloat16):
    # PyTorch-layout convenience wrapper; the kernels themselves are
    # NHWC-native (use bottleneck_forward_nhwc to avoid the two transposes).
    x_nhwc = jnp.transpose(x_nchw, (0, 2, 3, 1))
    out = bottleneck_forward_nhwc(x_nhwc, params, mxu_dtype=mxu_dtype)
    return jnp.transpose(out, (0, 3, 1, 2))


# ------------------------- pure-JAX reference check -------------------------
def bottleneck_reference(x, params, mxu_dtype=jnp.float32):
    def conv(v, w, padding=0):
        return lax.conv_general_dilated(
            v.astype(mxu_dtype), w.astype(mxu_dtype), (1, 1),
            [(padding, padding)] * 2,
            dimension_numbers=("NCHW", "OIHW", "NCHW"),
            preferred_element_type=jnp.float32)

    def bn(v, g, b):
        mean = jnp.mean(v, axis=(0, 2, 3), keepdims=True)
        var = jnp.mean((v - mean) ** 2, axis=(0, 2, 3), keepdims=True)
        vhat = (v - mean) * lax.rsqrt(var + EPS)
        return vhat * g.reshape(1, -1, 1, 1) + b.reshape(1, -1, 1, 1)

    out = jax.nn.relu(bn(conv(x, params["conv1"]), params["g1"], params["b1"]))
    out = jax.nn.relu(bn(conv(out, params["conv2"], padding=1),
                         params["g2"], params["b2"]))
    out = bn(conv(out, params["conv3"]), params["g3"], params["b3"])
    return jax.nn.relu(out + x)


# ----------------------------------- main -----------------------------------
if __name__ == "__main__":
    # Bottleneck(inplanes=256, planes=64): width=64, out=256 (== inplanes so
    # stride=1 / downsample=None residual add is well-defined).
    N, inplanes, H, W = 2, 256, 16, 16
    planes, expansion, base_width, groups = 64, 4, 64, 1
    width = int(planes * (base_width / 64.0)) * groups
    cout = planes * expansion

    key = jax.random.PRNGKey(0)
    ks = jax.random.split(key, 10)
    params = {
        "conv1": jax.random.normal(ks[0], (width, inplanes, 1, 1), jnp.float32) * 0.05,
        "conv2": jax.random.normal(ks[1], (width, width, 3, 3), jnp.float32) * 0.05,
        "conv3": jax.random.normal(ks[2], (cout, width, 1, 1), jnp.float32) * 0.1,
        "g1": jax.random.uniform(ks[3], (width,), jnp.float32, 0.5, 1.5),
        "b1": jax.random.normal(ks[4], (width,), jnp.float32) * 0.1,
        "g2": jax.random.uniform(ks[5], (width,), jnp.float32, 0.5, 1.5),
        "b2": jax.random.normal(ks[6], (width,), jnp.float32) * 0.1,
        "g3": jax.random.uniform(ks[7], (cout,), jnp.float32, 0.5, 1.5),
        "b3": jax.random.normal(ks[8], (cout,), jnp.float32) * 0.1,
    }
    x = jax.random.normal(ks[9], (N, inplanes, H, W), jnp.float32)

    fwd_bf16 = jax.jit(functools.partial(bottleneck_forward, mxu_dtype=jnp.bfloat16))
    fwd_f32 = jax.jit(functools.partial(bottleneck_forward, mxu_dtype=jnp.float32))

    # Semantic check: f32-MXU path vs f32 reference (tight).
    out_f32 = jax.block_until_ready(fwd_f32(x, params))
    ref_f32 = jax.block_until_ready(bottleneck_reference(x, params, jnp.float32))
    assert out_f32.shape == (N, cout, H, W), out_f32.shape
    err32 = float(jnp.max(jnp.abs(out_f32 - ref_f32)))
    assert err32 < 2e-3, err32

    # Performance path: bf16 MXU operands / f32 accumulation, checked against
    # a precision-matched reference (bf16 conv operands, f32 BN math).
    out_bf16 = jax.block_until_ready(fwd_bf16(x, params))
    ref_bf16 = jax.block_until_ready(bottleneck_reference(x, params, jnp.bfloat16))
    err16 = float(jnp.max(jnp.abs(out_bf16 - ref_bf16)))
    assert err16 < 2e-2, err16

    print("KERNEL_OK")
</pallas_src>

<mosaic_0001>
module attributes {stable_mosaic.version = 11 : i64} {
  func.func @kernel(%arg0: i32, %arg1: memref<256x256xf32, #tpu.memory_space<vmem>>, %arg2: memref<256x128xf32, #tpu.memory_space<vmem>>, %arg3: memref<256x128xf32, #tpu.memory_space<vmem>>, %arg4: memref<1x2x128xf32, #tpu.memory_space<vmem>>) attributes {dimension_semantics = [#tpu.dimension_semantics<parallel>], iteration_bounds = array<i64: 2>, scalar_prefetch = 0 : i64, scratch_operands = 0 : i64, tpu.core_type = #tpu.core_type<tc>, window_params = [{transform_indices = @transform_0, window_bounds = array<i64: 256, 256>}, {pipeline_mode = #tpu.pipeline_mode<synchronous>, transform_indices = @transform_1, window_bounds = array<i64: 256, 128>}, {transform_indices = @transform_2, window_bounds = array<i64: 256, 128>}, {transform_indices = @transform_3, window_bounds = array<i64: 1, 2, 128>}]} {
    %c0 = arith.constant 0 : index
    %c0_0 = arith.constant 0 : index
    %0 = vector.load %arg1[%c0, %c0_0] : memref<256x256xf32, #tpu.memory_space<vmem>>, vector<256x256xf32>
    %c0_1 = arith.constant 0 : index
    %c0_2 = arith.constant 0 : index
    %1 = vector.load %arg2[%c0_1, %c0_2] : memref<256x128xf32, #tpu.memory_space<vmem>>, vector<256x128xf32>
    %cst = arith.constant dense<0.000000e+00> : vector<256x128xf32>
    %2 = tpu.matmul %0, %1, %cst {dimension_numbers = #tpu.dot_dimension_numbers<[1], [0], [0], [1], [0, 0, 1, 1], [], []>} : vector<256x256xf32>, vector<256x128xf32>, vector<256x128xf32> -> vector<256x128xf32>
    %c0_3 = arith.constant 0 : index
    %c0_4 = arith.constant 0 : index
    %3 = vector.load %arg3[%c0_3, %c0_4] : memref<256x128xf32, #tpu.memory_space<vmem>>, vector<256x128xf32>
    tpu.vector_store %arg3[%c0_3, %c0_4], %2 {strides = array<i32>} : memref<256x128xf32, #tpu.memory_space<vmem>>, vector<256x128xf32>,
    %cst_5 = arith.constant dense<0.000000e+00> : vector<128xf32>
    %4 = vector.multi_reduction <add>, %2, %cst_5 [0] : vector<256x128xf32> to vector<128xf32>
    %5 = vector.shape_cast %4 : vector<128xf32> to vector<1x128xf32>
    %c0_6 = arith.constant 0 : index
    %c0_7 = arith.constant 0 : index
    %c0_8 = arith.constant 0 : index
    %6 = vector.load %arg4[%c0_6, %c0_7, %c0_8] : memref<1x2x128xf32, #tpu.memory_space<vmem>>, vector<1x1x128xf32>
    %7 = vector.shape_cast %6 : vector<1x1x128xf32> to vector<1x128xf32>
    %8 = vector.shape_cast %5 : vector<1x128xf32> to vector<1x1x128xf32>
    tpu.vector_store %arg4[%c0_6, %c0_7, %c0_8], %8 {strides = array<i32>} : memref<1x2x128xf32, #tpu.memory_space<vmem>>, vector<1x1x128xf32>,
    %9 = arith.mulf %2, %2 : vector<256x128xf32>
    %cst_9 = arith.constant dense<0.000000e+00> : vector<128xf32>
    %10 = vector.multi_reduction <add>, %9, %cst_9 [0] : vector<256x128xf32> to vector<128xf32>
    %11 = vector.shape_cast %10 : vector<128xf32> to vector<1x128xf32>
    %c0_10 = arith.constant 0 : index
    %c1 = arith.constant 1 : index
    %c0_11 = arith.constant 0 : index
    %12 = vector.load %arg4[%c0_10, %c1, %c0_11] : memref<1x2x128xf32, #tpu.memory_space<vmem>>, vector<1x1x128xf32>
    %13 = vector.shape_cast %12 : vector<1x1x128xf32> to vector<1x128xf32>
    %14 = vector.shape_cast %11 : vector<1x128xf32> to vector<1x1x128xf32>
    tpu.vector_store %arg4[%c0_10, %c1, %c0_11], %14 {strides = array<i32>} : memref<1x2x128xf32, #tpu.memory_space<vmem>>, vector<1x1x128xf32>,
    return
  }
  func.func @transform_0(%arg0: i32) -> (i32, i32) {
    %c0_i32 = arith.constant 0 : i32
    %c0_i32_0 = arith.constant 0 : i32
    return %arg0, %c0_i32 : i32, i32
  }
  func.func @transform_1(%arg0: i32) -> (i32, i32) {
    %c0_i32 = arith.constant 0 : i32
    %c0_i32_0 = arith.constant 0 : i32
    %c0_i32_1 = arith.constant 0 : i32
    return %c0_i32, %c0_i32_0 : i32, i32
  }
  func.func @transform_2(%arg0: i32) -> (i32, i32) {
    %c0_i32 = arith.constant 0 : i32
    %c0_i32_0 = arith.constant 0 : i32
    return %arg0, %c0_i32 : i32, i32
  }
  func.func @transform_3(%arg0: i32) -> (i32, i32, i32) {
    %c0_i32 = arith.constant 0 : i32
    %c0_i32_0 = arith.constant 0 : i32
    %c0_i32_1 = arith.constant 0 : i32
    return %arg0, %c0_i32, %c0_i32_0 : i32, i32, i32
  }
}

module attributes {stable_mosaic.version = 11 : i64} {
  func.func @kernel(%arg0: i32, %arg1: memref<1x256x128xf32, #tpu.memory_space<vmem>>, %arg2: memref<1x128xf32, #tpu.memory_space<vmem>>, %arg3: memref<1x128xf32, #tpu.memory_space<vmem>>, %arg4: memref<9x128x128xf32, #tpu.memory_space<vmem>>, %arg5: memref<1x256x128xf32, #tpu.memory_space<vmem>>, %arg6: memref<1x2x128xf32, #tpu.memory_space<vmem>>, %arg7: memref<297x128xf32, #tpu.memory_space<vmem>>) attributes {dimension_semantics = [#tpu.dimension_semantics<parallel>], iteration_bounds = array<i64: 2>, scalar_prefetch = 0 : i64, scratch_operands = 1 : i64, tpu.core_type = #tpu.core_type<tc>, window_params = [{transform_indices = @transform_0, window_bounds = array<i64: 1, 256, 128>}, {pipeline_mode = #tpu.pipeline_mode<synchronous>, transform_indices = @transform_1, window_bounds = array<i64: 1, 128>}, {pipeline_mode = #tpu.pipeline_mode<synchronous>, transform_indices = @transform_2, window_bounds = array<i64: 1, 128>}, {pipeline_mode = #tpu.pipeline_mode<synchronous>, transform_indices = @transform_3, window_bounds = array<i64: 9, 128, 128>}, {transform_indices = @transform_4, window_bounds = array<i64: 1, 256, 128>}, {transform_indices = @transform_5, window_bounds = array<i64: 1, 2, 128>}]} {
    %c0 = arith.constant 0 : index
    %c0_0 = arith.constant 0 : index
    %c0_1 = arith.constant 0 : index
    %0 = vector.load %arg1[%c0, %c0_0, %c0_1] : memref<1x256x128xf32, #tpu.memory_space<vmem>>, vector<1x256x128xf32>
    %1 = vector.shape_cast %0 : vector<1x256x128xf32> to vector<256x128xf32>
    %c0_2 = arith.constant 0 : index
    %c0_3 = arith.constant 0 : index
    %2 = vector.load %arg2[%c0_2, %c0_3] : memref<1x128xf32, #tpu.memory_space<vmem>>, vector<1x128xf32>
    %3 = vector.broadcast %2 : vector<1x128xf32> to vector<256x128xf32>
    %4 = arith.mulf %1, %3 : vector<256x128xf32>
    %c0_4 = arith.constant 0 : index
    %c0_5 = arith.constant 0 : index
    %5 = vector.load %arg3[%c0_4, %c0_5] : memref<1x128xf32, #tpu.memory_space<vmem>>, vector<1x128xf32>
    %6 = vector.broadcast %5 : vector<1x128xf32> to vector<256x128xf32>
    %7 = arith.addf %4, %6 : vector<256x128xf32>
    %cst = arith.constant 0.000000e+00 : f32
    %8 = vector.broadcast %cst : f32 to vector<256x128xf32>
    %9 = arith.maximumf %7, %8 : vector<256x128xf32>
    %cst_6 = arith.constant 0.000000e+00 : f32
    %10 = vector.broadcast %cst_6 : f32 to vector<24x128xf32>
    %c0_7 = arith.constant 0 : index
    %c0_8 = arith.constant 0 : index
    %11 = vector.load %arg7[%c0_7, %c0_8] : memref<297x128xf32, #tpu.memory_space<vmem>>, vector<24x128xf32>
    tpu.vector_store %arg7[%c0_7, %c0_8], %10 {strides = array<i32>} : memref<297x128xf32, #tpu.memory_space<vmem>>, vector<24x128xf32>,
    %cst_9 = arith.constant 0.000000e+00 : f32
    %12 = vector.broadcast %cst_9 : f32 to vector<17x128xf32>
    %c280 = arith.constant 280 : index
    %c0_10 = arith.constant 0 : index
    %13 = vector.load %arg7[%c280, %c0_10] : memref<297x128xf32, #tpu.memory_space<vmem>>, vector<17x128xf32>
    tpu.vector_store %arg7[%c280, %c0_10], %12 {strides = array<i32>} : memref<297x128xf32, #tpu.memory_space<vmem>>, vector<17x128xf32>,
    %c24 = arith.constant 24 : index
    %c0_11 = arith.constant 0 : index
    %14 = vector.load %arg7[%c24, %c0_11] : memref<297x128xf32, #tpu.memory_space<vmem>>, vector<256x128xf32>
    tpu.vector_store %arg7[%c24, %c0_11], %9 {strides = array<i32>} : memref<297x128xf32, #tpu.memory_space<vmem>>, vector<256x128xf32>,
    %15 = tpu.iota {dimensions = array<i32: 0>} : vector<256x1xi32>
    %c16_i32 = arith.constant 16 : i32
    %c0_i32 = arith.constant 0 : i32
    %16 = arith.cmpi eq, %c16_i32, %c0_i32 : i32
    %c1_i32 = arith.constant 1 : i32
    %17 = arith.select %16, %c1_i32, %c16_i32 : i32
    %18 = vector.broadcast %17 : i32 to vector<256x1xi32>
    %19 = arith.remsi %15, %18 : vector<256x1xi32>
    %c0_i32_12 = arith.constant 0 : i32
    %20 = vector.broadcast %c0_i32_12 : i32 to vector<256x1xi32>
    %21 = arith.cmpi ne, %19, %20 : vector<256x1xi32>
    %c0_i32_13 = arith.constant 0 : i32
    %22 = vector.broadcast %c0_i32_13 : i32 to vector<256x1xi32>
    %23 = arith.cmpi slt, %19, %22 : vector<256x1xi32>
    %c0_i32_14 = arith.constant 0 : i32
    %24 = arith.cmpi slt, %17, %c0_i32_14 : i32
    %25 = vector.broadcast %24 : i1 to vector<256x1xi1>
    %26 = vector.broadcast %25 : vector<256x1xi1> to vector<256x1xi1>
    %27 = arith.xori %23, %26 : vector<256x1xi1>
    %28 = arith.andi %27, %21 : vector<256x1xi1>
    %29 = vector.broadcast %17 : i32 to vector<256x1xi32>
    %30 = arith.addi %19, %29 : vector<256x1xi32>
    %31 = arith.select %28, %30, %19 : vector<256x1xi1>, vector<256x1xi32>
    %c0_i32_15 = arith.constant 0 : i32
    %32 = vector.broadcast %c0_i32_15 : i32 to vector<256x1xi32>
    %33 = arith.cmpi ne, %31, %32 : vector<256x1xi32>
    %c15_i32 = arith.constant 15 : i32
    %34 = vector.broadcast %c15_i32 : i32 to vector<256x1xi32>
    %35 = arith.cmpi ne, %31, %34 : vector<256x1xi32>
    %cst_16 = arith.constant 0.000000e+00 : f32
    %36 = vector.broadcast %cst_16 : f32 to vector<256x128xf32>
    %c7 = arith.constant 7 : index
    %c0_17 = arith.constant 0 : index
    %37 = vector.load %arg7[%c7, %c0_17] : memref<297x128xf32, #tpu.memory_space<vmem>>, vector<256x128xf32>
    %c0_18 = arith.constant 0 : index
    %c0_19 = arith.constant 0 : index
    %c0_20 = arith.constant 0 : index
    %38 = vector.load %arg4[%c0_18, %c0_19, %c0_20] : memref<9x128x128xf32, #tpu.memory_space<vmem>>, vector<1x128x128xf32>
    %39 = vector.shape_cast %38 : vector<1x128x128xf32> to vector<128x128xf32>
    %cst_21 = arith.constant dense<0.000000e+00> : vector<256x128xf32>
    %40 = tpu.matmul %37, %39, %cst_21 {dimension_numbers = #tpu.dot_dimension_numbers<[1], [0], [0], [1], [0, 0, 1, 1], [], []>} : vector<256x128xf32>, vector<128x128xf32>, vector<256x128xf32> -> vector<256x128xf32>
    %cst_22 = arith.constant 0.000000e+00 : f32
    %41 = vector.shape_cast %33 : vector<256x1xi1> to vector<256x1xi1>
    %42 = vector.broadcast %41 : vector<256x1xi1> to vector<256x128xi1>
    %43 = vector.broadcast %cst_22 : f32 to vector<256x128xf32>
    %44 = arith.select %42, %40, %43 : vector<256x128xi1>, vector<256x128xf32>
    %45 = arith.addf %36, %44 : vector<256x128xf32>
    %c8 = arith.constant 8 : index
    %c0_23 = arith.constant 0 : index
    %46 = vector.load %arg7[%c8, %c0_23] : memref<297x128xf32, #tpu.memory_space<vmem>>, vector<256x128xf32>
    %c1 = arith.constant 1 : index
    %c0_24 = arith.constant 0 : index
    %c0_25 = arith.constant 0 : index
    %47 = vector.load %arg4[%c1, %c0_24, %c0_25] : memref<9x128x128xf32, #tpu.memory_space<vmem>>, vector<1x128x128xf32>
    %48 = vector.shape_cast %47 : vector<1x128x128xf32> to vector<128x128xf32>
    %cst_26 = arith.constant dense<0.000000e+00> : vector<256x128xf32>
    %49 = tpu.matmul %46, %48, %cst_26 {dimension_numbers = #tpu.dot_dimension_numbers<[1], [0], [0], [1], [0, 0, 1, 1], [], []>} : vector<256x128xf32>, vector<128x128xf32>, vector<256x128xf32> -> vector<256x128xf32>
    %50 = arith.addf %45, %49 : vector<256x128xf32>
    %c9 = arith.constant 9 : index
    %c0_27 = arith.constant 0 : index
    %51 = vector.load %arg7[%c9, %c0_27] : memref<297x128xf32, #tpu.memory_space<vmem>>, vector<256x128xf32>
    %c2 = arith.constant 2 : index
    %c0_28 = arith.constant 0 : index
    %c0_29 = arith.constant 0 : index
    %52 = vector.load %arg4[%c2, %c0_28, %c0_29] : memref<9x128x128xf32, #tpu.memory_space<vmem>>, vector<1x128x128xf32>
    %53 = vector.shape_cast %52 : vector<1x128x128xf32> to vector<128x128xf32>
    %cst_30 = arith.constant dense<0.000000e+00> : vector<256x128xf32>
    %54 = tpu.matmul %51, %53, %cst_30 {dimension_numbers = #tpu.dot_dimension_numbers<[1], [0], [0], [1], [0, 0, 1, 1], [], []>} : vector<256x128xf32>, vector<128x128xf32>, vector<256x128xf32> -> vector<256x128xf32>
    %cst_31 = arith.constant 0.000000e+00 : f32
    %55 = vector.shape_cast %35 : vector<256x1xi1> to vector<256x1xi1>
    %56 = vector.broadcast %55 : vector<256x1xi1> to vector<256x128xi1>
    %57 = vector.broadcast %cst_31 : f32 to vector<256x128xf32>
    %58 = arith.select %56, %54, %57 : vector<256x128xi1>, vector<256x128xf32>
    %59 = arith.addf %50, %58 : vector<256x128xf32>
    %c23 = arith.constant 23 : index
    %c0_32 = arith.constant 0 : index
    %60 = vector.load %arg7[%c23, %c0_32] : memref<297x128xf32, #tpu.memory_space<vmem>>, vector<256x128xf32>
    %c3 = arith.constant 3 : index
    %c0_33 = arith.constant 0 : index
    %c0_34 = arith.constant 0 : index
    %61 = vector.load %arg4[%c3, %c0_33, %c0_34] : memref<9x128x128xf32, #tpu.memory_space<vmem>>, vector<1x128x128xf32>
    %62 = vector.shape_cast %61 : vector<1x128x128xf32> to vector<128x128xf32>
    %cst_35 = arith.constant dense<0.000000e+00> : vector<256x128xf32>
    %63 = tpu.matmul %60, %62, %cst_35 {dimension_numbers = #tpu.dot_dimension_numbers<[1], [0], [0], [1], [0, 0, 1, 1], [], []>} : vector<256x128xf32>, vector<128x128xf32>, vector<256x128xf32> -> vector<256x128xf32>
    %cst_36 = arith.constant 0.000000e+00 : f32
    %64 = vector.shape_cast %33 : vector<256x1xi1> to vector<256x1xi1>
    %65 = vector.broadcast %64 : vector<256x1xi1> to vector<256x128xi1>
    %66 = vector.broadcast %cst_36 : f32 to vector<256x128xf32>
    %67 = arith.select %65, %63, %66 : vector<256x128xi1>, vector<256x128xf32>
    %68 = arith.addf %59, %67 : vector<256x128xf32>
    %c24_37 = arith.constant 24 : index
    %c0_38 = arith.constant 0 : index
    %69 = vector.load %arg7[%c24_37, %c0_38] : memref<297x128xf32, #tpu.memory_space<vmem>>, vector<256x128xf32>
    %c4 = arith.constant 4 : index
    %c0_39 = arith.constant 0 : index
    %c0_40 = arith.constant 0 : index
    %70 = vector.load %arg4[%c4, %c0_39, %c0_40] : memref<9x128x128xf32, #tpu.memory_space<vmem>>, vector<1x128x128xf32>
    %71 = vector.shape_cast %70 : vector<1x128x128xf32> to vector<128x128xf32>
    %cst_41 = arith.constant dense<0.000000e+00> : vector<256x128xf32>
    %72 = tpu.matmul %69, %71, %cst_41 {dimension_numbers = #tpu.dot_dimension_numbers<[1], [0], [0], [1], [0, 0, 1, 1], [], []>} : vector<256x128xf32>, vector<128x128xf32>, vector<256x128xf32> -> vector<256x128xf32>
    %73 = arith.addf %68, %72 : vector<256x128xf32>
    %c25 = arith.constant 25 : index
    %c0_42 = arith.constant 0 : index
    %74 = vector.load %arg7[%c25, %c0_42] : memref<297x128xf32, #tpu.memory_space<vmem>>, vector<256x128xf32>
    %c5 = arith.constant 5 : index
    %c0_43 = arith.constant 0 : index
    %c0_44 = arith.constant 0 : index
    %75 = vector.load %arg4[%c5, %c0_43, %c0_44] : memref<9x128x128xf32, #tpu.memory_space<vmem>>, vector<1x128x128xf32>
    %76 = vector.shape_cast %75 : vector<1x128x128xf32> to vector<128x128xf32>
    %cst_45 = arith.constant dense<0.000000e+00> : vector<256x128xf32>
    %77 = tpu.matmul %74, %76, %cst_45 {dimension_numbers = #tpu.dot_dimension_numbers<[1], [0], [0], [1], [0, 0, 1, 1], [], []>} : vector<256x128xf32>, vector<128x128xf32>, vector<256x128xf32> -> vector<256x128xf32>
    %cst_46 = arith.constant 0.000000e+00 : f32
    %78 = vector.shape_cast %35 : vector<256x1xi1> to vector<256x1xi1>
    %79 = vector.broadcast %78 : vector<256x1xi1> to vector<256x128xi1>
    %80 = vector.broadcast %cst_46 : f32 to vector<256x128xf32>
    %81 = arith.select %79, %77, %80 : vector<256x128xi1>, vector<256x128xf32>
    %82 = arith.addf %73, %81 : vector<256x128xf32>
    %c39 = arith.constant 39 : index
    %c0_47 = arith.constant 0 : index
    %83 = vector.load %arg7[%c39, %c0_47] : memref<297x128xf32, #tpu.memory_space<vmem>>, vector<256x128xf32>
    %c6 = arith.constant 6 : index
    %c0_48 = arith.constant 0 : index
    %c0_49 = arith.constant 0 : index
    %84 = vector.load %arg4[%c6, %c0_48, %c0_49] : memref<9x128x128xf32, #tpu.memory_space<vmem>>, vector<1x128x128xf32>
    %85 = vector.shape_cast %84 : vector<1x128x128xf32> to vector<128x128xf32>
    %cst_50 = arith.constant dense<0.000000e+00> : vector<256x128xf32>
    %86 = tpu.matmul %83, %85, %cst_50 {dimension_numbers = #tpu.dot_dimension_numbers<[1], [0], [0], [1], [0, 0, 1, 1], [], []>} : vector<256x128xf32>, vector<128x128xf32>, vector<256x128xf32> -> vector<256x128xf32>
    %cst_51 = arith.constant 0.000000e+00 : f32
    %87 = vector.shape_cast %33 : vector<256x1xi1> to vector<256x1xi1>
    %88 = vector.broadcast %87 : vector<256x1xi1> to vector<256x128xi1>
    %89 = vector.broadcast %cst_51 : f32 to vector<256x128xf32>
    %90 = arith.select %88, %86, %89 : vector<256x128xi1>, vector<256x128xf32>
    %91 = arith.addf %82, %90 : vector<256x128xf32>
    %c40 = arith.constant 40 : index
    %c0_52 = arith.constant 0 : index
    %92 = vector.load %arg7[%c40, %c0_52] : memref<297x128xf32, #tpu.memory_space<vmem>>, vector<256x128xf32>
    %c7_53 = arith.constant 7 : index
    %c0_54 = arith.constant 0 : index
    %c0_55 = arith.constant 0 : index
    %93 = vector.load %arg4[%c7_53, %c0_54, %c0_55] : memref<9x128x128xf32, #tpu.memory_space<vmem>>, vector<1x128x128xf32>
    %94 = vector.shape_cast %93 : vector<1x128x128xf32> to vector<128x128xf32>
    %cst_56 = arith.constant dense<0.000000e+00> : vector<256x128xf32>
    %95 = tpu.matmul %92, %94, %cst_56 {dimension_numbers = #tpu.dot_dimension_numbers<[1], [0], [0], [1], [0, 0, 1, 1], [], []>} : vector<256x128xf32>, vector<128x128xf32>, vector<256x128xf32> -> vector<256x128xf32>
    %96 = arith.addf %91, %95 : vector<256x128xf32>
    %c41 = arith.constant 41 : index
    %c0_57 = arith.constant 0 : index
    %97 = vector.load %arg7[%c41, %c0_57] : memref<297x128xf32, #tpu.memory_space<vmem>>, vector<256x128xf32>
    %c8_58 = arith.constant 8 : index
    %c0_59 = arith.constant 0 : index
    %c0_60 = arith.constant 0 : index
    %98 = vector.load %arg4[%c8_58, %c0_59, %c0_60] : memref<9x128x128xf32, #tpu.memory_space<vmem>>, vector<1x128x128xf32>
    %99 = vector.shape_cast %98 : vector<1x128x128xf32> to vector<128x128xf32>
    %cst_61 = arith.constant dense<0.000000e+00> : vector<256x128xf32>
    %100 = tpu.matmul %97, %99, %cst_61 {dimension_numbers = #tpu.dot_dimension_numbers<[1], [0], [0], [1], [0, 0, 1, 1], [], []>} : vector<256x128xf32>, vector<128x128xf32>, vector<256x128xf32> -> vector<256x128xf32>
    %cst_62 = arith.constant 0.000000e+00 : f32
    %101 = vector.shape_cast %35 : vector<256x1xi1> to vector<256x1xi1>
    %102 = vector.broadcast %101 : vector<256x1xi1> to vector<256x128xi1>
    %103 = vector.broadcast %cst_62 : f32 to vector<256x128xf32>
    %104 = arith.select %102, %100, %103 : vector<256x128xi1>, vector<256x128xf32>
    %105 = arith.addf %96, %104 : vector<256x128xf32>
    %c0_63 = arith.constant 0 : index
    %c0_64 = arith.constant 0 : index
    %c0_65 = arith.constant 0 : index
    %106 = vector.load %arg5[%c0_63, %c0_64, %c0_65] : memref<1x256x128xf32, #tpu.memory_space<vmem>>, vector<1x256x128xf32>
    %107 = vector.shape_cast %106 : vector<1x256x128xf32> to vector<256x128xf32>
    %108 = vector.shape_cast %105 : vector<256x128xf32> to vector<1x256x128xf32>
    tpu.vector_store %arg5[%c0_63, %c0_64, %c0_65], %108 {strides = array<i32>} : memref<1x256x128xf32, #tpu.memory_space<vmem>>, vector<1x256x128xf32>,
    %cst_66 = arith.constant dense<0.000000e+00> : vector<128xf32>
    %109 = vector.multi_reduction <add>, %105, %cst_66 [0] : vector<256x128xf32> to vector<128xf32>
    %110 = vector.shape_cast %109 : vector<128xf32> to vector<1x128xf32>
    %c0_67 = arith.constant 0 : index
    %c0_68 = arith.constant 0 : index
    %c0_69 = arith.constant 0 : index
    %111 = vector.load %arg6[%c0_67, %c0_68, %c0_69] : memref<1x2x128xf32, #tpu.memory_space<vmem>>, vector<1x1x128xf32>
    %112 = vector.shape_cast %111 : vector<1x1x128xf32> to vector<1x128xf32>
    %113 = vector.shape_cast %110 : vector<1x128xf32> to vector<1x1x128xf32>
    tpu.vector_store %arg6[%c0_67, %c0_68, %c0_69], %113 {strides = array<i32>} : memref<1x2x128xf32, #tpu.memory_space<vmem>>, vector<1x1x128xf32>,
    %114 = arith.mulf %105, %105 : vector<256x128xf32>
    %cst_70 = arith.constant dense<0.000000e+00> : vector<128xf32>
    %115 = vector.multi_reduction <add>, %114, %cst_70 [0] : vector<256x128xf32> to vector<128xf32>
    %116 = vector.shape_cast %115 : vector<128xf32> to vector<1x128xf32>
    %c0_71 = arith.constant 0 : index
    %c1_72 = arith.constant 1 : index
    %c0_73 = arith.constant 0 : index
    %117 = vector.load %arg6[%c0_71, %c1_72, %c0_73] : memref<1x2x128xf32, #tpu.memory_space<vmem>>, vector<1x1x128xf32>
    %118 = vector.shape_cast %117 : vector<1x1x128xf32> to vector<1x128xf32>
    %119 = vector.shape_cast %116 : vector<1x128xf32> to vector<1x1x128xf32>
    tpu.vector_store %arg6[%c0_71, %c1_72, %c0_73], %119 {strides = array<i32>} : memref<1x2x128xf32, #tpu.memory_space<vmem>>, vector<1x1x128xf32>,
    return
  }
  func.func @transform_0(%arg0: i32) -> (i32, i32, i32) {
    %c0_i32 = arith.constant 0 : i32
    %c0_i32_0 = arith.constant 0 : i32
    %c0_i32_1 = arith.constant 0 : i32
    return %arg0, %c0_i32, %c0_i32_0 : i32, i32, i32
  }
  func.func @transform_1(%arg0: i32) -> (i32, i32) {
    %c0_i32 = arith.constant 0 : i32
    %c0_i32_0 = arith.constant 0 : i32
    %c0_i32_1 = arith.constant 0 : i32
    return %c0_i32, %c0_i32_0 : i32, i32
  }
  func.func @transform_2(%arg0: i32) -> (i32, i32) {
    %c0_i32 = arith.constant 0 : i32
    %c0_i32_0 = arith.constant 0 : i32
    %c0_i32_1 = arith.constant 0 : i32
    return %c0_i32, %c0_i32_0 : i32, i32
  }
  func.func @transform_3(%arg0: i32) -> (i32, i32, i32) {
    %c0_i32 = arith.constant 0 : i32
    %c0_i32_0 = arith.constant 0 : i32
    %c0_i32_1 = arith.constant 0 : i32
    %c0_i32_2 = arith.constant 0 : i32
    return %c0_i32, %c0_i32_0, %c0_i32_1 : i32, i32, i32
  }
  func.func @transform_4(%arg0: i32) -> (i32, i32, i32) {
    %c0_i32 = arith.constant 0 : i32
    %c0_i32_0 = arith.constant 0 : i32
    %c0_i32_1 = arith.constant 0 : i32
    return %arg0, %c0_i32, %c0_i32_0 : i32, i32, i32
  }
  func.func @transform_5(%arg0: i32) -> (i32, i32, i32) {
    %c0_i32 = arith.constant 0 : i32
    %c0_i32_0 = arith.constant 0 : i32
    %c0_i32_1 = arith.constant 0 : i32
    return %arg0, %c0_i32, %c0_i32_0 : i32, i32, i32
  }
}

module attributes {stable_mosaic.version = 11 : i64} {
  func.func @kernel(%arg0: i32, %arg1: memref<256x128xf32, #tpu.memory_space<vmem>>, %arg2: memref<1x128xf32, #tpu.memory_space<vmem>>, %arg3: memref<1x128xf32, #tpu.memory_space<vmem>>, %arg4: memref<128x256xf32, #tpu.memory_space<vmem>>, %arg5: memref<256x256xf32, #tpu.memory_space<vmem>>, %arg6: memref<1x2x256xf32, #tpu.memory_space<vmem>>) attributes {dimension_semantics = [#tpu.dimension_semantics<parallel>], iteration_bounds = array<i64: 2>, scalar_prefetch = 0 : i64, scratch_operands = 0 : i64, tpu.core_type = #tpu.core_type<tc>, window_params = [{transform_indices = @transform_0, window_bounds = array<i64: 256, 128>}, {pipeline_mode = #tpu.pipeline_mode<synchronous>, transform_indices = @transform_1, window_bounds = array<i64: 1, 128>}, {pipeline_mode = #tpu.pipeline_mode<synchronous>, transform_indices = @transform_2, window_bounds = array<i64: 1, 128>}, {pipeline_mode = #tpu.pipeline_mode<synchronous>, transform_indices = @transform_3, window_bounds = array<i64: 128, 256>}, {transform_indices = @transform_4, window_bounds = array<i64: 256, 256>}, {transform_indices = @transform_5, window_bounds = array<i64: 1, 2, 256>}]} {
    %c0 = arith.constant 0 : index
    %c0_0 = arith.constant 0 : index
    %0 = vector.load %arg1[%c0, %c0_0] : memref<256x128xf32, #tpu.memory_space<vmem>>, vector<256x128xf32>
    %c0_1 = arith.constant 0 : index
    %c0_2 = arith.constant 0 : index
    %1 = vector.load %arg2[%c0_1, %c0_2] : memref<1x128xf32, #tpu.memory_space<vmem>>, vector<1x128xf32>
    %2 = vector.broadcast %1 : vector<1x128xf32> to vector<256x128xf32>
    %3 = arith.mulf %0, %2 : vector<256x128xf32>
    %c0_3 = arith.constant 0 : index
    %c0_4 = arith.constant 0 : index
    %4 = vector.load %arg3[%c0_3, %c0_4] : memref<1x128xf32, #tpu.memory_space<vmem>>, vector<1x128xf32>
    %5 = vector.broadcast %4 : vector<1x128xf32> to vector<256x128xf32>
    %6 = arith.addf %3, %5 : vector<256x128xf32>
    %cst = arith.constant 0.000000e+00 : f32
    %7 = vector.broadcast %cst : f32 to vector<256x128xf32>
    %8 = arith.maximumf %6, %7 : vector<256x128xf32>
    %c0_5 = arith.constant 0 : index
    %c0_6 = arith.constant 0 : index
    %9 = vector.load %arg4[%c0_5, %c0_6] : memref<128x256xf32, #tpu.memory_space<vmem>>, vector<128x256xf32>
    %cst_7 = arith.constant dense<0.000000e+00> : vector<256x256xf32>
    %10 = tpu.matmul %8, %9, %cst_7 {dimension_numbers = #tpu.dot_dimension_numbers<[1], [0], [0], [1], [0, 0, 1, 1], [], []>} : vector<256x128xf32>, vector<128x256xf32>, vector<256x256xf32> -> vector<256x256xf32>
    %c0_8 = arith.constant 0 : index
    %c0_9 = arith.constant 0 : index
    %11 = vector.load %arg5[%c0_8, %c0_9] : memref<256x256xf32, #tpu.memory_space<vmem>>, vector<256x256xf32>
    tpu.vector_store %arg5[%c0_8, %c0_9], %10 {strides = array<i32>} : memref<256x256xf32, #tpu.memory_space<vmem>>, vector<256x256xf32>,
    %cst_10 = arith.constant dense<0.000000e+00> : vector<256xf32>
    %12 = vector.multi_reduction <add>, %10, %cst_10 [0] : vector<256x256xf32> to vector<256xf32>
    %13 = vector.shape_cast %12 : vector<256xf32> to vector<1x256xf32>
    %c0_11 = arith.constant 0 : index
    %c0_12 = arith.constant 0 : index
    %c0_13 = arith.constant 0 : index
    %14 = vector.load %arg6[%c0_11, %c0_12, %c0_13] : memref<1x2x256xf32, #tpu.memory_space<vmem>>, vector<1x1x256xf32>
    %15 = vector.shape_cast %14 : vector<1x1x256xf32> to vector<1x256xf32>
    %16 = vector.shape_cast %13 : vector<1x256xf32> to vector<1x1x256xf32>
    tpu.vector_store %arg6[%c0_11, %c0_12, %c0_13], %16 {strides = array<i32>} : memref<1x2x256xf32, #tpu.memory_space<vmem>>, vector<1x1x256xf32>,
    %17 = arith.mulf %10, %10 : vector<256x256xf32>
    %cst_14 = arith.constant dense<0.000000e+00> : vector<256xf32>
    %18 = vector.multi_reduction <add>, %17, %cst_14 [0] : vector<256x256xf32> to vector<256xf32>
    %19 = vector.shape_cast %18 : vector<256xf32> to vector<1x256xf32>
    %c0_15 = arith.constant 0 : index
    %c1 = arith.constant 1 : index
    %c0_16 = arith.constant 0 : index
    %20 = vector.load %arg6[%c0_15, %c1, %c0_16] : memref<1x2x256xf32, #tpu.memory_space<vmem>>, vector<1x1x256xf32>
    %21 = vector.shape_cast %20 : vector<1x1x256xf32> to vector<1x256xf32>
    %22 = vector.shape_cast %19 : vector<1x256xf32> to vector<1x1x256xf32>
    tpu.vector_store %arg6[%c0_15, %c1, %c0_16], %22 {strides = array<i32>} : memref<1x2x256xf32, #tpu.memory_space<vmem>>, vector<1x1x256xf32>,
    return
  }
  func.func @transform_0(%arg0: i32) -> (i32, i32) {
    %c0_i32 = arith.constant 0 : i32
    %c0_i32_0 = arith.constant 0 : i32
    return %arg0, %c0_i32 : i32, i32
  }
  func.func @transform_1(%arg0: i32) -> (i32, i32) {
    %c0_i32 = arith.constant 0 : i32
    %c0_i32_0 = arith.constant 0 : i32
    %c0_i32_1 = arith.constant 0 : i32
    return %c0_i32, %c0_i32_0 : i32, i32
  }
  func.func @transform_2(%arg0: i32) -> (i32, i32) {
    %c0_i32 = arith.constant 0 : i32
    %c0_i32_0 = arith.constant 0 : i32
    %c0_i32_1 = arith.constant 0 : i32
    return %c0_i32, %c0_i32_0 : i32, i32
  }
  func.func @transform_3(%arg0: i32) -> (i32, i32) {
    %c0_i32 = arith.constant 0 : i32
    %c0_i32_0 = arith.constant 0 : i32
    %c0_i32_1 = arith.constant 0 : i32
    return %c0_i32, %c0_i32_0 : i32, i32
  }
  func.func @transform_4(%arg0: i32) -> (i32, i32) {
    %c0_i32 = arith.constant 0 : i32
    %c0_i32_0 = arith.constant 0 : i32
    return %arg0, %c0_i32 : i32, i32
  }
  func.func @transform_5(%arg0: i32) -> (i32, i32, i32) {
    %c0_i32 = arith.constant 0 : i32
    %c0_i32_0 = arith.constant 0 : i32
    %c0_i32_1 = arith.constant 0 : i32
    return %arg0, %c0_i32, %c0_i32_0 : i32, i32, i32
  }
}

module attributes {stable_mosaic.version = 11 : i64} {
  func.func @_bn_add_relu_kernel(%arg0: i32, %arg1: memref<256x256xf32, #tpu.memory_space<vmem>>, %arg2: memref<256x256xf32, #tpu.memory_space<vmem>>, %arg3: memref<1x256xf32, #tpu.memory_space<vmem>>, %arg4: memref<1x256xf32, #tpu.memory_space<vmem>>, %arg5: memref<256x256xf32, #tpu.memory_space<vmem>>) attributes {dimension_semantics = [#tpu.dimension_semantics<parallel>], iteration_bounds = array<i64: 2>, scalar_prefetch = 0 : i64, scratch_operands = 0 : i64, tpu.core_type = #tpu.core_type<tc>, window_params = [{transform_indices = @transform_0, window_bounds = array<i64: 256, 256>}, {transform_indices = @transform_1, window_bounds = array<i64: 256, 256>}, {pipeline_mode = #tpu.pipeline_mode<synchronous>, transform_indices = @transform_2, window_bounds = array<i64: 1, 256>}, {pipeline_mode = #tpu.pipeline_mode<synchronous>, transform_indices = @transform_3, window_bounds = array<i64: 1, 256>}, {transform_indices = @transform_4, window_bounds = array<i64: 256, 256>}]} {
    %c0 = arith.constant 0 : index
    %c0_0 = arith.constant 0 : index
    %0 = vector.load %arg1[%c0, %c0_0] : memref<256x256xf32, #tpu.memory_space<vmem>>, vector<256x256xf32>
    %c0_1 = arith.constant 0 : index
    %c0_2 = arith.constant 0 : index
    %1 = vector.load %arg3[%c0_1, %c0_2] : memref<1x256xf32, #tpu.memory_space<vmem>>, vector<1x256xf32>
    %2 = vector.broadcast %1 : vector<1x256xf32> to vector<256x256xf32>
    %3 = arith.mulf %0, %2 : vector<256x256xf32>
    %c0_3 = arith.constant 0 : index
    %c0_4 = arith.constant 0 : index
    %4 = vector.load %arg4[%c0_3, %c0_4] : memref<1x256xf32, #tpu.memory_space<vmem>>, vector<1x256xf32>
    %5 = vector.broadcast %4 : vector<1x256xf32> to vector<256x256xf32>
    %6 = arith.addf %3, %5 : vector<256x256xf32>
    %c0_5 = arith.constant 0 : index
    %c0_6 = arith.constant 0 : index
    %7 = vector.load %arg2[%c0_5, %c0_6] : memref<256x256xf32, #tpu.memory_space<vmem>>, vector<256x256xf32>
    %8 = arith.addf %6, %7 : vector<256x256xf32>
    %cst = arith.constant 0.000000e+00 : f32
    %9 = vector.broadcast %cst : f32 to vector<256x256xf32>
    %10 = arith.maximumf %8, %9 : vector<256x256xf32>
    %c0_7 = arith.constant 0 : index
    %c0_8 = arith.constant 0 : index
    %11 = vector.load %arg5[%c0_7, %c0_8] : memref<256x256xf32, #tpu.memory_space<vmem>>, vector<256x256xf32>
    tpu.vector_store %arg5[%c0_7, %c0_8], %10 {strides = array<i32>} : memref<256x256xf32, #tpu.memory_space<vmem>>, vector<256x256xf32>,
    return
  }
  func.func @transform_0(%arg0: i32) -> (i32, i32) {
    %c0_i32 = arith.constant 0 : i32
    %c0_i32_0 = arith.constant 0 : i32
    return %arg0, %c0_i32 : i32, i32
  }
  func.func @transform_1(%arg0: i32) -> (i32, i32) {
    %c0_i32 = arith.constant 0 : i32
    %c0_i32_0 = arith.constant 0 : i32
    return %arg0, %c0_i32 : i32, i32
  }
  func.func @transform_2(%arg0: i32) -> (i32, i32) {
    %c0_i32 = arith.constant 0 : i32
    %c0_i32_0 = arith.constant 0 : i32
    %c0_i32_1 = arith.constant 0 : i32
    return %c0_i32, %c0_i32_0 : i32, i32
  }
  func.func @transform_3(%arg0: i32) -> (i32, i32) {
    %c0_i32 = arith.constant 0 : i32
    %c0_i32_0 = arith.constant 0 : i32
    %c0_i32_1 = arith.constant 0 : i32
    return %c0_i32, %c0_i32_0 : i32, i32
  }
  func.func @transform_4(%arg0: i32) -> (i32, i32) {
    %c0_i32 = arith.constant 0 : i32
    %c0_i32_0 = arith.constant 0 : i32
    return %arg0, %c0_i32 : i32, i32
  }
}

</mosaic_0001>

<llo_original>
// kernel: bottleneck_forward.4
$region0: #{bottleneck_forward.4}
  #allocation0 [shape = 'u32[]', space=smem, size = 0x4, offset = 0x4, fixed_abs, tag = 'smem constant byte address 0x4 - core index']
  #allocation1 [shape = 'u32[144,128]{1,0:T(1,128)}', space=vmem, size = 0x12000, scoped, tag = 'internal scratch']
  %s0 = inlined_call_operand.vmem [shape: f32[512,256], index: 0, kind: input, shape index: {}]
  %s1 = inlined_call_operand.vmem [shape: f32[256,128], index: 1, kind: input, shape index: {}]
  %s2 = inlined_call_operand.vmem [shape: f32[512,128], index: 2, kind: output, shape index: {0}]
  %s3 = inlined_call_operand.vmem [shape: f32[2,2,128], index: 3, kind: output, shape index: {1}]
  %4 = xla_tuple %s2, %s3
  %s5 = sld [smem:[#allocation0]]
  $region49: #{bottleneck_forward.4} parent=0
    _
  %s7 = ssub.s32 1, %s5
  %s8 = scalar_select 0, %s7, %s5
  loop: start=0, step=1, limit=4
  $region2: #{bottleneck_forward.4} parent=0 // loop_pre_header
    _
  $region3: #{bottleneck_forward.4} parent=0 // loop_header
    %s10 = sphi 0, %s14
    %p11 = scmp.ge.s32.totalorder %s10, 4
    %s20 = sphi 0, %s22
    %s23 = sphi 0, %s20
    %s24 = sphi 0, %s23
    %s40 = sphi 0, %s24
    %s44 = sphi 0, %s44
    %s46 = sphi 0, %s44
    %s47 = sphi 0, %s46
    %s61 = sphi 0, %s47
    %s67 = sphi 0, %s69
    %s70 = sphi 0, %s67
    %s71 = sphi 0, %s70
    %s87 = sphi 0, %s71
    %s93 = sphi 0, %s95
    %s96 = sphi 0, %s93
    %s97 = sphi 0, %s96
    %s113 = sphi 0, %s97
  $region4: #{bottleneck_forward.4} parent=0 // loop_header_branch
    %13 = sbr.rel (%p11) target = $region8
  $region5: #{bottleneck_forward.4} parent=0 // loop_body
    %s15 = ssub.s32 %s10, 1
    %s16 = ssub.s32 %s10, 2
    %s17 = sadd.s32 %s10, 1
    %s18 = ssub.s32 %s10, %s17
    %p19 = scmp.eq.s32.totalorder %s18, 0
    %s21 = sadd.s32 %s20, 1
    %s22 = scalar_select %p19, %s20, %s21
    %p25 = pneg %p19
    %p26 = scmp.eq.s32.totalorder %s10, 1
    %p27 = por %p25, %p26
    %p28 = scmp.ne.s32.totalorder %s20, %s23
    %p29 = scmp.eq.s32.totalorder %s10, 0
    %p30 = por %p28, %p29
    %p31 = scmp.ne.s32.totalorder %s20, %s23
    %p32 = scmp.eq.s32.totalorder %s15, 1
    %p33 = por %p31, %p32
    %p34 = scmp.ne.s32.totalorder %s23, %s24
    %p35 = scmp.eq.s32.totalorder %s15, 0
    %p36 = por %p34, %p35
    %p37 = scmp.ne.s32.totalorder %s23, %s24
    %p38 = scmp.eq.s32.totalorder %s16, 1
    %p39 = por %p37, %p38
    %p41 = scmp.ne.s32.totalorder %s24, %s40
    %p42 = scmp.eq.s32.totalorder %s16, 0
    %p43 = por %p41, %p42
    %s45 = sadd.s32 %s44, 1
    %p48 = scmp.eq.s32.totalorder %s10, 1
    %p49 = scmp.ne.s32.totalorder %s44, %s46
    %p50 = scmp.eq.s32.totalorder %s10, 0
    %p51 = por %p49, %p50
    %p52 = scmp.ne.s32.totalorder %s44, %s46
    %p53 = scmp.eq.s32.totalorder %s15, 1
    %p54 = por %p52, %p53
    %p55 = scmp.ne.s32.totalorder %s46, %s47
    %p56 = scmp.eq.s32.totalorder %s15, 0
    %p57 = por %p55, %p56
    %p58 = scmp.ne.s32.totalorder %s46, %s47
    %p59 = scmp.eq.s32.totalorder %s16, 1
    %p60 = por %p58, %p59
    %p62 = scmp.ne.s32.totalorder %s47, %s61
    %p63 = scmp.eq.s32.totalorder %s16, 0
    %p64 = por %p62, %p63
    %s65 = ssub.s32 %s10, %s17
    %p66 = scmp.eq.s32.totalorder %s65, 0
    %s68 = sadd.s32 %s67, 1
    %s69 = scalar_select %p66, %s67, %s68
    %p72 = pneg %p66
    %p73 = scmp.eq.s32.totalorder %s10, 1
    %p74 = por %p72, %p73
    %p75 = scmp.ne.s32.totalorder %s67, %s70
    %p76 = scmp.eq.s32.totalorder %s10, 0
    %p77 = por %p75, %p76
    %p78 = scmp.ne.s32.totalorder %s67, %s70
    %p79 = scmp.eq.s32.totalorder %s15, 1
    %p80 = por %p78, %p79
    %p81 = scmp.ne.s32.totalorder %s70, %s71
    %p82 = scmp.eq.s32.totalorder %s15, 0
    %p83 = por %p81, %p82
    %p84 = scmp.ne.s32.totalorder %s70, %s71
    %p85 = scmp.eq.s32.totalorder %s16, 1
    %p86 = por %p84, %p85
    %p88 = scmp.ne.s32.totalorder %s71, %s87
    %p89 = scmp.eq.s32.totalorder %s16, 0
    %p90 = por %p88, %p89
    %s91 = ssub.s32 %s10, %s17
    %p92 = scmp.eq.s32.totalorder %s91, 0
    %s94 = sadd.s32 %s93, 1
    %s95 = scalar_select %p92, %s93, %s94
    %p98 = pneg %p92
    %p99 = scmp.eq.s32.totalorder %s10, 1
    %p100 = por %p98, %p99
    %p101 = scmp.ne.s32.totalorder %s93, %s96
    %p102 = scmp.eq.s32.totalorder %s10, 0
    %p103 = por %p101, %p102
    %p104 = scmp.ne.s32.totalorder %s93, %s96
    %p105 = scmp.eq.s32.totalorder %s15, 1
    %p106 = por %p104, %p105
    %p107 = scmp.ne.s32.totalorder %s96, %s97
    %p108 = scmp.eq.s32.totalorder %s15, 0
    %p109 = por %p107, %p108
    %p110 = scmp.ne.s32.totalorder %s96, %s97
    %p111 = scmp.eq.s32.totalorder %s16, 1
    %p112 = por %p110, %p111
    %p114 = scmp.ne.s32.totalorder %s97, %s113
    %p115 = scmp.eq.s32.totalorder %s16, 0
    %p116 = por %p114, %p115
    %p117 = scmp.le.s32.totalorder 1, %s10
    %p118 = scmp.lt.s32.totalorder %s10, 3
    %p119 = pnand %p117, %p118
    %p120 = pneg %p119
    // Predicated region
    $region9: #{bottleneck_forward.4} parent=5 // pred_check
      _
    $region10: #{bottleneck_forward.4} parent=5 // pred_check_branch
      %122 = sbr.rel (%p119) target = $region12
    $region11: #{bottleneck_forward.4} parent=5 // pred_region
      %s123 = ssub.s32 %s10, 1
      // Predicated region
      $region13: #{bottleneck_forward.4} parent=11 // pred_check
        %p124 = pneg %p57
      $region14: #{bottleneck_forward.4} parent=11 // pred_check_branch
        %126 = sbr.rel (%p124) target = $region16
      $region15: #{bottleneck_forward.4} parent=11 // pred_region
        _
      $region16: #{bottleneck_forward.4} parent=11 // pred_fallthru
        _
    $region12: #{bottleneck_forward.4} parent=5 // pred_fallthru
      _
    %p127 = scmp.lt.s32.totalorder %s10, 2
    // Predicated region
    $region17: #{bottleneck_forward.4} parent=5 // pred_check
      %p128 = pneg %p127
    $region18: #{bottleneck_forward.4} parent=5 // pred_check_branch
      %130 = sbr.rel (%p128) target = $region20
    $region19: #{bottleneck_forward.4} parent=5 // pred_region
      // Predicated region
      $region21: #{bottleneck_forward.4} parent=19 // pred_check
        %p131 = pneg %p30
      $region22: #{bottleneck_forward.4} parent=19 // pred_check_branch
        %133 = sbr.rel (%p131) target = $region24
      $region23: #{bottleneck_forward.4} parent=19 // pred_region
        %s134 = smul.u32 32, %s10
        %p135 = scmp.lt.s32.totalorder %s134, 63
        %s136 = scalar_select %p135, %s134, 63
        %s137 = smul.addr %s136, 2
        %s138 = smul.addr %s137, 8
        %s139 = scalar_lea.vmem %s0, %s138
        %s140 = smul.u32 32, %s10
      $region24: #{bottleneck_forward.4} parent=19 // pred_fallthru
        _
    $region20: #{bottleneck_forward.4} parent=5 // pred_fallthru
      _
    %p141 = scmp.le.s32.totalorder 1, %s10
    %p142 = scmp.lt.s32.totalorder %s10, 3
    %p143 = pnand %p141, %p142
    %p144 = pneg %p143
    // Predicated region
    $region25: #{bottleneck_forward.4} parent=5 // pred_check
      _
    $region26: #{bottleneck_forward.4} parent=5 // pred_check_branch
      %146 = sbr.rel (%p143) target = $region28
    $region27: #{bottleneck_forward.4} parent=5 // pred_region
      %s147 = ssub.s32 %s10, 1
      %s148 = smul.u32 32, %s15
      %p149 = scmp.lt.s32.totalorder %s148, 63
      %s150 = scalar_select %p149, %s148, 63
      %s151 = smul.addr %s150, 2
      %s152 = smul.addr %s151, 8
      %s153 = scalar_lea.vmem %s0, %s152
      %p154 = pneg %p36
      %p155 = pneg %p33
      %p156 = pneg %p57
      %p157 = pneg %p54
      %p158 = pneg %p83
      %p159 = pneg %p80
      %s160 = smul.u32 32, %s15
      %p161 = scmp.lt.s32.totalorder %s160, 63
      %s162 = scalar_select %p161, %s160, 63
      %s163 = smul.addr %s162, 8
      %s164 = scalar_lea.vmem %s2, %s163
      %p165 = pneg %p109
      %p166 = pneg %p106
      %p167 = scmp.lt.s32.totalorder %s15, 1
      %s168 = scalar_select %p167, %s15, 1
      %s169 = smul.addr %s168, 2
      %s170 = scalar_lea.vmem %s3, %s169
      %s171 = smul.u32 32, %s15
      %p172 = scmp.lt.s32.totalorder %s171, 63
      %s173 = scalar_select %p172, %s171, 63
      %s174 = smul.addr %s173, 2
      %s175 = smul.addr %s174, 8
      %s176 = scalar_lea.vmem %s0, %s175
      %s177 = smul.u32 32, %s15
      %s178 = smul.u32 32, %s15
      %p179 = scmp.lt.s32.totalorder %s178, 63
      %s180 = scalar_select %p179, %s178, 63
      %s181 = smul.addr %s180, 8
      %s182 = scalar_lea.vmem %s2, %s181
      %s183 = smul.u32 32, %s15
      %p184 = scmp.lt.s32.totalorder %s15, 1
      %s185 = scalar_select %p184, %s15, 1
      %s186 = smul.addr %s185, 2
      %s187 = scalar_lea.vmem %s3, %s186
      %v188 = vld [vmem:[%s176] sm:$0xff]
      %v189 = vld [vmem:[%s176 + $0x8] sm:$0xff]
      %v190 = vld [vmem:[%s176 + $0x10] sm:$0xff]
      %v191 = vld [vmem:[%s176 + $0x18] sm:$0xff]
      %v192 = vld [vmem:[%s176 + $0x20] sm:$0xff]
      %v193 = vld [vmem:[%s176 + $0x28] sm:$0xff]
      %v194 = vld [vmem:[%s176 + $0x30] sm:$0xff]
      %v195 = vld [vmem:[%s176 + $0x38] sm:$0xff]
      %v196 = vld [vmem:[%s176 + $0x40] sm:$0xff]
      %v197 = vld [vmem:[%s176 + $0x48] sm:$0xff]
      %v198 = vld [vmem:[%s176 + $0x50] sm:$0xff]
      %v199 = vld [vmem:[%s176 + $0x58] sm:$0xff]
      %v200 = vld [vmem:[%s176 + $0x60] sm:$0xff]
      %v201 = vld [vmem:[%s176 + $0x68] sm:$0xff]
      %v202 = vld [vmem:[%s176 + $0x70] sm:$0xff]
      %v203 = vld [vmem:[%s176 + $0x78] sm:$0xff]
      %v204 = vld [vmem:[%s176 + $0x80] sm:$0xff]
      %v205 = vld [vmem:[%s176 + $0x88] sm:$0xff]
      %v206 = vld [vmem:[%s176 + $0x90] sm:$0xff]
      %v207 = vld [vmem:[%s176 + $0x98] sm:$0xff]
      %v208 = vld [vmem:[%s176 + $0xa0] sm:$0xff]
      %v209 = vld [vmem:[%s176 + $0xa8] sm:$0xff]
      %v210 = vld [vmem:[%s176 + $0xb0] sm:$0xff]
      %v211 = vld [vmem:[%s176 + $0xb8] sm:$0xff]
      %v212 = vld [vmem:[%s176 + $0xc0] sm:$0xff]
      %v213 = vld [vmem:[%s176 + $0xc8] sm:$0xff]
      %v214 = vld [vmem:[%s176 + $0xd0] sm:$0xff]
      %v215 = vld [vmem:[%s176 + $0xd8] sm:$0xff]
      %v216 = vld [vmem:[%s176 + $0xe0] sm:$0xff]
      %v217 = vld [vmem:[%s176 + $0xe8] sm:$0xff]
      %v218 = vld [vmem:[%s176 + $0xf0] sm:$0xff]
      %v219 = vld [vmem:[%s176 + $0xf8] sm:$0xff]
      %v220 = vld [vmem:[%s176 + $0x100] sm:$0xff]
      %v221 = vld [vmem:[%s176 + $0x108] sm:$0xff]
      %v222 = vld [vmem:[%s176 + $0x110] sm:$0xff]
      %v223 = vld [vmem:[%s176 + $0x118] sm:$0xff]
      %v224 = vld [vmem:[%s176 + $0x120] sm:$0xff]
      %v225 = vld [vmem:[%s176 + $0x128] sm:$0xff]
      %v226 = vld [vmem:[%s176 + $0x130] sm:$0xff]
      %v227 = vld [vmem:[%s176 + $0x138] sm:$0xff]
      %v228 = vld [vmem:[%s176 + $0x140] sm:$0xff]
      %v229 = vld [vmem:[%s176 + $0x148] sm:$0xff]
      %v230 = vld [vmem:[%s176 + $0x150] sm:$0xff]
      %v231 = vld [vmem:[%s176 + $0x158] sm:$0xff]
      %v232 = vld [vmem:[%s176 + $0x160] sm:$0xff]
      %v233 = vld [vmem:[%s176 + $0x168] sm:$0xff]
      %v234 = vld [vmem:[%s176 + $0x170] sm:$0xff]
      %v235 = vld [vmem:[%s176 + $0x178] sm:$0xff]
      %v236 = vld [vmem:[%s176 + $0x180] sm:$0xff]
      %v237 = vld [vmem:[%s176 + $0x188] sm:$0xff]
      %v238 = vld [vmem:[%s176 + $0x190] sm:$0xff]
      %v239 = vld [vmem:[%s176 + $0x198] sm:$0xff]
      %v240 = vld [vmem:[%s176 + $0x1a0] sm:$0xff]
      %v241 = vld [vmem:[%s176 + $0x1a8] sm:$0xff]
      %v242 = vld [vmem:[%s176 + $0x1b0] sm:$0xff]
      %v243 = vld [vmem:[%s176 + $0x1b8] sm:$0xff]
      %v244 = vld [vmem:[%s176 + $0x1c0] sm:$0xff]
      %v245 = vld [vmem:[%s176 + $0x1c8] sm:$0xff]
      %v246 = vld [vmem:[%s176 + $0x1d0] sm:$0xff]
      %v247 = vld [vmem:[%s176 + $0x1d8] sm:$0xff]
      %v248 = vld [vmem:[%s176 + $0x1e0] sm:$0xff]
      %v249 = vld [vmem:[%s176 + $0x1e8] sm:$0xff]
      %v250 = vld [vmem:[%s176 + $0x1f0] sm:$0xff]
      %v251 = vld [vmem:[%s176 + $0x1f8] sm:$0xff]
      %v252 = vld [vmem:[%s1] sm:$0xff]
      %v253 = vld [vmem:[%s1 + $0x8] sm:$0xff]
      %v254 = vld [vmem:[%s1 + $0x10] sm:$0xff]
      %v255 = vld [vmem:[%s1 + $0x18] sm:$0xff]
      %v256 = vld [vmem:[%s1 + $0x20] sm:$0xff]
      %v257 = vld [vmem:[%s1 + $0x28] sm:$0xff]
      %v258 = vld [vmem:[%s1 + $0x30] sm:$0xff]
      %v259 = vld [vmem:[%s1 + $0x38] sm:$0xff]
      %v260 = vld [vmem:[%s1 + $0x40] sm:$0xff]
      %v261 = vld [vmem:[%s1 + $0x48] sm:$0xff]
      %v262 = vld [vmem:[%s1 + $0x50] sm:$0xff]
      %v263 = vld [vmem:[%s1 + $0x58] sm:$0xff]
      %v264 = vld [vmem:[%s1 + $0x60] sm:$0xff]
      %v265 = vld [vmem:[%s1 + $0x68] sm:$0xff]
      %v266 = vld [vmem:[%s1 + $0x70] sm:$0xff]
      %v267 = vld [vmem:[%s1 + $0x78] sm:$0xff]
      %v268 = vld [vmem:[%s1 + $0x80] sm:$0xff]
      %v269 = vld [vmem:[%s1 + $0x88] sm:$0xff]
      %v270 = vld [vmem:[%s1 + $0x90] sm:$0xff]
      %v271 = vld [vmem:[%s1 + $0x98] sm:$0xff]
      %v272 = vld [vmem:[%s1 + $0xa0] sm:$0xff]
      %v273 = vld [vmem:[%s1 + $0xa8] sm:$0xff]
      %v274 = vld [vmem:[%s1 + $0xb0] sm:$0xff]
      %v275 = vld [vmem:[%s1 + $0xb8] sm:$0xff]
      %v276 = vld [vmem:[%s1 + $0xc0] sm:$0xff]
      %v277 = vld [vmem:[%s1 + $0xc8] sm:$0xff]
      %v278 = vld [vmem:[%s1 + $0xd0] sm:$0xff]
      %v279 = vld [vmem:[%s1 + $0xd8] sm:$0xff]
      %v280 = vld [vmem:[%s1 + $0xe0] sm:$0xff]
      %v281 = vld [vmem:[%s1 + $0xe8] sm:$0xff]
      %v282 = vld [vmem:[%s1 + $0xf0] sm:$0xff]
      %v283 = vld [vmem:[%s1 + $0xf8] sm:$0xff]
      %284 = vmatprep.subr.mxu0 0.0
      %285 = vmatpush1.msra.mxu0 %v267
      %286 = vmatprep.subr.mxu0 0.0
      %287 = vmatpush1.msra.mxu0 %v266
      %288 = vmatprep.subr.mxu0 0.0
      %289 = vmatpush1.msra.mxu0 %v265
      %290 = vmatprep.subr.mxu0 0.0
      %291 = vmatpush1.msra.mxu0 %v264
      %292 = vmatprep.subr.mxu0 0.0
      %293 = vmatpush1.msra.mxu0 %v263
      %294 = vmatprep.subr.mxu0 0.0
      %295 = vmatpush1.msra.mxu0 %v262
      %296 = vmatprep.subr.mxu0 0.0
      %297 = vmatpush1.msra.mxu0 %v261
      %298 = vmatprep.subr.mxu0 0.0
      %299 = vmatpush1.msra.mxu0 %v260
      %300 = vmatprep.subr.mxu0 0.0
      %301 = vmatpush1.msra.mxu0 %v259
      %302 = vmatprep.subr.mxu0 0.0
      %303 = vmatpush1.msra.mxu0 %v258
      %304 = vmatprep.subr.mxu0 0.0
      %305 = vmatpush1.msra.mxu0 %v257
      %306 = vmatprep.subr.mxu0 0.0
      %307 = vmatpush1.msra.mxu0 %v256
      %308 = vmatprep.subr.mxu0 0.0
      %309 = vmatpush1.msra.mxu0 %v255
      %310 = vmatprep.subr.mxu0 0.0
      %311 = vmatpush1.msra.mxu0 %v254
      %312 = vmatprep.subr.mxu0 0.0
      %313 = vmatpush1.msra.mxu0 %v253
      %314 = vmatprep.subr.mxu0 0.0
      %315 = vmatpush1.msra.mxu0 %v252
      %316 = vmatprep.subr.mxu0 0.0
      %317 = vmatpush2.msra.mxu0 %v283
      %318 = vmatprep.subr.mxu0 0.0
      %319 = vmatpush2.msra.mxu0 %v282
      %320 = vmatprep.subr.mxu0 0.0
      %321 = vmatpush2.msra.mxu0 %v281
      %322 = vmatprep.subr.mxu0 0.0
      %323 = vmatpush2.msra.mxu0 %v280
      %324 = vmatprep.subr.mxu0 0.0
      %325 = vmatpush2.msra.mxu0 %v279
      %326 = vmatprep.subr.mxu0 0.0
      %327 = vmatpush2.msra.mxu0 %v278
      %328 = vmatprep.subr.mxu0 0.0
      %329 = vmatpush2.msra.mxu0 %v277
      %330 = vmatprep.subr.mxu0 0.0
      %331 = vmatpush2.msra.mxu0 %v276
      %332 = vmatprep.subr.mxu0 0.0
      %333 = vmatpush2.msra.mxu0 %v275
      %334 = vmatprep.subr.mxu0 0.0
      %335 = vmatpush2.msra.mxu0 %v274
      %336 = vmatprep.subr.mxu0 0.0
      %337 = vmatpush2.msra.mxu0 %v273
      %338 = vmatprep.subr.mxu0 0.0
      %339 = vmatpush2.msra.mxu0 %v272
      %340 = vmatprep.subr.mxu0 0.0
      %341 = vmatpush2.msra.mxu0 %v271
      %342 = vmatprep.subr.mxu0 0.0
      %343 = vmatpush2.msra.mxu0 %v270
      %344 = vmatprep.subr.mxu0 0.0
      %345 = vmatpush2.msra.mxu0 %v269
      %346 = vmatprep.subr.mxu0 0.0
      %347 = vmatpush2.msra.mxu0 %v268
      %348 = vmatprep.mubr.f32.mxu0 %v189
      %349 = vmatmul.mubr.f32.gmra.mxu0 %v188
      %v350 = vpop.f32.mrf.mxu0
      %v351 = vadd.f32 0.0, %v350
      %v352 = vpop.f32.mrf.mxu0
      %353 = vmatprep.mubr.f32.mxu0 %v191
      %354 = vmatmul.mubr.f32.gmra.mxu0 %v190
      %v355 = vpop.f32.mrf.mxu0
      %v356 = vadd.f32 0.0, %v355
      %v357 = vpop.f32.mrf.mxu0
      %358 = vmatprep.mubr.f32.mxu0 %v193
      %359 = vmatmul.mubr.f32.gmra.mxu0 %v192
      %v360 = vpop.f32.mrf.mxu0
      %v361 = vadd.f32 0.0, %v360
      %v362 = vpop.f32.mrf.mxu0
      %363 = vmatprep.mubr.f32.mxu0 %v195
      %364 = vmatmul.mubr.f32.gmra.mxu0 %v194
      %v365 = vpop.f32.mrf.mxu0
      %v366 = vadd.f32 0.0, %v365
      %v367 = vpop.f32.mrf.mxu0
      %368 = vmatprep.mubr.f32.mxu0 %v197
      %369 = vmatmul.mubr.f32.gmra.mxu0 %v196
      %v370 = vpop.f32.mrf.mxu0
      %v371 = vadd.f32 0.0, %v370
      %v372 = vpop.f32.mrf.mxu0
      %373 = vmatprep.mubr.f32.mxu0 %v199
      %374 = vmatmul.mubr.f32.gmra.mxu0 %v198
      %v375 = vpop.f32.mrf.mxu0
      %v376 = vadd.f32 0.0, %v375
      %v377 = vpop.f32.mrf.mxu0
      %378 = vmatprep.mubr.f32.mxu0 %v201
      %379 = vmatmul.mubr.f32.gmra.mxu0 %v200
      %v380 = vpop.f32.mrf.mxu0
      %v381 = vadd.f32 0.0, %v380
      %v382 = vpop.f32.mrf.mxu0
      %383 = vmatprep.mubr.f32.mxu0 %v203
      %384 = vmatmul.mubr.f32.gmra.mxu0 %v202
      %v385 = vpop.f32.mrf.mxu0
      %v386 = vadd.f32 0.0, %v385
      %v387 = vpop.f32.mrf.mxu0
      %388 = vmatprep.mubr.f32.mxu0 %v205
      %389 = vmatmul.mubr.f32.gmra.mxu0 %v204
      %v390 = vpop.f32.mrf.mxu0
      %v391 = vadd.f32 0.0, %v390
      %v392 = vpop.f32.mrf.mxu0
      %393 = vmatprep.mubr.f32.mxu0 %v207
      %394 = vmatmul.mubr.f32.gmra.mxu0 %v206
      %v395 = vpop.f32.mrf.mxu0
      %v396 = vadd.f32 0.0, %v395
      %v397 = vpop.f32.mrf.mxu0
      %398 = vmatprep.mubr.f32.mxu0 %v209
      %399 = vmatmul.mubr.f32.gmra.mxu0 %v208
      %v400 = vpop.f32.mrf.mxu0
      %v401 = vadd.f32 0.0, %v400
      %v402 = vpop.f32.mrf.mxu0
      %403 = vmatprep.mubr.f32.mxu0 %v211
      %404 = vmatmul.mubr.f32.gmra.mxu0 %v210
      %v405 = vpop.f32.mrf.mxu0
      %v406 = vadd.f32 0.0, %v405
      %v407 = vpop.f32.mrf.mxu0
      %408 = vmatprep.mubr.f32.mxu0 %v213
      %409 = vmatmul.mubr.f32.gmra.mxu0 %v212
      %v410 = vpop.f32.mrf.mxu0
      %v411 = vadd.f32 0.0, %v410
      %v412 = vpop.f32.mrf.mxu0
      %413 = vmatprep.mubr.f32.mxu0 %v215
      %414 = vmatmul.mubr.f32.gmra.mxu0 %v214
      %v415 = vpop.f32.mrf.mxu0
      %v416 = vadd.f32 0.0, %v415
      %v417 = vpop.f32.mrf.mxu0
      %418 = vmatprep.mubr.f32.mxu0 %v217
      %419 = vmatmul.mubr.f32.gmra.mxu0 %v216
      %v420 = vpop.f32.mrf.mxu0
      %v421 = vadd.f32 0.0, %v420
      %v422 = vpop.f32.mrf.mxu0
      %423 = vmatprep.mubr.f32.mxu0 %v219
      %424 = vmatmul.mubr.f32.gmra.mxu0 %v218
      %v425 = vpop.f32.mrf.mxu0
      %v426 = vadd.f32 0.0, %v425
      %v427 = vpop.f32.mrf.mxu0
      %428 = vmatprep.mubr.f32.mxu0 %v221
      %429 = vmatmul.mubr.f32.gmra.mxu0 %v220
      %v430 = vpop.f32.mrf.mxu0
      %v431 = vadd.f32 0.0, %v430
      %v432 = vpop.f32.mrf.mxu0
      %433 = vmatprep.mubr.f32.mxu0 %v223
      %434 = vmatmul.mubr.f32.gmra.mxu0 %v222
      %v435 = vpop.f32.mrf.mxu0
      %v436 = vadd.f32 0.0, %v435
      %v437 = vpop.f32.mrf.mxu0
      %438 = vmatprep.mubr.f32.mxu0 %v225
      %439 = vmatmul.mubr.f32.gmra.mxu0 %v224
      %v440 = vpop.f32.mrf.mxu0
      %v441 = vadd.f32 0.0, %v440
      %v442 = vpop.f32.mrf.mxu0
      %443 = vmatprep.mubr.f32.mxu0 %v227
      %444 = vmatmul.mubr.f32.gmra.mxu0 %v226
      %v445 = vpop.f32.mrf.mxu0
      %v446 = vadd.f32 0.0, %v445
      %v447 = vpop.f32.mrf.mxu0
      %448 = vmatprep.mubr.f32.mxu0 %v229
      %449 = vmatmul.mubr.f32.gmra.mxu0 %v228
      %v450 = vpop.f32.mrf.mxu0
      %v451 = vadd.f32 0.0, %v450
      %v452 = vpop.f32.mrf.mxu0
      %453 = vmatprep.mubr.f32.mxu0 %v231
      %454 = vmatmul.mubr.f32.gmra.mxu0 %v230
      %v455 = vpop.f32.mrf.mxu0
      %v456 = vadd.f32 0.0, %v455
      %v457 = vpop.f32.mrf.mxu0
      %458 = vmatprep.mubr.f32.mxu0 %v233
      %459 = vmatmul.mubr.f32.gmra.mxu0 %v232
      %v460 = vpop.f32.mrf.mxu0
      %v461 = vadd.f32 0.0, %v460
      %v462 = vpop.f32.mrf.mxu0
      %463 = vmatprep.mubr.f32.mxu0 %v235
      %464 = vmatmul.mubr.f32.gmra.mxu0 %v234
      %v465 = vpop.f32.mrf.mxu0
      %v466 = vadd.f32 0.0, %v465
      %v467 = vpop.f32.mrf.mxu0
      %468 = vmatprep.mubr.f32.mxu0 %v237
      %469 = vmatmul.mubr.f32.gmra.mxu0 %v236
      %v470 = vpop.f32.mrf.mxu0
      %v471 = vadd.f32 0.0, %v470
      %v472 = vpop.f32.mrf.mxu0
      %473 = vmatprep.mubr.f32.mxu0 %v239
      %474 = vmatmul.mubr.f32.gmra.mxu0 %v238
      %v475 = vpop.f32.mrf.mxu0
      %v476 = vadd.f32 0.0, %v475
      %v477 = vpop.f32.mrf.mxu0
      %478 = vmatprep.mubr.f32.mxu0 %v241
      %479 = vmatmul.mubr.f32.gmra.mxu0 %v240
      %v480 = vpop.f32.mrf.mxu0
      %v481 = vadd.f32 0.0, %v480
      %v482 = vpop.f32.mrf.mxu0
      %483 = vmatprep.mubr.f32.mxu0 %v243
      %484 = vmatmul.mubr.f32.gmra.mxu0 %v242
      %v485 = vpop.f32.mrf.mxu0
      %v486 = vadd.f32 0.0, %v485
      %v487 = vpop.f32.mrf.mxu0
      %488 = vmatprep.mubr.f32.mxu0 %v245
      %489 = vmatmul.mubr.f32.gmra.mxu0 %v244
      %v490 = vpop.f32.mrf.mxu0
      %v491 = vadd.f32 0.0, %v490
      %v492 = vpop.f32.mrf.mxu0
      %493 = vmatprep.mubr.f32.mxu0 %v247
      %494 = vmatmul.mubr.f32.gmra.mxu0 %v246
      %v495 = vpop.f32.mrf.mxu0
      %v496 = vadd.f32 0.0, %v495
      %v497 = vpop.f32.mrf.mxu0
      %498 = vmatprep.mubr.f32.mxu0 %v249
      %499 = vmatmul.mubr.f32.gmra.mxu0 %v248
      %v500 = vpop.f32.mrf.mxu0
      %v501 = vadd.f32 0.0, %v500
      %v502 = vpop.f32.mrf.mxu0
      %503 = vmatprep.mubr.f32.mxu0 %v251
      %504 = vmatmul.mubr.f32.gmra.mxu0 %v250
      %v505 = vpop.f32.mrf.mxu0
      %v506 = vadd.f32 0.0, %v505
      %v507 = vpop.f32.mrf.mxu0
      %508 = vdwg.mxu0
      %509 = vst [vmem:[%s182] sm:$0xff] %v351
      %510 = vst [vmem:[%s182 + $0x8] sm:$0xff] %v356
      %511 = vst [vmem:[%s182 + $0x10] sm:$0xff] %v361
      %512 = vst [vmem:[%s182 + $0x18] sm:$0xff] %v366
      %513 = vst [vmem:[%s182 + $0x20] sm:$0xff] %v371
      %514 = vst [vmem:[%s182 + $0x28] sm:$0xff] %v376
      %515 = vst [vmem:[%s182 + $0x30] sm:$0xff] %v381
      %516 = vst [vmem:[%s182 + $0x38] sm:$0xff] %v386
      %517 = vst [vmem:[%s182 + $0x40] sm:$0xff] %v391
      %518 = vst [vmem:[%s182 + $0x48] sm:$0xff] %v396
      %519 = vst [vmem:[%s182 + $0x50] sm:$0xff] %v401
      %520 = vst [vmem:[%s182 + $0x58] sm:$0xff] %v406
      %521 = vst [vmem:[%s182 + $0x60] sm:$0xff] %v411
      %522 = vst [vmem:[%s182 + $0x68] sm:$0xff] %v416
      %523 = vst [vmem:[%s182 + $0x70] sm:$0xff] %v421
      %524 = vst [vmem:[%s182 + $0x78] sm:$0xff] %v426
      %525 = vst [vmem:[%s182 + $0x80] sm:$0xff] %v431
      %526 = vst [vmem:[%s182 + $0x88] sm:$0xff] %v436
      %527 = vst [vmem:[%s182 + $0x90] sm:$0xff] %v441
      %528 = vst [vmem:[%s182 + $0x98] sm:$0xff] %v446
      %529 = vst [vmem:[%s182 + $0xa0] sm:$0xff] %v451
      %530 = vst [vmem:[%s182 + $0xa8] sm:$0xff] %v456
      %531 = vst [vmem:[%s182 + $0xb0] sm:$0xff] %v461
      %532 = vst [vmem:[%s182 + $0xb8] sm:$0xff] %v466
      %533 = vst [vmem:[%s182 + $0xc0] sm:$0xff] %v471
      %534 = vst [vmem:[%s182 + $0xc8] sm:$0xff] %v476
      %535 = vst [vmem:[%s182 + $0xd0] sm:$0xff] %v481
      %536 = vst [vmem:[%s182 + $0xd8] sm:$0xff] %v486
      %537 = vst [vmem:[%s182 + $0xe0] sm:$0xff] %v491
      %538 = vst [vmem:[%s182 + $0xe8] sm:$0xff] %v496
      %539 = vst [vmem:[%s182 + $0xf0] sm:$0xff] %v501
      %540 = vst [vmem:[%s182 + $0xf8] sm:$0xff] %v506
      %v541 = vadd.f32 %v351, %v356
      %v542 = vadd.f32 %v541, %v361
      %v543 = vadd.f32 %v542, %v366
      %v544 = vadd.f32 %v543, %v371
      %v545 = vadd.f32 %v544, %v376
      %v546 = vadd.f32 %v545, %v381
      %v547 = vadd.f32 %v546, %v386
      %v548 = vadd.f32 %v547, %v391
      %v549 = vadd.f32 %v548, %v396
      %v550 = vadd.f32 %v549, %v401
      %v551 = vadd.f32 %v550, %v406
      %v552 = vadd.f32 %v551, %v411
      %v553 = vadd.f32 %v552, %v416
      %v554 = vadd.f32 %v553, %v421
      %v555 = vadd.f32 %v554, %v426
      %v556 = vadd.f32 %v555, %v431
      %v557 = vadd.f32 %v556, %v436
      %v558 = vadd.f32 %v557, %v441
      %v559 = vadd.f32 %v558, %v446
      %v560 = vadd.f32 %v559, %v451
      %v561 = vadd.f32 %v560, %v456
      %v562 = vadd.f32 %v561, %v461
      %v563 = vadd.f32 %v562, %v466
      %v564 = vadd.f32 %v563, %v471
      %v565 = vadd.f32 %v564, %v476
      %v566 = vadd.f32 %v565, %v481
      %v567 = vadd.f32 %v566, %v486
      %v568 = vadd.f32 %v567, %v491
      %v569 = vadd.f32 %v568, %v496
      %v570 = vadd.f32 %v569, %v501
      %v571 = vadd.f32 %v570, %v506
      %v572 = vrot.slane %v571, 4
      %v573 = vadd.f32 %v571, %v572
      %v574 = vrot.slane %v573, 2
      %v575 = vadd.f32 %v573, %v574
      %v576 = vrot.slane %v575, 1
      %v577 = vadd.f32 %v575, %v576
      %578 = vst [vmem:[%s187] sm:$0x1] %v577
      %v579 = vmul.f32 %v351, %v351
      %v580 = vmul.f32 %v356, %v356
      %v581 = vmul.f32 %v361, %v361
      %v582 = vmul.f32 %v366, %v366
      %v583 = vmul.f32 %v371, %v371
      %v584 = vmul.f32 %v376, %v376
      %v585 = vmul.f32 %v381, %v381
      %v586 = vmul.f32 %v386, %v386
      %v587 = vmul.f32 %v391, %v391
      %v588 = vmul.f32 %v396, %v396
      %v589 = vmul.f32 %v401, %v401
      %v590 = vmul.f32 %v406, %v406
      %v591 = vmul.f32 %v411, %v411
      %v592 = vmul.f32 %v416, %v416
      %v593 = vmul.f32 %v421, %v421
      %v594 = vmul.f32 %v426, %v426
      %v595 = vmul.f32 %v431, %v431
      %v596 = vmul.f32 %v436, %v436
      %v597 = vmul.f32 %v441, %v441
      %v598 = vmul.f32 %v446, %v446
      %v599 = vmul.f32 %v451, %v451
      %v600 = vmul.f32 %v456, %v456
      %v601 = vmul.f32 %v461, %v461
      %v602 = vmul.f32 %v466, %v466
      %v603 = vmul.f32 %v471, %v471
      %v604 = vmul.f32 %v476, %v476
      %v605 = vmul.f32 %v481, %v481
      %v606 = vmul.f32 %v486, %v486
      %v607 = vmul.f32 %v491, %v491
      %v608 = vmul.f32 %v496, %v496
      %v609 = vmul.f32 %v501, %v501
      %v610 = vmul.f32 %v506, %v506
      %v611 = vadd.f32 %v579, %v580
      %v612 = vadd.f32 %v611, %v581
      %v613 = vadd.f32 %v612, %v582
      %v614 = vadd.f32 %v613, %v583
      %v615 = vadd.f32 %v614, %v584
      %v616 = vadd.f32 %v615, %v585
      %v617 = vadd.f32 %v616, %v586
      %v618 = vadd.f32 %v617, %v587
      %v619 = vadd.f32 %v618, %v588
      %v620 = vadd.f32 %v619, %v589
      %v621 = vadd.f32 %v620, %v590
      %v622 = vadd.f32 %v621, %v591
      %v623 = vadd.f32 %v622, %v592
      %v624 = vadd.f32 %v623, %v593
      %v625 = vadd.f32 %v624, %v594
      %v626 = vadd.f32 %v625, %v595
      %v627 = vadd.f32 %v626, %v596
      %v628 = vadd.f32 %v627, %v597
      %v629 = vadd.f32 %v628, %v598
      %v630 = vadd.f32 %v629, %v599
      %v631 = vadd.f32 %v630, %v600
      %v632 = vadd.f32 %v631, %v601
      %v633 = vadd.f32 %v632, %v602
      %v634 = vadd.f32 %v633, %v603
      %v635 = vadd.f32 %v634, %v604
      %v636 = vadd.f32 %v635, %v605
      %v637 = vadd.f32 %v636, %v606
      %v638 = vadd.f32 %v637, %v607
      %v639 = vadd.f32 %v638, %v608
      %v640 = vadd.f32 %v639, %v609
      %v641 = vadd.f32 %v640, %v610
      %v642 = vrot.slane %v641, 4
      %v643 = vadd.f32 %v641, %v642
      %v644 = vrot.slane %v643, 2
      %v645 = vadd.f32 %v643, %v644
      %v646 = vrot.slane %v645, 1
      %v647 = vadd.f32 %v645, %v646
      %648 = vst [vmem:[%s187 + $0x1] sm:$0x1] %v647
      %s649 = smul.u32 32, %s15
      %p650 = scmp.lt.s32.totalorder %s649, 63
      %s651 = scalar_select %p650, %s649, 63
      %s652 = smul.addr %s651, 8
      %s653 = scalar_lea.vmem %s2, %s652
      %p654 = scmp.lt.s32.totalorder %s15, 1
      %s655 = scalar_select %p654, %s15, 1
      %s656 = smul.addr %s655, 2
      %s657 = scalar_lea.vmem %s3, %s656
      // Predicated region
      $region29: #{bottleneck_forward.4} parent=27 // pred_check
        %p658 = pneg %p80
      $region30: #{bottleneck_forward.4} parent=27 // pred_check_branch
        %660 = sbr.rel (%p658) target = $region32
      $region31: #{bottleneck_forward.4} parent=27 // pred_region
        %s661 = smul.u32 32, %s15
      $region32: #{bottleneck_forward.4} parent=27 // pred_fallthru
        _
      // Predicated region
      $region33: #{bottleneck_forward.4} parent=27 // pred_check
        %p662 = pneg %p106
      $region34: #{bottleneck_forward.4} parent=27 // pred_check_branch
        %664 = sbr.rel (%p662) target = $region36
      $region35: #{bottleneck_forward.4} parent=27 // pred_region
        _
      $region36: #{bottleneck_forward.4} parent=27 // pred_fallthru
        _
    $region28: #{bottleneck_forward.4} parent=5 // pred_fallthru
      _
    %p665 = scmp.le.s32.totalorder 2, %s10
    // Predicated region
    $region37: #{bottleneck_forward.4} parent=5 // pred_check
      %p666 = pneg %p665
    $region38: #{bottleneck_forward.4} parent=5 // pred_check_branch
      %668 = sbr.rel (%p666) target = $region40
    $region39: #{bottleneck_forward.4} parent=5 // pred_region
      %s669 = ssub.s32 %s10, 2
      // Predicated region
      $region41: #{bottleneck_forward.4} parent=39 // pred_check
        %p670 = pneg %p86
      $region42: #{bottleneck_forward.4} parent=39 // pred_check_branch
        %672 = sbr.rel (%p670) target = $region44
      $region43: #{bottleneck_forward.4} parent=39 // pred_region
        %s673 = smul.u32 32, %s16
        %p674 = scmp.lt.s32.totalorder %s673, 63
        %s675 = scalar_select %p674, %s673, 63
        %s676 = smul.addr %s675, 8
        %s677 = scalar_lea.vmem %s2, %s676
      $region44: #{bottleneck_forward.4} parent=39 // pred_fallthru
        _
      // Predicated region
      $region45: #{bottleneck_forward.4} parent=39 // pred_check
        %p678 = pneg %p112
      $region46: #{bottleneck_forward.4} parent=39 // pred_check_branch
        %680 = sbr.rel (%p678) target = $region48
      $region47: #{bottleneck_forward.4} parent=39 // pred_region
        %p681 = scmp.lt.s32.totalorder %s16, 1
        %s682 = scalar_select %p681, %s16, 1
        %s683 = smul.addr %s682, 2
        %s684 = scalar_lea.vmem %s3, %s683
      $region48: #{bottleneck_forward.4} parent=39 // pred_fallthru
        _
    $region40: #{bottleneck_forward.4} parent=5 // pred_fallthru
      _
  $region6: #{bottleneck_forward.4} parent=0 // loop_footer
    %s14 = sadd.s32 1, %s10
  $region7: #{bottleneck_forward.4} parent=0 // loop_footer_branch
    %9 = sbr.rel target = $region3
  $region8: #{bottleneck_forward.4} parent=0 // loop_exit
    _

// kernel: bottleneck_forward.6
$region0: #{bottleneck_forward.6}
  #allocation0 [shape = 'u32[]', space=smem, size = 0x4, offset = 0x4, fixed_abs, tag = 'smem constant byte address 0x4 - core index']
  #allocation1 [shape = 'u32[144,128]{1,0:T(1,128)}', space=vmem, size = 0x12000, scoped, tag = 'internal scratch']
  %s0 = inlined_call_operand.vmem [shape: f32[512,128], index: 0, kind: input, shape index: {}]
  %s1 = inlined_call_operand.vmem [shape: f32[1,128], index: 1, kind: input, shape index: {}]
  %s2 = inlined_call_operand.vmem [shape: f32[1,128], index: 2, kind: input, shape index: {}]
  %s3 = inlined_call_operand.vmem [shape: f32[128,256], index: 3, kind: input, shape index: {}]
  %s4 = inlined_call_operand.vmem [shape: f32[512,256], index: 4, kind: output, shape index: {0}]
  %s5 = inlined_call_operand.vmem [shape: f32[2,2,256], index: 5, kind: output, shape index: {1}]
  %6 = xla_tuple %s4, %s5
  %s7 = sld [smem:[#allocation0]]
  $region57: #{bottleneck_forward.6} parent=0
    _
  %s9 = ssub.s32 1, %s7
  %s10 = scalar_select 0, %s9, %s7
  loop: start=0, step=1, limit=4
  $region2: #{bottleneck_forward.6} parent=0 // loop_pre_header
    _
  $region3: #{bottleneck_forward.6} parent=0 // loop_header
    %s12 = sphi 0, %s16
    %p13 = scmp.ge.s32.totalorder %s12, 4
    %s22 = sphi 0, %s24
    %s25 = sphi 0, %s22
    %s26 = sphi 0, %s25
    %s42 = sphi 0, %s26
    %s46 = sphi 0, %s46
    %s48 = sphi 0, %s46
    %s49 = sphi 0, %s48
    %s63 = sphi 0, %s49
    %s67 = sphi 0, %s67
    %s69 = sphi 0, %s67
    %s70 = sphi 0, %s69
    %s84 = sphi 0, %s70
    %s88 = sphi 0, %s88
    %s90 = sphi 0, %s88
    %s91 = sphi 0, %s90
    %s105 = sphi 0, %s91
    %s111 = sphi 0, %s113
    %s114 = sphi 0, %s111
    %s115 = sphi 0, %s114
    %s131 = sphi 0, %s115
    %s137 = sphi 0, %s139
    %s140 = sphi 0, %s137
    %s141 = sphi 0, %s140
    %s157 = sphi 0, %s141
  $region4: #{bottleneck_forward.6} parent=0 // loop_header_branch
    %15 = sbr.rel (%p13) target = $region8
  $region5: #{bottleneck_forward.6} parent=0 // loop_body
    %s17 = ssub.s32 %s12, 1
    %s18 = ssub.s32 %s12, 2
    %s19 = sadd.s32 %s12, 1
    %s20 = ssub.s32 %s12, %s19
    %p21 = scmp.eq.s32.totalorder %s20, 0
    %s23 = sadd.s32 %s22, 1
    %s24 = scalar_select %p21, %s22, %s23
    %p27 = pneg %p21
    %p28 = scmp.eq.s32.totalorder %s12, 1
    %p29 = por %p27, %p28
    %p30 = scmp.ne.s32.totalorder %s22, %s25
    %p31 = scmp.eq.s32.totalorder %s12, 0
    %p32 = por %p30, %p31
    %p33 = scmp.ne.s32.totalorder %s22, %s25
    %p34 = scmp.eq.s32.totalorder %s17, 1
    %p35 = por %p33, %p34
    %p36 = scmp.ne.s32.totalorder %s25, %s26
    %p37 = scmp.eq.s32.totalorder %s17, 0
    %p38 = por %p36, %p37
    %p39 = scmp.ne.s32.totalorder %s25, %s26
    %p40 = scmp.eq.s32.totalorder %s18, 1
    %p41 = por %p39, %p40
    %p43 = scmp.ne.s32.totalorder %s26, %s42
    %p44 = scmp.eq.s32.totalorder %s18, 0
    %p45 = por %p43, %p44
    %s47 = sadd.s32 %s46, 1
    %p50 = scmp.eq.s32.totalorder %s12, 1
    %p51 = scmp.ne.s32.totalorder %s46, %s48
    %p52 = scmp.eq.s32.totalorder %s12, 0
    %p53 = por %p51, %p52
    %p54 = scmp.ne.s32.totalorder %s46, %s48
    %p55 = scmp.eq.s32.totalorder %s17, 1
    %p56 = por %p54, %p55
    %p57 = scmp.ne.s32.totalorder %s48, %s49
    %p58 = scmp.eq.s32.totalorder %s17, 0
    %p59 = por %p57, %p58
    %p60 = scmp.ne.s32.totalorder %s48, %s49
    %p61 = scmp.eq.s32.totalorder %s18, 1
    %p62 = por %p60, %p61
    %p64 = scmp.ne.s32.totalorder %s49, %s63
    %p65 = scmp.eq.s32.totalorder %s18, 0
    %p66 = por %p64, %p65
    %s68 = sadd.s32 %s67, 1
    %p71 = scmp.eq.s32.totalorder %s12, 1
    %p72 = scmp.ne.s32.totalorder %s67, %s69
    %p73 = scmp.eq.s32.totalorder %s12, 0
    %p74 = por %p72, %p73
    %p75 = scmp.ne.s32.totalorder %s67, %s69
    %p76 = scmp.eq.s32.totalorder %s17, 1
    %p77 = por %p75, %p76
    %p78 = scmp.ne.s32.totalorder %s69, %s70
    %p79 = scmp.eq.s32.totalorder %s17, 0
    %p80 = por %p78, %p79
    %p81 = scmp.ne.s32.totalorder %s69, %s70
    %p82 = scmp.eq.s32.totalorder %s18, 1
    %p83 = por %p81, %p82
    %p85 = scmp.ne.s32.totalorder %s70, %s84
    %p86 = scmp.eq.s32.totalorder %s18, 0
    %p87 = por %p85, %p86
    %s89 = sadd.s32 %s88, 1
    %p92 = scmp.eq.s32.totalorder %s12, 1
    %p93 = scmp.ne.s32.totalorder %s88, %s90
    %p94 = scmp.eq.s32.totalorder %s12, 0
    %p95 = por %p93, %p94
    %p96 = scmp.ne.s32.totalorder %s88, %s90
    %p97 = scmp.eq.s32.totalorder %s17, 1
    %p98 = por %p96, %p97
    %p99 = scmp.ne.s32.totalorder %s90, %s91
    %p100 = scmp.eq.s32.totalorder %s17, 0
    %p101 = por %p99, %p100
    %p102 = scmp.ne.s32.totalorder %s90, %s91
    %p103 = scmp.eq.s32.totalorder %s18, 1
    %p104 = por %p102, %p103
    %p106 = scmp.ne.s32.totalorder %s91, %s105
    %p107 = scmp.eq.s32.totalorder %s18, 0
    %p108 = por %p106, %p107
    %s109 = ssub.s32 %s12, %s19
    %p110 = scmp.eq.s32.totalorder %s109, 0
    %s112 = sadd.s32 %s111, 1
    %s113 = scalar_select %p110, %s111, %s112
    %p116 = pneg %p110
    %p117 = scmp.eq.s32.totalorder %s12, 1
    %p118 = por %p116, %p117
    %p119 = scmp.ne.s32.totalorder %s111, %s114
    %p120 = scmp.eq.s32.totalorder %s12, 0
    %p121 = por %p119, %p120
    %p122 = scmp.ne.s32.totalorder %s111, %s114
    %p123 = scmp.eq.s32.totalorder %s17, 1
    %p124 = por %p122, %p123
    %p125 = scmp.ne.s32.totalorder %s114, %s115
    %p126 = scmp.eq.s32.totalorder %s17, 0
    %p127 = por %p125, %p126
    %p128 = scmp.ne.s32.totalorder %s114, %s115
    %p129 = scmp.eq.s32.totalorder %s18, 1
    %p130 = por %p128, %p129
    %p132 = scmp.ne.s32.totalorder %s115, %s131
    %p133 = scmp.eq.s32.totalorder %s18, 0
    %p134 = por %p132, %p133
    %s135 = ssub.s32 %s12, %s19
    %p136 = scmp.eq.s32.totalorder %s135, 0
    %s138 = sadd.s32 %s137, 1
    %s139 = scalar_select %p136, %s137, %s138
    %p142 = pneg %p136
    %p143 = scmp.eq.s32.totalorder %s12, 1
    %p144 = por %p142, %p143
    %p145 = scmp.ne.s32.totalorder %s137, %s140
    %p146 = scmp.eq.s32.totalorder %s12, 0
    %p147 = por %p145, %p146
    %p148 = scmp.ne.s32.totalorder %s137, %s140
    %p149 = scmp.eq.s32.totalorder %s17, 1
    %p150 = por %p148, %p149
    %p151 = scmp.ne.s32.totalorder %s140, %s141
    %p152 = scmp.eq.s32.totalorder %s17, 0
    %p153 = por %p151, %p152
    %p154 = scmp.ne.s32.totalorder %s140, %s141
    %p155 = scmp.eq.s32.totalorder %s18, 1
    %p156 = por %p154, %p155
    %p158 = scmp.ne.s32.totalorder %s141, %s157
    %p159 = scmp.eq.s32.totalorder %s18, 0
    %p160 = por %p158, %p159
    %p161 = scmp.le.s32.totalorder 1, %s12
    %p162 = scmp.lt.s32.totalorder %s12, 3
    %p163 = pnand %p161, %p162
    %p164 = pneg %p163
    // Predicated region
    $region9: #{bottleneck_forward.6} parent=5 // pred_check
      _
    $region10: #{bottleneck_forward.6} parent=5 // pred_check_branch
      %166 = sbr.rel (%p163) target = $region12
    $region11: #{bottleneck_forward.6} parent=5 // pred_region
      %s167 = ssub.s32 %s12, 1
      // Predicated region
      $region13: #{bottleneck_forward.6} parent=11 // pred_check
        %p168 = pneg %p59
      $region14: #{bottleneck_forward.6} parent=11 // pred_check_branch
        %170 = sbr.rel (%p168) target = $region16
      $region15: #{bottleneck_forward.6} parent=11 // pred_region
        _
      $region16: #{bottleneck_forward.6} parent=11 // pred_fallthru
        _
      // Predicated region
      $region17: #{bottleneck_forward.6} parent=11 // pred_check
        %p171 = pneg %p80
      $region18: #{bottleneck_forward.6} parent=11 // pred_check_branch
        %173 = sbr.rel (%p171) target = $region20
      $region19: #{bottleneck_forward.6} parent=11 // pred_region
        _
      $region20: #{bottleneck_forward.6} parent=11 // pred_fallthru
        _
      // Predicated region
      $region21: #{bottleneck_forward.6} parent=11 // pred_check
        %p174 = pneg %p101
      $region22: #{bottleneck_forward.6} parent=11 // pred_check_branch
        %176 = sbr.rel (%p174) target = $region24
      $region23: #{bottleneck_forward.6} parent=11 // pred_region
        _
      $region24: #{bottleneck_forward.6} parent=11 // pred_fallthru
        _
    $region12: #{bottleneck_forward.6} parent=5 // pred_fallthru
      _
    %p177 = scmp.lt.s32.totalorder %s12, 2
    // Predicated region
    $region25: #{bottleneck_forward.6} parent=5 // pred_check
      %p178 = pneg %p177
    $region26: #{bottleneck_forward.6} parent=5 // pred_check_branch
      %180 = sbr.rel (%p178) target = $region28
    $region27: #{bottleneck_forward.6} parent=5 // pred_region
      // Predicated region
      $region29: #{bottleneck_forward.6} parent=27 // pred_check
        %p181 = pneg %p32
      $region30: #{bottleneck_forward.6} parent=27 // pred_check_branch
        %183 = sbr.rel (%p181) target = $region32
      $region31: #{bottleneck_forward.6} parent=27 // pred_region
        %s184 = smul.u32 32, %s12
        %p185 = scmp.lt.s32.totalorder %s184, 63
        %s186 = scalar_select %p185, %s184, 63
        %s187 = smul.addr %s186, 8
        %s188 = scalar_lea.vmem %s0, %s187
        %s189 = smul.u32 32, %s12
      $region32: #{bottleneck_forward.6} parent=27 // pred_fallthru
        _
    $region28: #{bottleneck_forward.6} parent=5 // pred_fallthru
      _
    %p190 = scmp.le.s32.totalorder 1, %s12
    %p191 = scmp.lt.s32.totalorder %s12, 3
    %p192 = pnand %p190, %p191
    %p193 = pneg %p192
    // Predicated region
    $region33: #{bottleneck_forward.6} parent=5 // pred_check
      _
    $region34: #{bottleneck_forward.6} parent=5 // pred_check_branch
      %195 = sbr.rel (%p192) target = $region36
    $region35: #{bottleneck_forward.6} parent=5 // pred_region
      %s196 = ssub.s32 %s12, 1
      %s197 = smul.u32 32, %s17
      %p198 = scmp.lt.s32.totalorder %s197, 63
      %s199 = scalar_select %p198, %s197, 63
      %s200 = smul.addr %s199, 8
      %s201 = scalar_lea.vmem %s0, %s200
      %p202 = pneg %p38
      %p203 = pneg %p35
      %p204 = pneg %p59
      %p205 = pneg %p56
      %p206 = pneg %p80
      %p207 = pneg %p77
      %p208 = pneg %p101
      %p209 = pneg %p98
      %p210 = pneg %p127
      %p211 = pneg %p124
      %s212 = smul.u32 32, %s17
      %p213 = scmp.lt.s32.totalorder %s212, 63
      %s214 = scalar_select %p213, %s212, 63
      %s215 = smul.addr %s214, 2
      %s216 = smul.addr %s215, 8
      %s217 = scalar_lea.vmem %s4, %s216
      %p218 = pneg %p153
      %p219 = pneg %p150
      %p220 = scmp.lt.s32.totalorder %s17, 1
      %s221 = scalar_select %p220, %s17, 1
      %s222 = smul.addr %s221, 2
      %s223 = smul.addr %s222, 2
      %s224 = scalar_lea.vmem %s5, %s223
      %s225 = smul.u32 32, %s17
      %p226 = scmp.lt.s32.totalorder %s225, 63
      %s227 = scalar_select %p226, %s225, 63
      %s228 = smul.addr %s227, 8
      %s229 = scalar_lea.vmem %s0, %s228
      %s230 = smul.u32 32, %s17
      %s231 = smul.u32 32, %s17
      %p232 = scmp.lt.s32.totalorder %s231, 63
      %s233 = scalar_select %p232, %s231, 63
      %s234 = smul.addr %s233, 2
      %s235 = smul.addr %s234, 8
      %s236 = scalar_lea.vmem %s4, %s235
      %s237 = smul.u32 32, %s17
      %p238 = scmp.lt.s32.totalorder %s17, 1
      %s239 = scalar_select %p238, %s17, 1
      %s240 = smul.addr %s239, 2
      %s241 = smul.addr %s240, 2
      %s242 = scalar_lea.vmem %s5, %s241
      %v243 = vld [vmem:[%s229] sm:$0xff]
      %v244 = vld [vmem:[%s229 + $0x8] sm:$0xff]
      %v245 = vld [vmem:[%s229 + $0x10] sm:$0xff]
      %v246 = vld [vmem:[%s229 + $0x18] sm:$0xff]
      %v247 = vld [vmem:[%s229 + $0x20] sm:$0xff]
      %v248 = vld [vmem:[%s229 + $0x28] sm:$0xff]
      %v249 = vld [vmem:[%s229 + $0x30] sm:$0xff]
      %v250 = vld [vmem:[%s229 + $0x38] sm:$0xff]
      %v251 = vld [vmem:[%s229 + $0x40] sm:$0xff]
      %v252 = vld [vmem:[%s229 + $0x48] sm:$0xff]
      %v253 = vld [vmem:[%s229 + $0x50] sm:$0xff]
      %v254 = vld [vmem:[%s229 + $0x58] sm:$0xff]
      %v255 = vld [vmem:[%s229 + $0x60] sm:$0xff]
      %v256 = vld [vmem:[%s229 + $0x68] sm:$0xff]
      %v257 = vld [vmem:[%s229 + $0x70] sm:$0xff]
      %v258 = vld [vmem:[%s229 + $0x78] sm:$0xff]
      %v259 = vld [vmem:[%s229 + $0x80] sm:$0xff]
      %v260 = vld [vmem:[%s229 + $0x88] sm:$0xff]
      %v261 = vld [vmem:[%s229 + $0x90] sm:$0xff]
      %v262 = vld [vmem:[%s229 + $0x98] sm:$0xff]
      %v263 = vld [vmem:[%s229 + $0xa0] sm:$0xff]
      %v264 = vld [vmem:[%s229 + $0xa8] sm:$0xff]
      %v265 = vld [vmem:[%s229 + $0xb0] sm:$0xff]
      %v266 = vld [vmem:[%s229 + $0xb8] sm:$0xff]
      %v267 = vld [vmem:[%s229 + $0xc0] sm:$0xff]
      %v268 = vld [vmem:[%s229 + $0xc8] sm:$0xff]
      %v269 = vld [vmem:[%s229 + $0xd0] sm:$0xff]
      %v270 = vld [vmem:[%s229 + $0xd8] sm:$0xff]
      %v271 = vld [vmem:[%s229 + $0xe0] sm:$0xff]
      %v272 = vld [vmem:[%s229 + $0xe8] sm:$0xff]
      %v273 = vld [vmem:[%s229 + $0xf0] sm:$0xff]
      %v274 = vld [vmem:[%s229 + $0xf8] sm:$0xff]
      %v275 = vld [vmem:[%s1] sm:$0x1]
      %v277 = vlaneseq
      %v278 = vshrl.u32 %v277, 7
      %v279 = vsub.s32 0, %v278
      %v280 = vrot.slane %v275, %v279
      %v282 = vmul.f32 %v243, %v280
      %v283 = vmul.f32 %v244, %v280
      %v284 = vmul.f32 %v245, %v280
      %v285 = vmul.f32 %v246, %v280
      %v286 = vmul.f32 %v247, %v280
      %v287 = vmul.f32 %v248, %v280
      %v288 = vmul.f32 %v249, %v280
      %v289 = vmul.f32 %v250, %v280
      %v290 = vmul.f32 %v251, %v280
      %v291 = vmul.f32 %v252, %v280
      %v292 = vmul.f32 %v253, %v280
      %v293 = vmul.f32 %v254, %v280
      %v294 = vmul.f32 %v255, %v280
      %v295 = vmul.f32 %v256, %v280
      %v296 = vmul.f32 %v257, %v280
      %v297 = vmul.f32 %v258, %v280
      %v298 = vmul.f32 %v259, %v280
      %v299 = vmul.f32 %v260, %v280
      %v300 = vmul.f32 %v261, %v280
      %v301 = vmul.f32 %v262, %v280
      %v302 = vmul.f32 %v263, %v280
      %v303 = vmul.f32 %v264, %v280
      %v304 = vmul.f32 %v265, %v280
      %v305 = vmul.f32 %v266, %v280
      %v306 = vmul.f32 %v267, %v280
      %v307 = vmul.f32 %v268, %v280
      %v308 = vmul.f32 %v269, %v280
      %v309 = vmul.f32 %v270, %v280
      %v310 = vmul.f32 %v271, %v280
      %v311 = vmul.f32 %v272, %v280
      %v312 = vmul.f32 %v273, %v280
      %v313 = vmul.f32 %v274, %v280
      %v314 = vld [vmem:[%s2] sm:$0x1]
      %v316 = vlaneseq
      %v317 = vshrl.u32 %v316, 7
      %v318 = vsub.s32 0, %v317
      %v319 = vrot.slane %v314, %v318
      %v321 = vadd.f32 %v282, %v319
      %v322 = vadd.f32 %v283, %v319
      %v323 = vadd.f32 %v284, %v319
      %v324 = vadd.f32 %v285, %v319
      %v325 = vadd.f32 %v286, %v319
      %v326 = vadd.f32 %v287, %v319
      %v327 = vadd.f32 %v288, %v319
      %v328 = vadd.f32 %v289, %v319
      %v329 = vadd.f32 %v290, %v319
      %v330 = vadd.f32 %v291, %v319
      %v331 = vadd.f32 %v292, %v319
      %v332 = vadd.f32 %v293, %v319
      %v333 = vadd.f32 %v294, %v319
      %v334 = vadd.f32 %v295, %v319
      %v335 = vadd.f32 %v296, %v319
      %v336 = vadd.f32 %v297, %v319
      %v337 = vadd.f32 %v298, %v319
      %v338 = vadd.f32 %v299, %v319
      %v339 = vadd.f32 %v300, %v319
      %v340 = vadd.f32 %v301, %v319
      %v341 = vadd.f32 %v302, %v319
      %v342 = vadd.f32 %v303, %v319
      %v343 = vadd.f32 %v304, %v319
      %v344 = vadd.f32 %v305, %v319
      %v345 = vadd.f32 %v306, %v319
      %v346 = vadd.f32 %v307, %v319
      %v347 = vadd.f32 %v308, %v319
      %v348 = vadd.f32 %v309, %v319
      %v349 = vadd.f32 %v310, %v319
      %v350 = vadd.f32 %v311, %v319
      %v351 = vadd.f32 %v312, %v319
      %v352 = vadd.f32 %v313, %v319
      %v353 = vmax.f32 %v321, 0.0
      %v354 = vmax.f32 %v322, 0.0
      %v355 = vmax.f32 %v323, 0.0
      %v356 = vmax.f32 %v324, 0.0
      %v357 = vmax.f32 %v325, 0.0
      %v358 = vmax.f32 %v326, 0.0
      %v359 = vmax.f32 %v327, 0.0
      %v360 = vmax.f32 %v328, 0.0
      %v361 = vmax.f32 %v329, 0.0
      %v362 = vmax.f32 %v330, 0.0
      %v363 = vmax.f32 %v331, 0.0
      %v364 = vmax.f32 %v332, 0.0
      %v365 = vmax.f32 %v333, 0.0
      %v366 = vmax.f32 %v334, 0.0
      %v367 = vmax.f32 %v335, 0.0
      %v368 = vmax.f32 %v336, 0.0
      %v369 = vmax.f32 %v337, 0.0
      %v370 = vmax.f32 %v338, 0.0
      %v371 = vmax.f32 %v339, 0.0
      %v372 = vmax.f32 %v340, 0.0
      %v373 = vmax.f32 %v341, 0.0
      %v374 = vmax.f32 %v342, 0.0
      %v375 = vmax.f32 %v343, 0.0
      %v376 = vmax.f32 %v344, 0.0
      %v377 = vmax.f32 %v345, 0.0
      %v378 = vmax.f32 %v346, 0.0
      %v379 = vmax.f32 %v347, 0.0
      %v380 = vmax.f32 %v348, 0.0
      %v381 = vmax.f32 %v349, 0.0
      %v382 = vmax.f32 %v350, 0.0
      %v383 = vmax.f32 %v351, 0.0
      %v384 = vmax.f32 %v352, 0.0
      %v385 = vld [vmem:[%s3] sm:$0xff]
      %v386 = vld [vmem:[%s3 + $0x8] sm:$0xff]
      %v387 = vld [vmem:[%s3 + $0x10] sm:$0xff]
      %v388 = vld [vmem:[%s3 + $0x18] sm:$0xff]
      %v389 = vld [vmem:[%s3 + $0x20] sm:$0xff]
      %v390 = vld [vmem:[%s3 + $0x28] sm:$0xff]
      %v391 = vld [vmem:[%s3 + $0x30] sm:$0xff]
      %v392 = vld [vmem:[%s3 + $0x38] sm:$0xff]
      %v393 = vld [vmem:[%s3 + $0x40] sm:$0xff]
      %v394 = vld [vmem:[%s3 + $0x48] sm:$0xff]
      %v395 = vld [vmem:[%s3 + $0x50] sm:$0xff]
      %v396 = vld [vmem:[%s3 + $0x58] sm:$0xff]
      %v397 = vld [vmem:[%s3 + $0x60] sm:$0xff]
      %v398 = vld [vmem:[%s3 + $0x68] sm:$0xff]
      %v399 = vld [vmem:[%s3 + $0x70] sm:$0xff]
      %v400 = vld [vmem:[%s3 + $0x78] sm:$0xff]
      %v401 = vld [vmem:[%s3 + $0x80] sm:$0xff]
      %v402 = vld [vmem:[%s3 + $0x88] sm:$0xff]
      %v403 = vld [vmem:[%s3 + $0x90] sm:$0xff]
      %v404 = vld [vmem:[%s3 + $0x98] sm:$0xff]
      %v405 = vld [vmem:[%s3 + $0xa0] sm:$0xff]
      %v406 = vld [vmem:[%s3 + $0xa8] sm:$0xff]
      %v407 = vld [vmem:[%s3 + $0xb0] sm:$0xff]
      %v408 = vld [vmem:[%s3 + $0xb8] sm:$0xff]
      %v409 = vld [vmem:[%s3 + $0xc0] sm:$0xff]
      %v410 = vld [vmem:[%s3 + $0xc8] sm:$0xff]
      %v411 = vld [vmem:[%s3 + $0xd0] sm:$0xff]
      %v412 = vld [vmem:[%s3 + $0xd8] sm:$0xff]
      %v413 = vld [vmem:[%s3 + $0xe0] sm:$0xff]
      %v414 = vld [vmem:[%s3 + $0xe8] sm:$0xff]
      %v415 = vld [vmem:[%s3 + $0xf0] sm:$0xff]
      %v416 = vld [vmem:[%s3 + $0xf8] sm:$0xff]
      %417 = vmatprep.subr.mxu0 %v416
      %418 = vmatpush1.msra.mxu0 %v415
      %419 = vmatprep.subr.mxu0 %v414
      %420 = vmatpush1.msra.mxu0 %v413
      %421 = vmatprep.subr.mxu0 %v412
      %422 = vmatpush1.msra.mxu0 %v411
      %423 = vmatprep.subr.mxu0 %v410
      %424 = vmatpush1.msra.mxu0 %v409
      %425 = vmatprep.subr.mxu0 %v408
      %426 = vmatpush1.msra.mxu0 %v407
      %427 = vmatprep.subr.mxu0 %v406
      %428 = vmatpush1.msra.mxu0 %v405
      %429 = vmatprep.subr.mxu0 %v404
      %430 = vmatpush1.msra.mxu0 %v403
      %431 = vmatprep.subr.mxu0 %v402
      %432 = vmatpush1.msra.mxu0 %v401
      %433 = vmatprep.subr.mxu0 %v400
      %434 = vmatpush1.msra.mxu0 %v399
      %435 = vmatprep.subr.mxu0 %v398
      %436 = vmatpush1.msra.mxu0 %v397
      %437 = vmatprep.subr.mxu0 %v396
      %438 = vmatpush1.msra.mxu0 %v395
      %439 = vmatprep.subr.mxu0 %v394
      %440 = vmatpush1.msra.mxu0 %v393
      %441 = vmatprep.subr.mxu0 %v392
      %442 = vmatpush1.msra.mxu0 %v391
      %443 = vmatprep.subr.mxu0 %v390
      %444 = vmatpush1.msra.mxu0 %v389
      %445 = vmatprep.subr.mxu0 %v388
      %446 = vmatpush1.msra.mxu0 %v387
      %447 = vmatprep.subr.mxu0 %v386
      %448 = vmatpush1.msra.mxu0 %v385
      %449 = vmatprep.subr.mxu0 0.0
      %450 = vmatpush2.msra.mxu0 0.0
      %451 = vmatprep.subr.mxu0 0.0
      %452 = vmatpush2.msra.mxu0 0.0
      %453 = vmatprep.subr.mxu0 0.0
      %454 = vmatpush2.msra.mxu0 0.0
      %455 = vmatprep.subr.mxu0 0.0
      %456 = vmatpush2.msra.mxu0 0.0
      %457 = vmatprep.subr.mxu0 0.0
      %458 = vmatpush2.msra.mxu0 0.0
      %459 = vmatprep.subr.mxu0 0.0
      %460 = vmatpush2.msra.mxu0 0.0
      %461 = vmatprep.subr.mxu0 0.0
      %462 = vmatpush2.msra.mxu0 0.0
      %463 = vmatprep.subr.mxu0 0.0
      %464 = vmatpush2.msra.mxu0 0.0
      %465 = vmatprep.subr.mxu0 0.0
      %466 = vmatpush2.msra.mxu0 0.0
      %467 = vmatprep.subr.mxu0 0.0
      %468 = vmatpush2.msra.mxu0 0.0
      %469 = vmatprep.subr.mxu0 0.0
      %470 = vmatpush2.msra.mxu0 0.0
      %471 = vmatprep.subr.mxu0 0.0
      %472 = vmatpush2.msra.mxu0 0.0
      %473 = vmatprep.subr.mxu0 0.0
      %474 = vmatpush2.msra.mxu0 0.0
      %475 = vmatprep.subr.mxu0 0.0
      %476 = vmatpush2.msra.mxu0 0.0
      %477 = vmatprep.subr.mxu0 0.0
      %478 = vmatpush2.msra.mxu0 0.0
      %479 = vmatprep.subr.mxu0 0.0
      %480 = vmatpush2.msra.mxu0 0.0
      %481 = vmatprep.mubr.f32.mxu0 0.0
      %482 = vmatmul.mubr.f32.gmra.mxu0 %v353
      %v483 = vpop.f32.mrf.mxu0
      %v484 = vadd.f32 0.0, %v483
      %v485 = vpop.f32.mrf.mxu0
      %v486 = vadd.f32 0.0, %v485
      %487 = vmatprep.mubr.f32.mxu0 0.0
      %488 = vmatmul.mubr.f32.gmra.mxu0 %v354
      %v489 = vpop.f32.mrf.mxu0
      %v490 = vadd.f32 0.0, %v489
      %v491 = vpop.f32.mrf.mxu0
      %v492 = vadd.f32 0.0, %v491
      %493 = vmatprep.mubr.f32.mxu0 0.0
      %494 = vmatmul.mubr.f32.gmra.mxu0 %v355
      %v495 = vpop.f32.mrf.mxu0
      %v496 = vadd.f32 0.0, %v495
      %v497 = vpop.f32.mrf.mxu0
      %v498 = vadd.f32 0.0, %v497
      %499 = vmatprep.mubr.f32.mxu0 0.0
      %500 = vmatmul.mubr.f32.gmra.mxu0 %v356
      %v501 = vpop.f32.mrf.mxu0
      %v502 = vadd.f32 0.0, %v501
      %v503 = vpop.f32.mrf.mxu0
      %v504 = vadd.f32 0.0, %v503
      %505 = vmatprep.mubr.f32.mxu0 0.0
      %506 = vmatmul.mubr.f32.gmra.mxu0 %v357
      %v507 = vpop.f32.mrf.mxu0
      %v508 = vadd.f32 0.0, %v507
      %v509 = vpop.f32.mrf.mxu0
      %v510 = vadd.f32 0.0, %v509
      %511 = vmatprep.mubr.f32.mxu0 0.0
      %512 = vmatmul.mubr.f32.gmra.mxu0 %v358
      %v513 = vpop.f32.mrf.mxu0
      %v514 = vadd.f32 0.0, %v513
      %v515 = vpop.f32.mrf.mxu0
      %v516 = vadd.f32 0.0, %v515
      %517 = vmatprep.mubr.f32.mxu0 0.0
      %518 = vmatmul.mubr.f32.gmra.mxu0 %v359
      %v519 = vpop.f32.mrf.mxu0
      %v520 = vadd.f32 0.0, %v519
      %v521 = vpop.f32.mrf.mxu0
      %v522 = vadd.f32 0.0, %v521
      %523 = vmatprep.mubr.f32.mxu0 0.0
      %524 = vmatmul.mubr.f32.gmra.mxu0 %v360
      %v525 = vpop.f32.mrf.mxu0
      %v526 = vadd.f32 0.0, %v525
      %v527 = vpop.f32.mrf.mxu0
      %v528 = vadd.f32 0.0, %v527
      %529 = vmatprep.mubr.f32.mxu0 0.0
      %530 = vmatmul.mubr.f32.gmra.mxu0 %v361
      %v531 = vpop.f32.mrf.mxu0
      %v532 = vadd.f32 0.0, %v531
      %v533 = vpop.f32.mrf.mxu0
      %v534 = vadd.f32 0.0, %v533
      %535 = vmatprep.mubr.f32.mxu0 0.0
      %536 = vmatmul.mubr.f32.gmra.mxu0 %v362
      %v537 = vpop.f32.mrf.mxu0
      %v538 = vadd.f32 0.0, %v537
      %v539 = vpop.f32.mrf.mxu0
      %v540 = vadd.f32 0.0, %v539
      %541 = vmatprep.mubr.f32.mxu0 0.0
      %542 = vmatmul.mubr.f32.gmra.mxu0 %v363
      %v543 = vpop.f32.mrf.mxu0
      %v544 = vadd.f32 0.0, %v543
      %v545 = vpop.f32.mrf.mxu0
      %v546 = vadd.f32 0.0, %v545
      %547 = vmatprep.mubr.f32.mxu0 0.0
      %548 = vmatmul.mubr.f32.gmra.mxu0 %v364
      %v549 = vpop.f32.mrf.mxu0
      %v550 = vadd.f32 0.0, %v549
      %v551 = vpop.f32.mrf.mxu0
      %v552 = vadd.f32 0.0, %v551
      %553 = vmatprep.mubr.f32.mxu0 0.0
      %554 = vmatmul.mubr.f32.gmra.mxu0 %v365
      %v555 = vpop.f32.mrf.mxu0
      %v556 = vadd.f32 0.0, %v555
      %v557 = vpop.f32.mrf.mxu0
      %v558 = vadd.f32 0.0, %v557
      %559 = vmatprep.mubr.f32.mxu0 0.0
      %560 = vmatmul.mubr.f32.gmra.mxu0 %v366
      %v561 = vpop.f32.mrf.mxu0
      %v562 = vadd.f32 0.0, %v561
      %v563 = vpop.f32.mrf.mxu0
      %v564 = vadd.f32 0.0, %v563
      %565 = vmatprep.mubr.f32.mxu0 0.0
      %566 = vmatmul.mubr.f32.gmra.mxu0 %v367
      %v567 = vpop.f32.mrf.mxu0
      %v568 = vadd.f32 0.0, %v567
      %v569 = vpop.f32.mrf.mxu0
      %v570 = vadd.f32 0.0, %v569
      %571 = vmatprep.mubr.f32.mxu0 0.0
      %572 = vmatmul.mubr.f32.gmra.mxu0 %v368
      %v573 = vpop.f32.mrf.mxu0
      %v574 = vadd.f32 0.0, %v573
      %v575 = vpop.f32.mrf.mxu0
      %v576 = vadd.f32 0.0, %v575
      %577 = vmatprep.mubr.f32.mxu0 0.0
      %578 = vmatmul.mubr.f32.gmra.mxu0 %v369
      %v579 = vpop.f32.mrf.mxu0
      %v580 = vadd.f32 0.0, %v579
      %v581 = vpop.f32.mrf.mxu0
      %v582 = vadd.f32 0.0, %v581
      %583 = vmatprep.mubr.f32.mxu0 0.0
      %584 = vmatmul.mubr.f32.gmra.mxu0 %v370
      %v585 = vpop.f32.mrf.mxu0
      %v586 = vadd.f32 0.0, %v585
      %v587 = vpop.f32.mrf.mxu0
      %v588 = vadd.f32 0.0, %v587
      %589 = vmatprep.mubr.f32.mxu0 0.0
      %590 = vmatmul.mubr.f32.gmra.mxu0 %v371
      %v591 = vpop.f32.mrf.mxu0
      %v592 = vadd.f32 0.0, %v591
      %v593 = vpop.f32.mrf.mxu0
      %v594 = vadd.f32 0.0, %v593
      %595 = vmatprep.mubr.f32.mxu0 0.0
      %596 = vmatmul.mubr.f32.gmra.mxu0 %v372
      %v597 = vpop.f32.mrf.mxu0
      %v598 = vadd.f32 0.0, %v597
      %v599 = vpop.f32.mrf.mxu0
      %v600 = vadd.f32 0.0, %v599
      %601 = vmatprep.mubr.f32.mxu0 0.0
      %602 = vmatmul.mubr.f32.gmra.mxu0 %v373
      %v603 = vpop.f32.mrf.mxu0
      %v604 = vadd.f32 0.0, %v603
      %v605 = vpop.f32.mrf.mxu0
      %v606 = vadd.f32 0.0, %v605
      %607 = vmatprep.mubr.f32.mxu0 0.0
      %608 = vmatmul.mubr.f32.gmra.mxu0 %v374
      %v609 = vpop.f32.mrf.mxu0
      %v610 = vadd.f32 0.0, %v609
      %v611 = vpop.f32.mrf.mxu0
      %v612 = vadd.f32 0.0, %v611
      %613 = vmatprep.mubr.f32.mxu0 0.0
      %614 = vmatmul.mubr.f32.gmra.mxu0 %v375
      %v615 = vpop.f32.mrf.mxu0
      %v616 = vadd.f32 0.0, %v615
      %v617 = vpop.f32.mrf.mxu0
      %v618 = vadd.f32 0.0, %v617
      %619 = vmatprep.mubr.f32.mxu0 0.0
      %620 = vmatmul.mubr.f32.gmra.mxu0 %v376
      %v621 = vpop.f32.mrf.mxu0
      %v622 = vadd.f32 0.0, %v621
      %v623 = vpop.f32.mrf.mxu0
      %v624 = vadd.f32 0.0, %v623
      %625 = vmatprep.mubr.f32.mxu0 0.0
      %626 = vmatmul.mubr.f32.gmra.mxu0 %v377
      %v627 = vpop.f32.mrf.mxu0
      %v628 = vadd.f32 0.0, %v627
      %v629 = vpop.f32.mrf.mxu0
      %v630 = vadd.f32 0.0, %v629
      %631 = vmatprep.mubr.f32.mxu0 0.0
      %632 = vmatmul.mubr.f32.gmra.mxu0 %v378
      %v633 = vpop.f32.mrf.mxu0
      %v634 = vadd.f32 0.0, %v633
      %v635 = vpop.f32.mrf.mxu0
      %v636 = vadd.f32 0.0, %v635
      %637 = vmatprep.mubr.f32.mxu0 0.0
      %638 = vmatmul.mubr.f32.gmra.mxu0 %v379
      %v639 = vpop.f32.mrf.mxu0
      %v640 = vadd.f32 0.0, %v639
      %v641 = vpop.f32.mrf.mxu0
      %v642 = vadd.f32 0.0, %v641
      %643 = vmatprep.mubr.f32.mxu0 0.0
      %644 = vmatmul.mubr.f32.gmra.mxu0 %v380
      %v645 = vpop.f32.mrf.mxu0
      %v646 = vadd.f32 0.0, %v645
      %v647 = vpop.f32.mrf.mxu0
      %v648 = vadd.f32 0.0, %v647
      %649 = vmatprep.mubr.f32.mxu0 0.0
      %650 = vmatmul.mubr.f32.gmra.mxu0 %v381
      %v651 = vpop.f32.mrf.mxu0
      %v652 = vadd.f32 0.0, %v651
      %v653 = vpop.f32.mrf.mxu0
      %v654 = vadd.f32 0.0, %v653
      %655 = vmatprep.mubr.f32.mxu0 0.0
      %656 = vmatmul.mubr.f32.gmra.mxu0 %v382
      %v657 = vpop.f32.mrf.mxu0
      %v658 = vadd.f32 0.0, %v657
      %v659 = vpop.f32.mrf.mxu0
      %v660 = vadd.f32 0.0, %v659
      %661 = vmatprep.mubr.f32.mxu0 0.0
      %662 = vmatmul.mubr.f32.gmra.mxu0 %v383
      %v663 = vpop.f32.mrf.mxu0
      %v664 = vadd.f32 0.0, %v663
      %v665 = vpop.f32.mrf.mxu0
      %v666 = vadd.f32 0.0, %v665
      %667 = vmatprep.mubr.f32.mxu0 0.0
      %668 = vmatmul.mubr.f32.gmra.mxu0 %v384
      %v669 = vpop.f32.mrf.mxu0
      %v670 = vadd.f32 0.0, %v669
      %v671 = vpop.f32.mrf.mxu0
      %v672 = vadd.f32 0.0, %v671
      %673 = vdwg.mxu0
      %674 = vst [vmem:[%s236] sm:$0xff] %v484
      %675 = vst [vmem:[%s236 + $0x8] sm:$0xff] %v486
      %676 = vst [vmem:[%s236 + $0x10] sm:$0xff] %v490
      %677 = vst [vmem:[%s236 + $0x18] sm:$0xff] %v492
      %678 = vst [vmem:[%s236 + $0x20] sm:$0xff] %v496
      %679 = vst [vmem:[%s236 + $0x28] sm:$0xff] %v498
      %680 = vst [vmem:[%s236 + $0x30] sm:$0xff] %v502
      %681 = vst [vmem:[%s236 + $0x38] sm:$0xff] %v504
      %682 = vst [vmem:[%s236 + $0x40] sm:$0xff] %v508
      %683 = vst [vmem:[%s236 + $0x48] sm:$0xff] %v510
      %684 = vst [vmem:[%s236 + $0x50] sm:$0xff] %v514
      %685 = vst [vmem:[%s236 + $0x58] sm:$0xff] %v516
      %686 = vst [vmem:[%s236 + $0x60] sm:$0xff] %v520
      %687 = vst [vmem:[%s236 + $0x68] sm:$0xff] %v522
      %688 = vst [vmem:[%s236 + $0x70] sm:$0xff] %v526
      %689 = vst [vmem:[%s236 + $0x78] sm:$0xff] %v528
      %690 = vst [vmem:[%s236 + $0x80] sm:$0xff] %v532
      %691 = vst [vmem:[%s236 + $0x88] sm:$0xff] %v534
      %692 = vst [vmem:[%s236 + $0x90] sm:$0xff] %v538
      %693 = vst [vmem:[%s236 + $0x98] sm:$0xff] %v540
      %694 = vst [vmem:[%s236 + $0xa0] sm:$0xff] %v544
      %695 = vst [vmem:[%s236 + $0xa8] sm:$0xff] %v546
      %696 = vst [vmem:[%s236 + $0xb0] sm:$0xff] %v550
      %697 = vst [vmem:[%s236 + $0xb8] sm:$0xff] %v552
      %698 = vst [vmem:[%s236 + $0xc0] sm:$0xff] %v556
      %699 = vst [vmem:[%s236 + $0xc8] sm:$0xff] %v558
      %700 = vst [vmem:[%s236 + $0xd0] sm:$0xff] %v562
      %701 = vst [vmem:[%s236 + $0xd8] sm:$0xff] %v564
      %702 = vst [vmem:[%s236 + $0xe0] sm:$0xff] %v568
      %703 = vst [vmem:[%s236 + $0xe8] sm:$0xff] %v570
      %704 = vst [vmem:[%s236 + $0xf0] sm:$0xff] %v574
      %705 = vst [vmem:[%s236 + $0xf8] sm:$0xff] %v576
      %706 = vst [vmem:[%s236 + $0x100] sm:$0xff] %v580
      %707 = vst [vmem:[%s236 + $0x108] sm:$0xff] %v582
      %708 = vst [vmem:[%s236 + $0x110] sm:$0xff] %v586
      %709 = vst [vmem:[%s236 + $0x118] sm:$0xff] %v588
      %710 = vst [vmem:[%s236 + $0x120] sm:$0xff] %v592
      %711 = vst [vmem:[%s236 + $0x128] sm:$0xff] %v594
      %712 = vst [vmem:[%s236 + $0x130] sm:$0xff] %v598
      %713 = vst [vmem:[%s236 + $0x138] sm:$0xff] %v600
      %714 = vst [vmem:[%s236 + $0x140] sm:$0xff] %v604
      %715 = vst [vmem:[%s236 + $0x148] sm:$0xff] %v606
      %716 = vst [vmem:[%s236 + $0x150] sm:$0xff] %v610
      %717 = vst [vmem:[%s236 + $0x158] sm:$0xff] %v612
      %718 = vst [vmem:[%s236 + $0x160] sm:$0xff] %v616
      %719 = vst [vmem:[%s236 + $0x168] sm:$0xff] %v618
      %720 = vst [vmem:[%s236 + $0x170] sm:$0xff] %v622
      %721 = vst [vmem:[%s236 + $0x178] sm:$0xff] %v624
      %722 = vst [vmem:[%s236 + $0x180] sm:$0xff] %v628
      %723 = vst [vmem:[%s236 + $0x188] sm:$0xff] %v630
      %724 = vst [vmem:[%s236 + $0x190] sm:$0xff] %v634
      %725 = vst [vmem:[%s236 + $0x198] sm:$0xff] %v636
      %726 = vst [vmem:[%s236 + $0x1a0] sm:$0xff] %v640
      %727 = vst [vmem:[%s236 + $0x1a8] sm:$0xff] %v642
      %728 = vst [vmem:[%s236 + $0x1b0] sm:$0xff] %v646
      %729 = vst [vmem:[%s236 + $0x1b8] sm:$0xff] %v648
      %730 = vst [vmem:[%s236 + $0x1c0] sm:$0xff] %v652
      %731 = vst [vmem:[%s236 + $0x1c8] sm:$0xff] %v654
      %732 = vst [vmem:[%s236 + $0x1d0] sm:$0xff] %v658
      %733 = vst [vmem:[%s236 + $0x1d8] sm:$0xff] %v660
      %734 = vst [vmem:[%s236 + $0x1e0] sm:$0xff] %v664
      %735 = vst [vmem:[%s236 + $0x1e8] sm:$0xff] %v666
      %736 = vst [vmem:[%s236 + $0x1f0] sm:$0xff] %v670
      %737 = vst [vmem:[%s236 + $0x1f8] sm:$0xff] %v672
      %v738 = vadd.f32 %v484, %v490
      %v739 = vadd.f32 %v738, %v496
      %v740 = vadd.f32 %v739, %v502
      %v741 = vadd.f32 %v740, %v508
      %v742 = vadd.f32 %v741, %v514
      %v743 = vadd.f32 %v742, %v520
      %v744 = vadd.f32 %v743, %v526
      %v745 = vadd.f32 %v744, %v532
      %v746 = vadd.f32 %v745, %v538
      %v747 = vadd.f32 %v746, %v544
      %v748 = vadd.f32 %v747, %v550
      %v749 = vadd.f32 %v748, %v556
      %v750 = vadd.f32 %v749, %v562
      %v751 = vadd.f32 %v750, %v568
      %v752 = vadd.f32 %v751, %v574
      %v753 = vadd.f32 %v752, %v580
      %v754 = vadd.f32 %v753, %v586
      %v755 = vadd.f32 %v754, %v592
      %v756 = vadd.f32 %v755, %v598
      %v757 = vadd.f32 %v756, %v604
      %v758 = vadd.f32 %v757, %v610
      %v759 = vadd.f32 %v758, %v616
      %v760 = vadd.f32 %v759, %v622
      %v761 = vadd.f32 %v760, %v628
      %v762 = vadd.f32 %v761, %v634
      %v763 = vadd.f32 %v762, %v640
      %v764 = vadd.f32 %v763, %v646
      %v765 = vadd.f32 %v764, %v652
      %v766 = vadd.f32 %v765, %v658
      %v767 = vadd.f32 %v766, %v664
      %v768 = vadd.f32 %v767, %v670
      %v769 = vrot.slane %v768, 4
      %v770 = vadd.f32 %v768, %v769
      %v771 = vrot.slane %v770, 2
      %v772 = vadd.f32 %v770, %v771
      %v773 = vrot.slane %v772, 1
      %v774 = vadd.f32 %v772, %v773
      %v775 = vadd.f32 %v486, %v492
      %v776 = vadd.f32 %v775, %v498
      %v777 = vadd.f32 %v776, %v504
      %v778 = vadd.f32 %v777, %v510
      %v779 = vadd.f32 %v778, %v516
      %v780 = vadd.f32 %v779, %v522
      %v781 = vadd.f32 %v780, %v528
      %v782 = vadd.f32 %v781, %v534
      %v783 = vadd.f32 %v782, %v540
      %v784 = vadd.f32 %v783, %v546
      %v785 = vadd.f32 %v784, %v552
      %v786 = vadd.f32 %v785, %v558
      %v787 = vadd.f32 %v786, %v564
      %v788 = vadd.f32 %v787, %v570
      %v789 = vadd.f32 %v788, %v576
      %v790 = vadd.f32 %v789, %v582
      %v791 = vadd.f32 %v790, %v588
      %v792 = vadd.f32 %v791, %v594
      %v793 = vadd.f32 %v792, %v600
      %v794 = vadd.f32 %v793, %v606
      %v795 = vadd.f32 %v794, %v612
      %v796 = vadd.f32 %v795, %v618
      %v797 = vadd.f32 %v796, %v624
      %v798 = vadd.f32 %v797, %v630
      %v799 = vadd.f32 %v798, %v636
      %v800 = vadd.f32 %v799, %v642
      %v801 = vadd.f32 %v800, %v648
      %v802 = vadd.f32 %v801, %v654
      %v803 = vadd.f32 %v802, %v660
      %v804 = vadd.f32 %v803, %v666
      %v805 = vadd.f32 %v804, %v672
      %v806 = vrot.slane %v805, 4
      %v807 = vadd.f32 %v805, %v806
      %v808 = vrot.slane %v807, 2
      %v809 = vadd.f32 %v807, %v808
      %v810 = vrot.slane %v809, 1
      %v811 = vadd.f32 %v809, %v810
      %v814 = vcombine.low %v774, %v811
      %v816 = vunpack.c.l.s4 1966171168
      %v817 = vunpack.c.0.s8 %v816
      %v818 = vlaneseq
      %v819 = vshrl.u32 %v818, 7
      %v820 = vsub.s32 %v817, %v819
      %v821 = vrot.slane %v814, %v820
      %v823 = vunpack.c.l.s4 1966171168
      %v824 = vunpack.c.0.s8 %v823
      %v825 = vlaneseq
      %v826 = vshrl.u32 %v825, 7
      %v827 = vsub.s32 %v824, %v826
      %v828 = vrot.slane %v821, %v827
      %v830 = vlaneseq
      %vm831 = vcmp.ge.s32.totalorder %v830, 0
      %vm832 = vcmp.lt.s32.totalorder %v830, 256
      %vm833 = vmand %vm831, %vm832
      %834 = vst.msk [vmem:[%s242] ss:$2 sm:$0x3] %vm833, %v828
      %v835 = vmul.f32 %v484, %v484
      %v836 = vmul.f32 %v486, %v486
      %v837 = vmul.f32 %v490, %v490
      %v838 = vmul.f32 %v492, %v492
      %v839 = vmul.f32 %v496, %v496
      %v840 = vmul.f32 %v498, %v498
      %v841 = vmul.f32 %v502, %v502
      %v842 = vmul.f32 %v504, %v504
      %v843 = vmul.f32 %v508, %v508
      %v844 = vmul.f32 %v510, %v510
      %v845 = vmul.f32 %v514, %v514
      %v846 = vmul.f32 %v516, %v516
      %v847 = vmul.f32 %v520, %v520
      %v848 = vmul.f32 %v522, %v522
      %v849 = vmul.f32 %v526, %v526
      %v850 = vmul.f32 %v528, %v528
      %v851 = vmul.f32 %v532, %v532
      %v852 = vmul.f32 %v534, %v534
      %v853 = vmul.f32 %v538, %v538
      %v854 = vmul.f32 %v540, %v540
      %v855 = vmul.f32 %v544, %v544
      %v856 = vmul.f32 %v546, %v546
      %v857 = vmul.f32 %v550, %v550
      %v858 = vmul.f32 %v552, %v552
      %v859 = vmul.f32 %v556, %v556
      %v860 = vmul.f32 %v558, %v558
      %v861 = vmul.f32 %v562, %v562
      %v862 = vmul.f32 %v564, %v564
      %v863 = vmul.f32 %v568, %v568
      %v864 = vmul.f32 %v570, %v570
      %v865 = vmul.f32 %v574, %v574
      %v866 = vmul.f32 %v576, %v576
      %v867 = vmul.f32 %v580, %v580
      %v868 = vmul.f32 %v582, %v582
      %v869 = vmul.f32 %v586, %v586
      %v870 = vmul.f32 %v588, %v588
      %v871 = vmul.f32 %v592, %v592
      %v872 = vmul.f32 %v594, %v594
      %v873 = vmul.f32 %v598, %v598
      %v874 = vmul.f32 %v600, %v600
      %v875 = vmul.f32 %v604, %v604
      %v876 = vmul.f32 %v606, %v606
      %v877 = vmul.f32 %v610, %v610
      %v878 = vmul.f32 %v612, %v612
      %v879 = vmul.f32 %v616, %v616
      %v880 = vmul.f32 %v618, %v618
      %v881 = vmul.f32 %v622, %v622
      %v882 = vmul.f32 %v624, %v624
      %v883 = vmul.f32 %v628, %v628
      %v884 = vmul.f32 %v630, %v630
      %v885 = vmul.f32 %v634, %v634
      %v886 = vmul.f32 %v636, %v636
      %v887 = vmul.f32 %v640, %v640
      %v888 = vmul.f32 %v642, %v642
      %v889 = vmul.f32 %v646, %v646
      %v890 = vmul.f32 %v648, %v648
      %v891 = vmul.f32 %v652, %v652
      %v892 = vmul.f32 %v654, %v654
      %v893 = vmul.f32 %v658, %v658
      %v894 = vmul.f32 %v660, %v660
      %v895 = vmul.f32 %v664, %v664
      %v896 = vmul.f32 %v666, %v666
      %v897 = vmul.f32 %v670, %v670
      %v898 = vmul.f32 %v672, %v672
      %v899 = vadd.f32 %v835, %v837
      %v900 = vadd.f32 %v899, %v839
      %v901 = vadd.f32 %v900, %v841
      %v902 = vadd.f32 %v901, %v843
      %v903 = vadd.f32 %v902, %v845
      %v904 = vadd.f32 %v903, %v847
      %v905 = vadd.f32 %v904, %v849
      %v906 = vadd.f32 %v905, %v851
      %v907 = vadd.f32 %v906, %v853
      %v908 = vadd.f32 %v907, %v855
      %v909 = vadd.f32 %v908, %v857
      %v910 = vadd.f32 %v909, %v859
      %v911 = vadd.f32 %v910, %v861
      %v912 = vadd.f32 %v911, %v863
      %v913 = vadd.f32 %v912, %v865
      %v914 = vadd.f32 %v913, %v867
      %v915 = vadd.f32 %v914, %v869
      %v916 = vadd.f32 %v915, %v871
      %v917 = vadd.f32 %v916, %v873
      %v918 = vadd.f32 %v917, %v875
      %v919 = vadd.f32 %v918, %v877
      %v920 = vadd.f32 %v919, %v879
      %v921 = vadd.f32 %v920, %v881
      %v922 = vadd.f32 %v921, %v883
      %v923 = vadd.f32 %v922, %v885
      %v924 = vadd.f32 %v923, %v887
      %v925 = vadd.f32 %v924, %v889
      %v926 = vadd.f32 %v925, %v891
      %v927 = vadd.f32 %v926, %v893
      %v928 = vadd.f32 %v927, %v895
      %v929 = vadd.f32 %v928, %v897
      %v930 = vrot.slane %v929, 4
      %v931 = vadd.f32 %v929, %v930
      %v932 = vrot.slane %v931, 2
      %v933 = vadd.f32 %v931, %v932
      %v934 = vrot.slane %v933, 1
      %v935 = vadd.f32 %v933, %v934
      %v936 = vadd.f32 %v836, %v838
      %v937 = vadd.f32 %v936, %v840
      %v938 = vadd.f32 %v937, %v842
      %v939 = vadd.f32 %v938, %v844
      %v940 = vadd.f32 %v939, %v846
      %v941 = vadd.f32 %v940, %v848
      %v942 = vadd.f32 %v941, %v850
      %v943 = vadd.f32 %v942, %v852
      %v944 = vadd.f32 %v943, %v854
      %v945 = vadd.f32 %v944, %v856
      %v946 = vadd.f32 %v945, %v858
      %v947 = vadd.f32 %v946, %v860
      %v948 = vadd.f32 %v947, %v862
      %v949 = vadd.f32 %v948, %v864
      %v950 = vadd.f32 %v949, %v866
      %v951 = vadd.f32 %v950, %v868
      %v952 = vadd.f32 %v951, %v870
      %v953 = vadd.f32 %v952, %v872
      %v954 = vadd.f32 %v953, %v874
      %v955 = vadd.f32 %v954, %v876
      %v956 = vadd.f32 %v955, %v878
      %v957 = vadd.f32 %v956, %v880
      %v958 = vadd.f32 %v957, %v882
      %v959 = vadd.f32 %v958, %v884
      %v960 = vadd.f32 %v959, %v886
      %v961 = vadd.f32 %v960, %v888
      %v962 = vadd.f32 %v961, %v890
      %v963 = vadd.f32 %v962, %v892
      %v964 = vadd.f32 %v963, %v894
      %v965 = vadd.f32 %v964, %v896
      %v966 = vadd.f32 %v965, %v898
      %v967 = vrot.slane %v966, 4
      %v968 = vadd.f32 %v966, %v967
      %v969 = vrot.slane %v968, 2
      %v970 = vadd.f32 %v968, %v969
      %v971 = vrot.slane %v970, 1
      %v972 = vadd.f32 %v970, %v971
      %v975 = vcombine.low %v935, %v972
      %v977 = vunpack.c.l.s4 1966171168
      %v978 = vunpack.c.0.s8 %v977
      %v979 = vlaneseq
      %v980 = vshrl.u32 %v979, 7
      %v981 = vsub.s32 %v978, %v980
      %v982 = vrot.slane %v975, %v981
      %v984 = vunpack.c.l.s4 1966171168
      %v985 = vunpack.c.0.s8 %v984
      %v986 = vlaneseq
      %v987 = vshrl.u32 %v986, 7
      %v988 = vsub.s32 %v985, %v987
      %v989 = vrot.slane %v982, %v988
      %s991 = scalar_lea.vmem %s242, 1
      %992 = vst.msk [vmem:[%s991] ss:$2 sm:$0x3] %vm833, %v989
      %s993 = smul.u32 32, %s17
      %p994 = scmp.lt.s32.totalorder %s993, 63
      %s995 = scalar_select %p994, %s993, 63
      %s996 = smul.addr %s995, 2
      %s997 = smul.addr %s996, 8
      %s998 = scalar_lea.vmem %s4, %s997
      %p999 = scmp.lt.s32.totalorder %s17, 1
      %s1000 = scalar_select %p999, %s17, 1
      %s1001 = smul.addr %s1000, 2
      %s1002 = smul.addr %s1001, 2
      %s1003 = scalar_lea.vmem %s5, %s1002
      // Predicated region
      $region37: #{bottleneck_forward.6} parent=35 // pred_check
        %p1004 = pneg %p124
      $region38: #{bottleneck_forward.6} parent=35 // pred_check_branch
        %1006 = sbr.rel (%p1004) target = $region40
      $region39: #{bottleneck_forward.6} parent=35 // pred_region
        %s1007 = smul.u32 32, %s17
      $region40: #{bottleneck_forward.6} parent=35 // pred_fallthru
        _
      // Predicated region
      $region41: #{bottleneck_forward.6} parent=35 // pred_check
        %p1008 = pneg %p150
      $region42: #{bottleneck_forward.6} parent=35 // pred_check_branch
        %1010 = sbr.rel (%p1008) target = $region44
      $region43: #{bottleneck_forward.6} parent=35 // pred_region
        _
      $region44: #{bottleneck_forward.6} parent=35 // pred_fallthru
        _
    $region36: #{bottleneck_forward.6} parent=5 // pred_fallthru
      _
    %p1011 = scmp.le.s32.totalorder 2, %s12
    // Predicated region
    $region45: #{bottleneck_forward.6} parent=5 // pred_check
      %p1012 = pneg %p1011
    $region46: #{bottleneck_forward.6} parent=5 // pred_check_branch
      %1014 = sbr.rel (%p1012) target = $region48
    $region47: #{bottleneck_forward.6} parent=5 // pred_region
      %s1015 = ssub.s32 %s12, 2
      // Predicated region
      $region49: #{bottleneck_forward.6} parent=47 // pred_check
        %p1016 = pneg %p130
      $region50: #{bottleneck_forward.6} parent=47 // pred_check_branch
        %1018 = sbr.rel (%p1016) target = $region52
      $region51: #{bottleneck_forward.6} parent=47 // pred_region
        %s1019 = smul.u32 32, %s18
        %p1020 = scmp.lt.s32.totalorder %s1019, 63
        %s1021 = scalar_select %p1020, %s1019, 63
        %s1022 = smul.addr %s1021, 2
        %s1023 = smul.addr %s1022, 8
        %s1024 = scalar_lea.vmem %s4, %s1023
      $region52: #{bottleneck_forward.6} parent=47 // pred_fallthru
        _
      // Predicated region
      $region53: #{bottleneck_forward.6} parent=47 // pred_check
        %p1025 = pneg %p156
      $region54: #{bottleneck_forward.6} parent=47 // pred_check_branch
        %1027 = sbr.rel (%p1025) target = $region56
      $region55: #{bottleneck_forward.6} parent=47 // pred_region
        %p1028 = scmp.lt.s32.totalorder %s18, 1
        %s1029 = scalar_select %p1028, %s18, 1
        %s1030 = smul.addr %s1029, 2
        %s1031 = smul.addr %s1030, 2
        %s1032 = scalar_lea.vmem %s5, %s1031
      $region56: #{bottleneck_forward.6} parent=47 // pred_fallthru
        _
    $region48: #{bottleneck_forward.6} parent=5 // pred_fallthru
      _
  $region6: #{bottleneck_forward.6} parent=0 // loop_footer
    %s16 = sadd.s32 1, %s12
  $region7: #{bottleneck_forward.6} parent=0 // loop_footer_branch
    %11 = sbr.rel target = $region3
  $region8: #{bottleneck_forward.6} parent=0 // loop_exit
    _

// kernel: bottleneck_forward.7
$region0: #{bottleneck_forward.7}
  #allocation0 [shape = 'u32[]', space=smem, size = 0x4, offset = 0x4, fixed_abs, tag = 'smem constant byte address 0x4 - core index']
  #allocation1 [shape = 'u32[144,128]{1,0:T(1,128)}', space=vmem, size = 0x12000, scoped, tag = 'internal scratch']
  %s0 = inlined_call_operand.vmem [shape: f32[512,256], index: 0, kind: input, shape index: {}]
  %s1 = inlined_call_operand.vmem [shape: f32[512,256], index: 1, kind: input, shape index: {}]
  %s2 = inlined_call_operand.vmem [shape: f32[1,256], index: 2, kind: input, shape index: {}]
  %s3 = inlined_call_operand.vmem [shape: f32[1,256], index: 3, kind: input, shape index: {}]
  %s4 = inlined_call_operand.hbm [shape: f32[512,256], index: 4, kind: output, shape index: {}]
  %s5 = sld [smem:[#allocation0]]
  $region49: #{bottleneck_forward.7} parent=0
    _
  %s7 = ssub.s32 1, %s5
  %s8 = scalar_select 0, %s7, %s5
  $region1: #{bottleneck_forward.7} parent=0
    #allocation2 [shape = 'u8[524288]{0}', space=vmem, size = 0x80000, scoped, tag = 'output window, operand 0']
    #allocation3 [shape = 's32[2]{0}', space=sflag, size = 0x8, scoped, tag = 'scoped memory for bottleneck_forward.7']
    %9 = vsyncpa [#allocation3], 0
    %s10 = scalar_lea.sflag [#allocation3], 1
    %11 = vsyncpa %s10, 0
    loop: start=0, step=1, limit=4
    $region2: #{bottleneck_forward.7} parent=1 // loop_pre_header
      _
    $region3: #{bottleneck_forward.7} parent=1 // loop_header
      %s13 = sphi 0, %s17
      %p14 = scmp.ge.s32.totalorder %s13, 4
      %s23 = sphi 0, %s25
      %s26 = sphi 0, %s23
      %s27 = sphi 0, %s26
      %s43 = sphi 0, %s27
      %s49 = sphi 0, %s51
      %s52 = sphi 0, %s49
      %s53 = sphi 0, %s52
      %s69 = sphi 0, %s53
      %s73 = sphi 0, %s73
      %s75 = sphi 0, %s73
      %s76 = sphi 0, %s75
      %s90 = sphi 0, %s76
      %s94 = sphi 0, %s94
      %s96 = sphi 0, %s94
      %s97 = sphi 0, %s96
      %s111 = sphi 0, %s97
      %s117 = sphi 0, %s119
      %s120 = sphi 0, %s117
      %s121 = sphi 0, %s120
      %s137 = sphi 0, %s121
    $region4: #{bottleneck_forward.7} parent=1 // loop_header_branch
      %16 = sbr.rel (%p14) target = $region8
    $region5: #{bottleneck_forward.7} parent=1 // loop_body
      %s18 = ssub.s32 %s13, 1
      %s19 = ssub.s32 %s13, 2
      %s20 = sadd.s32 %s13, 1
      %s21 = ssub.s32 %s13, %s20
      %p22 = scmp.eq.s32.totalorder %s21, 0
      %s24 = sadd.s32 %s23, 1
      %s25 = scalar_select %p22, %s23, %s24
      %p28 = pneg %p22
      %p29 = scmp.eq.s32.totalorder %s13, 1
      %p30 = por %p28, %p29
      %p31 = scmp.ne.s32.totalorder %s23, %s26
      %p32 = scmp.eq.s32.totalorder %s13, 0
      %p33 = por %p31, %p32
      %p34 = scmp.ne.s32.totalorder %s23, %s26
      %p35 = scmp.eq.s32.totalorder %s18, 1
      %p36 = por %p34, %p35
      %p37 = scmp.ne.s32.totalorder %s26, %s27
      %p38 = scmp.eq.s32.totalorder %s18, 0
      %p39 = por %p37, %p38
      %p40 = scmp.ne.s32.totalorder %s26, %s27
      %p41 = scmp.eq.s32.totalorder %s19, 1
      %p42 = por %p40, %p41
      %p44 = scmp.ne.s32.totalorder %s27, %s43
      %p45 = scmp.eq.s32.totalorder %s19, 0
      %p46 = por %p44, %p45
      %s47 = ssub.s32 %s13, %s20
      %p48 = scmp.eq.s32.totalorder %s47, 0
      %s50 = sadd.s32 %s49, 1
      %s51 = scalar_select %p48, %s49, %s50
      %p54 = pneg %p48
      %p55 = scmp.eq.s32.totalorder %s13, 1
      %p56 = por %p54, %p55
      %p57 = scmp.ne.s32.totalorder %s49, %s52
      %p58 = scmp.eq.s32.totalorder %s13, 0
      %p59 = por %p57, %p58
      %p60 = scmp.ne.s32.totalorder %s49, %s52
      %p61 = scmp.eq.s32.totalorder %s18, 1
      %p62 = por %p60, %p61
      %p63 = scmp.ne.s32.totalorder %s52, %s53
      %p64 = scmp.eq.s32.totalorder %s18, 0
      %p65 = por %p63, %p64
      %p66 = scmp.ne.s32.totalorder %s52, %s53
      %p67 = scmp.eq.s32.totalorder %s19, 1
      %p68 = por %p66, %p67
      %p70 = scmp.ne.s32.totalorder %s53, %s69
      %p71 = scmp.eq.s32.totalorder %s19, 0
      %p72 = por %p70, %p71
      %s74 = sadd.s32 %s73, 1
      %p77 = scmp.eq.s32.totalorder %s13, 1
      %p78 = scmp.ne.s32.totalorder %s73, %s75
      %p79 = scmp.eq.s32.totalorder %s13, 0
      %p80 = por %p78, %p79
      %p81 = scmp.ne.s32.totalorder %s73, %s75
      %p82 = scmp.eq.s32.totalorder %s18, 1
      %p83 = por %p81, %p82
      %p84 = scmp.ne.s32.totalorder %s75, %s76
      %p85 = scmp.eq.s32.totalorder %s18, 0
      %p86 = por %p84, %p85
      %p87 = scmp.ne.s32.totalorder %s75, %s76
      %p88 = scmp.eq.s32.totalorder %s19, 1
      %p89 = por %p87, %p88
      %p91 = scmp.ne.s32.totalorder %s76, %s90
      %p92 = scmp.eq.s32.totalorder %s19, 0
      %p93 = por %p91, %p92
      %s95 = sadd.s32 %s94, 1
      %p98 = scmp.eq.s32.totalorder %s13, 1
      %p99 = scmp.ne.s32.totalorder %s94, %s96
      %p100 = scmp.eq.s32.totalorder %s13, 0
      %p101 = por %p99, %p100
      %p102 = scmp.ne.s32.totalorder %s94, %s96
      %p103 = scmp.eq.s32.totalorder %s18, 1
      %p104 = por %p102, %p103
      %p105 = scmp.ne.s32.totalorder %s96, %s97
      %p106 = scmp.eq.s32.totalorder %s18, 0
      %p107 = por %p105, %p106
      %p108 = scmp.ne.s32.totalorder %s96, %s97
      %p109 = scmp.eq.s32.totalorder %s19, 1
      %p110 = por %p108, %p109
      %p112 = scmp.ne.s32.totalorder %s97, %s111
      %p113 = scmp.eq.s32.totalorder %s19, 0
      %p114 = por %p112, %p113
      %s115 = ssub.s32 %s13, %s20
      %p116 = scmp.eq.s32.totalorder %s115, 0
      %s118 = sadd.s32 %s117, 1
      %s119 = scalar_select %p116, %s117, %s118
      %p122 = pneg %p116
      %p123 = scmp.eq.s32.totalorder %s13, 1
      %p124 = por %p122, %p123
      %p125 = scmp.ne.s32.totalorder %s117, %s120
      %p126 = scmp.eq.s32.totalorder %s13, 0
      %p127 = por %p125, %p126
      %p128 = scmp.ne.s32.totalorder %s117, %s120
      %p129 = scmp.eq.s32.totalorder %s18, 1
      %p130 = por %p128, %p129
      %p131 = scmp.ne.s32.totalorder %s120, %s121
      %p132 = scmp.eq.s32.totalorder %s18, 0
      %p133 = por %p131, %p132
      %p134 = scmp.ne.s32.totalorder %s120, %s121
      %p135 = scmp.eq.s32.totalorder %s19, 1
      %p136 = por %p134, %p135
      %p138 = scmp.ne.s32.totalorder %s121, %s137
      %p139 = scmp.eq.s32.totalorder %s19, 0
      %p140 = por %p138, %p139
      %p141 = scmp.le.s32.totalorder 1, %s13
      %p142 = scmp.lt.s32.totalorder %s13, 3
      %p143 = pnand %p141, %p142
      %p144 = pneg %p143
      // Predicated region
      $region9: #{bottleneck_forward.7} parent=5 // pred_check
        _
      $region10: #{bottleneck_forward.7} parent=5 // pred_check_branch
        %146 = sbr.rel (%p143) target = $region12
      $region11: #{bottleneck_forward.7} parent=5 // pred_region
        %s147 = ssub.s32 %s13, 1
        // Predicated region
        $region13: #{bottleneck_forward.7} parent=11 // pred_check
          %p148 = pneg %p86
        $region14: #{bottleneck_forward.7} parent=11 // pred_check_branch
          %150 = sbr.rel (%p148) target = $region16
        $region15: #{bottleneck_forward.7} parent=11 // pred_region
          _
        $region16: #{bottleneck_forward.7} parent=11 // pred_fallthru
          _
        // Predicated region
        $region17: #{bottleneck_forward.7} parent=11 // pred_check
          %p151 = pneg %p107
        $region18: #{bottleneck_forward.7} parent=11 // pred_check_branch
          %153 = sbr.rel (%p151) target = $region20
        $region19: #{bottleneck_forward.7} parent=11 // pred_region
          _
        $region20: #{bottleneck_forward.7} parent=11 // pred_fallthru
          _
      $region12: #{bottleneck_forward.7} parent=5 // pred_fallthru
        _
      %p154 = scmp.lt.s32.totalorder %s13, 2
      // Predicated region
      $region21: #{bottleneck_forward.7} parent=5 // pred_check
        %p155 = pneg %p154
      $region22: #{bottleneck_forward.7} parent=5 // pred_check_branch
        %157 = sbr.rel (%p155) target = $region24
      $region23: #{bottleneck_forward.7} parent=5 // pred_region
        // Predicated region
        $region25: #{bottleneck_forward.7} parent=23 // pred_check
          %p158 = pneg %p33
        $region26: #{bottleneck_forward.7} parent=23 // pred_check_branch
          %160 = sbr.rel (%p158) target = $region28
        $region27: #{bottleneck_forward.7} parent=23 // pred_region
          %s161 = smul.u32 32, %s13
          %p162 = scmp.lt.s32.totalorder %s161, 63
          %s163 = scalar_select %p162, %s161, 63
          %s164 = smul.addr %s163, 2
          %s165 = smul.addr %s164, 8
          %s166 = scalar_lea.vmem %s0, %s165
          %s167 = smul.u32 32, %s13
        $region28: #{bottleneck_forward.7} parent=23 // pred_fallthru
          _
        // Predicated region
        $region29: #{bottleneck_forward.7} parent=23 // pred_check
          %p168 = pneg %p59
        $region30: #{bottleneck_forward.7} parent=23 // pred_check_branch
          %170 = sbr.rel (%p168) target = $region32
        $region31: #{bottleneck_forward.7} parent=23 // pred_region
          %s171 = smul.u32 32, %s13
          %p172 = scmp.lt.s32.totalorder %s171, 63
          %s173 = scalar_select %p172, %s171, 63
          %s174 = smul.addr %s173, 2
          %s175 = smul.addr %s174, 8
          %s176 = scalar_lea.vmem %s1, %s175
          %s177 = smul.u32 32, %s13
        $region32: #{bottleneck_forward.7} parent=23 // pred_fallthru
          _
      $region24: #{bottleneck_forward.7} parent=5 // pred_fallthru
        _
      %p178 = scmp.le.s32.totalorder 1, %s13
      %p179 = scmp.lt.s32.totalorder %s13, 3
      %p180 = pnand %p178, %p179
      %p181 = pneg %p180
      // Predicated region
      $region33: #{bottleneck_forward.7} parent=5 // pred_check
        _
      $region34: #{bottleneck_forward.7} parent=5 // pred_check_branch
        %183 = sbr.rel (%p180) target = $region36
      $region35: #{bottleneck_forward.7} parent=5 // pred_region
        %s184 = ssub.s32 %s13, 1
        %s185 = smul.u32 32, %s18
        %p186 = scmp.lt.s32.totalorder %s185, 63
        %s187 = scalar_select %p186, %s185, 63
        %s188 = smul.addr %s187, 2
        %s189 = smul.addr %s188, 8
        %s190 = scalar_lea.vmem %s0, %s189
        %p191 = pneg %p39
        %p192 = pneg %p36
        %s193 = smul.u32 32, %s18
        %p194 = scmp.lt.s32.totalorder %s193, 63
        %s195 = scalar_select %p194, %s193, 63
        %s196 = smul.addr %s195, 2
        %s197 = smul.addr %s196, 8
        %s198 = scalar_lea.vmem %s1, %s197
        %p199 = pneg %p65
        %p200 = pneg %p62
        %p201 = pneg %p86
        %p202 = pneg %p83
        %p203 = pneg %p107
        %p204 = pneg %p104
        %p205 = pneg %p133
        %p206 = pneg %p130
        %s207 = sand.u32 %s120, 1
        %s208 = scalar_lea.sflag [#allocation3], %s207
        %s209 = sand.u32 %s120, 1
        %s210 = smul.addr %s209, 512
        %s211 = scalar_lea.vmem [#allocation2], %s210
        %s212 = smul.u32 32, %s18
        %p213 = scmp.lt.s32.totalorder %s212, 63
        %s214 = scalar_select %p213, %s212, 63
        %s215 = smul.addr %s214, 2
        %s216 = smul.addr %s215, 8
        %s217 = scalar_lea.vmem %s0, %s216
        %s218 = smul.u32 32, %s18
        %s219 = smul.u32 32, %s18
        %p220 = scmp.lt.s32.totalorder %s219, 63
        %s221 = scalar_select %p220, %s219, 63
        %s222 = smul.addr %s221, 2
        %s223 = smul.addr %s222, 8
        %s224 = scalar_lea.vmem %s1, %s223
        %s225 = smul.u32 32, %s18
        %s226 = smul.u32 32, %s18
        %v227 = vld [vmem:[%s217] sm:$0xff]
        %v228 = vld [vmem:[%s217 + $0x8] sm:$0xff]
        %v229 = vld [vmem:[%s217 + $0x10] sm:$0xff]
        %v230 = vld [vmem:[%s217 + $0x18] sm:$0xff]
        %v231 = vld [vmem:[%s217 + $0x20] sm:$0xff]
        %v232 = vld [vmem:[%s217 + $0x28] sm:$0xff]
        %v233 = vld [vmem:[%s217 + $0x30] sm:$0xff]
        %v234 = vld [vmem:[%s217 + $0x38] sm:$0xff]
        %v235 = vld [vmem:[%s217 + $0x40] sm:$0xff]
        %v236 = vld [vmem:[%s217 + $0x48] sm:$0xff]
        %v237 = vld [vmem:[%s217 + $0x50] sm:$0xff]
        %v238 = vld [vmem:[%s217 + $0x58] sm:$0xff]
        %v239 = vld [vmem:[%s217 + $0x60] sm:$0xff]
        %v240 = vld [vmem:[%s217 + $0x68] sm:$0xff]
        %v241 = vld [vmem:[%s217 + $0x70] sm:$0xff]
        %v242 = vld [vmem:[%s217 + $0x78] sm:$0xff]
        %v243 = vld [vmem:[%s217 + $0x80] sm:$0xff]
        %v244 = vld [vmem:[%s217 + $0x88] sm:$0xff]
        %v245 = vld [vmem:[%s217 + $0x90] sm:$0xff]
        %v246 = vld [vmem:[%s217 + $0x98] sm:$0xff]
        %v247 = vld [vmem:[%s217 + $0xa0] sm:$0xff]
        %v248 = vld [vmem:[%s217 + $0xa8] sm:$0xff]
        %v249 = vld [vmem:[%s217 + $0xb0] sm:$0xff]
        %v250 = vld [vmem:[%s217 + $0xb8] sm:$0xff]
        %v251 = vld [vmem:[%s217 + $0xc0] sm:$0xff]
        %v252 = vld [vmem:[%s217 + $0xc8] sm:$0xff]
        %v253 = vld [vmem:[%s217 + $0xd0] sm:$0xff]
        %v254 = vld [vmem:[%s217 + $0xd8] sm:$0xff]
        %v255 = vld [vmem:[%s217 + $0xe0] sm:$0xff]
        %v256 = vld [vmem:[%s217 + $0xe8] sm:$0xff]
        %v257 = vld [vmem:[%s217 + $0xf0] sm:$0xff]
        %v258 = vld [vmem:[%s217 + $0xf8] sm:$0xff]
        %v259 = vld [vmem:[%s217 + $0x100] sm:$0xff]
        %v260 = vld [vmem:[%s217 + $0x108] sm:$0xff]
        %v261 = vld [vmem:[%s217 + $0x110] sm:$0xff]
        %v262 = vld [vmem:[%s217 + $0x118] sm:$0xff]
        %v263 = vld [vmem:[%s217 + $0x120] sm:$0xff]
        %v264 = vld [vmem:[%s217 + $0x128] sm:$0xff]
        %v265 = vld [vmem:[%s217 + $0x130] sm:$0xff]
        %v266 = vld [vmem:[%s217 + $0x138] sm:$0xff]
        %v267 = vld [vmem:[%s217 + $0x140] sm:$0xff]
        %v268 = vld [vmem:[%s217 + $0x148] sm:$0xff]
        %v269 = vld [vmem:[%s217 + $0x150] sm:$0xff]
        %v270 = vld [vmem:[%s217 + $0x158] sm:$0xff]
        %v271 = vld [vmem:[%s217 + $0x160] sm:$0xff]
        %v272 = vld [vmem:[%s217 + $0x168] sm:$0xff]
        %v273 = vld [vmem:[%s217 + $0x170] sm:$0xff]
        %v274 = vld [vmem:[%s217 + $0x178] sm:$0xff]
        %v275 = vld [vmem:[%s217 + $0x180] sm:$0xff]
        %v276 = vld [vmem:[%s217 + $0x188] sm:$0xff]
        %v277 = vld [vmem:[%s217 + $0x190] sm:$0xff]
        %v278 = vld [vmem:[%s217 + $0x198] sm:$0xff]
        %v279 = vld [vmem:[%s217 + $0x1a0] sm:$0xff]
        %v280 = vld [vmem:[%s217 + $0x1a8] sm:$0xff]
        %v281 = vld [vmem:[%s217 + $0x1b0] sm:$0xff]
        %v282 = vld [vmem:[%s217 + $0x1b8] sm:$0xff]
        %v283 = vld [vmem:[%s217 + $0x1c0] sm:$0xff]
        %v284 = vld [vmem:[%s217 + $0x1c8] sm:$0xff]
        %v285 = vld [vmem:[%s217 + $0x1d0] sm:$0xff]
        %v286 = vld [vmem:[%s217 + $0x1d8] sm:$0xff]
        %v287 = vld [vmem:[%s217 + $0x1e0] sm:$0xff]
        %v288 = vld [vmem:[%s217 + $0x1e8] sm:$0xff]
        %v289 = vld [vmem:[%s217 + $0x1f0] sm:$0xff]
        %v290 = vld [vmem:[%s217 + $0x1f8] sm:$0xff]
        %v291 = vld [vmem:[%s2] sm:$0x3]
        %v293 = vlaneseq
        %v294 = vshrl.u32 %v293, 7
        %v295 = vsub.s32 0, %v294
        %v296 = vrot.slane %v291, %v295
        %v297 = vlaneseq
        %v298 = vshrl.u32 %v297, 7
        %v299 = vsub.s32 1, %v298
        %v300 = vrot.slane %v291, %v299
        %v303 = vmul.f32 %v227, %v296
        %v304 = vmul.f32 %v228, %v300
        %v305 = vmul.f32 %v229, %v296
        %v306 = vmul.f32 %v230, %v300
        %v307 = vmul.f32 %v231, %v296
        %v308 = vmul.f32 %v232, %v300
        %v309 = vmul.f32 %v233, %v296
        %v310 = vmul.f32 %v234, %v300
        %v311 = vmul.f32 %v235, %v296
        %v312 = vmul.f32 %v236, %v300
        %v313 = vmul.f32 %v237, %v296
        %v314 = vmul.f32 %v238, %v300
        %v315 = vmul.f32 %v239, %v296
        %v316 = vmul.f32 %v240, %v300
        %v317 = vmul.f32 %v241, %v296
        %v318 = vmul.f32 %v242, %v300
        %v319 = vmul.f32 %v243, %v296
        %v320 = vmul.f32 %v244, %v300
        %v321 = vmul.f32 %v245, %v296
        %v322 = vmul.f32 %v246, %v300
        %v323 = vmul.f32 %v247, %v296
        %v324 = vmul.f32 %v248, %v300
        %v325 = vmul.f32 %v249, %v296
        %v326 = vmul.f32 %v250, %v300
        %v327 = vmul.f32 %v251, %v296
        %v328 = vmul.f32 %v252, %v300
        %v329 = vmul.f32 %v253, %v296
        %v330 = vmul.f32 %v254, %v300
        %v331 = vmul.f32 %v255, %v296
        %v332 = vmul.f32 %v256, %v300
        %v333 = vmul.f32 %v257, %v296
        %v334 = vmul.f32 %v258, %v300
        %v335 = vmul.f32 %v259, %v296
        %v336 = vmul.f32 %v260, %v300
        %v337 = vmul.f32 %v261, %v296
        %v338 = vmul.f32 %v262, %v300
        %v339 = vmul.f32 %v263, %v296
        %v340 = vmul.f32 %v264, %v300
        %v341 = vmul.f32 %v265, %v296
        %v342 = vmul.f32 %v266, %v300
        %v343 = vmul.f32 %v267, %v296
        %v344 = vmul.f32 %v268, %v300
        %v345 = vmul.f32 %v269, %v296
        %v346 = vmul.f32 %v270, %v300
        %v347 = vmul.f32 %v271, %v296
        %v348 = vmul.f32 %v272, %v300
        %v349 = vmul.f32 %v273, %v296
        %v350 = vmul.f32 %v274, %v300
        %v351 = vmul.f32 %v275, %v296
        %v352 = vmul.f32 %v276, %v300
        %v353 = vmul.f32 %v277, %v296
        %v354 = vmul.f32 %v278, %v300
        %v355 = vmul.f32 %v279, %v296
        %v356 = vmul.f32 %v280, %v300
        %v357 = vmul.f32 %v281, %v296
        %v358 = vmul.f32 %v282, %v300
        %v359 = vmul.f32 %v283, %v296
        %v360 = vmul.f32 %v284, %v300
        %v361 = vmul.f32 %v285, %v296
        %v362 = vmul.f32 %v286, %v300
        %v363 = vmul.f32 %v287, %v296
        %v364 = vmul.f32 %v288, %v300
        %v365 = vmul.f32 %v289, %v296
        %v366 = vmul.f32 %v290, %v300
        %v367 = vld [vmem:[%s3] sm:$0x3]
        %v369 = vlaneseq
        %v370 = vshrl.u32 %v369, 7
        %v371 = vsub.s32 0, %v370
        %v372 = vrot.slane %v367, %v371
        %v373 = vlaneseq
        %v374 = vshrl.u32 %v373, 7
        %v375 = vsub.s32 1, %v374
        %v376 = vrot.slane %v367, %v375
        %v379 = vadd.f32 %v303, %v372
        %v380 = vadd.f32 %v304, %v376
        %v381 = vadd.f32 %v305, %v372
        %v382 = vadd.f32 %v306, %v376
        %v383 = vadd.f32 %v307, %v372
        %v384 = vadd.f32 %v308, %v376
        %v385 = vadd.f32 %v309, %v372
        %v386 = vadd.f32 %v310, %v376
        %v387 = vadd.f32 %v311, %v372
        %v388 = vadd.f32 %v312, %v376
        %v389 = vadd.f32 %v313, %v372
        %v390 = vadd.f32 %v314, %v376
        %v391 = vadd.f32 %v315, %v372
        %v392 = vadd.f32 %v316, %v376
        %v393 = vadd.f32 %v317, %v372
        %v394 = vadd.f32 %v318, %v376
        %v395 = vadd.f32 %v319, %v372
        %v396 = vadd.f32 %v320, %v376
        %v397 = vadd.f32 %v321, %v372
        %v398 = vadd.f32 %v322, %v376
        %v399 = vadd.f32 %v323, %v372
        %v400 = vadd.f32 %v324, %v376
        %v401 = vadd.f32 %v325, %v372
        %v402 = vadd.f32 %v326, %v376
        %v403 = vadd.f32 %v327, %v372
        %v404 = vadd.f32 %v328, %v376
        %v405 = vadd.f32 %v329, %v372
        %v406 = vadd.f32 %v330, %v376
        %v407 = vadd.f32 %v331, %v372
        %v408 = vadd.f32 %v332, %v376
        %v409 = vadd.f32 %v333, %v372
        %v410 = vadd.f32 %v334, %v376
        %v411 = vadd.f32 %v335, %v372
        %v412 = vadd.f32 %v336, %v376
        %v413 = vadd.f32 %v337, %v372
        %v414 = vadd.f32 %v338, %v376
        %v415 = vadd.f32 %v339, %v372
        %v416 = vadd.f32 %v340, %v376
        %v417 = vadd.f32 %v341, %v372
        %v418 = vadd.f32 %v342, %v376
        %v419 = vadd.f32 %v343, %v372
        %v420 = vadd.f32 %v344, %v376
        %v421 = vadd.f32 %v345, %v372
        %v422 = vadd.f32 %v346, %v376
        %v423 = vadd.f32 %v347, %v372
        %v424 = vadd.f32 %v348, %v376
        %v425 = vadd.f32 %v349, %v372
        %v426 = vadd.f32 %v350, %v376
        %v427 = vadd.f32 %v351, %v372
        %v428 = vadd.f32 %v352, %v376
        %v429 = vadd.f32 %v353, %v372
        %v430 = vadd.f32 %v354, %v376
        %v431 = vadd.f32 %v355, %v372
        %v432 = vadd.f32 %v356, %v376
        %v433 = vadd.f32 %v357, %v372
        %v434 = vadd.f32 %v358, %v376
        %v435 = vadd.f32 %v359, %v372
        %v436 = vadd.f32 %v360, %v376
        %v437 = vadd.f32 %v361, %v372
        %v438 = vadd.f32 %v362, %v376
        %v439 = vadd.f32 %v363, %v372
        %v440 = vadd.f32 %v364, %v376
        %v441 = vadd.f32 %v365, %v372
        %v442 = vadd.f32 %v366, %v376
        %v443 = vld [vmem:[%s224] sm:$0xff]
        %v444 = vld [vmem:[%s224 + $0x8] sm:$0xff]
        %v445 = vld [vmem:[%s224 + $0x10] sm:$0xff]
        %v446 = vld [vmem:[%s224 + $0x18] sm:$0xff]
        %v447 = vld [vmem:[%s224 + $0x20] sm:$0xff]
        %v448 = vld [vmem:[%s224 + $0x28] sm:$0xff]
        %v449 = vld [vmem:[%s224 + $0x30] sm:$0xff]
        %v450 = vld [vmem:[%s224 + $0x38] sm:$0xff]
        %v451 = vld [vmem:[%s224 + $0x40] sm:$0xff]
        %v452 = vld [vmem:[%s224 + $0x48] sm:$0xff]
        %v453 = vld [vmem:[%s224 + $0x50] sm:$0xff]
        %v454 = vld [vmem:[%s224 + $0x58] sm:$0xff]
        %v455 = vld [vmem:[%s224 + $0x60] sm:$0xff]
        %v456 = vld [vmem:[%s224 + $0x68] sm:$0xff]
        %v457 = vld [vmem:[%s224 + $0x70] sm:$0xff]
        %v458 = vld [vmem:[%s224 + $0x78] sm:$0xff]
        %v459 = vld [vmem:[%s224 + $0x80] sm:$0xff]
        %v460 = vld [vmem:[%s224 + $0x88] sm:$0xff]
        %v461 = vld [vmem:[%s224 + $0x90] sm:$0xff]
        %v462 = vld [vmem:[%s224 + $0x98] sm:$0xff]
        %v463 = vld [vmem:[%s224 + $0xa0] sm:$0xff]
        %v464 = vld [vmem:[%s224 + $0xa8] sm:$0xff]
        %v465 = vld [vmem:[%s224 + $0xb0] sm:$0xff]
        %v466 = vld [vmem:[%s224 + $0xb8] sm:$0xff]
        %v467 = vld [vmem:[%s224 + $0xc0] sm:$0xff]
        %v468 = vld [vmem:[%s224 + $0xc8] sm:$0xff]
        %v469 = vld [vmem:[%s224 + $0xd0] sm:$0xff]
        %v470 = vld [vmem:[%s224 + $0xd8] sm:$0xff]
        %v471 = vld [vmem:[%s224 + $0xe0] sm:$0xff]
        %v472 = vld [vmem:[%s224 + $0xe8] sm:$0xff]
        %v473 = vld [vmem:[%s224 + $0xf0] sm:$0xff]
        %v474 = vld [vmem:[%s224 + $0xf8] sm:$0xff]
        %v475 = vld [vmem:[%s224 + $0x100] sm:$0xff]
        %v476 = vld [vmem:[%s224 + $0x108] sm:$0xff]
        %v477 = vld [vmem:[%s224 + $0x110] sm:$0xff]
        %v478 = vld [vmem:[%s224 + $0x118] sm:$0xff]
        %v479 = vld [vmem:[%s224 + $0x120] sm:$0xff]
        %v480 = vld [vmem:[%s224 + $0x128] sm:$0xff]
        %v481 = vld [vmem:[%s224 + $0x130] sm:$0xff]
        %v482 = vld [vmem:[%s224 + $0x138] sm:$0xff]
        %v483 = vld [vmem:[%s224 + $0x140] sm:$0xff]
        %v484 = vld [vmem:[%s224 + $0x148] sm:$0xff]
        %v485 = vld [vmem:[%s224 + $0x150] sm:$0xff]
        %v486 = vld [vmem:[%s224 + $0x158] sm:$0xff]
        %v487 = vld [vmem:[%s224 + $0x160] sm:$0xff]
        %v488 = vld [vmem:[%s224 + $0x168] sm:$0xff]
        %v489 = vld [vmem:[%s224 + $0x170] sm:$0xff]
        %v490 = vld [vmem:[%s224 + $0x178] sm:$0xff]
        %v491 = vld [vmem:[%s224 + $0x180] sm:$0xff]
        %v492 = vld [vmem:[%s224 + $0x188] sm:$0xff]
        %v493 = vld [vmem:[%s224 + $0x190] sm:$0xff]
        %v494 = vld [vmem:[%s224 + $0x198] sm:$0xff]
        %v495 = vld [vmem:[%s224 + $0x1a0] sm:$0xff]
        %v496 = vld [vmem:[%s224 + $0x1a8] sm:$0xff]
        %v497 = vld [vmem:[%s224 + $0x1b0] sm:$0xff]
        %v498 = vld [vmem:[%s224 + $0x1b8] sm:$0xff]
        %v499 = vld [vmem:[%s224 + $0x1c0] sm:$0xff]
        %v500 = vld [vmem:[%s224 + $0x1c8] sm:$0xff]
        %v501 = vld [vmem:[%s224 + $0x1d0] sm:$0xff]
        %v502 = vld [vmem:[%s224 + $0x1d8] sm:$0xff]
        %v503 = vld [vmem:[%s224 + $0x1e0] sm:$0xff]
        %v504 = vld [vmem:[%s224 + $0x1e8] sm:$0xff]
        %v505 = vld [vmem:[%s224 + $0x1f0] sm:$0xff]
        %v506 = vld [vmem:[%s224 + $0x1f8] sm:$0xff]
        %v507 = vadd.f32 %v379, %v443
        %v508 = vadd.f32 %v380, %v444
        %v509 = vadd.f32 %v381, %v445
        %v510 = vadd.f32 %v382, %v446
        %v511 = vadd.f32 %v383, %v447
        %v512 = vadd.f32 %v384, %v448
        %v513 = vadd.f32 %v385, %v449
        %v514 = vadd.f32 %v386, %v450
        %v515 = vadd.f32 %v387, %v451
        %v516 = vadd.f32 %v388, %v452
        %v517 = vadd.f32 %v389, %v453
        %v518 = vadd.f32 %v390, %v454
        %v519 = vadd.f32 %v391, %v455
        %v520 = vadd.f32 %v392, %v456
        %v521 = vadd.f32 %v393, %v457
        %v522 = vadd.f32 %v394, %v458
        %v523 = vadd.f32 %v395, %v459
        %v524 = vadd.f32 %v396, %v460
        %v525 = vadd.f32 %v397, %v461
        %v526 = vadd.f32 %v398, %v462
        %v527 = vadd.f32 %v399, %v463
        %v528 = vadd.f32 %v400, %v464
        %v529 = vadd.f32 %v401, %v465
        %v530 = vadd.f32 %v402, %v466
        %v531 = vadd.f32 %v403, %v467
        %v532 = vadd.f32 %v404, %v468
        %v533 = vadd.f32 %v405, %v469
        %v534 = vadd.f32 %v406, %v470
        %v535 = vadd.f32 %v407, %v471
        %v536 = vadd.f32 %v408, %v472
        %v537 = vadd.f32 %v409, %v473
        %v538 = vadd.f32 %v410, %v474
        %v539 = vadd.f32 %v411, %v475
        %v540 = vadd.f32 %v412, %v476
        %v541 = vadd.f32 %v413, %v477
        %v542 = vadd.f32 %v414, %v478
        %v543 = vadd.f32 %v415, %v479
        %v544 = vadd.f32 %v416, %v480
        %v545 = vadd.f32 %v417, %v481
        %v546 = vadd.f32 %v418, %v482
        %v547 = vadd.f32 %v419, %v483
        %v548 = vadd.f32 %v420, %v484
        %v549 = vadd.f32 %v421, %v485
        %v550 = vadd.f32 %v422, %v486
        %v551 = vadd.f32 %v423, %v487
        %v552 = vadd.f32 %v424, %v488
        %v553 = vadd.f32 %v425, %v489
        %v554 = vadd.f32 %v426, %v490
        %v555 = vadd.f32 %v427, %v491
        %v556 = vadd.f32 %v428, %v492
        %v557 = vadd.f32 %v429, %v493
        %v558 = vadd.f32 %v430, %v494
        %v559 = vadd.f32 %v431, %v495
        %v560 = vadd.f32 %v432, %v496
        %v561 = vadd.f32 %v433, %v497
        %v562 = vadd.f32 %v434, %v498
        %v563 = vadd.f32 %v435, %v499
        %v564 = vadd.f32 %v436, %v500
        %v565 = vadd.f32 %v437, %v501
        %v566 = vadd.f32 %v438, %v502
        %v567 = vadd.f32 %v439, %v503
        %v568 = vadd.f32 %v440, %v504
        %v569 = vadd.f32 %v441, %v505
        %v570 = vadd.f32 %v442, %v506
        %v571 = vmax.f32 %v507, 0.0
        %v572 = vmax.f32 %v508, 0.0
        %v573 = vmax.f32 %v509, 0.0
        %v574 = vmax.f32 %v510, 0.0
        %v575 = vmax.f32 %v511, 0.0
        %v576 = vmax.f32 %v512, 0.0
        %v577 = vmax.f32 %v513, 0.0
        %v578 = vmax.f32 %v514, 0.0
        %v579 = vmax.f32 %v515, 0.0
        %v580 = vmax.f32 %v516, 0.0
        %v581 = vmax.f32 %v517, 0.0
        %v582 = vmax.f32 %v518, 0.0
        %v583 = vmax.f32 %v519, 0.0
        %v584 = vmax.f32 %v520, 0.0
        %v585 = vmax.f32 %v521, 0.0
        %v586 = vmax.f32 %v522, 0.0
        %v587 = vmax.f32 %v523, 0.0
        %v588 = vmax.f32 %v524, 0.0
        %v589 = vmax.f32 %v525, 0.0
        %v590 = vmax.f32 %v526, 0.0
        %v591 = vmax.f32 %v527, 0.0
        %v592 = vmax.f32 %v528, 0.0
        %v593 = vmax.f32 %v529, 0.0
        %v594 = vmax.f32 %v530, 0.0
        %v595 = vmax.f32 %v531, 0.0
        %v596 = vmax.f32 %v532, 0.0
        %v597 = vmax.f32 %v533, 0.0
        %v598 = vmax.f32 %v534, 0.0
        %v599 = vmax.f32 %v535, 0.0
        %v600 = vmax.f32 %v536, 0.0
        %v601 = vmax.f32 %v537, 0.0
        %v602 = vmax.f32 %v538, 0.0
        %v603 = vmax.f32 %v539, 0.0
        %v604 = vmax.f32 %v540, 0.0
        %v605 = vmax.f32 %v541, 0.0
        %v606 = vmax.f32 %v542, 0.0
        %v607 = vmax.f32 %v543, 0.0
        %v608 = vmax.f32 %v544, 0.0
        %v609 = vmax.f32 %v545, 0.0
        %v610 = vmax.f32 %v546, 0.0
        %v611 = vmax.f32 %v547, 0.0
        %v612 = vmax.f32 %v548, 0.0
        %v613 = vmax.f32 %v549, 0.0
        %v614 = vmax.f32 %v550, 0.0
        %v615 = vmax.f32 %v551, 0.0
        %v616 = vmax.f32 %v552, 0.0
        %v617 = vmax.f32 %v553, 0.0
        %v618 = vmax.f32 %v554, 0.0
        %v619 = vmax.f32 %v555, 0.0
        %v620 = vmax.f32 %v556, 0.0
        %v621 = vmax.f32 %v557, 0.0
        %v622 = vmax.f32 %v558, 0.0
        %v623 = vmax.f32 %v559, 0.0
        %v624 = vmax.f32 %v560, 0.0
        %v625 = vmax.f32 %v561, 0.0
        %v626 = vmax.f32 %v562, 0.0
        %v627 = vmax.f32 %v563, 0.0
        %v628 = vmax.f32 %v564, 0.0
        %v629 = vmax.f32 %v565, 0.0
        %v630 = vmax.f32 %v566, 0.0
        %v631 = vmax.f32 %v567, 0.0
        %v632 = vmax.f32 %v568, 0.0
        %v633 = vmax.f32 %v569, 0.0
        %v634 = vmax.f32 %v570, 0.0
        %635 = vst [vmem:[%s211] sm:$0xff] %v571
        %636 = vst [vmem:[%s211 + $0x8] sm:$0xff] %v572
        %637 = vst [vmem:[%s211 + $0x10] sm:$0xff] %v573
        %638 = vst [vmem:[%s211 + $0x18] sm:$0xff] %v574
        %639 = vst [vmem:[%s211 + $0x20] sm:$0xff] %v575
        %640 = vst [vmem:[%s211 + $0x28] sm:$0xff] %v576
        %641 = vst [vmem:[%s211 + $0x30] sm:$0xff] %v577
        %642 = vst [vmem:[%s211 + $0x38] sm:$0xff] %v578
        %643 = vst [vmem:[%s211 + $0x40] sm:$0xff] %v579
        %644 = vst [vmem:[%s211 + $0x48] sm:$0xff] %v580
        %645 = vst [vmem:[%s211 + $0x50] sm:$0xff] %v581
        %646 = vst [vmem:[%s211 + $0x58] sm:$0xff] %v582
        %647 = vst [vmem:[%s211 + $0x60] sm:$0xff] %v583
        %648 = vst [vmem:[%s211 + $0x68] sm:$0xff] %v584
        %649 = vst [vmem:[%s211 + $0x70] sm:$0xff] %v585
        %650 = vst [vmem:[%s211 + $0x78] sm:$0xff] %v586
        %651 = vst [vmem:[%s211 + $0x80] sm:$0xff] %v587
        %652 = vst [vmem:[%s211 + $0x88] sm:$0xff] %v588
        %653 = vst [vmem:[%s211 + $0x90] sm:$0xff] %v589
        %654 = vst [vmem:[%s211 + $0x98] sm:$0xff] %v590
        %655 = vst [vmem:[%s211 + $0xa0] sm:$0xff] %v591
        %656 = vst [vmem:[%s211 + $0xa8] sm:$0xff] %v592
        %657 = vst [vmem:[%s211 + $0xb0] sm:$0xff] %v593
        %658 = vst [vmem:[%s211 + $0xb8] sm:$0xff] %v594
        %659 = vst [vmem:[%s211 + $0xc0] sm:$0xff] %v595
        %660 = vst [vmem:[%s211 + $0xc8] sm:$0xff] %v596
        %661 = vst [vmem:[%s211 + $0xd0] sm:$0xff] %v597
        %662 = vst [vmem:[%s211 + $0xd8] sm:$0xff] %v598
        %663 = vst [vmem:[%s211 + $0xe0] sm:$0xff] %v599
        %664 = vst [vmem:[%s211 + $0xe8] sm:$0xff] %v600
        %665 = vst [vmem:[%s211 + $0xf0] sm:$0xff] %v601
        %666 = vst [vmem:[%s211 + $0xf8] sm:$0xff] %v602
        %667 = vst [vmem:[%s211 + $0x100] sm:$0xff] %v603
        %668 = vst [vmem:[%s211 + $0x108] sm:$0xff] %v604
        %669 = vst [vmem:[%s211 + $0x110] sm:$0xff] %v605
        %670 = vst [vmem:[%s211 + $0x118] sm:$0xff] %v606
        %671 = vst [vmem:[%s211 + $0x120] sm:$0xff] %v607
        %672 = vst [vmem:[%s211 + $0x128] sm:$0xff] %v608
        %673 = vst [vmem:[%s211 + $0x130] sm:$0xff] %v609
        %674 = vst [vmem:[%s211 + $0x138] sm:$0xff] %v610
        %675 = vst [vmem:[%s211 + $0x140] sm:$0xff] %v611
        %676 = vst [vmem:[%s211 + $0x148] sm:$0xff] %v612
        %677 = vst [vmem:[%s211 + $0x150] sm:$0xff] %v613
        %678 = vst [vmem:[%s211 + $0x158] sm:$0xff] %v614
        %679 = vst [vmem:[%s211 + $0x160] sm:$0xff] %v615
        %680 = vst [vmem:[%s211 + $0x168] sm:$0xff] %v616
        %681 = vst [vmem:[%s211 + $0x170] sm:$0xff] %v617
        %682 = vst [vmem:[%s211 + $0x178] sm:$0xff] %v618
        %683 = vst [vmem:[%s211 + $0x180] sm:$0xff] %v619
        %684 = vst [vmem:[%s211 + $0x188] sm:$0xff] %v620
        %685 = vst [vmem:[%s211 + $0x190] sm:$0xff] %v621
        %686 = vst [vmem:[%s211 + $0x198] sm:$0xff] %v622
        %687 = vst [vmem:[%s211 + $0x1a0] sm:$0xff] %v623
        %688 = vst [vmem:[%s211 + $0x1a8] sm:$0xff] %v624
        %689 = vst [vmem:[%s211 + $0x1b0] sm:$0xff] %v625
        %690 = vst [vmem:[%s211 + $0x1b8] sm:$0xff] %v626
        %691 = vst [vmem:[%s211 + $0x1c0] sm:$0xff] %v627
        %692 = vst [vmem:[%s211 + $0x1c8] sm:$0xff] %v628
        %693 = vst [vmem:[%s211 + $0x1d0] sm:$0xff] %v629
        %694 = vst [vmem:[%s211 + $0x1d8] sm:$0xff] %v630
        %695 = vst [vmem:[%s211 + $0x1e0] sm:$0xff] %v631
        %696 = vst [vmem:[%s211 + $0x1e8] sm:$0xff] %v632
        %697 = vst [vmem:[%s211 + $0x1f0] sm:$0xff] %v633
        %698 = vst [vmem:[%s211 + $0x1f8] sm:$0xff] %v634
        %s699 = sand.u32 %s120, 1
        %s700 = scalar_lea.sflag [#allocation3], %s699
        %s701 = sand.u32 %s120, 1
        %s702 = smul.addr %s701, 512
        %s703 = scalar_lea.vmem [#allocation2], %s702
        // Predicated region
        $region37: #{bottleneck_forward.7} parent=35 // pred_check
          %p704 = pneg %p130
        $region38: #{bottleneck_forward.7} parent=35 // pred_check_branch
          %706 = sbr.rel (%p704) target = $region40
        $region39: #{bottleneck_forward.7} parent=35 // pred_region
          %s707 = smul.u32 32, %s18
          %s709 = ssub.s32 8192, 8192
          %710 = vsyncadd %s700, %s709
          %s711 = smul.addr %s707, 2
          %s712 = smul.addr %s711, 128
          %s713 = scalar_lea.hbm %s4, %s712
          %s714 = sshll.u32 %s703, 4
          %s715 = int_to_ptr.vmem [resolvable:$true] %s714
          %720 = dma.vmem_to_hbm [thread:$0]  %s715, 8192, %s713, %s700, 256, 256, 16
        $region40: #{bottleneck_forward.7} parent=35 // pred_fallthru
          _
      $region36: #{bottleneck_forward.7} parent=5 // pred_fallthru
        _
      %p721 = scmp.le.s32.totalorder 2, %s13
      // Predicated region
      $region41: #{bottleneck_forward.7} parent=5 // pred_check
        %p722 = pneg %p721
      $region42: #{bottleneck_forward.7} parent=5 // pred_check_branch
        %724 = sbr.rel (%p722) target = $region44
      $region43: #{bottleneck_forward.7} parent=5 // pred_region
        %s725 = ssub.s32 %s13, 2
        // Predicated region
        $region45: #{bottleneck_forward.7} parent=43 // pred_check
          %p726 = pneg %p136
        $region46: #{bottleneck_forward.7} parent=43 // pred_check_branch
          %728 = sbr.rel (%p726) target = $region48
        $region47: #{bottleneck_forward.7} parent=43 // pred_region
          %s729 = sand.u32 %s121, 1
          %s730 = scalar_lea.sflag [#allocation3], %s729
          %s731 = sand.u32 %s121, 1
          %s732 = smul.addr %s731, 512
          %s733 = scalar_lea.vmem [#allocation2], %s732
          %734 = dma.done %s730, 8192
        $region48: #{bottleneck_forward.7} parent=43 // pred_fallthru
          _
      $region44: #{bottleneck_forward.7} parent=5 // pred_fallthru
        _
    $region6: #{bottleneck_forward.7} parent=1 // loop_footer
      %s17 = sadd.s32 1, %s13
    $region7: #{bottleneck_forward.7} parent=1 // loop_footer_branch
      %12 = sbr.rel target = $region3
    $region8: #{bottleneck_forward.7} parent=1 // loop_exit
      _
    %735 = vsyncpa [#allocation3], 1
    %s736 = scalar_lea.sflag [#allocation3], 1
    %737 = vsyncpa %s736, 1

// kernel: bottleneck_forward.5
$region0: #{bottleneck_forward.5}
  #allocation0 [shape = 'u32[]', space=smem, size = 0x4, offset = 0x4, fixed_abs, tag = 'smem constant byte address 0x4 - core index']
  #allocation1 [shape = 'u32[144,128]{1,0:T(1,128)}', space=vmem, size = 0x12000, scoped, tag = 'internal scratch']
  #allocation2 [shape = 'f32[297,128]{1,0:T(8,128)}', space=vmem, size = 0x26000, scoped, tag = 'scratch operand']
  %s0 = inlined_call_operand.vmem [shape: f32[2,256,128], index: 0, kind: input, shape index: {}]
  %s1 = inlined_call_operand.vmem [shape: f32[1,128], index: 1, kind: input, shape index: {}]
  %s2 = inlined_call_operand.vmem [shape: f32[1,128], index: 2, kind: input, shape index: {}]
  %s3 = inlined_call_operand.vmem [shape: f32[9,128,128], index: 3, kind: input, shape index: {}]
  %s4 = inlined_call_operand.vmem [shape: f32[2,256,128], index: 4, kind: output, shape index: {0}]
  %s5 = inlined_call_operand.vmem [shape: f32[2,2,128], index: 5, kind: output, shape index: {1}]
  %6 = xla_tuple %s4, %s5
  %s7 = sld [smem:[#allocation0]]
  $region57: #{bottleneck_forward.5} parent=0
    _
  %s9 = ssub.s32 1, %s7
  %s10 = scalar_select 0, %s9, %s7
  loop: start=0, step=1, limit=4
  $region2: #{bottleneck_forward.5} parent=0 // loop_pre_header
    _
  $region3: #{bottleneck_forward.5} parent=0 // loop_header
    %s12 = sphi 0, %s16
    %p13 = scmp.ge.s32.totalorder %s12, 4
    %s22 = sphi 0, %s24
    %s25 = sphi 0, %s22
    %s26 = sphi 0, %s25
    %s42 = sphi 0, %s26
    %s46 = sphi 0, %s46
    %s48 = sphi 0, %s46
    %s49 = sphi 0, %s48
    %s63 = sphi 0, %s49
    %s67 = sphi 0, %s67
    %s69 = sphi 0, %s67
    %s70 = sphi 0, %s69
    %s84 = sphi 0, %s70
    %s88 = sphi 0, %s88
    %s90 = sphi 0, %s88
    %s91 = sphi 0, %s90
    %s105 = sphi 0, %s91
    %s111 = sphi 0, %s113
    %s114 = sphi 0, %s111
    %s115 = sphi 0, %s114
    %s131 = sphi 0, %s115
    %s137 = sphi 0, %s139
    %s140 = sphi 0, %s137
    %s141 = sphi 0, %s140
    %s157 = sphi 0, %s141
  $region4: #{bottleneck_forward.5} parent=0 // loop_header_branch
    %15 = sbr.rel (%p13) target = $region8
  $region5: #{bottleneck_forward.5} parent=0 // loop_body
    %s17 = ssub.s32 %s12, 1
    %s18 = ssub.s32 %s12, 2
    %s19 = sadd.s32 %s12, 1
    %s20 = ssub.s32 %s12, %s19
    %p21 = scmp.eq.s32.totalorder %s20, 0
    %s23 = sadd.s32 %s22, 1
    %s24 = scalar_select %p21, %s22, %s23
    %p27 = pneg %p21
    %p28 = scmp.eq.s32.totalorder %s12, 1
    %p29 = por %p27, %p28
    %p30 = scmp.ne.s32.totalorder %s22, %s25
    %p31 = scmp.eq.s32.totalorder %s12, 0
    %p32 = por %p30, %p31
    %p33 = scmp.ne.s32.totalorder %s22, %s25
    %p34 = scmp.eq.s32.totalorder %s17, 1
    %p35 = por %p33, %p34
    %p36 = scmp.ne.s32.totalorder %s25, %s26
    %p37 = scmp.eq.s32.totalorder %s17, 0
    %p38 = por %p36, %p37
    %p39 = scmp.ne.s32.totalorder %s25, %s26
    %p40 = scmp.eq.s32.totalorder %s18, 1
    %p41 = por %p39, %p40
    %p43 = scmp.ne.s32.totalorder %s26, %s42
    %p44 = scmp.eq.s32.totalorder %s18, 0
    %p45 = por %p43, %p44
    %s47 = sadd.s32 %s46, 1
    %p50 = scmp.eq.s32.totalorder %s12, 1
    %p51 = scmp.ne.s32.totalorder %s46, %s48
    %p52 = scmp.eq.s32.totalorder %s12, 0
    %p53 = por %p51, %p52
    %p54 = scmp.ne.s32.totalorder %s46, %s48
    %p55 = scmp.eq.s32.totalorder %s17, 1
    %p56 = por %p54, %p55
    %p57 = scmp.ne.s32.totalorder %s48, %s49
    %p58 = scmp.eq.s32.totalorder %s17, 0
    %p59 = por %p57, %p58
    %p60 = scmp.ne.s32.totalorder %s48, %s49
    %p61 = scmp.eq.s32.totalorder %s18, 1
    %p62 = por %p60, %p61
    %p64 = scmp.ne.s32.totalorder %s49, %s63
    %p65 = scmp.eq.s32.totalorder %s18, 0
    %p66 = por %p64, %p65
    %s68 = sadd.s32 %s67, 1
    %p71 = scmp.eq.s32.totalorder %s12, 1
    %p72 = scmp.ne.s32.totalorder %s67, %s69
    %p73 = scmp.eq.s32.totalorder %s12, 0
    %p74 = por %p72, %p73
    %p75 = scmp.ne.s32.totalorder %s67, %s69
    %p76 = scmp.eq.s32.totalorder %s17, 1
    %p77 = por %p75, %p76
    %p78 = scmp.ne.s32.totalorder %s69, %s70
    %p79 = scmp.eq.s32.totalorder %s17, 0
    %p80 = por %p78, %p79
    %p81 = scmp.ne.s32.totalorder %s69, %s70
    %p82 = scmp.eq.s32.totalorder %s18, 1
    %p83 = por %p81, %p82
    %p85 = scmp.ne.s32.totalorder %s70, %s84
    %p86 = scmp.eq.s32.totalorder %s18, 0
    %p87 = por %p85, %p86
    %s89 = sadd.s32 %s88, 1
    %p92 = scmp.eq.s32.totalorder %s12, 1
    %p93 = scmp.ne.s32.totalorder %s88, %s90
    %p94 = scmp.eq.s32.totalorder %s12, 0
    %p95 = por %p93, %p94
    %p96 = scmp.ne.s32.totalorder %s88, %s90
    %p97 = scmp.eq.s32.totalorder %s17, 1
    %p98 = por %p96, %p97
    %p99 = scmp.ne.s32.totalorder %s90, %s91
    %p100 = scmp.eq.s32.totalorder %s17, 0
    %p101 = por %p99, %p100
    %p102 = scmp.ne.s32.totalorder %s90, %s91
    %p103 = scmp.eq.s32.totalorder %s18, 1
    %p104 = por %p102, %p103
    %p106 = scmp.ne.s32.totalorder %s91, %s105
    %p107 = scmp.eq.s32.totalorder %s18, 0
    %p108 = por %p106, %p107
    %s109 = ssub.s32 %s12, %s19
    %p110 = scmp.eq.s32.totalorder %s109, 0
    %s112 = sadd.s32 %s111, 1
    %s113 = scalar_select %p110, %s111, %s112
    %p116 = pneg %p110
    %p117 = scmp.eq.s32.totalorder %s12, 1
    %p118 = por %p116, %p117
    %p119 = scmp.ne.s32.totalorder %s111, %s114
    %p120 = scmp.eq.s32.totalorder %s12, 0
    %p121 = por %p119, %p120
    %p122 = scmp.ne.s32.totalorder %s111, %s114
    %p123 = scmp.eq.s32.totalorder %s17, 1
    %p124 = por %p122, %p123
    %p125 = scmp.ne.s32.totalorder %s114, %s115
    %p126 = scmp.eq.s32.totalorder %s17, 0
    %p127 = por %p125, %p126
    %p128 = scmp.ne.s32.totalorder %s114, %s115
    %p129 = scmp.eq.s32.totalorder %s18, 1
    %p130 = por %p128, %p129
    %p132 = scmp.ne.s32.totalorder %s115, %s131
    %p133 = scmp.eq.s32.totalorder %s18, 0
    %p134 = por %p132, %p133
    %s135 = ssub.s32 %s12, %s19
    %p136 = scmp.eq.s32.totalorder %s135, 0
    %s138 = sadd.s32 %s137, 1
    %s139 = scalar_select %p136, %s137, %s138
    %p142 = pneg %p136
    %p143 = scmp.eq.s32.totalorder %s12, 1
    %p144 = por %p142, %p143
    %p145 = scmp.ne.s32.totalorder %s137, %s140
    %p146 = scmp.eq.s32.totalorder %s12, 0
    %p147 = por %p145, %p146
    %p148 = scmp.ne.s32.totalorder %s137, %s140
    %p149 = scmp.eq.s32.totalorder %s17, 1
    %p150 = por %p148, %p149
    %p151 = scmp.ne.s32.totalorder %s140, %s141
    %p152 = scmp.eq.s32.totalorder %s17, 0
    %p153 = por %p151, %p152
    %p154 = scmp.ne.s32.totalorder %s140, %s141
    %p155 = scmp.eq.s32.totalorder %s18, 1
    %p156 = por %p154, %p155
    %p158 = scmp.ne.s32.totalorder %s141, %s157
    %p159 = scmp.eq.s32.totalorder %s18, 0
    %p160 = por %p158, %p159
    %p161 = scmp.le.s32.totalorder 1, %s12
    %p162 = scmp.lt.s32.totalorder %s12, 3
    %p163 = pnand %p161, %p162
    %p164 = pneg %p163
    // Predicated region
    $region9: #{bottleneck_forward.5} parent=5 // pred_check
      _
    $region10: #{bottleneck_forward.5} parent=5 // pred_check_branch
      %166 = sbr.rel (%p163) target = $region12
    $region11: #{bottleneck_forward.5} parent=5 // pred_region
      %s167 = ssub.s32 %s12, 1
      // Predicated region
      $region13: #{bottleneck_forward.5} parent=11 // pred_check
        %p168 = pneg %p59
      $region14: #{bottleneck_forward.5} parent=11 // pred_check_branch
        %170 = sbr.rel (%p168) target = $region16
      $region15: #{bottleneck_forward.5} parent=11 // pred_region
        _
      $region16: #{bottleneck_forward.5} parent=11 // pred_fallthru
        _
      // Predicated region
      $region17: #{bottleneck_forward.5} parent=11 // pred_check
        %p171 = pneg %p80
      $region18: #{bottleneck_forward.5} parent=11 // pred_check_branch
        %173 = sbr.rel (%p171) target = $region20
      $region19: #{bottleneck_forward.5} parent=11 // pred_region
        _
      $region20: #{bottleneck_forward.5} parent=11 // pred_fallthru
        _
      // Predicated region
      $region21: #{bottleneck_forward.5} parent=11 // pred_check
        %p174 = pneg %p101
      $region22: #{bottleneck_forward.5} parent=11 // pred_check_branch
        %176 = sbr.rel (%p174) target = $region24
      $region23: #{bottleneck_forward.5} parent=11 // pred_region
        _
      $region24: #{bottleneck_forward.5} parent=11 // pred_fallthru
        _
    $region12: #{bottleneck_forward.5} parent=5 // pred_fallthru
      _
    %p177 = scmp.lt.s32.totalorder %s12, 2
    // Predicated region
    $region25: #{bottleneck_forward.5} parent=5 // pred_check
      %p178 = pneg %p177
    $region26: #{bottleneck_forward.5} parent=5 // pred_check_branch
      %180 = sbr.rel (%p178) target = $region28
    $region27: #{bottleneck_forward.5} parent=5 // pred_region
      // Predicated region
      $region29: #{bottleneck_forward.5} parent=27 // pred_check
        %p181 = pneg %p32
      $region30: #{bottleneck_forward.5} parent=27 // pred_check_branch
        %183 = sbr.rel (%p181) target = $region32
      $region31: #{bottleneck_forward.5} parent=27 // pred_region
        %p184 = scmp.lt.s32.totalorder %s12, 1
        %s185 = scalar_select %p184, %s12, 1
        %s186 = smul.addr %s185, 32
        %s187 = smul.addr %s186, 8
        %s188 = scalar_lea.vmem %s0, %s187
      $region32: #{bottleneck_forward.5} parent=27 // pred_fallthru
        _
    $region28: #{bottleneck_forward.5} parent=5 // pred_fallthru
      _
    %p189 = scmp.le.s32.totalorder 1, %s12
    %p190 = scmp.lt.s32.totalorder %s12, 3
    %p191 = pnand %p189, %p190
    %p192 = pneg %p191
    // Predicated region
    $region33: #{bottleneck_forward.5} parent=5 // pred_check
      _
    $region34: #{bottleneck_forward.5} parent=5 // pred_check_branch
      %194 = sbr.rel (%p191) target = $region36
    $region35: #{bottleneck_forward.5} parent=5 // pred_region
      %s195 = ssub.s32 %s12, 1
      %p196 = scmp.lt.s32.totalorder %s17, 1
      %s197 = scalar_select %p196, %s17, 1
      %s198 = smul.addr %s197, 32
      %s199 = smul.addr %s198, 8
      %s200 = scalar_lea.vmem %s0, %s199
      %p201 = pneg %p38
      %p202 = pneg %p35
      %p203 = pneg %p59
      %p204 = pneg %p56
      %p205 = pneg %p80
      %p206 = pneg %p77
      %p207 = pneg %p101
      %p208 = pneg %p98
      %p209 = pneg %p127
      %p210 = pneg %p124
      %p211 = scmp.lt.s32.totalorder %s17, 1
      %s212 = scalar_select %p211, %s17, 1
      %s213 = smul.addr %s212, 32
      %s214 = smul.addr %s213, 8
      %s215 = scalar_lea.vmem %s4, %s214
      %p216 = pneg %p153
      %p217 = pneg %p150
      %p218 = scmp.lt.s32.totalorder %s17, 1
      %s219 = scalar_select %p218, %s17, 1
      %s220 = smul.addr %s219, 2
      %s221 = scalar_lea.vmem %s5, %s220
      %p222 = scmp.lt.s32.totalorder %s17, 1
      %s223 = scalar_select %p222, %s17, 1
      %s224 = smul.addr %s223, 32
      %s225 = smul.addr %s224, 8
      %s226 = scalar_lea.vmem %s0, %s225
      %p227 = scmp.lt.s32.totalorder %s17, 1
      %s228 = scalar_select %p227, %s17, 1
      %s229 = smul.addr %s228, 32
      %s230 = smul.addr %s229, 8
      %s231 = scalar_lea.vmem %s4, %s230
      %p232 = scmp.lt.s32.totalorder %s17, 1
      %s233 = scalar_select %p232, %s17, 1
      %s234 = smul.addr %s233, 2
      %s235 = scalar_lea.vmem %s5, %s234
      %v236 = vld [vmem:[%s226] sm:$0xff]
      %v237 = vld [vmem:[%s226 + $0x8] sm:$0xff]
      %v238 = vld [vmem:[%s226 + $0x10] sm:$0xff]
      %v239 = vld [vmem:[%s226 + $0x18] sm:$0xff]
      %v240 = vld [vmem:[%s226 + $0x20] sm:$0xff]
      %v241 = vld [vmem:[%s226 + $0x28] sm:$0xff]
      %v242 = vld [vmem:[%s226 + $0x30] sm:$0xff]
      %v243 = vld [vmem:[%s226 + $0x38] sm:$0xff]
      %v244 = vld [vmem:[%s226 + $0x40] sm:$0xff]
      %v245 = vld [vmem:[%s226 + $0x48] sm:$0xff]
      %v246 = vld [vmem:[%s226 + $0x50] sm:$0xff]
      %v247 = vld [vmem:[%s226 + $0x58] sm:$0xff]
      %v248 = vld [vmem:[%s226 + $0x60] sm:$0xff]
      %v249 = vld [vmem:[%s226 + $0x68] sm:$0xff]
      %v250 = vld [vmem:[%s226 + $0x70] sm:$0xff]
      %v251 = vld [vmem:[%s226 + $0x78] sm:$0xff]
      %v252 = vld [vmem:[%s226 + $0x80] sm:$0xff]
      %v253 = vld [vmem:[%s226 + $0x88] sm:$0xff]
      %v254 = vld [vmem:[%s226 + $0x90] sm:$0xff]
      %v255 = vld [vmem:[%s226 + $0x98] sm:$0xff]
      %v256 = vld [vmem:[%s226 + $0xa0] sm:$0xff]
      %v257 = vld [vmem:[%s226 + $0xa8] sm:$0xff]
      %v258 = vld [vmem:[%s226 + $0xb0] sm:$0xff]
      %v259 = vld [vmem:[%s226 + $0xb8] sm:$0xff]
      %v260 = vld [vmem:[%s226 + $0xc0] sm:$0xff]
      %v261 = vld [vmem:[%s226 + $0xc8] sm:$0xff]
      %v262 = vld [vmem:[%s226 + $0xd0] sm:$0xff]
      %v263 = vld [vmem:[%s226 + $0xd8] sm:$0xff]
      %v264 = vld [vmem:[%s226 + $0xe0] sm:$0xff]
      %v265 = vld [vmem:[%s226 + $0xe8] sm:$0xff]
      %v266 = vld [vmem:[%s226 + $0xf0] sm:$0xff]
      %v267 = vld [vmem:[%s226 + $0xf8] sm:$0xff]
      %v268 = vld [vmem:[%s1] sm:$0x1]
      %v270 = vlaneseq
      %v271 = vshrl.u32 %v270, 7
      %v272 = vsub.s32 0, %v271
      %v273 = vrot.slane %v268, %v272
      %v275 = vmul.f32 %v236, %v273
      %v276 = vmul.f32 %v237, %v273
      %v277 = vmul.f32 %v238, %v273
      %v278 = vmul.f32 %v239, %v273
      %v279 = vmul.f32 %v240, %v273
      %v280 = vmul.f32 %v241, %v273
      %v281 = vmul.f32 %v242, %v273
      %v282 = vmul.f32 %v243, %v273
      %v283 = vmul.f32 %v244, %v273
      %v284 = vmul.f32 %v245, %v273
      %v285 = vmul.f32 %v246, %v273
      %v286 = vmul.f32 %v247, %v273
      %v287 = vmul.f32 %v248, %v273
      %v288 = vmul.f32 %v249, %v273
      %v289 = vmul.f32 %v250, %v273
      %v290 = vmul.f32 %v251, %v273
      %v291 = vmul.f32 %v252, %v273
      %v292 = vmul.f32 %v253, %v273
      %v293 = vmul.f32 %v254, %v273
      %v294 = vmul.f32 %v255, %v273
      %v295 = vmul.f32 %v256, %v273
      %v296 = vmul.f32 %v257, %v273
      %v297 = vmul.f32 %v258, %v273
      %v298 = vmul.f32 %v259, %v273
      %v299 = vmul.f32 %v260, %v273
      %v300 = vmul.f32 %v261, %v273
      %v301 = vmul.f32 %v262, %v273
      %v302 = vmul.f32 %v263, %v273
      %v303 = vmul.f32 %v264, %v273
      %v304 = vmul.f32 %v265, %v273
      %v305 = vmul.f32 %v266, %v273
      %v306 = vmul.f32 %v267, %v273
      %v307 = vld [vmem:[%s2] sm:$0x1]
      %v309 = vlaneseq
      %v310 = vshrl.u32 %v309, 7
      %v311 = vsub.s32 0, %v310
      %v312 = vrot.slane %v307, %v311
      %v314 = vadd.f32 %v275, %v312
      %v315 = vadd.f32 %v276, %v312
      %v316 = vadd.f32 %v277, %v312
      %v317 = vadd.f32 %v278, %v312
      %v318 = vadd.f32 %v279, %v312
      %v319 = vadd.f32 %v280, %v312
      %v320 = vadd.f32 %v281, %v312
      %v321 = vadd.f32 %v282, %v312
      %v322 = vadd.f32 %v283, %v312
      %v323 = vadd.f32 %v284, %v312
      %v324 = vadd.f32 %v285, %v312
      %v325 = vadd.f32 %v286, %v312
      %v326 = vadd.f32 %v287, %v312
      %v327 = vadd.f32 %v288, %v312
      %v328 = vadd.f32 %v289, %v312
      %v329 = vadd.f32 %v290, %v312
      %v330 = vadd.f32 %v291, %v312
      %v331 = vadd.f32 %v292, %v312
      %v332 = vadd.f32 %v293, %v312
      %v333 = vadd.f32 %v294, %v312
      %v334 = vadd.f32 %v295, %v312
      %v335 = vadd.f32 %v296, %v312
      %v336 = vadd.f32 %v297, %v312
      %v337 = vadd.f32 %v298, %v312
      %v338 = vadd.f32 %v299, %v312
      %v339 = vadd.f32 %v300, %v312
      %v340 = vadd.f32 %v301, %v312
      %v341 = vadd.f32 %v302, %v312
      %v342 = vadd.f32 %v303, %v312
      %v343 = vadd.f32 %v304, %v312
      %v344 = vadd.f32 %v305, %v312
      %v345 = vadd.f32 %v306, %v312
      %v346 = vmax.f32 %v314, 0.0
      %v347 = vmax.f32 %v315, 0.0
      %v348 = vmax.f32 %v316, 0.0
      %v349 = vmax.f32 %v317, 0.0
      %v350 = vmax.f32 %v318, 0.0
      %v351 = vmax.f32 %v319, 0.0
      %v352 = vmax.f32 %v320, 0.0
      %v353 = vmax.f32 %v321, 0.0
      %v354 = vmax.f32 %v322, 0.0
      %v355 = vmax.f32 %v323, 0.0
      %v356 = vmax.f32 %v324, 0.0
      %v357 = vmax.f32 %v325, 0.0
      %v358 = vmax.f32 %v326, 0.0
      %v359 = vmax.f32 %v327, 0.0
      %v360 = vmax.f32 %v328, 0.0
      %v361 = vmax.f32 %v329, 0.0
      %v362 = vmax.f32 %v330, 0.0
      %v363 = vmax.f32 %v331, 0.0
      %v364 = vmax.f32 %v332, 0.0
      %v365 = vmax.f32 %v333, 0.0
      %v366 = vmax.f32 %v334, 0.0
      %v367 = vmax.f32 %v335, 0.0
      %v368 = vmax.f32 %v336, 0.0
      %v369 = vmax.f32 %v337, 0.0
      %v370 = vmax.f32 %v338, 0.0
      %v371 = vmax.f32 %v339, 0.0
      %v372 = vmax.f32 %v340, 0.0
      %v373 = vmax.f32 %v341, 0.0
      %v374 = vmax.f32 %v342, 0.0
      %v375 = vmax.f32 %v343, 0.0
      %v376 = vmax.f32 %v344, 0.0
      %v377 = vmax.f32 %v345, 0.0
      %378 = vst [vmem:[#allocation2] sm:$0xff] 0.0
      %379 = vst [vmem:[#allocation2 + $0x8] sm:$0xff] 0.0
      %380 = vst [vmem:[#allocation2 + $0x10] sm:$0xff] 0.0
      %381 = vst [vmem:[#allocation2 + $0x118] sm:$0xff] 0.0
      %382 = vst [vmem:[#allocation2 + $0x120] sm:$0xff] 0.0
      %383 = vst [vmem:[#allocation2 + $0x128] sm:$0x1] 0.0
      %384 = vst [vmem:[#allocation2 + $0x18] sm:$0xff] %v346
      %385 = vst [vmem:[#allocation2 + $0x20] sm:$0xff] %v347
      %386 = vst [vmem:[#allocation2 + $0x28] sm:$0xff] %v348
      %387 = vst [vmem:[#allocation2 + $0x30] sm:$0xff] %v349
      %388 = vst [vmem:[#allocation2 + $0x38] sm:$0xff] %v350
      %389 = vst [vmem:[#allocation2 + $0x40] sm:$0xff] %v351
      %390 = vst [vmem:[#allocation2 + $0x48] sm:$0xff] %v352
      %391 = vst [vmem:[#allocation2 + $0x50] sm:$0xff] %v353
      %392 = vst [vmem:[#allocation2 + $0x58] sm:$0xff] %v354
      %393 = vst [vmem:[#allocation2 + $0x60] sm:$0xff] %v355
      %394 = vst [vmem:[#allocation2 + $0x68] sm:$0xff] %v356
      %395 = vst [vmem:[#allocation2 + $0x70] sm:$0xff] %v357
      %396 = vst [vmem:[#allocation2 + $0x78] sm:$0xff] %v358
      %397 = vst [vmem:[#allocation2 + $0x80] sm:$0xff] %v359
      %398 = vst [vmem:[#allocation2 + $0x88] sm:$0xff] %v360
      %399 = vst [vmem:[#allocation2 + $0x90] sm:$0xff] %v361
      %400 = vst [vmem:[#allocation2 + $0x98] sm:$0xff] %v362
      %401 = vst [vmem:[#allocation2 + $0xa0] sm:$0xff] %v363
      %402 = vst [vmem:[#allocation2 + $0xa8] sm:$0xff] %v364
      %403 = vst [vmem:[#allocation2 + $0xb0] sm:$0xff] %v365
      %404 = vst [vmem:[#allocation2 + $0xb8] sm:$0xff] %v366
      %405 = vst [vmem:[#allocation2 + $0xc0] sm:$0xff] %v367
      %406 = vst [vmem:[#allocation2 + $0xc8] sm:$0xff] %v368
      %407 = vst [vmem:[#allocation2 + $0xd0] sm:$0xff] %v369
      %408 = vst [vmem:[#allocation2 + $0xd8] sm:$0xff] %v370
      %409 = vst [vmem:[#allocation2 + $0xe0] sm:$0xff] %v371
      %410 = vst [vmem:[#allocation2 + $0xe8] sm:$0xff] %v372
      %411 = vst [vmem:[#allocation2 + $0xf0] sm:$0xff] %v373
      %412 = vst [vmem:[#allocation2 + $0xf8] sm:$0xff] %v374
      %413 = vst [vmem:[#allocation2 + $0x100] sm:$0xff] %v375
      %414 = vst [vmem:[#allocation2 + $0x108] sm:$0xff] %v376
      %415 = vst [vmem:[#allocation2 + $0x110] sm:$0xff] %v377
      %v416 = vlaneseq
      %v417 = vshrl.u32 %v416, 7
      %v418 = vadd.s32 %v417, 8
      %v419 = vadd.s32 %v417, 16
      %v420 = vadd.s32 %v417, 24
      %v421 = vadd.s32 %v417, 32
      %v422 = vadd.s32 %v417, 40
      %v423 = vadd.s32 %v417, 48
      %v424 = vadd.s32 %v417, 56
      %v425 = vadd.s32 %v417, 64
      %v426 = vadd.s32 %v417, 72
      %v427 = vadd.s32 %v417, 80
      %v428 = vadd.s32 %v417, 88
      %v429 = vadd.s32 %v417, 96
      %v430 = vadd.s32 %v417, 104
      %v431 = vadd.s32 %v417, 112
      %v432 = vadd.s32 %v417, 120
      %v433 = vadd.s32 %v417, 128
      %v434 = vadd.s32 %v417, 136
      %v435 = vadd.s32 %v417, 144
      %v436 = vadd.s32 %v417, 152
      %v437 = vadd.s32 %v417, 160
      %v438 = vadd.s32 %v417, 168
      %v439 = vadd.s32 %v417, 176
      %v440 = vadd.s32 %v417, 184
      %v441 = vadd.s32 %v417, 192
      %v442 = vadd.s32 %v417, 200
      %v443 = vadd.s32 %v417, 208
      %v444 = vadd.s32 %v417, 216
      %v445 = vadd.s32 %v417, 224
      %v446 = vadd.s32 %v417, 232
      %v447 = vadd.s32 %v417, 240
      %v448 = vadd.s32 %v417, 248
      %vm449 = vcmp.lt.s32.totalorder %v417, 0
      %v450 = vsub.s32 0, %v417
      %v451 = vsel %vm449, %v450, %v417
      %v452 = vshrl.u32 %v451, 4
      %v453 = vand.u32 %v451, 15
      %v454 = vsub.s32 0, %v453
      %v455 = vsel %vm449, %v454, %v453
      %vm456 = vcmp.lt.s32.totalorder %v418, 0
      %v457 = vsub.s32 0, %v418
      %v458 = vsel %vm456, %v457, %v418
      %v459 = vshrl.u32 %v458, 4
      %v460 = vand.u32 %v458, 15
      %v461 = vsub.s32 0, %v460
      %v462 = vsel %vm456, %v461, %v460
      %vm463 = vcmp.lt.s32.totalorder %v419, 0
      %v464 = vsub.s32 0, %v419
      %v465 = vsel %vm463, %v464, %v419
      %v466 = vshrl.u32 %v465, 4
      %v467 = vand.u32 %v465, 15
      %v468 = vsub.s32 0, %v467
      %v469 = vsel %vm463, %v468, %v467
      %vm470 = vcmp.lt.s32.totalorder %v420, 0
      %v471 = vsub.s32 0, %v420
      %v472 = vsel %vm470, %v471, %v420
      %v473 = vshrl.u32 %v472, 4
      %v474 = vand.u32 %v472, 15
      %v475 = vsub.s32 0, %v474
      %v476 = vsel %vm470, %v475, %v474
      %vm477 = vcmp.lt.s32.totalorder %v421, 0
      %v478 = vsub.s32 0, %v421
      %v479 = vsel %vm477, %v478, %v421
      %v480 = vshrl.u32 %v479, 4
      %v481 = vand.u32 %v479, 15
      %v482 = vsub.s32 0, %v481
      %v483 = vsel %vm477, %v482, %v481
      %vm484 = vcmp.lt.s32.totalorder %v422, 0
      %v485 = vsub.s32 0, %v422
      %v486 = vsel %vm484, %v485, %v422
      %v487 = vshrl.u32 %v486, 4
      %v488 = vand.u32 %v486, 15
      %v489 = vsub.s32 0, %v488
      %v490 = vsel %vm484, %v489, %v488
      %vm491 = vcmp.lt.s32.totalorder %v423, 0
      %v492 = vsub.s32 0, %v423
      %v493 = vsel %vm491, %v492, %v423
      %v494 = vshrl.u32 %v493, 4
      %v495 = vand.u32 %v493, 15
      %v496 = vsub.s32 0, %v495
      %v497 = vsel %vm491, %v496, %v495
      %vm498 = vcmp.lt.s32.totalorder %v424, 0
      %v499 = vsub.s32 0, %v424
      %v500 = vsel %vm498, %v499, %v424
      %v501 = vshrl.u32 %v500, 4
      %v502 = vand.u32 %v500, 15
      %v503 = vsub.s32 0, %v502
      %v504 = vsel %vm498, %v503, %v502
      %vm505 = vcmp.lt.s32.totalorder %v425, 0
      %v506 = vsub.s32 0, %v425
      %v507 = vsel %vm505, %v506, %v425
      %v508 = vshrl.u32 %v507, 4
      %v509 = vand.u32 %v507, 15
      %v510 = vsub.s32 0, %v509
      %v511 = vsel %vm505, %v510, %v509
      %vm512 = vcmp.lt.s32.totalorder %v426, 0
      %v513 = vsub.s32 0, %v426
      %v514 = vsel %vm512, %v513, %v426
      %v515 = vshrl.u32 %v514, 4
      %v516 = vand.u32 %v514, 15
      %v517 = vsub.s32 0, %v516
      %v518 = vsel %vm512, %v517, %v516
      %vm519 = vcmp.lt.s32.totalorder %v427, 0
      %v520 = vsub.s32 0, %v427
      %v521 = vsel %vm519, %v520, %v427
      %v522 = vshrl.u32 %v521, 4
      %v523 = vand.u32 %v521, 15
      %v524 = vsub.s32 0, %v523
      %v525 = vsel %vm519, %v524, %v523
      %vm526 = vcmp.lt.s32.totalorder %v428, 0
      %v527 = vsub.s32 0, %v428
      %v528 = vsel %vm526, %v527, %v428
      %v529 = vshrl.u32 %v528, 4
      %v530 = vand.u32 %v528, 15
      %v531 = vsub.s32 0, %v530
      %v532 = vsel %vm526, %v531, %v530
      %vm533 = vcmp.lt.s32.totalorder %v429, 0
      %v534 = vsub.s32 0, %v429
      %v535 = vsel %vm533, %v534, %v429
      %v536 = vshrl.u32 %v535, 4
      %v537 = vand.u32 %v535, 15
      %v538 = vsub.s32 0, %v537
      %v539 = vsel %vm533, %v538, %v537
      %vm540 = vcmp.lt.s32.totalorder %v430, 0
      %v541 = vsub.s32 0, %v430
      %v542 = vsel %vm540, %v541, %v430
      %v543 = vshrl.u32 %v542, 4
      %v544 = vand.u32 %v542, 15
      %v545 = vsub.s32 0, %v544
      %v546 = vsel %vm540, %v545, %v544
      %vm547 = vcmp.lt.s32.totalorder %v431, 0
      %v548 = vsub.s32 0, %v431
      %v549 = vsel %vm547, %v548, %v431
      %v550 = vshrl.u32 %v549, 4
      %v551 = vand.u32 %v549, 15
      %v552 = vsub.s32 0, %v551
      %v553 = vsel %vm547, %v552, %v551
      %vm554 = vcmp.lt.s32.totalorder %v432, 0
      %v555 = vsub.s32 0, %v432
      %v556 = vsel %vm554, %v555, %v432
      %v557 = vshrl.u32 %v556, 4
      %v558 = vand.u32 %v556, 15
      %v559 = vsub.s32 0, %v558
      %v560 = vsel %vm554, %v559, %v558
      %vm561 = vcmp.lt.s32.totalorder %v433, 0
      %v562 = vsub.s32 0, %v433
      %v563 = vsel %vm561, %v562, %v433
      %v564 = vshrl.u32 %v563, 4
      %v565 = vand.u32 %v563, 15
      %v566 = vsub.s32 0, %v565
      %v567 = vsel %vm561, %v566, %v565
      %vm568 = vcmp.lt.s32.totalorder %v434, 0
      %v569 = vsub.s32 0, %v434
      %v570 = vsel %vm568, %v569, %v434
      %v571 = vshrl.u32 %v570, 4
      %v572 = vand.u32 %v570, 15
      %v573 = vsub.s32 0, %v572
      %v574 = vsel %vm568, %v573, %v572
      %vm575 = vcmp.lt.s32.totalorder %v435, 0
      %v576 = vsub.s32 0, %v435
      %v577 = vsel %vm575, %v576, %v435
      %v578 = vshrl.u32 %v577, 4
      %v579 = vand.u32 %v577, 15
      %v580 = vsub.s32 0, %v579
      %v581 = vsel %vm575, %v580, %v579
      %vm582 = vcmp.lt.s32.totalorder %v436, 0
      %v583 = vsub.s32 0, %v436
      %v584 = vsel %vm582, %v583, %v436
      %v585 = vshrl.u32 %v584, 4
      %v586 = vand.u32 %v584, 15
      %v587 = vsub.s32 0, %v586
      %v588 = vsel %vm582, %v587, %v586
      %vm589 = vcmp.lt.s32.totalorder %v437, 0
      %v590 = vsub.s32 0, %v437
      %v591 = vsel %vm589, %v590, %v437
      %v592 = vshrl.u32 %v591, 4
      %v593 = vand.u32 %v591, 15
      %v594 = vsub.s32 0, %v593
      %v595 = vsel %vm589, %v594, %v593
      %vm596 = vcmp.lt.s32.totalorder %v438, 0
      %v597 = vsub.s32 0, %v438
      %v598 = vsel %vm596, %v597, %v438
      %v599 = vshrl.u32 %v598, 4
      %v600 = vand.u32 %v598, 15
      %v601 = vsub.s32 0, %v600
      %v602 = vsel %vm596, %v601, %v600
      %vm603 = vcmp.lt.s32.totalorder %v439, 0
      %v604 = vsub.s32 0, %v439
      %v605 = vsel %vm603, %v604, %v439
      %v606 = vshrl.u32 %v605, 4
      %v607 = vand.u32 %v605, 15
      %v608 = vsub.s32 0, %v607
      %v609 = vsel %vm603, %v608, %v607
      %vm610 = vcmp.lt.s32.totalorder %v440, 0
      %v611 = vsub.s32 0, %v440
      %v612 = vsel %vm610, %v611, %v440
      %v613 = vshrl.u32 %v612, 4
      %v614 = vand.u32 %v612, 15
      %v615 = vsub.s32 0, %v614
      %v616 = vsel %vm610, %v615, %v614
      %vm617 = vcmp.lt.s32.totalorder %v441, 0
      %v618 = vsub.s32 0, %v441
      %v619 = vsel %vm617, %v618, %v441
      %v620 = vshrl.u32 %v619, 4
      %v621 = vand.u32 %v619, 15
      %v622 = vsub.s32 0, %v621
      %v623 = vsel %vm617, %v622, %v621
      %vm624 = vcmp.lt.s32.totalorder %v442, 0
      %v625 = vsub.s32 0, %v442
      %v626 = vsel %vm624, %v625, %v442
      %v627 = vshrl.u32 %v626, 4
      %v628 = vand.u32 %v626, 15
      %v629 = vsub.s32 0, %v628
      %v630 = vsel %vm624, %v629, %v628
      %vm631 = vcmp.lt.s32.totalorder %v443, 0
      %v632 = vsub.s32 0, %v443
      %v633 = vsel %vm631, %v632, %v443
      %v634 = vshrl.u32 %v633, 4
      %v635 = vand.u32 %v633, 15
      %v636 = vsub.s32 0, %v635
      %v637 = vsel %vm631, %v636, %v635
      %vm638 = vcmp.lt.s32.totalorder %v444, 0
      %v639 = vsub.s32 0, %v444
      %v640 = vsel %vm638, %v639, %v444
      %v641 = vshrl.u32 %v640, 4
      %v642 = vand.u32 %v640, 15
      %v643 = vsub.s32 0, %v642
      %v644 = vsel %vm638, %v643, %v642
      %vm645 = vcmp.lt.s32.totalorder %v445, 0
      %v646 = vsub.s32 0, %v445
      %v647 = vsel %vm645, %v646, %v445
      %v648 = vshrl.u32 %v647, 4
      %v649 = vand.u32 %v647, 15
      %v650 = vsub.s32 0, %v649
      %v651 = vsel %vm645, %v650, %v649
      %vm652 = vcmp.lt.s32.totalorder %v446, 0
      %v653 = vsub.s32 0, %v446
      %v654 = vsel %vm652, %v653, %v446
      %v655 = vshrl.u32 %v654, 4
      %v656 = vand.u32 %v654, 15
      %v657 = vsub.s32 0, %v656
      %v658 = vsel %vm652, %v657, %v656
      %vm659 = vcmp.lt.s32.totalorder %v447, 0
      %v660 = vsub.s32 0, %v447
      %v661 = vsel %vm659, %v660, %v447
      %v662 = vshrl.u32 %v661, 4
      %v663 = vand.u32 %v661, 15
      %v664 = vsub.s32 0, %v663
      %v665 = vsel %vm659, %v664, %v663
      %vm666 = vcmp.lt.s32.totalorder %v448, 0
      %v667 = vsub.s32 0, %v448
      %v668 = vsel %vm666, %v667, %v448
      %v669 = vshrl.u32 %v668, 4
      %v670 = vand.u32 %v668, 15
      %v671 = vsub.s32 0, %v670
      %v672 = vsel %vm666, %v671, %v670
      %vm673 = vcmp.ne.s32.totalorder %v455, 0
      %vm674 = vcmp.ne.s32.totalorder %v462, 0
      %vm675 = vcmp.ne.s32.totalorder %v469, 0
      %vm676 = vcmp.ne.s32.totalorder %v476, 0
      %vm677 = vcmp.ne.s32.totalorder %v483, 0
      %vm678 = vcmp.ne.s32.totalorder %v490, 0
      %vm679 = vcmp.ne.s32.totalorder %v497, 0
      %vm680 = vcmp.ne.s32.totalorder %v504, 0
      %vm681 = vcmp.ne.s32.totalorder %v511, 0
      %vm682 = vcmp.ne.s32.totalorder %v518, 0
      %vm683 = vcmp.ne.s32.totalorder %v525, 0
      %vm684 = vcmp.ne.s32.totalorder %v532, 0
      %vm685 = vcmp.ne.s32.totalorder %v539, 0
      %vm686 = vcmp.ne.s32.totalorder %v546, 0
      %vm687 = vcmp.ne.s32.totalorder %v553, 0
      %vm688 = vcmp.ne.s32.totalorder %v560, 0
      %vm689 = vcmp.ne.s32.totalorder %v567, 0
      %vm690 = vcmp.ne.s32.totalorder %v574, 0
      %vm691 = vcmp.ne.s32.totalorder %v581, 0
      %vm692 = vcmp.ne.s32.totalorder %v588, 0
      %vm693 = vcmp.ne.s32.totalorder %v595, 0
      %vm694 = vcmp.ne.s32.totalorder %v602, 0
      %vm695 = vcmp.ne.s32.totalorder %v609, 0
      %vm696 = vcmp.ne.s32.totalorder %v616, 0
      %vm697 = vcmp.ne.s32.totalorder %v623, 0
      %vm698 = vcmp.ne.s32.totalorder %v630, 0
      %vm699 = vcmp.ne.s32.totalorder %v637, 0
      %vm700 = vcmp.ne.s32.totalorder %v644, 0
      %vm701 = vcmp.ne.s32.totalorder %v651, 0
      %vm702 = vcmp.ne.s32.totalorder %v658, 0
      %vm703 = vcmp.ne.s32.totalorder %v665, 0
      %vm704 = vcmp.ne.s32.totalorder %v672, 0
      %vm705 = vcmp.lt.s32.totalorder %v455, 0
      %vm706 = vcmp.lt.s32.totalorder %v462, 0
      %vm707 = vcmp.lt.s32.totalorder %v469, 0
      %vm708 = vcmp.lt.s32.totalorder %v476, 0
      %vm709 = vcmp.lt.s32.totalorder %v483, 0
      %vm710 = vcmp.lt.s32.totalorder %v490, 0
      %vm711 = vcmp.lt.s32.totalorder %v497, 0
      %vm712 = vcmp.lt.s32.totalorder %v504, 0
      %vm713 = vcmp.lt.s32.totalorder %v511, 0
      %vm714 = vcmp.lt.s32.totalorder %v518, 0
      %vm715 = vcmp.lt.s32.totalorder %v525, 0
      %vm716 = vcmp.lt.s32.totalorder %v532, 0
      %vm717 = vcmp.lt.s32.totalorder %v539, 0
      %vm718 = vcmp.lt.s32.totalorder %v546, 0
      %vm719 = vcmp.lt.s32.totalorder %v553, 0
      %vm720 = vcmp.lt.s32.totalorder %v560, 0
      %vm721 = vcmp.lt.s32.totalorder %v567, 0
      %vm722 = vcmp.lt.s32.totalorder %v574, 0
      %vm723 = vcmp.lt.s32.totalorder %v581, 0
      %vm724 = vcmp.lt.s32.totalorder %v588, 0
      %vm725 = vcmp.lt.s32.totalorder %v595, 0
      %vm726 = vcmp.lt.s32.totalorder %v602, 0
      %vm727 = vcmp.lt.s32.totalorder %v609, 0
      %vm728 = vcmp.lt.s32.totalorder %v616, 0
      %vm729 = vcmp.lt.s32.totalorder %v623, 0
      %vm730 = vcmp.lt.s32.totalorder %v630, 0
      %vm731 = vcmp.lt.s32.totalorder %v637, 0
      %vm732 = vcmp.lt.s32.totalorder %v644, 0
      %vm733 = vcmp.lt.s32.totalorder %v651, 0
      %vm734 = vcmp.lt.s32.totalorder %v658, 0
      %vm735 = vcmp.lt.s32.totalorder %v665, 0
      %vm736 = vcmp.lt.s32.totalorder %v672, 0
      %vm737 = vmand %vm705, %vm673
      %vm738 = vmand %vm706, %vm674
      %vm739 = vmand %vm707, %vm675
      %vm740 = vmand %vm708, %vm676
      %vm741 = vmand %vm709, %vm677
      %vm742 = vmand %vm710, %vm678
      %vm743 = vmand %vm711, %vm679
      %vm744 = vmand %vm712, %vm680
      %vm745 = vmand %vm713, %vm681
      %vm746 = vmand %vm714, %vm682
      %vm747 = vmand %vm715, %vm683
      %vm748 = vmand %vm716, %vm684
      %vm749 = vmand %vm717, %vm685
      %vm750 = vmand %vm718, %vm686
      %vm751 = vmand %vm719, %vm687
      %vm752 = vmand %vm720, %vm688
      %vm753 = vmand %vm721, %vm689
      %vm754 = vmand %vm722, %vm690
      %vm755 = vmand %vm723, %vm691
      %vm756 = vmand %vm724, %vm692
      %vm757 = vmand %vm725, %vm693
      %vm758 = vmand %vm726, %vm694
      %vm759 = vmand %vm727, %vm695
      %vm760 = vmand %vm728, %vm696
      %vm761 = vmand %vm729, %vm697
      %vm762 = vmand %vm730, %vm698
      %vm763 = vmand %vm731, %vm699
      %vm764 = vmand %vm732, %vm700
      %vm765 = vmand %vm733, %vm701
      %vm766 = vmand %vm734, %vm702
      %vm767 = vmand %vm735, %vm703
      %vm768 = vmand %vm736, %vm704
      %v769 = vadd.s32 %v455, 16
      %v770 = vadd.s32 %v462, 16
      %v771 = vadd.s32 %v469, 16
      %v772 = vadd.s32 %v476, 16
      %v773 = vadd.s32 %v483, 16
      %v774 = vadd.s32 %v490, 16
      %v775 = vadd.s32 %v497, 16
      %v776 = vadd.s32 %v504, 16
      %v777 = vadd.s32 %v511, 16
      %v778 = vadd.s32 %v518, 16
      %v779 = vadd.s32 %v525, 16
      %v780 = vadd.s32 %v532, 16
      %v781 = vadd.s32 %v539, 16
      %v782 = vadd.s32 %v546, 16
      %v783 = vadd.s32 %v553, 16
      %v784 = vadd.s32 %v560, 16
      %v785 = vadd.s32 %v567, 16
      %v786 = vadd.s32 %v574, 16
      %v787 = vadd.s32 %v581, 16
      %v788 = vadd.s32 %v588, 16
      %v789 = vadd.s32 %v595, 16
      %v790 = vadd.s32 %v602, 16
      %v791 = vadd.s32 %v609, 16
      %v792 = vadd.s32 %v616, 16
      %v793 = vadd.s32 %v623, 16
      %v794 = vadd.s32 %v630, 16
      %v795 = vadd.s32 %v637, 16
      %v796 = vadd.s32 %v644, 16
      %v797 = vadd.s32 %v651, 16
      %v798 = vadd.s32 %v658, 16
      %v799 = vadd.s32 %v665, 16
      %v800 = vadd.s32 %v672, 16
      %v801 = vsel %vm737, %v769, %v455
      %v802 = vsel %vm738, %v770, %v462
      %v803 = vsel %vm739, %v771, %v469
      %v804 = vsel %vm740, %v772, %v476
      %v805 = vsel %vm741, %v773, %v483
      %v806 = vsel %vm742, %v774, %v490
      %v807 = vsel %vm743, %v775, %v497
      %v808 = vsel %vm744, %v776, %v504
      %v809 = vsel %vm745, %v777, %v511
      %v810 = vsel %vm746, %v778, %v518
      %v811 = vsel %vm747, %v779, %v525
      %v812 = vsel %vm748, %v780, %v532
      %v813 = vsel %vm749, %v781, %v539
      %v814 = vsel %vm750, %v782, %v546
      %v815 = vsel %vm751, %v783, %v553
      %v816 = vsel %vm752, %v784, %v560
      %v817 = vsel %vm753, %v785, %v567
      %v818 = vsel %vm754, %v786, %v574
      %v819 = vsel %vm755, %v787, %v581
      %v820 = vsel %vm756, %v788, %v588
      %v821 = vsel %vm757, %v789, %v595
      %v822 = vsel %vm758, %v790, %v602
      %v823 = vsel %vm759, %v791, %v609
      %v824 = vsel %vm760, %v792, %v616
      %v825 = vsel %vm761, %v793, %v623
      %v826 = vsel %vm762, %v794, %v630
      %v827 = vsel %vm763, %v795, %v637
      %v828 = vsel %vm764, %v796, %v644
      %v829 = vsel %vm765, %v797, %v651
      %v830 = vsel %vm766, %v798, %v658
      %v831 = vsel %vm767, %v799, %v665
      %v832 = vsel %vm768, %v800, %v672
      %vm833 = vcmp.ne.s32.totalorder %v801, 0
      %vm834 = vcmp.ne.s32.totalorder %v802, 0
      %vm835 = vcmp.ne.s32.totalorder %v803, 0
      %vm836 = vcmp.ne.s32.totalorder %v804, 0
      %vm837 = vcmp.ne.s32.totalorder %v805, 0
      %vm838 = vcmp.ne.s32.totalorder %v806, 0
      %vm839 = vcmp.ne.s32.totalorder %v807, 0
      %vm840 = vcmp.ne.s32.totalorder %v808, 0
      %vm841 = vcmp.ne.s32.totalorder %v809, 0
      %vm842 = vcmp.ne.s32.totalorder %v810, 0
      %vm843 = vcmp.ne.s32.totalorder %v811, 0
      %vm844 = vcmp.ne.s32.totalorder %v812, 0
      %vm845 = vcmp.ne.s32.totalorder %v813, 0
      %vm846 = vcmp.ne.s32.totalorder %v814, 0
      %vm847 = vcmp.ne.s32.totalorder %v815, 0
      %vm848 = vcmp.ne.s32.totalorder %v816, 0
      %vm849 = vcmp.ne.s32.totalorder %v817, 0
      %vm850 = vcmp.ne.s32.totalorder %v818, 0
      %vm851 = vcmp.ne.s32.totalorder %v819, 0
      %vm852 = vcmp.ne.s32.totalorder %v820, 0
      %vm853 = vcmp.ne.s32.totalorder %v821, 0
      %vm854 = vcmp.ne.s32.totalorder %v822, 0
      %vm855 = vcmp.ne.s32.totalorder %v823, 0
      %vm856 = vcmp.ne.s32.totalorder %v824, 0
      %vm857 = vcmp.ne.s32.totalorder %v825, 0
      %vm858 = vcmp.ne.s32.totalorder %v826, 0
      %vm859 = vcmp.ne.s32.totalorder %v827, 0
      %vm860 = vcmp.ne.s32.totalorder %v828, 0
      %vm861 = vcmp.ne.s32.totalorder %v829, 0
      %vm862 = vcmp.ne.s32.totalorder %v830, 0
      %vm863 = vcmp.ne.s32.totalorder %v831, 0
      %vm864 = vcmp.ne.s32.totalorder %v832, 0
      %vm865 = vcmp.ne.s32.totalorder %v801, 15
      %vm866 = vcmp.ne.s32.totalorder %v802, 15
      %vm867 = vcmp.ne.s32.totalorder %v803, 15
      %vm868 = vcmp.ne.s32.totalorder %v804, 15
      %vm869 = vcmp.ne.s32.totalorder %v805, 15
      %vm870 = vcmp.ne.s32.totalorder %v806, 15
      %vm871 = vcmp.ne.s32.totalorder %v807, 15
      %vm872 = vcmp.ne.s32.totalorder %v808, 15
      %vm873 = vcmp.ne.s32.totalorder %v809, 15
      %vm874 = vcmp.ne.s32.totalorder %v810, 15
      %vm875 = vcmp.ne.s32.totalorder %v811, 15
      %vm876 = vcmp.ne.s32.totalorder %v812, 15
      %vm877 = vcmp.ne.s32.totalorder %v813, 15
      %vm878 = vcmp.ne.s32.totalorder %v814, 15
      %vm879 = vcmp.ne.s32.totalorder %v815, 15
      %vm880 = vcmp.ne.s32.totalorder %v816, 15
      %vm881 = vcmp.ne.s32.totalorder %v817, 15
      %vm882 = vcmp.ne.s32.totalorder %v818, 15
      %vm883 = vcmp.ne.s32.totalorder %v819, 15
      %vm884 = vcmp.ne.s32.totalorder %v820, 15
      %vm885 = vcmp.ne.s32.totalorder %v821, 15
      %vm886 = vcmp.ne.s32.totalorder %v822, 15
      %vm887 = vcmp.ne.s32.totalorder %v823, 15
      %vm888 = vcmp.ne.s32.totalorder %v824, 15
      %vm889 = vcmp.ne.s32.totalorder %v825, 15
      %vm890 = vcmp.ne.s32.totalorder %v826, 15
      %vm891 = vcmp.ne.s32.totalorder %v827, 15
      %vm892 = vcmp.ne.s32.totalorder %v828, 15
      %vm893 = vcmp.ne.s32.totalorder %v829, 15
      %vm894 = vcmp.ne.s32.totalorder %v830, 15
      %vm895 = vcmp.ne.s32.totalorder %v831, 15
      %vm896 = vcmp.ne.s32.totalorder %v832, 15
      %v897 = vld [vmem:[#allocation2 + $0x7] sm:$0xff]
      %v898 = vld [vmem:[#allocation2 + $0xf] sm:$0xff]
      %v899 = vld [vmem:[#allocation2 + $0x17] sm:$0xff]
      %v900 = vld [vmem:[#allocation2 + $0x1f] sm:$0xff]
      %v901 = vld [vmem:[#allocation2 + $0x27] sm:$0xff]
      %v902 = vld [vmem:[#allocation2 + $0x2f] sm:$0xff]
      %v903 = vld [vmem:[#allocation2 + $0x37] sm:$0xff]
      %v904 = vld [vmem:[#allocation2 + $0x3f] sm:$0xff]
      %v905 = vld [vmem:[#allocation2 + $0x47] sm:$0xff]
      %v906 = vld [vmem:[#allocation2 + $0x4f] sm:$0xff]
      %v907 = vld [vmem:[#allocation2 + $0x57] sm:$0xff]
      %v908 = vld [vmem:[#allocation2 + $0x5f] sm:$0xff]
      %v909 = vld [vmem:[#allocation2 + $0x67] sm:$0xff]
      %v910 = vld [vmem:[#allocation2 + $0x6f] sm:$0xff]
      %v911 = vld [vmem:[#allocation2 + $0x77] sm:$0xff]
      %v912 = vld [vmem:[#allocation2 + $0x7f] sm:$0xff]
      %v913 = vld [vmem:[#allocation2 + $0x87] sm:$0xff]
      %v914 = vld [vmem:[#allocation2 + $0x8f] sm:$0xff]
      %v915 = vld [vmem:[#allocation2 + $0x97] sm:$0xff]
      %v916 = vld [vmem:[#allocation2 + $0x9f] sm:$0xff]
      %v917 = vld [vmem:[#allocation2 + $0xa7] sm:$0xff]
      %v918 = vld [vmem:[#allocation2 + $0xaf] sm:$0xff]
      %v919 = vld [vmem:[#allocation2 + $0xb7] sm:$0xff]
      %v920 = vld [vmem:[#allocation2 + $0xbf] sm:$0xff]
      %v921 = vld [vmem:[#allocation2 + $0xc7] sm:$0xff]
      %v922 = vld [vmem:[#allocation2 + $0xcf] sm:$0xff]
      %v923 = vld [vmem:[#allocation2 + $0xd7] sm:$0xff]
      %v924 = vld [vmem:[#allocation2 + $0xdf] sm:$0xff]
      %v925 = vld [vmem:[#allocation2 + $0xe7] sm:$0xff]
      %v926 = vld [vmem:[#allocation2 + $0xef] sm:$0xff]
      %v927 = vld [vmem:[#allocation2 + $0xf7] sm:$0xff]
      %v928 = vld [vmem:[#allocation2 + $0xff] sm:$0xff]
      %v929 = vld [vmem:[%s3] sm:$0xff]
      %v930 = vld [vmem:[%s3 + $0x8] sm:$0xff]
      %v931 = vld [vmem:[%s3 + $0x10] sm:$0xff]
      %v932 = vld [vmem:[%s3 + $0x18] sm:$0xff]
      %v933 = vld [vmem:[%s3 + $0x20] sm:$0xff]
      %v934 = vld [vmem:[%s3 + $0x28] sm:$0xff]
      %v935 = vld [vmem:[%s3 + $0x30] sm:$0xff]
      %v936 = vld [vmem:[%s3 + $0x38] sm:$0xff]
      %v937 = vld [vmem:[%s3 + $0x40] sm:$0xff]
      %v938 = vld [vmem:[%s3 + $0x48] sm:$0xff]
      %v939 = vld [vmem:[%s3 + $0x50] sm:$0xff]
      %v940 = vld [vmem:[%s3 + $0x58] sm:$0xff]
      %v941 = vld [vmem:[%s3 + $0x60] sm:$0xff]
      %v942 = vld [vmem:[%s3 + $0x68] sm:$0xff]
      %v943 = vld [vmem:[%s3 + $0x70] sm:$0xff]
      %v944 = vld [vmem:[%s3 + $0x78] sm:$0xff]
      %945 = vmatprep.subr.mxu0 0.0
      %946 = vmatpush1.msra.mxu0 %v944
      %947 = vmatprep.subr.mxu0 0.0
      %948 = vmatpush1.msra.mxu0 %v943
      %949 = vmatprep.subr.mxu0 0.0
      %950 = vmatpush1.msra.mxu0 %v942
      %951 = vmatprep.subr.mxu0 0.0
      %952 = vmatpush1.msra.mxu0 %v941
      %953 = vmatprep.subr.mxu0 0.0
      %954 = vmatpush1.msra.mxu0 %v940
      %955 = vmatprep.subr.mxu0 0.0
      %956 = vmatpush1.msra.mxu0 %v939
      %957 = vmatprep.subr.mxu0 0.0
      %958 = vmatpush1.msra.mxu0 %v938
      %959 = vmatprep.subr.mxu0 0.0
      %960 = vmatpush1.msra.mxu0 %v937
      %961 = vmatprep.subr.mxu0 0.0
      %962 = vmatpush1.msra.mxu0 %v936
      %963 = vmatprep.subr.mxu0 0.0
      %964 = vmatpush1.msra.mxu0 %v935
      %965 = vmatprep.subr.mxu0 0.0
      %966 = vmatpush1.msra.mxu0 %v934
      %967 = vmatprep.subr.mxu0 0.0
      %968 = vmatpush1.msra.mxu0 %v933
      %969 = vmatprep.subr.mxu0 0.0
      %970 = vmatpush1.msra.mxu0 %v932
      %971 = vmatprep.subr.mxu0 0.0
      %972 = vmatpush1.msra.mxu0 %v931
      %973 = vmatprep.subr.mxu0 0.0
      %974 = vmatpush1.msra.mxu0 %v930
      %975 = vmatprep.subr.mxu0 0.0
      %976 = vmatpush1.msra.mxu0 %v929
      %977 = vmatprep.subr.mxu0 0.0
      %978 = vmatpush2.msra.mxu0 0.0
      %979 = vmatprep.subr.mxu0 0.0
      %980 = vmatpush2.msra.mxu0 0.0
      %981 = vmatprep.subr.mxu0 0.0
      %982 = vmatpush2.msra.mxu0 0.0
      %983 = vmatprep.subr.mxu0 0.0
      %984 = vmatpush2.msra.mxu0 0.0
      %985 = vmatprep.subr.mxu0 0.0
      %986 = vmatpush2.msra.mxu0 0.0
      %987 = vmatprep.subr.mxu0 0.0
      %988 = vmatpush2.msra.mxu0 0.0
      %989 = vmatprep.subr.mxu0 0.0
      %990 = vmatpush2.msra.mxu0 0.0
      %991 = vmatprep.subr.mxu0 0.0
      %992 = vmatpush2.msra.mxu0 0.0
      %993 = vmatprep.subr.mxu0 0.0
      %994 = vmatpush2.msra.mxu0 0.0
      %995 = vmatprep.subr.mxu0 0.0
      %996 = vmatpush2.msra.mxu0 0.0
      %997 = vmatprep.subr.mxu0 0.0
      %998 = vmatpush2.msra.mxu0 0.0
      %999 = vmatprep.subr.mxu0 0.0
      %1000 = vmatpush2.msra.mxu0 0.0
      %1001 = vmatprep.subr.mxu0 0.0
      %1002 = vmatpush2.msra.mxu0 0.0
      %1003 = vmatprep.subr.mxu0 0.0
      %1004 = vmatpush2.msra.mxu0 0.0
      %1005 = vmatprep.subr.mxu0 0.0
      %1006 = vmatpush2.msra.mxu0 0.0
      %1007 = vmatprep.subr.mxu0 0.0
      %1008 = vmatpush2.msra.mxu0 0.0
      %1009 = vmatprep.mubr.f32.mxu0 0.0
      %1010 = vmatmul.mubr.f32.gmra.mxu0 %v897
      %v1011 = vpop.f32.mrf.mxu0
      %v1012 = vadd.f32 0.0, %v1011
      %v1013 = vpop.f32.mrf.mxu0
      %1014 = vmatprep.mubr.f32.mxu0 0.0
      %1015 = vmatmul.mubr.f32.gmra.mxu0 %v898
      %v1016 = vpop.f32.mrf.mxu0
      %v1017 = vadd.f32 0.0, %v1016
      %v1018 = vpop.f32.mrf.mxu0
      %1019 = vmatprep.mubr.f32.mxu0 0.0
      %1020 = vmatmul.mubr.f32.gmra.mxu0 %v899
      %v1021 = vpop.f32.mrf.mxu0
      %v1022 = vadd.f32 0.0, %v1021
      %v1023 = vpop.f32.mrf.mxu0
      %1024 = vmatprep.mubr.f32.mxu0 0.0
      %1025 = vmatmul.mubr.f32.gmra.mxu0 %v900
      %v1026 = vpop.f32.mrf.mxu0
      %v1027 = vadd.f32 0.0, %v1026
      %v1028 = vpop.f32.mrf.mxu0
      %1029 = vmatprep.mubr.f32.mxu0 0.0
      %1030 = vmatmul.mubr.f32.gmra.mxu0 %v901
      %v1031 = vpop.f32.mrf.mxu0
      %v1032 = vadd.f32 0.0, %v1031
      %v1033 = vpop.f32.mrf.mxu0
      %1034 = vmatprep.mubr.f32.mxu0 0.0
      %1035 = vmatmul.mubr.f32.gmra.mxu0 %v902
      %v1036 = vpop.f32.mrf.mxu0
      %v1037 = vadd.f32 0.0, %v1036
      %v1038 = vpop.f32.mrf.mxu0
      %1039 = vmatprep.mubr.f32.mxu0 0.0
      %1040 = vmatmul.mubr.f32.gmra.mxu0 %v903
      %v1041 = vpop.f32.mrf.mxu0
      %v1042 = vadd.f32 0.0, %v1041
      %v1043 = vpop.f32.mrf.mxu0
      %1044 = vmatprep.mubr.f32.mxu0 0.0
      %1045 = vmatmul.mubr.f32.gmra.mxu0 %v904
      %v1046 = vpop.f32.mrf.mxu0
      %v1047 = vadd.f32 0.0, %v1046
      %v1048 = vpop.f32.mrf.mxu0
      %1049 = vmatprep.mubr.f32.mxu0 0.0
      %1050 = vmatmul.mubr.f32.gmra.mxu0 %v905
      %v1051 = vpop.f32.mrf.mxu0
      %v1052 = vadd.f32 0.0, %v1051
      %v1053 = vpop.f32.mrf.mxu0
      %1054 = vmatprep.mubr.f32.mxu0 0.0
      %1055 = vmatmul.mubr.f32.gmra.mxu0 %v906
      %v1056 = vpop.f32.mrf.mxu0
      %v1057 = vadd.f32 0.0, %v1056
      %v1058 = vpop.f32.mrf.mxu0
      %1059 = vmatprep.mubr.f32.mxu0 0.0
      %1060 = vmatmul.mubr.f32.gmra.mxu0 %v907
      %v1061 = vpop.f32.mrf.mxu0
      %v1062 = vadd.f32 0.0, %v1061
      %v1063 = vpop.f32.mrf.mxu0
      %1064 = vmatprep.mubr.f32.mxu0 0.0
      %1065 = vmatmul.mubr.f32.gmra.mxu0 %v908
      %v1066 = vpop.f32.mrf.mxu0
      %v1067 = vadd.f32 0.0, %v1066
      %v1068 = vpop.f32.mrf.mxu0
      %1069 = vmatprep.mubr.f32.mxu0 0.0
      %1070 = vmatmul.mubr.f32.gmra.mxu0 %v909
      %v1071 = vpop.f32.mrf.mxu0
      %v1072 = vadd.f32 0.0, %v1071
      %v1073 = vpop.f32.mrf.mxu0
      %1074 = vmatprep.mubr.f32.mxu0 0.0
      %1075 = vmatmul.mubr.f32.gmra.mxu0 %v910
      %v1076 = vpop.f32.mrf.mxu0
      %v1077 = vadd.f32 0.0, %v1076
      %v1078 = vpop.f32.mrf.mxu0
      %1079 = vmatprep.mubr.f32.mxu0 0.0
      %1080 = vmatmul.mubr.f32.gmra.mxu0 %v911
      %v1081 = vpop.f32.mrf.mxu0
      %v1082 = vadd.f32 0.0, %v1081
      %v1083 = vpop.f32.mrf.mxu0
      %1084 = vmatprep.mubr.f32.mxu0 0.0
      %1085 = vmatmul.mubr.f32.gmra.mxu0 %v912
      %v1086 = vpop.f32.mrf.mxu0
      %v1087 = vadd.f32 0.0, %v1086
      %v1088 = vpop.f32.mrf.mxu0
      %1089 = vmatprep.mubr.f32.mxu0 0.0
      %1090 = vmatmul.mubr.f32.gmra.mxu0 %v913
      %v1091 = vpop.f32.mrf.mxu0
      %v1092 = vadd.f32 0.0, %v1091
      %v1093 = vpop.f32.mrf.mxu0
      %1094 = vmatprep.mubr.f32.mxu0 0.0
      %1095 = vmatmul.mubr.f32.gmra.mxu0 %v914
      %v1096 = vpop.f32.mrf.mxu0
      %v1097 = vadd.f32 0.0, %v1096
      %v1098 = vpop.f32.mrf.mxu0
      %1099 = vmatprep.mubr.f32.mxu0 0.0
      %1100 = vmatmul.mubr.f32.gmra.mxu0 %v915
      %v1101 = vpop.f32.mrf.mxu0
      %v1102 = vadd.f32 0.0, %v1101
      %v1103 = vpop.f32.mrf.mxu0
      %1104 = vmatprep.mubr.f32.mxu0 0.0
      %1105 = vmatmul.mubr.f32.gmra.mxu0 %v916
      %v1106 = vpop.f32.mrf.mxu0
      %v1107 = vadd.f32 0.0, %v1106
      %v1108 = vpop.f32.mrf.mxu0
      %1109 = vmatprep.mubr.f32.mxu0 0.0
      %1110 = vmatmul.mubr.f32.gmra.mxu0 %v917
      %v1111 = vpop.f32.mrf.mxu0
      %v1112 = vadd.f32 0.0, %v1111
      %v1113 = vpop.f32.mrf.mxu0
      %1114 = vmatprep.mubr.f32.mxu0 0.0
      %1115 = vmatmul.mubr.f32.gmra.mxu0 %v918
      %v1116 = vpop.f32.mrf.mxu0
      %v1117 = vadd.f32 0.0, %v1116
      %v1118 = vpop.f32.mrf.mxu0
      %1119 = vmatprep.mubr.f32.mxu0 0.0
      %1120 = vmatmul.mubr.f32.gmra.mxu0 %v919
      %v1121 = vpop.f32.mrf.mxu0
      %v1122 = vadd.f32 0.0, %v1121
      %v1123 = vpop.f32.mrf.mxu0
      %1124 = vmatprep.mubr.f32.mxu0 0.0
      %1125 = vmatmul.mubr.f32.gmra.mxu0 %v920
      %v1126 = vpop.f32.mrf.mxu0
      %v1127 = vadd.f32 0.0, %v1126
      %v1128 = vpop.f32.mrf.mxu0
      %1129 = vmatprep.mubr.f32.mxu0 0.0
      %1130 = vmatmul.mubr.f32.gmra.mxu0 %v921
      %v1131 = vpop.f32.mrf.mxu0
      %v1132 = vadd.f32 0.0, %v1131
      %v1133 = vpop.f32.mrf.mxu0
      %1134 = vmatprep.mubr.f32.mxu0 0.0
      %1135 = vmatmul.mubr.f32.gmra.mxu0 %v922
      %v1136 = vpop.f32.mrf.mxu0
      %v1137 = vadd.f32 0.0, %v1136
      %v1138 = vpop.f32.mrf.mxu0
      %1139 = vmatprep.mubr.f32.mxu0 0.0
      %1140 = vmatmul.mubr.f32.gmra.mxu0 %v923
      %v1141 = vpop.f32.mrf.mxu0
      %v1142 = vadd.f32 0.0, %v1141
      %v1143 = vpop.f32.mrf.mxu0
      %1144 = vmatprep.mubr.f32.mxu0 0.0
      %1145 = vmatmul.mubr.f32.gmra.mxu0 %v924
      %v1146 = vpop.f32.mrf.mxu0
      %v1147 = vadd.f32 0.0, %v1146
      %v1148 = vpop.f32.mrf.mxu0
      %1149 = vmatprep.mubr.f32.mxu0 0.0
      %1150 = vmatmul.mubr.f32.gmra.mxu0 %v925
      %v1151 = vpop.f32.mrf.mxu0
      %v1152 = vadd.f32 0.0, %v1151
      %v1153 = vpop.f32.mrf.mxu0
      %1154 = vmatprep.mubr.f32.mxu0 0.0
      %1155 = vmatmul.mubr.f32.gmra.mxu0 %v926
      %v1156 = vpop.f32.mrf.mxu0
      %v1157 = vadd.f32 0.0, %v1156
      %v1158 = vpop.f32.mrf.mxu0
      %1159 = vmatprep.mubr.f32.mxu0 0.0
      %1160 = vmatmul.mubr.f32.gmra.mxu0 %v927
      %v1161 = vpop.f32.mrf.mxu0
      %v1162 = vadd.f32 0.0, %v1161
      %v1163 = vpop.f32.mrf.mxu0
      %1164 = vmatprep.mubr.f32.mxu0 0.0
      %1165 = vmatmul.mubr.f32.gmra.mxu0 %v928
      %v1166 = vpop.f32.mrf.mxu0
      %v1167 = vadd.f32 0.0, %v1166
      %v1168 = vpop.f32.mrf.mxu0
      %1169 = vdwg.mxu0
      %v1170 = vsel %vm833, 1, 0
      %v1171 = vsel %vm834, 1, 0
      %v1172 = vsel %vm835, 1, 0
      %v1173 = vsel %vm836, 1, 0
      %v1174 = vsel %vm837, 1, 0
      %v1175 = vsel %vm838, 1, 0
      %v1176 = vsel %vm839, 1, 0
      %v1177 = vsel %vm840, 1, 0
      %v1178 = vsel %vm841, 1, 0
      %v1179 = vsel %vm842, 1, 0
      %v1180 = vsel %vm843, 1, 0
      %v1181 = vsel %vm844, 1, 0
      %v1182 = vsel %vm845, 1, 0
      %v1183 = vsel %vm846, 1, 0
      %v1184 = vsel %vm847, 1, 0
      %v1185 = vsel %vm848, 1, 0
      %v1186 = vsel %vm849, 1, 0
      %v1187 = vsel %vm850, 1, 0
      %v1188 = vsel %vm851, 1, 0
      %v1189 = vsel %vm852, 1, 0
      %v1190 = vsel %vm853, 1, 0
      %v1191 = vsel %vm854, 1, 0
      %v1192 = vsel %vm855, 1, 0
      %v1193 = vsel %vm856, 1, 0
      %v1194 = vsel %vm857, 1, 0
      %v1195 = vsel %vm858, 1, 0
      %v1196 = vsel %vm859, 1, 0
      %v1197 = vsel %vm860, 1, 0
      %v1198 = vsel %vm861, 1, 0
      %v1199 = vsel %vm862, 1, 0
      %v1200 = vsel %vm863, 1, 0
      %v1201 = vsel %vm864, 1, 0
      %vm1202 = vcmp.eq.s32.totalorder %v1170, 1
      %vm1203 = vcmp.eq.s32.totalorder %v1171, 1
      %vm1204 = vcmp.eq.s32.totalorder %v1172, 1
      %vm1205 = vcmp.eq.s32.totalorder %v1173, 1
      %vm1206 = vcmp.eq.s32.totalorder %v1174, 1
      %vm1207 = vcmp.eq.s32.totalorder %v1175, 1
      %vm1208 = vcmp.eq.s32.totalorder %v1176, 1
      %vm1209 = vcmp.eq.s32.totalorder %v1177, 1
      %vm1210 = vcmp.eq.s32.totalorder %v1178, 1
      %vm1211 = vcmp.eq.s32.totalorder %v1179, 1
      %vm1212 = vcmp.eq.s32.totalorder %v1180, 1
      %vm1213 = vcmp.eq.s32.totalorder %v1181, 1
      %vm1214 = vcmp.eq.s32.totalorder %v1182, 1
      %vm1215 = vcmp.eq.s32.totalorder %v1183, 1
      %vm1216 = vcmp.eq.s32.totalorder %v1184, 1
      %vm1217 = vcmp.eq.s32.totalorder %v1185, 1
      %vm1218 = vcmp.eq.s32.totalorder %v1186, 1
      %vm1219 = vcmp.eq.s32.totalorder %v1187, 1
      %vm1220 = vcmp.eq.s32.totalorder %v1188, 1
      %vm1221 = vcmp.eq.s32.totalorder %v1189, 1
      %vm1222 = vcmp.eq.s32.totalorder %v1190, 1
      %vm1223 = vcmp.eq.s32.totalorder %v1191, 1
      %vm1224 = vcmp.eq.s32.totalorder %v1192, 1
      %vm1225 = vcmp.eq.s32.totalorder %v1193, 1
      %vm1226 = vcmp.eq.s32.totalorder %v1194, 1
      %vm1227 = vcmp.eq.s32.totalorder %v1195, 1
      %vm1228 = vcmp.eq.s32.totalorder %v1196, 1
      %vm1229 = vcmp.eq.s32.totalorder %v1197, 1
      %vm1230 = vcmp.eq.s32.totalorder %v1198, 1
      %vm1231 = vcmp.eq.s32.totalorder %v1199, 1
      %vm1232 = vcmp.eq.s32.totalorder %v1200, 1
      %vm1233 = vcmp.eq.s32.totalorder %v1201, 1
      %v1234 = vsel %vm1202, %v1012, 0.0
      %v1235 = vsel %vm1203, %v1017, 0.0
      %v1236 = vsel %vm1204, %v1022, 0.0
      %v1237 = vsel %vm1205, %v1027, 0.0
      %v1238 = vsel %vm1206, %v1032, 0.0
      %v1239 = vsel %vm1207, %v1037, 0.0
      %v1240 = vsel %vm1208, %v1042, 0.0
      %v1241 = vsel %vm1209, %v1047, 0.0
      %v1242 = vsel %vm1210, %v1052, 0.0
      %v1243 = vsel %vm1211, %v1057, 0.0
      %v1244 = vsel %vm1212, %v1062, 0.0
      %v1245 = vsel %vm1213, %v1067, 0.0
      %v1246 = vsel %vm1214, %v1072, 0.0
      %v1247 = vsel %vm1215, %v1077, 0.0
      %v1248 = vsel %vm1216, %v1082, 0.0
      %v1249 = vsel %vm1217, %v1087, 0.0
      %v1250 = vsel %vm1218, %v1092, 0.0
      %v1251 = vsel %vm1219, %v1097, 0.0
      %v1252 = vsel %vm1220, %v1102, 0.0
      %v1253 = vsel %vm1221, %v1107, 0.0
      %v1254 = vsel %vm1222, %v1112, 0.0
      %v1255 = vsel %vm1223, %v1117, 0.0
      %v1256 = vsel %vm1224, %v1122, 0.0
      %v1257 = vsel %vm1225, %v1127, 0.0
      %v1258 = vsel %vm1226, %v1132, 0.0
      %v1259 = vsel %vm1227, %v1137, 0.0
      %v1260 = vsel %vm1228, %v1142, 0.0
      %v1261 = vsel %vm1229, %v1147, 0.0
      %v1262 = vsel %vm1230, %v1152, 0.0
      %v1263 = vsel %vm1231, %v1157, 0.0
      %v1264 = vsel %vm1232, %v1162, 0.0
      %v1265 = vsel %vm1233, %v1167, 0.0
      %v1266 = vadd.f32 %v1234, 0.0
      %v1267 = vadd.f32 %v1235, 0.0
      %v1268 = vadd.f32 %v1236, 0.0
      %v1269 = vadd.f32 %v1237, 0.0
      %v1270 = vadd.f32 %v1238, 0.0
      %v1271 = vadd.f32 %v1239, 0.0
      %v1272 = vadd.f32 %v1240, 0.0
      %v1273 = vadd.f32 %v1241, 0.0
      %v1274 = vadd.f32 %v1242, 0.0
      %v1275 = vadd.f32 %v1243, 0.0
      %v1276 = vadd.f32 %v1244, 0.0
      %v1277 = vadd.f32 %v1245, 0.0
      %v1278 = vadd.f32 %v1246, 0.0
      %v1279 = vadd.f32 %v1247, 0.0
      %v1280 = vadd.f32 %v1248, 0.0
      %v1281 = vadd.f32 %v1249, 0.0
      %v1282 = vadd.f32 %v1250, 0.0
      %v1283 = vadd.f32 %v1251, 0.0
      %v1284 = vadd.f32 %v1252, 0.0
      %v1285 = vadd.f32 %v1253, 0.0
      %v1286 = vadd.f32 %v1254, 0.0
      %v1287 = vadd.f32 %v1255, 0.0
      %v1288 = vadd.f32 %v1256, 0.0
      %v1289 = vadd.f32 %v1257, 0.0
      %v1290 = vadd.f32 %v1258, 0.0
      %v1291 = vadd.f32 %v1259, 0.0
      %v1292 = vadd.f32 %v1260, 0.0
      %v1293 = vadd.f32 %v1261, 0.0
      %v1294 = vadd.f32 %v1262, 0.0
      %v1295 = vadd.f32 %v1263, 0.0
      %v1296 = vadd.f32 %v1264, 0.0
      %v1297 = vadd.f32 %v1265, 0.0
      %v1298 = vld [vmem:[#allocation2 + $0x8] sm:$0xff]
      %v1299 = vld [vmem:[#allocation2 + $0x10] sm:$0xff]
      %v1300 = vld [vmem:[#allocation2 + $0x18] sm:$0xff]
      %v1301 = vld [vmem:[#allocation2 + $0x20] sm:$0xff]
      %v1302 = vld [vmem:[#allocation2 + $0x28] sm:$0xff]
      %v1303 = vld [vmem:[#allocation2 + $0x30] sm:$0xff]
      %v1304 = vld [vmem:[#allocation2 + $0x38] sm:$0xff]
      %v1305 = vld [vmem:[#allocation2 + $0x40] sm:$0xff]
      %v1306 = vld [vmem:[#allocation2 + $0x48] sm:$0xff]
      %v1307 = vld [vmem:[#allocation2 + $0x50] sm:$0xff]
      %v1308 = vld [vmem:[#allocation2 + $0x58] sm:$0xff]
      %v1309 = vld [vmem:[#allocation2 + $0x60] sm:$0xff]
      %v1310 = vld [vmem:[#allocation2 + $0x68] sm:$0xff]
      %v1311 = vld [vmem:[#allocation2 + $0x70] sm:$0xff]
      %v1312 = vld [vmem:[#allocation2 + $0x78] sm:$0xff]
      %v1313 = vld [vmem:[#allocation2 + $0x80] sm:$0xff]
      %v1314 = vld [vmem:[#allocation2 + $0x88] sm:$0xff]
      %v1315 = vld [vmem:[#allocation2 + $0x90] sm:$0xff]
      %v1316 = vld [vmem:[#allocation2 + $0x98] sm:$0xff]
      %v1317 = vld [vmem:[#allocation2 + $0xa0] sm:$0xff]
      %v1318 = vld [vmem:[#allocation2 + $0xa8] sm:$0xff]
      %v1319 = vld [vmem:[#allocation2 + $0xb0] sm:$0xff]
      %v1320 = vld [vmem:[#allocation2 + $0xb8] sm:$0xff]
      %v1321 = vld [vmem:[#allocation2 + $0xc0] sm:$0xff]
      %v1322 = vld [vmem:[#allocation2 + $0xc8] sm:$0xff]
      %v1323 = vld [vmem:[#allocation2 + $0xd0] sm:$0xff]
      %v1324 = vld [vmem:[#allocation2 + $0xd8] sm:$0xff]
      %v1325 = vld [vmem:[#allocation2 + $0xe0] sm:$0xff]
      %v1326 = vld [vmem:[#allocation2 + $0xe8] sm:$0xff]
      %v1327 = vld [vmem:[#allocation2 + $0xf0] sm:$0xff]
      %v1328 = vld [vmem:[#allocation2 + $0xf8] sm:$0xff]
      %v1329 = vld [vmem:[#allocation2 + $0x100] sm:$0xff]
      %s1330 = scalar_lea.vmem %s3, 128
      %v1331 = vld [vmem:[%s1330] sm:$0xff]
      %v1332 = vld [vmem:[%s1330 + $0x8] sm:$0xff]
      %v1333 = vld [vmem:[%s1330 + $0x10] sm:$0xff]
      %v1334 = vld [vmem:[%s1330 + $0x18] sm:$0xff]
      %v1335 = vld [vmem:[%s1330 + $0x20] sm:$0xff]
      %v1336 = vld [vmem:[%s1330 + $0x28] sm:$0xff]
      %v1337 = vld [vmem:[%s1330 + $0x30] sm:$0xff]
      %v1338 = vld [vmem:[%s1330 + $0x38] sm:$0xff]
      %v1339 = vld [vmem:[%s1330 + $0x40] sm:$0xff]
      %v1340 = vld [vmem:[%s1330 + $0x48] sm:$0xff]
      %v1341 = vld [vmem:[%s1330 + $0x50] sm:$0xff]
      %v1342 = vld [vmem:[%s1330 + $0x58] sm:$0xff]
      %v1343 = vld [vmem:[%s1330 + $0x60] sm:$0xff]
      %v1344 = vld [vmem:[%s1330 + $0x68] sm:$0xff]
      %v1345 = vld [vmem:[%s1330 + $0x70] sm:$0xff]
      %v1346 = vld [vmem:[%s1330 + $0x78] sm:$0xff]
      %1347 = vmatprep.subr.mxu0 0.0
      %1348 = vmatpush1.msra.mxu0 %v1346
      %1349 = vmatprep.subr.mxu0 0.0
      %1350 = vmatpush1.msra.mxu0 %v1345
      %1351 = vmatprep.subr.mxu0 0.0
      %1352 = vmatpush1.msra.mxu0 %v1344
      %1353 = vmatprep.subr.mxu0 0.0
      %1354 = vmatpush1.msra.mxu0 %v1343
      %1355 = vmatprep.subr.mxu0 0.0
      %1356 = vmatpush1.msra.mxu0 %v1342
      %1357 = vmatprep.subr.mxu0 0.0
      %1358 = vmatpush1.msra.mxu0 %v1341
      %1359 = vmatprep.subr.mxu0 0.0
      %1360 = vmatpush1.msra.mxu0 %v1340
      %1361 = vmatprep.subr.mxu0 0.0
      %1362 = vmatpush1.msra.mxu0 %v1339
      %1363 = vmatprep.subr.mxu0 0.0
      %1364 = vmatpush1.msra.mxu0 %v1338
      %1365 = vmatprep.subr.mxu0 0.0
      %1366 = vmatpush1.msra.mxu0 %v1337
      %1367 = vmatprep.subr.mxu0 0.0
      %1368 = vmatpush1.msra.mxu0 %v1336
      %1369 = vmatprep.subr.mxu0 0.0
      %1370 = vmatpush1.msra.mxu0 %v1335
      %1371 = vmatprep.subr.mxu0 0.0
      %1372 = vmatpush1.msra.mxu0 %v1334
      %1373 = vmatprep.subr.mxu0 0.0
      %1374 = vmatpush1.msra.mxu0 %v1333
      %1375 = vmatprep.subr.mxu0 0.0
      %1376 = vmatpush1.msra.mxu0 %v1332
      %1377 = vmatprep.subr.mxu0 0.0
      %1378 = vmatpush1.msra.mxu0 %v1331
      %1379 = vmatprep.subr.mxu0 0.0
      %1380 = vmatpush2.msra.mxu0 0.0
      %1381 = vmatprep.subr.mxu0 0.0
      %1382 = vmatpush2.msra.mxu0 0.0
      %1383 = vmatprep.subr.mxu0 0.0
      %1384 = vmatpush2.msra.mxu0 0.0
      %1385 = vmatprep.subr.mxu0 0.0
      %1386 = vmatpush2.msra.mxu0 0.0
      %1387 = vmatprep.subr.mxu0 0.0
      %1388 = vmatpush2.msra.mxu0 0.0
      %1389 = vmatprep.subr.mxu0 0.0
      %1390 = vmatpush2.msra.mxu0 0.0
      %1391 = vmatprep.subr.mxu0 0.0
      %1392 = vmatpush2.msra.mxu0 0.0
      %1393 = vmatprep.subr.mxu0 0.0
      %1394 = vmatpush2.msra.mxu0 0.0
      %1395 = vmatprep.subr.mxu0 0.0
      %1396 = vmatpush2.msra.mxu0 0.0
      %1397 = vmatprep.subr.mxu0 0.0
      %1398 = vmatpush2.msra.mxu0 0.0
      %1399 = vmatprep.subr.mxu0 0.0
      %1400 = vmatpush2.msra.mxu0 0.0
      %1401 = vmatprep.subr.mxu0 0.0
      %1402 = vmatpush2.msra.mxu0 0.0
      %1403 = vmatprep.subr.mxu0 0.0
      %1404 = vmatpush2.msra.mxu0 0.0
      %1405 = vmatprep.subr.mxu0 0.0
      %1406 = vmatpush2.msra.mxu0 0.0
      %1407 = vmatprep.subr.mxu0 0.0
      %1408 = vmatpush2.msra.mxu0 0.0
      %1409 = vmatprep.subr.mxu0 0.0
      %1410 = vmatpush2.msra.mxu0 0.0
      %1411 = vmatprep.mubr.f32.mxu0 0.0
      %1412 = vmatmul.mubr.f32.gmra.mxu0 %v1298
      %v1413 = vpop.f32.mrf.mxu0
      %v1414 = vadd.f32 0.0, %v1413
      %v1415 = vpop.f32.mrf.mxu0
      %1416 = vmatprep.mubr.f32.mxu0 0.0
      %1417 = vmatmul.mubr.f32.gmra.mxu0 %v1299
      %v1418 = vpop.f32.mrf.mxu0
      %v1419 = vadd.f32 0.0, %v1418
      %v1420 = vpop.f32.mrf.mxu0
      %1421 = vmatprep.mubr.f32.mxu0 0.0
      %1422 = vmatmul.mubr.f32.gmra.mxu0 %v1300
      %v1423 = vpop.f32.mrf.mxu0
      %v1424 = vadd.f32 0.0, %v1423
      %v1425 = vpop.f32.mrf.mxu0
      %1426 = vmatprep.mubr.f32.mxu0 0.0
      %1427 = vmatmul.mubr.f32.gmra.mxu0 %v1301
      %v1428 = vpop.f32.mrf.mxu0
      %v1429 = vadd.f32 0.0, %v1428
      %v1430 = vpop.f32.mrf.mxu0
      %1431 = vmatprep.mubr.f32.mxu0 0.0
      %1432 = vmatmul.mubr.f32.gmra.mxu0 %v1302
      %v1433 = vpop.f32.mrf.mxu0
      %v1434 = vadd.f32 0.0, %v1433
      %v1435 = vpop.f32.mrf.mxu0
      %1436 = vmatprep.mubr.f32.mxu0 0.0
      %1437 = vmatmul.mubr.f32.gmra.mxu0 %v1303
      %v1438 = vpop.f32.mrf.mxu0
      %v1439 = vadd.f32 0.0, %v1438
      %v1440 = vpop.f32.mrf.mxu0
      %1441 = vmatprep.mubr.f32.mxu0 0.0
      %1442 = vmatmul.mubr.f32.gmra.mxu0 %v1304
      %v1443 = vpop.f32.mrf.mxu0
      %v1444 = vadd.f32 0.0, %v1443
      %v1445 = vpop.f32.mrf.mxu0
      %1446 = vmatprep.mubr.f32.mxu0 0.0
      %1447 = vmatmul.mubr.f32.gmra.mxu0 %v1305
      %v1448 = vpop.f32.mrf.mxu0
      %v1449 = vadd.f32 0.0, %v1448
      %v1450 = vpop.f32.mrf.mxu0
      %1451 = vmatprep.mubr.f32.mxu0 0.0
      %1452 = vmatmul.mubr.f32.gmra.mxu0 %v1306
      %v1453 = vpop.f32.mrf.mxu0
      %v1454 = vadd.f32 0.0, %v1453
      %v1455 = vpop.f32.mrf.mxu0
      %1456 = vmatprep.mubr.f32.mxu0 0.0
      %1457 = vmatmul.mubr.f32.gmra.mxu0 %v1307
      %v1458 = vpop.f32.mrf.mxu0
      %v1459 = vadd.f32 0.0, %v1458
      %v1460 = vpop.f32.mrf.mxu0
      %1461 = vmatprep.mubr.f32.mxu0 0.0
      %1462 = vmatmul.mubr.f32.gmra.mxu0 %v1308
      %v1463 = vpop.f32.mrf.mxu0
      %v1464 = vadd.f32 0.0, %v1463
      %v1465 = vpop.f32.mrf.mxu0
      %1466 = vmatprep.mubr.f32.mxu0 0.0
      %1467 = vmatmul.mubr.f32.gmra.mxu0 %v1309
      %v1468 = vpop.f32.mrf.mxu0
      %v1469 = vadd.f32 0.0, %v1468
      %v1470 = vpop.f32.mrf.mxu0
      %1471 = vmatprep.mubr.f32.mxu0 0.0
      %1472 = vmatmul.mubr.f32.gmra.mxu0 %v1310
      %v1473 = vpop.f32.mrf.mxu0
      %v1474 = vadd.f32 0.0, %v1473
      %v1475 = vpop.f32.mrf.mxu0
      %1476 = vmatprep.mubr.f32.mxu0 0.0
      %1477 = vmatmul.mubr.f32.gmra.mxu0 %v1311
      %v1478 = vpop.f32.mrf.mxu0
      %v1479 = vadd.f32 0.0, %v1478
      %v1480 = vpop.f32.mrf.mxu0
      %1481 = vmatprep.mubr.f32.mxu0 0.0
      %1482 = vmatmul.mubr.f32.gmra.mxu0 %v1312
      %v1483 = vpop.f32.mrf.mxu0
      %v1484 = vadd.f32 0.0, %v1483
      %v1485 = vpop.f32.mrf.mxu0
      %1486 = vmatprep.mubr.f32.mxu0 0.0
      %1487 = vmatmul.mubr.f32.gmra.mxu0 %v1313
      %v1488 = vpop.f32.mrf.mxu0
      %v1489 = vadd.f32 0.0, %v1488
      %v1490 = vpop.f32.mrf.mxu0
      %1491 = vmatprep.mubr.f32.mxu0 0.0
      %1492 = vmatmul.mubr.f32.gmra.mxu0 %v1314
      %v1493 = vpop.f32.mrf.mxu0
      %v1494 = vadd.f32 0.0, %v1493
      %v1495 = vpop.f32.mrf.mxu0
      %1496 = vmatprep.mubr.f32.mxu0 0.0
      %1497 = vmatmul.mubr.f32.gmra.mxu0 %v1315
      %v1498 = vpop.f32.mrf.mxu0
      %v1499 = vadd.f32 0.0, %v1498
      %v1500 = vpop.f32.mrf.mxu0
      %1501 = vmatprep.mubr.f32.mxu0 0.0
      %1502 = vmatmul.mubr.f32.gmra.mxu0 %v1316
      %v1503 = vpop.f32.mrf.mxu0
      %v1504 = vadd.f32 0.0, %v1503
      %v1505 = vpop.f32.mrf.mxu0
      %1506 = vmatprep.mubr.f32.mxu0 0.0
      %1507 = vmatmul.mubr.f32.gmra.mxu0 %v1317
      %v1508 = vpop.f32.mrf.mxu0
      %v1509 = vadd.f32 0.0, %v1508
      %v1510 = vpop.f32.mrf.mxu0
      %1511 = vmatprep.mubr.f32.mxu0 0.0
      %1512 = vmatmul.mubr.f32.gmra.mxu0 %v1318
      %v1513 = vpop.f32.mrf.mxu0
      %v1514 = vadd.f32 0.0, %v1513
      %v1515 = vpop.f32.mrf.mxu0
      %1516 = vmatprep.mubr.f32.mxu0 0.0
      %1517 = vmatmul.mubr.f32.gmra.mxu0 %v1319
      %v1518 = vpop.f32.mrf.mxu0
      %v1519 = vadd.f32 0.0, %v1518
      %v1520 = vpop.f32.mrf.mxu0
      %1521 = vmatprep.mubr.f32.mxu0 0.0
      %1522 = vmatmul.mubr.f32.gmra.mxu0 %v1320
      %v1523 = vpop.f32.mrf.mxu0
      %v1524 = vadd.f32 0.0, %v1523
      %v1525 = vpop.f32.mrf.mxu0
      %1526 = vmatprep.mubr.f32.mxu0 0.0
      %1527 = vmatmul.mubr.f32.gmra.mxu0 %v1321
      %v1528 = vpop.f32.mrf.mxu0
      %v1529 = vadd.f32 0.0, %v1528
      %v1530 = vpop.f32.mrf.mxu0
      %1531 = vmatprep.mubr.f32.mxu0 0.0
      %1532 = vmatmul.mubr.f32.gmra.mxu0 %v1322
      %v1533 = vpop.f32.mrf.mxu0
      %v1534 = vadd.f32 0.0, %v1533
      %v1535 = vpop.f32.mrf.mxu0
      %1536 = vmatprep.mubr.f32.mxu0 0.0
      %1537 = vmatmul.mubr.f32.gmra.mxu0 %v1323
      %v1538 = vpop.f32.mrf.mxu0
      %v1539 = vadd.f32 0.0, %v1538
      %v1540 = vpop.f32.mrf.mxu0
      %1541 = vmatprep.mubr.f32.mxu0 0.0
      %1542 = vmatmul.mubr.f32.gmra.mxu0 %v1324
      %v1543 = vpop.f32.mrf.mxu0
      %v1544 = vadd.f32 0.0, %v1543
      %v1545 = vpop.f32.mrf.mxu0
      %1546 = vmatprep.mubr.f32.mxu0 0.0
      %1547 = vmatmul.mubr.f32.gmra.mxu0 %v1325
      %v1548 = vpop.f32.mrf.mxu0
      %v1549 = vadd.f32 0.0, %v1548
      %v1550 = vpop.f32.mrf.mxu0
      %1551 = vmatprep.mubr.f32.mxu0 0.0
      %1552 = vmatmul.mubr.f32.gmra.mxu0 %v1326
      %v1553 = vpop.f32.mrf.mxu0
      %v1554 = vadd.f32 0.0, %v1553
      %v1555 = vpop.f32.mrf.mxu0
      %1556 = vmatprep.mubr.f32.mxu0 0.0
      %1557 = vmatmul.mubr.f32.gmra.mxu0 %v1327
      %v1558 = vpop.f32.mrf.mxu0
      %v1559 = vadd.f32 0.0, %v1558
      %v1560 = vpop.f32.mrf.mxu0
      %1561 = vmatprep.mubr.f32.mxu0 0.0
      %1562 = vmatmul.mubr.f32.gmra.mxu0 %v1328
      %v1563 = vpop.f32.mrf.mxu0
      %v1564 = vadd.f32 0.0, %v1563
      %v1565 = vpop.f32.mrf.mxu0
      %1566 = vmatprep.mubr.f32.mxu0 0.0
      %1567 = vmatmul.mubr.f32.gmra.mxu0 %v1329
      %v1568 = vpop.f32.mrf.mxu0
      %v1569 = vadd.f32 0.0, %v1568
      %v1570 = vpop.f32.mrf.mxu0
      %1571 = vdwg.mxu0
      %v1572 = vadd.f32 %v1266, %v1414
      %v1573 = vadd.f32 %v1267, %v1419
      %v1574 = vadd.f32 %v1268, %v1424
      %v1575 = vadd.f32 %v1269, %v1429
      %v1576 = vadd.f32 %v1270, %v1434
      %v1577 = vadd.f32 %v1271, %v1439
      %v1578 = vadd.f32 %v1272, %v1444
      %v1579 = vadd.f32 %v1273, %v1449
      %v1580 = vadd.f32 %v1274, %v1454
      %v1581 = vadd.f32 %v1275, %v1459
      %v1582 = vadd.f32 %v1276, %v1464
      %v1583 = vadd.f32 %v1277, %v1469
      %v1584 = vadd.f32 %v1278, %v1474
      %v1585 = vadd.f32 %v1279, %v1479
      %v1586 = vadd.f32 %v1280, %v1484
      %v1587 = vadd.f32 %v1281, %v1489
      %v1588 = vadd.f32 %v1282, %v1494
      %v1589 = vadd.f32 %v1283, %v1499
      %v1590 = vadd.f32 %v1284, %v1504
      %v1591 = vadd.f32 %v1285, %v1509
      %v1592 = vadd.f32 %v1286, %v1514
      %v1593 = vadd.f32 %v1287, %v1519
      %v1594 = vadd.f32 %v1288, %v1524
      %v1595 = vadd.f32 %v1289, %v1529
      %v1596 = vadd.f32 %v1290, %v1534
      %v1597 = vadd.f32 %v1291, %v1539
      %v1598 = vadd.f32 %v1292, %v1544
      %v1599 = vadd.f32 %v1293, %v1549
      %v1600 = vadd.f32 %v1294, %v1554
      %v1601 = vadd.f32 %v1295, %v1559
      %v1602 = vadd.f32 %v1296, %v1564
      %v1603 = vadd.f32 %v1297, %v1569
      %v1604 = vld [vmem:[#allocation2 + $0x9] sm:$0xff]
      %v1605 = vld [vmem:[#allocation2 + $0x11] sm:$0xff]
      %v1606 = vld [vmem:[#allocation2 + $0x19] sm:$0xff]
      %v1607 = vld [vmem:[#allocation2 + $0x21] sm:$0xff]
      %v1608 = vld [vmem:[#allocation2 + $0x29] sm:$0xff]
      %v1609 = vld [vmem:[#allocation2 + $0x31] sm:$0xff]
      %v1610 = vld [vmem:[#allocation2 + $0x39] sm:$0xff]
      %v1611 = vld [vmem:[#allocation2 + $0x41] sm:$0xff]
      %v1612 = vld [vmem:[#allocation2 + $0x49] sm:$0xff]
      %v1613 = vld [vmem:[#allocation2 + $0x51] sm:$0xff]
      %v1614 = vld [vmem:[#allocation2 + $0x59] sm:$0xff]
      %v1615 = vld [vmem:[#allocation2 + $0x61] sm:$0xff]
      %v1616 = vld [vmem:[#allocation2 + $0x69] sm:$0xff]
      %v1617 = vld [vmem:[#allocation2 + $0x71] sm:$0xff]
      %v1618 = vld [vmem:[#allocation2 + $0x79] sm:$0xff]
      %v1619 = vld [vmem:[#allocation2 + $0x81] sm:$0xff]
      %v1620 = vld [vmem:[#allocation2 + $0x89] sm:$0xff]
      %v1621 = vld [vmem:[#allocation2 + $0x91] sm:$0xff]
      %v1622 = vld [vmem:[#allocation2 + $0x99] sm:$0xff]
      %v1623 = vld [vmem:[#allocation2 + $0xa1] sm:$0xff]
      %v1624 = vld [vmem:[#allocation2 + $0xa9] sm:$0xff]
      %v1625 = vld [vmem:[#allocation2 + $0xb1] sm:$0xff]
      %v1626 = vld [vmem:[#allocation2 + $0xb9] sm:$0xff]
      %v1627 = vld [vmem:[#allocation2 + $0xc1] sm:$0xff]
      %v1628 = vld [vmem:[#allocation2 + $0xc9] sm:$0xff]
      %v1629 = vld [vmem:[#allocation2 + $0xd1] sm:$0xff]
      %v1630 = vld [vmem:[#allocation2 + $0xd9] sm:$0xff]
      %v1631 = vld [vmem:[#allocation2 + $0xe1] sm:$0xff]
      %v1632 = vld [vmem:[#allocation2 + $0xe9] sm:$0xff]
      %v1633 = vld [vmem:[#allocation2 + $0xf1] sm:$0xff]
      %v1634 = vld [vmem:[#allocation2 + $0xf9] sm:$0xff]
      %v1635 = vld [vmem:[#allocation2 + $0x101] sm:$0xff]
      %s1636 = scalar_lea.vmem %s3, 256
      %v1637 = vld [vmem:[%s1636] sm:$0xff]
      %v1638 = vld [vmem:[%s1636 + $0x8] sm:$0xff]
      %v1639 = vld [vmem:[%s1636 + $0x10] sm:$0xff]
      %v1640 = vld [vmem:[%s1636 + $0x18] sm:$0xff]
      %v1641 = vld [vmem:[%s1636 + $0x20] sm:$0xff]
      %v1642 = vld [vmem:[%s1636 + $0x28] sm:$0xff]
      %v1643 = vld [vmem:[%s1636 + $0x30] sm:$0xff]
      %v1644 = vld [vmem:[%s1636 + $0x38] sm:$0xff]
      %v1645 = vld [vmem:[%s1636 + $0x40] sm:$0xff]
      %v1646 = vld [vmem:[%s1636 + $0x48] sm:$0xff]
      %v1647 = vld [vmem:[%s1636 + $0x50] sm:$0xff]
      %v1648 = vld [vmem:[%s1636 + $0x58] sm:$0xff]
      %v1649 = vld [vmem:[%s1636 + $0x60] sm:$0xff]
      %v1650 = vld [vmem:[%s1636 + $0x68] sm:$0xff]
      %v1651 = vld [vmem:[%s1636 + $0x70] sm:$0xff]
      %v1652 = vld [vmem:[%s1636 + $0x78] sm:$0xff]
      %1653 = vmatprep.subr.mxu0 0.0
      %1654 = vmatpush1.msra.mxu0 %v1652
      %1655 = vmatprep.subr.mxu0 0.0
      %1656 = vmatpush1.msra.mxu0 %v1651
      %1657 = vmatprep.subr.mxu0 0.0
      %1658 = vmatpush1.msra.mxu0 %v1650
      %1659 = vmatprep.subr.mxu0 0.0
      %1660 = vmatpush1.msra.mxu0 %v1649
      %1661 = vmatprep.subr.mxu0 0.0
      %1662 = vmatpush1.msra.mxu0 %v1648
      %1663 = vmatprep.subr.mxu0 0.0
      %1664 = vmatpush1.msra.mxu0 %v1647
      %1665 = vmatprep.subr.mxu0 0.0
      %1666 = vmatpush1.msra.mxu0 %v1646
      %1667 = vmatprep.subr.mxu0 0.0
      %1668 = vmatpush1.msra.mxu0 %v1645
      %1669 = vmatprep.subr.mxu0 0.0
      %1670 = vmatpush1.msra.mxu0 %v1644
      %1671 = vmatprep.subr.mxu0 0.0
      %1672 = vmatpush1.msra.mxu0 %v1643
      %1673 = vmatprep.subr.mxu0 0.0
      %1674 = vmatpush1.msra.mxu0 %v1642
      %1675 = vmatprep.subr.mxu0 0.0
      %1676 = vmatpush1.msra.mxu0 %v1641
      %1677 = vmatprep.subr.mxu0 0.0
      %1678 = vmatpush1.msra.mxu0 %v1640
      %1679 = vmatprep.subr.mxu0 0.0
      %1680 = vmatpush1.msra.mxu0 %v1639
      %1681 = vmatprep.subr.mxu0 0.0
      %1682 = vmatpush1.msra.mxu0 %v1638
      %1683 = vmatprep.subr.mxu0 0.0
      %1684 = vmatpush1.msra.mxu0 %v1637
      %1685 = vmatprep.subr.mxu0 0.0
      %1686 = vmatpush2.msra.mxu0 0.0
      %1687 = vmatprep.subr.mxu0 0.0
      %1688 = vmatpush2.msra.mxu0 0.0
      %1689 = vmatprep.subr.mxu0 0.0
      %1690 = vmatpush2.msra.mxu0 0.0
      %1691 = vmatprep.subr.mxu0 0.0
      %1692 = vmatpush2.msra.mxu0 0.0
      %1693 = vmatprep.subr.mxu0 0.0
      %1694 = vmatpush2.msra.mxu0 0.0
      %1695 = vmatprep.subr.mxu0 0.0
      %1696 = vmatpush2.msra.mxu0 0.0
      %1697 = vmatprep.subr.mxu0 0.0
      %1698 = vmatpush2.msra.mxu0 0.0
      %1699 = vmatprep.subr.mxu0 0.0
      %1700 = vmatpush2.msra.mxu0 0.0
      %1701 = vmatprep.subr.mxu0 0.0
      %1702 = vmatpush2.msra.mxu0 0.0
      %1703 = vmatprep.subr.mxu0 0.0
      %1704 = vmatpush2.msra.mxu0 0.0
      %1705 = vmatprep.subr.mxu0 0.0
      %1706 = vmatpush2.msra.mxu0 0.0
      %1707 = vmatprep.subr.mxu0 0.0
      %1708 = vmatpush2.msra.mxu0 0.0
      %1709 = vmatprep.subr.mxu0 0.0
      %1710 = vmatpush2.msra.mxu0 0.0
      %1711 = vmatprep.subr.mxu0 0.0
      %1712 = vmatpush2.msra.mxu0 0.0
      %1713 = vmatprep.subr.mxu0 0.0
      %1714 = vmatpush2.msra.mxu0 0.0
      %1715 = vmatprep.subr.mxu0 0.0
      %1716 = vmatpush2.msra.mxu0 0.0
      %1717 = vmatprep.mubr.f32.mxu0 0.0
      %1718 = vmatmul.mubr.f32.gmra.mxu0 %v1604
      %v1719 = vpop.f32.mrf.mxu0
      %v1720 = vadd.f32 0.0, %v1719
      %v1721 = vpop.f32.mrf.mxu0
      %1722 = vmatprep.mubr.f32.mxu0 0.0
      %1723 = vmatmul.mubr.f32.gmra.mxu0 %v1605
      %v1724 = vpop.f32.mrf.mxu0
      %v1725 = vadd.f32 0.0, %v1724
      %v1726 = vpop.f32.mrf.mxu0
      %1727 = vmatprep.mubr.f32.mxu0 0.0
      %1728 = vmatmul.mubr.f32.gmra.mxu0 %v1606
      %v1729 = vpop.f32.mrf.mxu0
      %v1730 = vadd.f32 0.0, %v1729
      %v1731 = vpop.f32.mrf.mxu0
      %1732 = vmatprep.mubr.f32.mxu0 0.0
      %1733 = vmatmul.mubr.f32.gmra.mxu0 %v1607
      %v1734 = vpop.f32.mrf.mxu0
      %v1735 = vadd.f32 0.0, %v1734
      %v1736 = vpop.f32.mrf.mxu0
      %1737 = vmatprep.mubr.f32.mxu0 0.0
      %1738 = vmatmul.mubr.f32.gmra.mxu0 %v1608
      %v1739 = vpop.f32.mrf.mxu0
      %v1740 = vadd.f32 0.0, %v1739
      %v1741 = vpop.f32.mrf.mxu0
      %1742 = vmatprep.mubr.f32.mxu0 0.0
      %1743 = vmatmul.mubr.f32.gmra.mxu0 %v1609
      %v1744 = vpop.f32.mrf.mxu0
      %v1745 = vadd.f32 0.0, %v1744
      %v1746 = vpop.f32.mrf.mxu0
      %1747 = vmatprep.mubr.f32.mxu0 0.0
      %1748 = vmatmul.mubr.f32.gmra.mxu0 %v1610
      %v1749 = vpop.f32.mrf.mxu0
      %v1750 = vadd.f32 0.0, %v1749
      %v1751 = vpop.f32.mrf.mxu0
      %1752 = vmatprep.mubr.f32.mxu0 0.0
      %1753 = vmatmul.mubr.f32.gmra.mxu0 %v1611
      %v1754 = vpop.f32.mrf.mxu0
      %v1755 = vadd.f32 0.0, %v1754
      %v1756 = vpop.f32.mrf.mxu0
      %1757 = vmatprep.mubr.f32.mxu0 0.0
      %1758 = vmatmul.mubr.f32.gmra.mxu0 %v1612
      %v1759 = vpop.f32.mrf.mxu0
      %v1760 = vadd.f32 0.0, %v1759
      %v1761 = vpop.f32.mrf.mxu0
      %1762 = vmatprep.mubr.f32.mxu0 0.0
      %1763 = vmatmul.mubr.f32.gmra.mxu0 %v1613
      %v1764 = vpop.f32.mrf.mxu0
      %v1765 = vadd.f32 0.0, %v1764
      %v1766 = vpop.f32.mrf.mxu0
      %1767 = vmatprep.mubr.f32.mxu0 0.0
      %1768 = vmatmul.mubr.f32.gmra.mxu0 %v1614
      %v1769 = vpop.f32.mrf.mxu0
      %v1770 = vadd.f32 0.0, %v1769
      %v1771 = vpop.f32.mrf.mxu0
      %1772 = vmatprep.mubr.f32.mxu0 0.0
      %1773 = vmatmul.mubr.f32.gmra.mxu0 %v1615
      %v1774 = vpop.f32.mrf.mxu0
      %v1775 = vadd.f32 0.0, %v1774
      %v1776 = vpop.f32.mrf.mxu0
      %1777 = vmatprep.mubr.f32.mxu0 0.0
      %1778 = vmatmul.mubr.f32.gmra.mxu0 %v1616
      %v1779 = vpop.f32.mrf.mxu0
      %v1780 = vadd.f32 0.0, %v1779
      %v1781 = vpop.f32.mrf.mxu0
      %1782 = vmatprep.mubr.f32.mxu0 0.0
      %1783 = vmatmul.mubr.f32.gmra.mxu0 %v1617
      %v1784 = vpop.f32.mrf.mxu0
      %v1785 = vadd.f32 0.0, %v1784
      %v1786 = vpop.f32.mrf.mxu0
      %1787 = vmatprep.mubr.f32.mxu0 0.0
      %1788 = vmatmul.mubr.f32.gmra.mxu0 %v1618
      %v1789 = vpop.f32.mrf.mxu0
      %v1790 = vadd.f32 0.0, %v1789
      %v1791 = vpop.f32.mrf.mxu0
      %1792 = vmatprep.mubr.f32.mxu0 0.0
      %1793 = vmatmul.mubr.f32.gmra.mxu0 %v1619
      %v1794 = vpop.f32.mrf.mxu0
      %v1795 = vadd.f32 0.0, %v1794
      %v1796 = vpop.f32.mrf.mxu0
      %1797 = vmatprep.mubr.f32.mxu0 0.0
      %1798 = vmatmul.mubr.f32.gmra.mxu0 %v1620
      %v1799 = vpop.f32.mrf.mxu0
      %v1800 = vadd.f32 0.0, %v1799
      %v1801 = vpop.f32.mrf.mxu0
      %1802 = vmatprep.mubr.f32.mxu0 0.0
      %1803 = vmatmul.mubr.f32.gmra.mxu0 %v1621
      %v1804 = vpop.f32.mrf.mxu0
      %v1805 = vadd.f32 0.0, %v1804
      %v1806 = vpop.f32.mrf.mxu0
      %1807 = vmatprep.mubr.f32.mxu0 0.0
      %1808 = vmatmul.mubr.f32.gmra.mxu0 %v1622
      %v1809 = vpop.f32.mrf.mxu0
      %v1810 = vadd.f32 0.0, %v1809
      %v1811 = vpop.f32.mrf.mxu0
      %1812 = vmatprep.mubr.f32.mxu0 0.0
      %1813 = vmatmul.mubr.f32.gmra.mxu0 %v1623
      %v1814 = vpop.f32.mrf.mxu0
      %v1815 = vadd.f32 0.0, %v1814
      %v1816 = vpop.f32.mrf.mxu0
      %1817 = vmatprep.mubr.f32.mxu0 0.0
      %1818 = vmatmul.mubr.f32.gmra.mxu0 %v1624
      %v1819 = vpop.f32.mrf.mxu0
      %v1820 = vadd.f32 0.0, %v1819
      %v1821 = vpop.f32.mrf.mxu0
      %1822 = vmatprep.mubr.f32.mxu0 0.0
      %1823 = vmatmul.mubr.f32.gmra.mxu0 %v1625
      %v1824 = vpop.f32.mrf.mxu0
      %v1825 = vadd.f32 0.0, %v1824
      %v1826 = vpop.f32.mrf.mxu0
      %1827 = vmatprep.mubr.f32.mxu0 0.0
      %1828 = vmatmul.mubr.f32.gmra.mxu0 %v1626
      %v1829 = vpop.f32.mrf.mxu0
      %v1830 = vadd.f32 0.0, %v1829
      %v1831 = vpop.f32.mrf.mxu0
      %1832 = vmatprep.mubr.f32.mxu0 0.0
      %1833 = vmatmul.mubr.f32.gmra.mxu0 %v1627
      %v1834 = vpop.f32.mrf.mxu0
      %v1835 = vadd.f32 0.0, %v1834
      %v1836 = vpop.f32.mrf.mxu0
      %1837 = vmatprep.mubr.f32.mxu0 0.0
      %1838 = vmatmul.mubr.f32.gmra.mxu0 %v1628
      %v1839 = vpop.f32.mrf.mxu0
      %v1840 = vadd.f32 0.0, %v1839
      %v1841 = vpop.f32.mrf.mxu0
      %1842 = vmatprep.mubr.f32.mxu0 0.0
      %1843 = vmatmul.mubr.f32.gmra.mxu0 %v1629
      %v1844 = vpop.f32.mrf.mxu0
      %v1845 = vadd.f32 0.0, %v1844
      %v1846 = vpop.f32.mrf.mxu0
      %1847 = vmatprep.mubr.f32.mxu0 0.0
      %1848 = vmatmul.mubr.f32.gmra.mxu0 %v1630
      %v1849 = vpop.f32.mrf.mxu0
      %v1850 = vadd.f32 0.0, %v1849
      %v1851 = vpop.f32.mrf.mxu0
      %1852 = vmatprep.mubr.f32.mxu0 0.0
      %1853 = vmatmul.mubr.f32.gmra.mxu0 %v1631
      %v1854 = vpop.f32.mrf.mxu0
      %v1855 = vadd.f32 0.0, %v1854
      %v1856 = vpop.f32.mrf.mxu0
      %1857 = vmatprep.mubr.f32.mxu0 0.0
      %1858 = vmatmul.mubr.f32.gmra.mxu0 %v1632
      %v1859 = vpop.f32.mrf.mxu0
      %v1860 = vadd.f32 0.0, %v1859
      %v1861 = vpop.f32.mrf.mxu0
      %1862 = vmatprep.mubr.f32.mxu0 0.0
      %1863 = vmatmul.mubr.f32.gmra.mxu0 %v1633
      %v1864 = vpop.f32.mrf.mxu0
      %v1865 = vadd.f32 0.0, %v1864
      %v1866 = vpop.f32.mrf.mxu0
      %1867 = vmatprep.mubr.f32.mxu0 0.0
      %1868 = vmatmul.mubr.f32.gmra.mxu0 %v1634
      %v1869 = vpop.f32.mrf.mxu0
      %v1870 = vadd.f32 0.0, %v1869
      %v1871 = vpop.f32.mrf.mxu0
      %1872 = vmatprep.mubr.f32.mxu0 0.0
      %1873 = vmatmul.mubr.f32.gmra.mxu0 %v1635
      %v1874 = vpop.f32.mrf.mxu0
      %v1875 = vadd.f32 0.0, %v1874
      %v1876 = vpop.f32.mrf.mxu0
      %1877 = vdwg.mxu0
      %v1878 = vsel %vm865, 1, 0
      %v1879 = vsel %vm866, 1, 0
      %v1880 = vsel %vm867, 1, 0
      %v1881 = vsel %vm868, 1, 0
      %v1882 = vsel %vm869, 1, 0
      %v1883 = vsel %vm870, 1, 0
      %v1884 = vsel %vm871, 1, 0
      %v1885 = vsel %vm872, 1, 0
      %v1886 = vsel %vm873, 1, 0
      %v1887 = vsel %vm874, 1, 0
      %v1888 = vsel %vm875, 1, 0
      %v1889 = vsel %vm876, 1, 0
      %v1890 = vsel %vm877, 1, 0
      %v1891 = vsel %vm878, 1, 0
      %v1892 = vsel %vm879, 1, 0
      %v1893 = vsel %vm880, 1, 0
      %v1894 = vsel %vm881, 1, 0
      %v1895 = vsel %vm882, 1, 0
      %v1896 = vsel %vm883, 1, 0
      %v1897 = vsel %vm884, 1, 0
      %v1898 = vsel %vm885, 1, 0
      %v1899 = vsel %vm886, 1, 0
      %v1900 = vsel %vm887, 1, 0
      %v1901 = vsel %vm888, 1, 0
      %v1902 = vsel %vm889, 1, 0
      %v1903 = vsel %vm890, 1, 0
      %v1904 = vsel %vm891, 1, 0
      %v1905 = vsel %vm892, 1, 0
      %v1906 = vsel %vm893, 1, 0
      %v1907 = vsel %vm894, 1, 0
      %v1908 = vsel %vm895, 1, 0
      %v1909 = vsel %vm896, 1, 0
      %vm1910 = vcmp.eq.s32.totalorder %v1878, 1
      %vm1911 = vcmp.eq.s32.totalorder %v1879, 1
      %vm1912 = vcmp.eq.s32.totalorder %v1880, 1
      %vm1913 = vcmp.eq.s32.totalorder %v1881, 1
      %vm1914 = vcmp.eq.s32.totalorder %v1882, 1
      %vm1915 = vcmp.eq.s32.totalorder %v1883, 1
      %vm1916 = vcmp.eq.s32.totalorder %v1884, 1
      %vm1917 = vcmp.eq.s32.totalorder %v1885, 1
      %vm1918 = vcmp.eq.s32.totalorder %v1886, 1
      %vm1919 = vcmp.eq.s32.totalorder %v1887, 1
      %vm1920 = vcmp.eq.s32.totalorder %v1888, 1
      %vm1921 = vcmp.eq.s32.totalorder %v1889, 1
      %vm1922 = vcmp.eq.s32.totalorder %v1890, 1
      %vm1923 = vcmp.eq.s32.totalorder %v1891, 1
      %vm1924 = vcmp.eq.s32.totalorder %v1892, 1
      %vm1925 = vcmp.eq.s32.totalorder %v1893, 1
      %vm1926 = vcmp.eq.s32.totalorder %v1894, 1
      %vm1927 = vcmp.eq.s32.totalorder %v1895, 1
      %vm1928 = vcmp.eq.s32.totalorder %v1896, 1
      %vm1929 = vcmp.eq.s32.totalorder %v1897, 1
      %vm1930 = vcmp.eq.s32.totalorder %v1898, 1
      %vm1931 = vcmp.eq.s32.totalorder %v1899, 1
      %vm1932 = vcmp.eq.s32.totalorder %v1900, 1
      %vm1933 = vcmp.eq.s32.totalorder %v1901, 1
      %vm1934 = vcmp.eq.s32.totalorder %v1902, 1
      %vm1935 = vcmp.eq.s32.totalorder %v1903, 1
      %vm1936 = vcmp.eq.s32.totalorder %v1904, 1
      %vm1937 = vcmp.eq.s32.totalorder %v1905, 1
      %vm1938 = vcmp.eq.s32.totalorder %v1906, 1
      %vm1939 = vcmp.eq.s32.totalorder %v1907, 1
      %vm1940 = vcmp.eq.s32.totalorder %v1908, 1
      %vm1941 = vcmp.eq.s32.totalorder %v1909, 1
      %v1942 = vsel %vm1910, %v1720, 0.0
      %v1943 = vsel %vm1911, %v1725, 0.0
      %v1944 = vsel %vm1912, %v1730, 0.0
      %v1945 = vsel %vm1913, %v1735, 0.0
      %v1946 = vsel %vm1914, %v1740, 0.0
      %v1947 = vsel %vm1915, %v1745, 0.0
      %v1948 = vsel %vm1916, %v1750, 0.0
      %v1949 = vsel %vm1917, %v1755, 0.0
      %v1950 = vsel %vm1918, %v1760, 0.0
      %v1951 = vsel %vm1919, %v1765, 0.0
      %v1952 = vsel %vm1920, %v1770, 0.0
      %v1953 = vsel %vm1921, %v1775, 0.0
      %v1954 = vsel %vm1922, %v1780, 0.0
      %v1955 = vsel %vm1923, %v1785, 0.0
      %v1956 = vsel %vm1924, %v1790, 0.0
      %v1957 = vsel %vm1925, %v1795, 0.0
      %v1958 = vsel %vm1926, %v1800, 0.0
      %v1959 = vsel %vm1927, %v1805, 0.0
      %v1960 = vsel %vm1928, %v1810, 0.0
      %v1961 = vsel %vm1929, %v1815, 0.0
      %v1962 = vsel %vm1930, %v1820, 0.0
      %v1963 = vsel %vm1931, %v1825, 0.0
      %v1964 = vsel %vm1932, %v1830, 0.0
      %v1965 = vsel %vm1933, %v1835, 0.0
      %v1966 = vsel %vm1934, %v1840, 0.0
      %v1967 = vsel %vm1935, %v1845, 0.0
      %v1968 = vsel %vm1936, %v1850, 0.0
      %v1969 = vsel %vm1937, %v1855, 0.0
      %v1970 = vsel %vm1938, %v1860, 0.0
      %v1971 = vsel %vm1939, %v1865, 0.0
      %v1972 = vsel %vm1940, %v1870, 0.0
      %v1973 = vsel %vm1941, %v1875, 0.0
      %v1974 = vadd.f32 %v1572, %v1942
      %v1975 = vadd.f32 %v1573, %v1943
      %v1976 = vadd.f32 %v1574, %v1944
      %v1977 = vadd.f32 %v1575, %v1945
      %v1978 = vadd.f32 %v1576, %v1946
      %v1979 = vadd.f32 %v1577, %v1947
      %v1980 = vadd.f32 %v1578, %v1948
      %v1981 = vadd.f32 %v1579, %v1949
      %v1982 = vadd.f32 %v1580, %v1950
      %v1983 = vadd.f32 %v1581, %v1951
      %v1984 = vadd.f32 %v1582, %v1952
      %v1985 = vadd.f32 %v1583, %v1953
      %v1986 = vadd.f32 %v1584, %v1954
      %v1987 = vadd.f32 %v1585, %v1955
      %v1988 = vadd.f32 %v1586, %v1956
      %v1989 = vadd.f32 %v1587, %v1957
      %v1990 = vadd.f32 %v1588, %v1958
      %v1991 = vadd.f32 %v1589, %v1959
      %v1992 = vadd.f32 %v1590, %v1960
      %v1993 = vadd.f32 %v1591, %v1961
      %v1994 = vadd.f32 %v1592, %v1962
      %v1995 = vadd.f32 %v1593, %v1963
      %v1996 = vadd.f32 %v1594, %v1964
      %v1997 = vadd.f32 %v1595, %v1965
      %v1998 = vadd.f32 %v1596, %v1966
      %v1999 = vadd.f32 %v1597, %v1967
      %v2000 = vadd.f32 %v1598, %v1968
      %v2001 = vadd.f32 %v1599, %v1969
      %v2002 = vadd.f32 %v1600, %v1970
      %v2003 = vadd.f32 %v1601, %v1971
      %v2004 = vadd.f32 %v1602, %v1972
      %v2005 = vadd.f32 %v1603, %v1973
      %v2006 = vld [vmem:[#allocation2 + $0x17] sm:$0xff]
      %v2007 = vld [vmem:[#allocation2 + $0x1f] sm:$0xff]
      %v2008 = vld [vmem:[#allocation2 + $0x27] sm:$0xff]
      %v2009 = vld [vmem:[#allocation2 + $0x2f] sm:$0xff]
      %v2010 = vld [vmem:[#allocation2 + $0x37] sm:$0xff]
      %v2011 = vld [vmem:[#allocation2 + $0x3f] sm:$0xff]
      %v2012 = vld [vmem:[#allocation2 + $0x47] sm:$0xff]
      %v2013 = vld [vmem:[#allocation2 + $0x4f] sm:$0xff]
      %v2014 = vld [vmem:[#allocation2 + $0x57] sm:$0xff]
      %v2015 = vld [vmem:[#allocation2 + $0x5f] sm:$0xff]
      %v2016 = vld [vmem:[#allocation2 + $0x67] sm:$0xff]
      %v2017 = vld [vmem:[#allocation2 + $0x6f] sm:$0xff]
      %v2018 = vld [vmem:[#allocation2 + $0x77] sm:$0xff]
      %v2019 = vld [vmem:[#allocation2 + $0x7f] sm:$0xff]
      %v2020 = vld [vmem:[#allocation2 + $0x87] sm:$0xff]
      %v2021 = vld [vmem:[#allocation2 + $0x8f] sm:$0xff]
      %v2022 = vld [vmem:[#allocation2 + $0x97] sm:$0xff]
      %v2023 = vld [vmem:[#allocation2 + $0x9f] sm:$0xff]
      %v2024 = vld [vmem:[#allocation2 + $0xa7] sm:$0xff]
      %v2025 = vld [vmem:[#allocation2 + $0xaf] sm:$0xff]
      %v2026 = vld [vmem:[#allocation2 + $0xb7] sm:$0xff]
      %v2027 = vld [vmem:[#allocation2 + $0xbf] sm:$0xff]
      %v2028 = vld [vmem:[#allocation2 + $0xc7] sm:$0xff]
      %v2029 = vld [vmem:[#allocation2 + $0xcf] sm:$0xff]
      %v2030 = vld [vmem:[#allocation2 + $0xd7] sm:$0xff]
      %v2031 = vld [vmem:[#allocation2 + $0xdf] sm:$0xff]
      %v2032 = vld [vmem:[#allocation2 + $0xe7] sm:$0xff]
      %v2033 = vld [vmem:[#allocation2 + $0xef] sm:$0xff]
      %v2034 = vld [vmem:[#allocation2 + $0xf7] sm:$0xff]
      %v2035 = vld [vmem:[#allocation2 + $0xff] sm:$0xff]
      %v2036 = vld [vmem:[#allocation2 + $0x107] sm:$0xff]
      %v2037 = vld [vmem:[#allocation2 + $0x10f] sm:$0xff]
      %s2038 = scalar_lea.vmem %s3, 384
      %v2039 = vld [vmem:[%s2038] sm:$0xff]
      %v2040 = vld [vmem:[%s2038 + $0x8] sm:$0xff]
      %v2041 = vld [vmem:[%s2038 + $0x10] sm:$0xff]
      %v2042 = vld [vmem:[%s2038 + $0x18] sm:$0xff]
      %v2043 = vld [vmem:[%s2038 + $0x20] sm:$0xff]
      %v2044 = vld [vmem:[%s2038 + $0x28] sm:$0xff]
      %v2045 = vld [vmem:[%s2038 + $0x30] sm:$0xff]
      %v2046 = vld [vmem:[%s2038 + $0x38] sm:$0xff]
      %v2047 = vld [vmem:[%s2038 + $0x40] sm:$0xff]
      %v2048 = vld [vmem:[%s2038 + $0x48] sm:$0xff]
      %v2049 = vld [vmem:[%s2038 + $0x50] sm:$0xff]
      %v2050 = vld [vmem:[%s2038 + $0x58] sm:$0xff]
      %v2051 = vld [vmem:[%s2038 + $0x60] sm:$0xff]
      %v2052 = vld [vmem:[%s2038 + $0x68] sm:$0xff]
      %v2053 = vld [vmem:[%s2038 + $0x70] sm:$0xff]
      %v2054 = vld [vmem:[%s2038 + $0x78] sm:$0xff]
      %2055 = vmatprep.subr.mxu0 0.0
      %2056 = vmatpush1.msra.mxu0 %v2054
      %2057 = vmatprep.subr.mxu0 0.0
      %2058 = vmatpush1.msra.mxu0 %v2053
      %2059 = vmatprep.subr.mxu0 0.0
      %2060 = vmatpush1.msra.mxu0 %v2052
      %2061 = vmatprep.subr.mxu0 0.0
      %2062 = vmatpush1.msra.mxu0 %v2051
      %2063 = vmatprep.subr.mxu0 0.0
      %2064 = vmatpush1.msra.mxu0 %v2050
      %2065 = vmatprep.subr.mxu0 0.0
      %2066 = vmatpush1.msra.mxu0 %v2049
      %2067 = vmatprep.subr.mxu0 0.0
      %2068 = vmatpush1.msra.mxu0 %v2048
      %2069 = vmatprep.subr.mxu0 0.0
      %2070 = vmatpush1.msra.mxu0 %v2047
      %2071 = vmatprep.subr.mxu0 0.0
      %2072 = vmatpush1.msra.mxu0 %v2046
      %2073 = vmatprep.subr.mxu0 0.0
      %2074 = vmatpush1.msra.mxu0 %v2045
      %2075 = vmatprep.subr.mxu0 0.0
      %2076 = vmatpush1.msra.mxu0 %v2044
      %2077 = vmatprep.subr.mxu0 0.0
      %2078 = vmatpush1.msra.mxu0 %v2043
      %2079 = vmatprep.subr.mxu0 0.0
      %2080 = vmatpush1.msra.mxu0 %v2042
      %2081 = vmatprep.subr.mxu0 0.0
      %2082 = vmatpush1.msra.mxu0 %v2041
      %2083 = vmatprep.subr.mxu0 0.0
      %2084 = vmatpush1.msra.mxu0 %v2040
      %2085 = vmatprep.subr.mxu0 0.0
      %2086 = vmatpush1.msra.mxu0 %v2039
      %2087 = vmatprep.subr.mxu0 0.0
      %2088 = vmatpush2.msra.mxu0 0.0
      %2089 = vmatprep.subr.mxu0 0.0
      %2090 = vmatpush2.msra.mxu0 0.0
      %2091 = vmatprep.subr.mxu0 0.0
      %2092 = vmatpush2.msra.mxu0 0.0
      %2093 = vmatprep.subr.mxu0 0.0
      %2094 = vmatpush2.msra.mxu0 0.0
      %2095 = vmatprep.subr.mxu0 0.0
      %2096 = vmatpush2.msra.mxu0 0.0
      %2097 = vmatprep.subr.mxu0 0.0
      %2098 = vmatpush2.msra.mxu0 0.0
      %2099 = vmatprep.subr.mxu0 0.0
      %2100 = vmatpush2.msra.mxu0 0.0
      %2101 = vmatprep.subr.mxu0 0.0
      %2102 = vmatpush2.msra.mxu0 0.0
      %2103 = vmatprep.subr.mxu0 0.0
      %2104 = vmatpush2.msra.mxu0 0.0
      %2105 = vmatprep.subr.mxu0 0.0
      %2106 = vmatpush2.msra.mxu0 0.0
      %2107 = vmatprep.subr.mxu0 0.0
      %2108 = vmatpush2.msra.mxu0 0.0
      %2109 = vmatprep.subr.mxu0 0.0
      %2110 = vmatpush2.msra.mxu0 0.0
      %2111 = vmatprep.subr.mxu0 0.0
      %2112 = vmatpush2.msra.mxu0 0.0
      %2113 = vmatprep.subr.mxu0 0.0
      %2114 = vmatpush2.msra.mxu0 0.0
      %2115 = vmatprep.subr.mxu0 0.0
      %2116 = vmatpush2.msra.mxu0 0.0
      %2117 = vmatprep.subr.mxu0 0.0
      %2118 = vmatpush2.msra.mxu0 0.0
      %2119 = vmatprep.mubr.f32.mxu0 0.0
      %2120 = vmatmul.mubr.f32.gmra.mxu0 %v2006
      %v2121 = vpop.f32.mrf.mxu0
      %v2122 = vadd.f32 0.0, %v2121
      %v2123 = vpop.f32.mrf.mxu0
      %2124 = vmatprep.mubr.f32.mxu0 0.0
      %2125 = vmatmul.mubr.f32.gmra.mxu0 %v2007
      %v2126 = vpop.f32.mrf.mxu0
      %v2127 = vadd.f32 0.0, %v2126
      %v2128 = vpop.f32.mrf.mxu0
      %2129 = vmatprep.mubr.f32.mxu0 0.0
      %2130 = vmatmul.mubr.f32.gmra.mxu0 %v2008
      %v2131 = vpop.f32.mrf.mxu0
      %v2132 = vadd.f32 0.0, %v2131
      %v2133 = vpop.f32.mrf.mxu0
      %2134 = vmatprep.mubr.f32.mxu0 0.0
      %2135 = vmatmul.mubr.f32.gmra.mxu0 %v2009
      %v2136 = vpop.f32.mrf.mxu0
      %v2137 = vadd.f32 0.0, %v2136
      %v2138 = vpop.f32.mrf.mxu0
      %2139 = vmatprep.mubr.f32.mxu0 0.0
      %2140 = vmatmul.mubr.f32.gmra.mxu0 %v2010
      %v2141 = vpop.f32.mrf.mxu0
      %v2142 = vadd.f32 0.0, %v2141
      %v2143 = vpop.f32.mrf.mxu0
      %2144 = vmatprep.mubr.f32.mxu0 0.0
      %2145 = vmatmul.mubr.f32.gmra.mxu0 %v2011
      %v2146 = vpop.f32.mrf.mxu0
      %v2147 = vadd.f32 0.0, %v2146
      %v2148 = vpop.f32.mrf.mxu0
      %2149 = vmatprep.mubr.f32.mxu0 0.0
      %2150 = vmatmul.mubr.f32.gmra.mxu0 %v2012
      %v2151 = vpop.f32.mrf.mxu0
      %v2152 = vadd.f32 0.0, %v2151
      %v2153 = vpop.f32.mrf.mxu0
      %2154 = vmatprep.mubr.f32.mxu0 0.0
      %2155 = vmatmul.mubr.f32.gmra.mxu0 %v2013
      %v2156 = vpop.f32.mrf.mxu0
      %v2157 = vadd.f32 0.0, %v2156
      %v2158 = vpop.f32.mrf.mxu0
      %2159 = vmatprep.mubr.f32.mxu0 0.0
      %2160 = vmatmul.mubr.f32.gmra.mxu0 %v2014
      %v2161 = vpop.f32.mrf.mxu0
      %v2162 = vadd.f32 0.0, %v2161
      %v2163 = vpop.f32.mrf.mxu0
      %2164 = vmatprep.mubr.f32.mxu0 0.0
      %2165 = vmatmul.mubr.f32.gmra.mxu0 %v2015
      %v2166 = vpop.f32.mrf.mxu0
      %v2167 = vadd.f32 0.0, %v2166
      %v2168 = vpop.f32.mrf.mxu0
      %2169 = vmatprep.mubr.f32.mxu0 0.0
      %2170 = vmatmul.mubr.f32.gmra.mxu0 %v2016
      %v2171 = vpop.f32.mrf.mxu0
      %v2172 = vadd.f32 0.0, %v2171
      %v2173 = vpop.f32.mrf.mxu0
      %2174 = vmatprep.mubr.f32.mxu0 0.0
      %2175 = vmatmul.mubr.f32.gmra.mxu0 %v2017
      %v2176 = vpop.f32.mrf.mxu0
      %v2177 = vadd.f32 0.0, %v2176
      %v2178 = vpop.f32.mrf.mxu0
      %2179 = vmatprep.mubr.f32.mxu0 0.0
      %2180 = vmatmul.mubr.f32.gmra.mxu0 %v2018
      %v2181 = vpop.f32.mrf.mxu0
      %v2182 = vadd.f32 0.0, %v2181
      %v2183 = vpop.f32.mrf.mxu0
      %2184 = vmatprep.mubr.f32.mxu0 0.0
      %2185 = vmatmul.mubr.f32.gmra.mxu0 %v2019
      %v2186 = vpop.f32.mrf.mxu0
      %v2187 = vadd.f32 0.0, %v2186
      %v2188 = vpop.f32.mrf.mxu0
      %2189 = vmatprep.mubr.f32.mxu0 0.0
      %2190 = vmatmul.mubr.f32.gmra.mxu0 %v2020
      %v2191 = vpop.f32.mrf.mxu0
      %v2192 = vadd.f32 0.0, %v2191
      %v2193 = vpop.f32.mrf.mxu0
      %2194 = vmatprep.mubr.f32.mxu0 0.0
      %2195 = vmatmul.mubr.f32.gmra.mxu0 %v2021
      %v2196 = vpop.f32.mrf.mxu0
      %v2197 = vadd.f32 0.0, %v2196
      %v2198 = vpop.f32.mrf.mxu0
      %2199 = vmatprep.mubr.f32.mxu0 0.0
      %2200 = vmatmul.mubr.f32.gmra.mxu0 %v2022
      %v2201 = vpop.f32.mrf.mxu0
      %v2202 = vadd.f32 0.0, %v2201
      %v2203 = vpop.f32.mrf.mxu0
      %2204 = vmatprep.mubr.f32.mxu0 0.0
      %2205 = vmatmul.mubr.f32.gmra.mxu0 %v2023
      %v2206 = vpop.f32.mrf.mxu0
      %v2207 = vadd.f32 0.0, %v2206
      %v2208 = vpop.f32.mrf.mxu0
      %2209 = vmatprep.mubr.f32.mxu0 0.0
      %2210 = vmatmul.mubr.f32.gmra.mxu0 %v2024
      %v2211 = vpop.f32.mrf.mxu0
      %v2212 = vadd.f32 0.0, %v2211
      %v2213 = vpop.f32.mrf.mxu0
      %2214 = vmatprep.mubr.f32.mxu0 0.0
      %2215 = vmatmul.mubr.f32.gmra.mxu0 %v2025
      %v2216 = vpop.f32.mrf.mxu0
      %v2217 = vadd.f32 0.0, %v2216
      %v2218 = vpop.f32.mrf.mxu0
      %2219 = vmatprep.mubr.f32.mxu0 0.0
      %2220 = vmatmul.mubr.f32.gmra.mxu0 %v2026
      %v2221 = vpop.f32.mrf.mxu0
      %v2222 = vadd.f32 0.0, %v2221
      %v2223 = vpop.f32.mrf.mxu0
      %2224 = vmatprep.mubr.f32.mxu0 0.0
      %2225 = vmatmul.mubr.f32.gmra.mxu0 %v2027
      %v2226 = vpop.f32.mrf.mxu0
      %v2227 = vadd.f32 0.0, %v2226
      %v2228 = vpop.f32.mrf.mxu0
      %2229 = vmatprep.mubr.f32.mxu0 0.0
      %2230 = vmatmul.mubr.f32.gmra.mxu0 %v2028
      %v2231 = vpop.f32.mrf.mxu0
      %v2232 = vadd.f32 0.0, %v2231
      %v2233 = vpop.f32.mrf.mxu0
      %2234 = vmatprep.mubr.f32.mxu0 0.0
      %2235 = vmatmul.mubr.f32.gmra.mxu0 %v2029
      %v2236 = vpop.f32.mrf.mxu0
      %v2237 = vadd.f32 0.0, %v2236
      %v2238 = vpop.f32.mrf.mxu0
      %2239 = vmatprep.mubr.f32.mxu0 0.0
      %2240 = vmatmul.mubr.f32.gmra.mxu0 %v2030
      %v2241 = vpop.f32.mrf.mxu0
      %v2242 = vadd.f32 0.0, %v2241
      %v2243 = vpop.f32.mrf.mxu0
      %2244 = vmatprep.mubr.f32.mxu0 0.0
      %2245 = vmatmul.mubr.f32.gmra.mxu0 %v2031
      %v2246 = vpop.f32.mrf.mxu0
      %v2247 = vadd.f32 0.0, %v2246
      %v2248 = vpop.f32.mrf.mxu0
      %2249 = vmatprep.mubr.f32.mxu0 0.0
      %2250 = vmatmul.mubr.f32.gmra.mxu0 %v2032
      %v2251 = vpop.f32.mrf.mxu0
      %v2252 = vadd.f32 0.0, %v2251
      %v2253 = vpop.f32.mrf.mxu0
      %2254 = vmatprep.mubr.f32.mxu0 0.0
      %2255 = vmatmul.mubr.f32.gmra.mxu0 %v2033
      %v2256 = vpop.f32.mrf.mxu0
      %v2257 = vadd.f32 0.0, %v2256
      %v2258 = vpop.f32.mrf.mxu0
      %2259 = vmatprep.mubr.f32.mxu0 0.0
      %2260 = vmatmul.mubr.f32.gmra.mxu0 %v2034
      %v2261 = vpop.f32.mrf.mxu0
      %v2262 = vadd.f32 0.0, %v2261
      %v2263 = vpop.f32.mrf.mxu0
      %2264 = vmatprep.mubr.f32.mxu0 0.0
      %2265 = vmatmul.mubr.f32.gmra.mxu0 %v2035
      %v2266 = vpop.f32.mrf.mxu0
      %v2267 = vadd.f32 0.0, %v2266
      %v2268 = vpop.f32.mrf.mxu0
      %2269 = vmatprep.mubr.f32.mxu0 0.0
      %2270 = vmatmul.mubr.f32.gmra.mxu0 %v2036
      %v2271 = vpop.f32.mrf.mxu0
      %v2272 = vadd.f32 0.0, %v2271
      %v2273 = vpop.f32.mrf.mxu0
      %2274 = vmatprep.mubr.f32.mxu0 0.0
      %2275 = vmatmul.mubr.f32.gmra.mxu0 %v2037
      %v2276 = vpop.f32.mrf.mxu0
      %v2277 = vadd.f32 0.0, %v2276
      %v2278 = vpop.f32.mrf.mxu0
      %2279 = vdwg.mxu0
      %v2280 = vsel %vm1202, %v2122, 0.0
      %v2281 = vsel %vm1203, %v2127, 0.0
      %v2282 = vsel %vm1204, %v2132, 0.0
      %v2283 = vsel %vm1205, %v2137, 0.0
      %v2284 = vsel %vm1206, %v2142, 0.0
      %v2285 = vsel %vm1207, %v2147, 0.0
      %v2286 = vsel %vm1208, %v2152, 0.0
      %v2287 = vsel %vm1209, %v2157, 0.0
      %v2288 = vsel %vm1210, %v2162, 0.0
      %v2289 = vsel %vm1211, %v2167, 0.0
      %v2290 = vsel %vm1212, %v2172, 0.0
      %v2291 = vsel %vm1213, %v2177, 0.0
      %v2292 = vsel %vm1214, %v2182, 0.0
      %v2293 = vsel %vm1215, %v2187, 0.0
      %v2294 = vsel %vm1216, %v2192, 0.0
      %v2295 = vsel %vm1217, %v2197, 0.0
      %v2296 = vsel %vm1218, %v2202, 0.0
      %v2297 = vsel %vm1219, %v2207, 0.0
      %v2298 = vsel %vm1220, %v2212, 0.0
      %v2299 = vsel %vm1221, %v2217, 0.0
      %v2300 = vsel %vm1222, %v2222, 0.0
      %v2301 = vsel %vm1223, %v2227, 0.0
      %v2302 = vsel %vm1224, %v2232, 0.0
      %v2303 = vsel %vm1225, %v2237, 0.0
      %v2304 = vsel %vm1226, %v2242, 0.0
      %v2305 = vsel %vm1227, %v2247, 0.0
      %v2306 = vsel %vm1228, %v2252, 0.0
      %v2307 = vsel %vm1229, %v2257, 0.0
      %v2308 = vsel %vm1230, %v2262, 0.0
      %v2309 = vsel %vm1231, %v2267, 0.0
      %v2310 = vsel %vm1232, %v2272, 0.0
      %v2311 = vsel %vm1233, %v2277, 0.0
      %v2312 = vadd.f32 %v1974, %v2280
      %v2313 = vadd.f32 %v1975, %v2281
      %v2314 = vadd.f32 %v1976, %v2282
      %v2315 = vadd.f32 %v1977, %v2283
      %v2316 = vadd.f32 %v1978, %v2284
      %v2317 = vadd.f32 %v1979, %v2285
      %v2318 = vadd.f32 %v1980, %v2286
      %v2319 = vadd.f32 %v1981, %v2287
      %v2320 = vadd.f32 %v1982, %v2288
      %v2321 = vadd.f32 %v1983, %v2289
      %v2322 = vadd.f32 %v1984, %v2290
      %v2323 = vadd.f32 %v1985, %v2291
      %v2324 = vadd.f32 %v1986, %v2292
      %v2325 = vadd.f32 %v1987, %v2293
      %v2326 = vadd.f32 %v1988, %v2294
      %v2327 = vadd.f32 %v1989, %v2295
      %v2328 = vadd.f32 %v1990, %v2296
      %v2329 = vadd.f32 %v1991, %v2297
      %v2330 = vadd.f32 %v1992, %v2298
      %v2331 = vadd.f32 %v1993, %v2299
      %v2332 = vadd.f32 %v1994, %v2300
      %v2333 = vadd.f32 %v1995, %v2301
      %v2334 = vadd.f32 %v1996, %v2302
      %v2335 = vadd.f32 %v1997, %v2303
      %v2336 = vadd.f32 %v1998, %v2304
      %v2337 = vadd.f32 %v1999, %v2305
      %v2338 = vadd.f32 %v2000, %v2306
      %v2339 = vadd.f32 %v2001, %v2307
      %v2340 = vadd.f32 %v2002, %v2308
      %v2341 = vadd.f32 %v2003, %v2309
      %v2342 = vadd.f32 %v2004, %v2310
      %v2343 = vadd.f32 %v2005, %v2311
      %v2344 = vld [vmem:[#allocation2 + $0x18] sm:$0xff]
      %v2345 = vld [vmem:[#allocation2 + $0x20] sm:$0xff]
      %v2346 = vld [vmem:[#allocation2 + $0x28] sm:$0xff]
      %v2347 = vld [vmem:[#allocation2 + $0x30] sm:$0xff]
      %v2348 = vld [vmem:[#allocation2 + $0x38] sm:$0xff]
      %v2349 = vld [vmem:[#allocation2 + $0x40] sm:$0xff]
      %v2350 = vld [vmem:[#allocation2 + $0x48] sm:$0xff]
      %v2351 = vld [vmem:[#allocation2 + $0x50] sm:$0xff]
      %v2352 = vld [vmem:[#allocation2 + $0x58] sm:$0xff]
      %v2353 = vld [vmem:[#allocation2 + $0x60] sm:$0xff]
      %v2354 = vld [vmem:[#allocation2 + $0x68] sm:$0xff]
      %v2355 = vld [vmem:[#allocation2 + $0x70] sm:$0xff]
      %v2356 = vld [vmem:[#allocation2 + $0x78] sm:$0xff]
      %v2357 = vld [vmem:[#allocation2 + $0x80] sm:$0xff]
      %v2358 = vld [vmem:[#allocation2 + $0x88] sm:$0xff]
      %v2359 = vld [vmem:[#allocation2 + $0x90] sm:$0xff]
      %v2360 = vld [vmem:[#allocation2 + $0x98] sm:$0xff]
      %v2361 = vld [vmem:[#allocation2 + $0xa0] sm:$0xff]
      %v2362 = vld [vmem:[#allocation2 + $0xa8] sm:$0xff]
      %v2363 = vld [vmem:[#allocation2 + $0xb0] sm:$0xff]
      %v2364 = vld [vmem:[#allocation2 + $0xb8] sm:$0xff]
      %v2365 = vld [vmem:[#allocation2 + $0xc0] sm:$0xff]
      %v2366 = vld [vmem:[#allocation2 + $0xc8] sm:$0xff]
      %v2367 = vld [vmem:[#allocation2 + $0xd0] sm:$0xff]
      %v2368 = vld [vmem:[#allocation2 + $0xd8] sm:$0xff]
      %v2369 = vld [vmem:[#allocation2 + $0xe0] sm:$0xff]
      %v2370 = vld [vmem:[#allocation2 + $0xe8] sm:$0xff]
      %v2371 = vld [vmem:[#allocation2 + $0xf0] sm:$0xff]
      %v2372 = vld [vmem:[#allocation2 + $0xf8] sm:$0xff]
      %v2373 = vld [vmem:[#allocation2 + $0x100] sm:$0xff]
      %v2374 = vld [vmem:[#allocation2 + $0x108] sm:$0xff]
      %v2375 = vld [vmem:[#allocation2 + $0x110] sm:$0xff]
      %s2376 = scalar_lea.vmem %s3, 512
      %v2377 = vld [vmem:[%s2376] sm:$0xff]
      %v2378 = vld [vmem:[%s2376 + $0x8] sm:$0xff]
      %v2379 = vld [vmem:[%s2376 + $0x10] sm:$0xff]
      %v2380 = vld [vmem:[%s2376 + $0x18] sm:$0xff]
      %v2381 = vld [vmem:[%s2376 + $0x20] sm:$0xff]
      %v2382 = vld [vmem:[%s2376 + $0x28] sm:$0xff]
      %v2383 = vld [vmem:[%s2376 + $0x30] sm:$0xff]
      %v2384 = vld [vmem:[%s2376 + $0x38] sm:$0xff]
      %v2385 = vld [vmem:[%s2376 + $0x40] sm:$0xff]
      %v2386 = vld [vmem:[%s2376 + $0x48] sm:$0xff]
      %v2387 = vld [vmem:[%s2376 + $0x50] sm:$0xff]
      %v2388 = vld [vmem:[%s2376 + $0x58] sm:$0xff]
      %v2389 = vld [vmem:[%s2376 + $0x60] sm:$0xff]
      %v2390 = vld [vmem:[%s2376 + $0x68] sm:$0xff]
      %v2391 = vld [vmem:[%s2376 + $0x70] sm:$0xff]
      %v2392 = vld [vmem:[%s2376 + $0x78] sm:$0xff]
      %2393 = vmatprep.subr.mxu0 0.0
      %2394 = vmatpush1.msra.mxu0 %v2392
      %2395 = vmatprep.subr.mxu0 0.0
      %2396 = vmatpush1.msra.mxu0 %v2391
      %2397 = vmatprep.subr.mxu0 0.0
      %2398 = vmatpush1.msra.mxu0 %v2390
      %2399 = vmatprep.subr.mxu0 0.0
      %2400 = vmatpush1.msra.mxu0 %v2389
      %2401 = vmatprep.subr.mxu0 0.0
      %2402 = vmatpush1.msra.mxu0 %v2388
      %2403 = vmatprep.subr.mxu0 0.0
      %2404 = vmatpush1.msra.mxu0 %v2387
      %2405 = vmatprep.subr.mxu0 0.0
      %2406 = vmatpush1.msra.mxu0 %v2386
      %2407 = vmatprep.subr.mxu0 0.0
      %2408 = vmatpush1.msra.mxu0 %v2385
      %2409 = vmatprep.subr.mxu0 0.0
      %2410 = vmatpush1.msra.mxu0 %v2384
      %2411 = vmatprep.subr.mxu0 0.0
      %2412 = vmatpush1.msra.mxu0 %v2383
      %2413 = vmatprep.subr.mxu0 0.0
      %2414 = vmatpush1.msra.mxu0 %v2382
      %2415 = vmatprep.subr.mxu0 0.0
      %2416 = vmatpush1.msra.mxu0 %v2381
      %2417 = vmatprep.subr.mxu0 0.0
      %2418 = vmatpush1.msra.mxu0 %v2380
      %2419 = vmatprep.subr.mxu0 0.0
      %2420 = vmatpush1.msra.mxu0 %v2379
      %2421 = vmatprep.subr.mxu0 0.0
      %2422 = vmatpush1.msra.mxu0 %v2378
      %2423 = vmatprep.subr.mxu0 0.0
      %2424 = vmatpush1.msra.mxu0 %v2377
      %2425 = vmatprep.subr.mxu0 0.0
      %2426 = vmatpush2.msra.mxu0 0.0
      %2427 = vmatprep.subr.mxu0 0.0
      %2428 = vmatpush2.msra.mxu0 0.0
      %2429 = vmatprep.subr.mxu0 0.0
      %2430 = vmatpush2.msra.mxu0 0.0
      %2431 = vmatprep.subr.mxu0 0.0
      %2432 = vmatpush2.msra.mxu0 0.0
      %2433 = vmatprep.subr.mxu0 0.0
      %2434 = vmatpush2.msra.mxu0 0.0
      %2435 = vmatprep.subr.mxu0 0.0
      %2436 = vmatpush2.msra.mxu0 0.0
      %2437 = vmatprep.subr.mxu0 0.0
      %2438 = vmatpush2.msra.mxu0 0.0
      %2439 = vmatprep.subr.mxu0 0.0
      %2440 = vmatpush2.msra.mxu0 0.0
      %2441 = vmatprep.subr.mxu0 0.0
      %2442 = vmatpush2.msra.mxu0 0.0
      %2443 = vmatprep.subr.mxu0 0.0
      %2444 = vmatpush2.msra.mxu0 0.0
      %2445 = vmatprep.subr.mxu0 0.0
      %2446 = vmatpush2.msra.mxu0 0.0
      %2447 = vmatprep.subr.mxu0 0.0
      %2448 = vmatpush2.msra.mxu0 0.0
      %2449 = vmatprep.subr.mxu0 0.0
      %2450 = vmatpush2.msra.mxu0 0.0
      %2451 = vmatprep.subr.mxu0 0.0
      %2452 = vmatpush2.msra.mxu0 0.0
      %2453 = vmatprep.subr.mxu0 0.0
      %2454 = vmatpush2.msra.mxu0 0.0
      %2455 = vmatprep.subr.mxu0 0.0
      %2456 = vmatpush2.msra.mxu0 0.0
      %2457 = vmatprep.mubr.f32.mxu0 0.0
      %2458 = vmatmul.mubr.f32.gmra.mxu0 %v2344
      %v2459 = vpop.f32.mrf.mxu0
      %v2460 = vadd.f32 0.0, %v2459
      %v2461 = vpop.f32.mrf.mxu0
      %2462 = vmatprep.mubr.f32.mxu0 0.0
      %2463 = vmatmul.mubr.f32.gmra.mxu0 %v2345
      %v2464 = vpop.f32.mrf.mxu0
      %v2465 = vadd.f32 0.0, %v2464
      %v2466 = vpop.f32.mrf.mxu0
      %2467 = vmatprep.mubr.f32.mxu0 0.0
      %2468 = vmatmul.mubr.f32.gmra.mxu0 %v2346
      %v2469 = vpop.f32.mrf.mxu0
      %v2470 = vadd.f32 0.0, %v2469
      %v2471 = vpop.f32.mrf.mxu0
      %2472 = vmatprep.mubr.f32.mxu0 0.0
      %2473 = vmatmul.mubr.f32.gmra.mxu0 %v2347
      %v2474 = vpop.f32.mrf.mxu0
      %v2475 = vadd.f32 0.0, %v2474
      %v2476 = vpop.f32.mrf.mxu0
      %2477 = vmatprep.mubr.f32.mxu0 0.0
      %2478 = vmatmul.mubr.f32.gmra.mxu0 %v2348
      %v2479 = vpop.f32.mrf.mxu0
      %v2480 = vadd.f32 0.0, %v2479
      %v2481 = vpop.f32.mrf.mxu0
      %2482 = vmatprep.mubr.f32.mxu0 0.0
      %2483 = vmatmul.mubr.f32.gmra.mxu0 %v2349
      %v2484 = vpop.f32.mrf.mxu0
      %v2485 = vadd.f32 0.0, %v2484
      %v2486 = vpop.f32.mrf.mxu0
      %2487 = vmatprep.mubr.f32.mxu0 0.0
      %2488 = vmatmul.mubr.f32.gmra.mxu0 %v2350
      %v2489 = vpop.f32.mrf.mxu0
      %v2490 = vadd.f32 0.0, %v2489
      %v2491 = vpop.f32.mrf.mxu0
      %2492 = vmatprep.mubr.f32.mxu0 0.0
      %2493 = vmatmul.mubr.f32.gmra.mxu0 %v2351
      %v2494 = vpop.f32.mrf.mxu0
      %v2495 = vadd.f32 0.0, %v2494
      %v2496 = vpop.f32.mrf.mxu0
      %2497 = vmatprep.mubr.f32.mxu0 0.0
      %2498 = vmatmul.mubr.f32.gmra.mxu0 %v2352
      %v2499 = vpop.f32.mrf.mxu0
      %v2500 = vadd.f32 0.0, %v2499
      %v2501 = vpop.f32.mrf.mxu0
      %2502 = vmatprep.mubr.f32.mxu0 0.0
      %2503 = vmatmul.mubr.f32.gmra.mxu0 %v2353
      %v2504 = vpop.f32.mrf.mxu0
      %v2505 = vadd.f32 0.0, %v2504
      %v2506 = vpop.f32.mrf.mxu0
      %2507 = vmatprep.mubr.f32.mxu0 0.0
      %2508 = vmatmul.mubr.f32.gmra.mxu0 %v2354
      %v2509 = vpop.f32.mrf.mxu0
      %v2510 = vadd.f32 0.0, %v2509
      %v2511 = vpop.f32.mrf.mxu0
      %2512 = vmatprep.mubr.f32.mxu0 0.0
      %2513 = vmatmul.mubr.f32.gmra.mxu0 %v2355
      %v2514 = vpop.f32.mrf.mxu0
      %v2515 = vadd.f32 0.0, %v2514
      %v2516 = vpop.f32.mrf.mxu0
      %2517 = vmatprep.mubr.f32.mxu0 0.0
      %2518 = vmatmul.mubr.f32.gmra.mxu0 %v2356
      %v2519 = vpop.f32.mrf.mxu0
      %v2520 = vadd.f32 0.0, %v2519
      %v2521 = vpop.f32.mrf.mxu0
      %2522 = vmatprep.mubr.f32.mxu0 0.0
      %2523 = vmatmul.mubr.f32.gmra.mxu0 %v2357
      %v2524 = vpop.f32.mrf.mxu0
      %v2525 = vadd.f32 0.0, %v2524
      %v2526 = vpop.f32.mrf.mxu0
      %2527 = vmatprep.mubr.f32.mxu0 0.0
      %2528 = vmatmul.mubr.f32.gmra.mxu0 %v2358
      %v2529 = vpop.f32.mrf.mxu0
      %v2530 = vadd.f32 0.0, %v2529
      %v2531 = vpop.f32.mrf.mxu0
      %2532 = vmatprep.mubr.f32.mxu0 0.0
      %2533 = vmatmul.mubr.f32.gmra.mxu0 %v2359
      %v2534 = vpop.f32.mrf.mxu0
      %v2535 = vadd.f32 0.0, %v2534
      %v2536 = vpop.f32.mrf.mxu0
      %2537 = vmatprep.mubr.f32.mxu0 0.0
      %2538 = vmatmul.mubr.f32.gmra.mxu0 %v2360
      %v2539 = vpop.f32.mrf.mxu0
      %v2540 = vadd.f32 0.0, %v2539
      %v2541 = vpop.f32.mrf.mxu0
      %2542 = vmatprep.mubr.f32.mxu0 0.0
      %2543 = vmatmul.mubr.f32.gmra.mxu0 %v2361
      %v2544 = vpop.f32.mrf.mxu0
      %v2545 = vadd.f32 0.0, %v2544
      %v2546 = vpop.f32.mrf.mxu0
      %2547 = vmatprep.mubr.f32.mxu0 0.0
      %2548 = vmatmul.mubr.f32.gmra.mxu0 %v2362
      %v2549 = vpop.f32.mrf.mxu0
      %v2550 = vadd.f32 0.0, %v2549
      %v2551 = vpop.f32.mrf.mxu0
      %2552 = vmatprep.mubr.f32.mxu0 0.0
      %2553 = vmatmul.mubr.f32.gmra.mxu0 %v2363
      %v2554 = vpop.f32.mrf.mxu0
      %v2555 = vadd.f32 0.0, %v2554
      %v2556 = vpop.f32.mrf.mxu0
      %2557 = vmatprep.mubr.f32.mxu0 0.0
      %2558 = vmatmul.mubr.f32.gmra.mxu0 %v2364
      %v2559 = vpop.f32.mrf.mxu0
      %v2560 = vadd.f32 0.0, %v2559
      %v2561 = vpop.f32.mrf.mxu0
      %2562 = vmatprep.mubr.f32.mxu0 0.0
      %2563 = vmatmul.mubr.f32.gmra.mxu0 %v2365
      %v2564 = vpop.f32.mrf.mxu0
      %v2565 = vadd.f32 0.0, %v2564
      %v2566 = vpop.f32.mrf.mxu0
      %2567 = vmatprep.mubr.f32.mxu0 0.0
      %2568 = vmatmul.mubr.f32.gmra.mxu0 %v2366
      %v2569 = vpop.f32.mrf.mxu0
      %v2570 = vadd.f32 0.0, %v2569
      %v2571 = vpop.f32.mrf.mxu0
      %2572 = vmatprep.mubr.f32.mxu0 0.0
      %2573 = vmatmul.mubr.f32.gmra.mxu0 %v2367
      %v2574 = vpop.f32.mrf.mxu0
      %v2575 = vadd.f32 0.0, %v2574
      %v2576 = vpop.f32.mrf.mxu0
      %2577 = vmatprep.mubr.f32.mxu0 0.0
      %2578 = vmatmul.mubr.f32.gmra.mxu0 %v2368
      %v2579 = vpop.f32.mrf.mxu0
      %v2580 = vadd.f32 0.0, %v2579
      %v2581 = vpop.f32.mrf.mxu0
      %2582 = vmatprep.mubr.f32.mxu0 0.0
      %2583 = vmatmul.mubr.f32.gmra.mxu0 %v2369
      %v2584 = vpop.f32.mrf.mxu0
      %v2585 = vadd.f32 0.0, %v2584
      %v2586 = vpop.f32.mrf.mxu0
      %2587 = vmatprep.mubr.f32.mxu0 0.0
      %2588 = vmatmul.mubr.f32.gmra.mxu0 %v2370
      %v2589 = vpop.f32.mrf.mxu0
      %v2590 = vadd.f32 0.0, %v2589
      %v2591 = vpop.f32.mrf.mxu0
      %2592 = vmatprep.mubr.f32.mxu0 0.0
      %2593 = vmatmul.mubr.f32.gmra.mxu0 %v2371
      %v2594 = vpop.f32.mrf.mxu0
      %v2595 = vadd.f32 0.0, %v2594
      %v2596 = vpop.f32.mrf.mxu0
      %2597 = vmatprep.mubr.f32.mxu0 0.0
      %2598 = vmatmul.mubr.f32.gmra.mxu0 %v2372
      %v2599 = vpop.f32.mrf.mxu0
      %v2600 = vadd.f32 0.0, %v2599
      %v2601 = vpop.f32.mrf.mxu0
      %2602 = vmatprep.mubr.f32.mxu0 0.0
      %2603 = vmatmul.mubr.f32.gmra.mxu0 %v2373
      %v2604 = vpop.f32.mrf.mxu0
      %v2605 = vadd.f32 0.0, %v2604
      %v2606 = vpop.f32.mrf.mxu0
      %2607 = vmatprep.mubr.f32.mxu0 0.0
      %2608 = vmatmul.mubr.f32.gmra.mxu0 %v2374
      %v2609 = vpop.f32.mrf.mxu0
      %v2610 = vadd.f32 0.0, %v2609
      %v2611 = vpop.f32.mrf.mxu0
      %2612 = vmatprep.mubr.f32.mxu0 0.0
      %2613 = vmatmul.mubr.f32.gmra.mxu0 %v2375
      %v2614 = vpop.f32.mrf.mxu0
      %v2615 = vadd.f32 0.0, %v2614
      %v2616 = vpop.f32.mrf.mxu0
      %2617 = vdwg.mxu0
      %v2618 = vadd.f32 %v2312, %v2460
      %v2619 = vadd.f32 %v2313, %v2465
      %v2620 = vadd.f32 %v2314, %v2470
      %v2621 = vadd.f32 %v2315, %v2475
      %v2622 = vadd.f32 %v2316, %v2480
      %v2623 = vadd.f32 %v2317, %v2485
      %v2624 = vadd.f32 %v2318, %v2490
      %v2625 = vadd.f32 %v2319, %v2495
      %v2626 = vadd.f32 %v2320, %v2500
      %v2627 = vadd.f32 %v2321, %v2505
      %v2628 = vadd.f32 %v2322, %v2510
      %v2629 = vadd.f32 %v2323, %v2515
      %v2630 = vadd.f32 %v2324, %v2520
      %v2631 = vadd.f32 %v2325, %v2525
      %v2632 = vadd.f32 %v2326, %v2530
      %v2633 = vadd.f32 %v2327, %v2535
      %v2634 = vadd.f32 %v2328, %v2540
      %v2635 = vadd.f32 %v2329, %v2545
      %v2636 = vadd.f32 %v2330, %v2550
      %v2637 = vadd.f32 %v2331, %v2555
      %v2638 = vadd.f32 %v2332, %v2560
      %v2639 = vadd.f32 %v2333, %v2565
      %v2640 = vadd.f32 %v2334, %v2570
      %v2641 = vadd.f32 %v2335, %v2575
      %v2642 = vadd.f32 %v2336, %v2580
      %v2643 = vadd.f32 %v2337, %v2585
      %v2644 = vadd.f32 %v2338, %v2590
      %v2645 = vadd.f32 %v2339, %v2595
      %v2646 = vadd.f32 %v2340, %v2600
      %v2647 = vadd.f32 %v2341, %v2605
      %v2648 = vadd.f32 %v2342, %v2610
      %v2649 = vadd.f32 %v2343, %v2615
      %v2650 = vld [vmem:[#allocation2 + $0x19] sm:$0xff]
      %v2651 = vld [vmem:[#allocation2 + $0x21] sm:$0xff]
      %v2652 = vld [vmem:[#allocation2 + $0x29] sm:$0xff]
      %v2653 = vld [vmem:[#allocation2 + $0x31] sm:$0xff]
      %v2654 = vld [vmem:[#allocation2 + $0x39] sm:$0xff]
      %v2655 = vld [vmem:[#allocation2 + $0x41] sm:$0xff]
      %v2656 = vld [vmem:[#allocation2 + $0x49] sm:$0xff]
      %v2657 = vld [vmem:[#allocation2 + $0x51] sm:$0xff]
      %v2658 = vld [vmem:[#allocation2 + $0x59] sm:$0xff]
      %v2659 = vld [vmem:[#allocation2 + $0x61] sm:$0xff]
      %v2660 = vld [vmem:[#allocation2 + $0x69] sm:$0xff]
      %v2661 = vld [vmem:[#allocation2 + $0x71] sm:$0xff]
      %v2662 = vld [vmem:[#allocation2 + $0x79] sm:$0xff]
      %v2663 = vld [vmem:[#allocation2 + $0x81] sm:$0xff]
      %v2664 = vld [vmem:[#allocation2 + $0x89] sm:$0xff]
      %v2665 = vld [vmem:[#allocation2 + $0x91] sm:$0xff]
      %v2666 = vld [vmem:[#allocation2 + $0x99] sm:$0xff]
      %v2667 = vld [vmem:[#allocation2 + $0xa1] sm:$0xff]
      %v2668 = vld [vmem:[#allocation2 + $0xa9] sm:$0xff]
      %v2669 = vld [vmem:[#allocation2 + $0xb1] sm:$0xff]
      %v2670 = vld [vmem:[#allocation2 + $0xb9] sm:$0xff]
      %v2671 = vld [vmem:[#allocation2 + $0xc1] sm:$0xff]
      %v2672 = vld [vmem:[#allocation2 + $0xc9] sm:$0xff]
      %v2673 = vld [vmem:[#allocation2 + $0xd1] sm:$0xff]
      %v2674 = vld [vmem:[#allocation2 + $0xd9] sm:$0xff]
      %v2675 = vld [vmem:[#allocation2 + $0xe1] sm:$0xff]
      %v2676 = vld [vmem:[#allocation2 + $0xe9] sm:$0xff]
      %v2677 = vld [vmem:[#allocation2 + $0xf1] sm:$0xff]
      %v2678 = vld [vmem:[#allocation2 + $0xf9] sm:$0xff]
      %v2679 = vld [vmem:[#allocation2 + $0x101] sm:$0xff]
      %v2680 = vld [vmem:[#allocation2 + $0x109] sm:$0xff]
      %v2681 = vld [vmem:[#allocation2 + $0x111] sm:$0xff]
      %s2682 = scalar_lea.vmem %s3, 640
      %v2683 = vld [vmem:[%s2682] sm:$0xff]
      %v2684 = vld [vmem:[%s2682 + $0x8] sm:$0xff]
      %v2685 = vld [vmem:[%s2682 + $0x10] sm:$0xff]
      %v2686 = vld [vmem:[%s2682 + $0x18] sm:$0xff]
      %v2687 = vld [vmem:[%s2682 + $0x20] sm:$0xff]
      %v2688 = vld [vmem:[%s2682 + $0x28] sm:$0xff]
      %v2689 = vld [vmem:[%s2682 + $0x30] sm:$0xff]
      %v2690 = vld [vmem:[%s2682 + $0x38] sm:$0xff]
      %v2691 = vld [vmem:[%s2682 + $0x40] sm:$0xff]
      %v2692 = vld [vmem:[%s2682 + $0x48] sm:$0xff]
      %v2693 = vld [vmem:[%s2682 + $0x50] sm:$0xff]
      %v2694 = vld [vmem:[%s2682 + $0x58] sm:$0xff]
      %v2695 = vld [vmem:[%s2682 + $0x60] sm:$0xff]
      %v2696 = vld [vmem:[%s2682 + $0x68] sm:$0xff]
      %v2697 = vld [vmem:[%s2682 + $0x70] sm:$0xff]
      %v2698 = vld [vmem:[%s2682 + $0x78] sm:$0xff]
      %2699 = vmatprep.subr.mxu0 0.0
      %2700 = vmatpush1.msra.mxu0 %v2698
      %2701 = vmatprep.subr.mxu0 0.0
      %2702 = vmatpush1.msra.mxu0 %v2697
      %2703 = vmatprep.subr.mxu0 0.0
      %2704 = vmatpush1.msra.mxu0 %v2696
      %2705 = vmatprep.subr.mxu0 0.0
      %2706 = vmatpush1.msra.mxu0 %v2695
      %2707 = vmatprep.subr.mxu0 0.0
      %2708 = vmatpush1.msra.mxu0 %v2694
      %2709 = vmatprep.subr.mxu0 0.0
      %2710 = vmatpush1.msra.mxu0 %v2693
      %2711 = vmatprep.subr.mxu0 0.0
      %2712 = vmatpush1.msra.mxu0 %v2692
      %2713 = vmatprep.subr.mxu0 0.0
      %2714 = vmatpush1.msra.mxu0 %v2691
      %2715 = vmatprep.subr.mxu0 0.0
      %2716 = vmatpush1.msra.mxu0 %v2690
      %2717 = vmatprep.subr.mxu0 0.0
      %2718 = vmatpush1.msra.mxu0 %v2689
      %2719 = vmatprep.subr.mxu0 0.0
      %2720 = vmatpush1.msra.mxu0 %v2688
      %2721 = vmatprep.subr.mxu0 0.0
      %2722 = vmatpush1.msra.mxu0 %v2687
      %2723 = vmatprep.subr.mxu0 0.0
      %2724 = vmatpush1.msra.mxu0 %v2686
      %2725 = vmatprep.subr.mxu0 0.0
      %2726 = vmatpush1.msra.mxu0 %v2685
      %2727 = vmatprep.subr.mxu0 0.0
      %2728 = vmatpush1.msra.mxu0 %v2684
      %2729 = vmatprep.subr.mxu0 0.0
      %2730 = vmatpush1.msra.mxu0 %v2683
      %2731 = vmatprep.subr.mxu0 0.0
      %2732 = vmatpush2.msra.mxu0 0.0
      %2733 = vmatprep.subr.mxu0 0.0
      %2734 = vmatpush2.msra.mxu0 0.0
      %2735 = vmatprep.subr.mxu0 0.0
      %2736 = vmatpush2.msra.mxu0 0.0
      %2737 = vmatprep.subr.mxu0 0.0
      %2738 = vmatpush2.msra.mxu0 0.0
      %2739 = vmatprep.subr.mxu0 0.0
      %2740 = vmatpush2.msra.mxu0 0.0
      %2741 = vmatprep.subr.mxu0 0.0
      %2742 = vmatpush2.msra.mxu0 0.0
      %2743 = vmatprep.subr.mxu0 0.0
      %2744 = vmatpush2.msra.mxu0 0.0
      %2745 = vmatprep.subr.mxu0 0.0
      %2746 = vmatpush2.msra.mxu0 0.0
      %2747 = vmatprep.subr.mxu0 0.0
      %2748 = vmatpush2.msra.mxu0 0.0
      %2749 = vmatprep.subr.mxu0 0.0
      %2750 = vmatpush2.msra.mxu0 0.0
      %2751 = vmatprep.subr.mxu0 0.0
      %2752 = vmatpush2.msra.mxu0 0.0
      %2753 = vmatprep.subr.mxu0 0.0
      %2754 = vmatpush2.msra.mxu0 0.0
      %2755 = vmatprep.subr.mxu0 0.0
      %2756 = vmatpush2.msra.mxu0 0.0
      %2757 = vmatprep.subr.mxu0 0.0
      %2758 = vmatpush2.msra.mxu0 0.0
      %2759 = vmatprep.subr.mxu0 0.0
      %2760 = vmatpush2.msra.mxu0 0.0
      %2761 = vmatprep.subr.mxu0 0.0
      %2762 = vmatpush2.msra.mxu0 0.0
      %2763 = vmatprep.mubr.f32.mxu0 0.0
      %2764 = vmatmul.mubr.f32.gmra.mxu0 %v2650
      %v2765 = vpop.f32.mrf.mxu0
      %v2766 = vadd.f32 0.0, %v2765
      %v2767 = vpop.f32.mrf.mxu0
      %2768 = vmatprep.mubr.f32.mxu0 0.0
      %2769 = vmatmul.mubr.f32.gmra.mxu0 %v2651
      %v2770 = vpop.f32.mrf.mxu0
      %v2771 = vadd.f32 0.0, %v2770
      %v2772 = vpop.f32.mrf.mxu0
      %2773 = vmatprep.mubr.f32.mxu0 0.0
      %2774 = vmatmul.mubr.f32.gmra.mxu0 %v2652
      %v2775 = vpop.f32.mrf.mxu0
      %v2776 = vadd.f32 0.0, %v2775
      %v2777 = vpop.f32.mrf.mxu0
      %2778 = vmatprep.mubr.f32.mxu0 0.0
      %2779 = vmatmul.mubr.f32.gmra.mxu0 %v2653
      %v2780 = vpop.f32.mrf.mxu0
      %v2781 = vadd.f32 0.0, %v2780
      %v2782 = vpop.f32.mrf.mxu0
      %2783 = vmatprep.mubr.f32.mxu0 0.0
      %2784 = vmatmul.mubr.f32.gmra.mxu0 %v2654
      %v2785 = vpop.f32.mrf.mxu0
      %v2786 = vadd.f32 0.0, %v2785
      %v2787 = vpop.f32.mrf.mxu0
      %2788 = vmatprep.mubr.f32.mxu0 0.0
      %2789 = vmatmul.mubr.f32.gmra.mxu0 %v2655
      %v2790 = vpop.f32.mrf.mxu0
      %v2791 = vadd.f32 0.0, %v2790
      %v2792 = vpop.f32.mrf.mxu0
      %2793 = vmatprep.mubr.f32.mxu0 0.0
      %2794 = vmatmul.mubr.f32.gmra.mxu0 %v2656
      %v2795 = vpop.f32.mrf.mxu0
      %v2796 = vadd.f32 0.0, %v2795
      %v2797 = vpop.f32.mrf.mxu0
      %2798 = vmatprep.mubr.f32.mxu0 0.0
      %2799 = vmatmul.mubr.f32.gmra.mxu0 %v2657
      %v2800 = vpop.f32.mrf.mxu0
      %v2801 = vadd.f32 0.0, %v2800
      %v2802 = vpop.f32.mrf.mxu0
      %2803 = vmatprep.mubr.f32.mxu0 0.0
      %2804 = vmatmul.mubr.f32.gmra.mxu0 %v2658
      %v2805 = vpop.f32.mrf.mxu0
      %v2806 = vadd.f32 0.0, %v2805
      %v2807 = vpop.f32.mrf.mxu0
      %2808 = vmatprep.mubr.f32.mxu0 0.0
      %2809 = vmatmul.mubr.f32.gmra.mxu0 %v2659
      %v2810 = vpop.f32.mrf.mxu0
      %v2811 = vadd.f32 0.0, %v2810
      %v2812 = vpop.f32.mrf.mxu0
      %2813 = vmatprep.mubr.f32.mxu0 0.0
      %2814 = vmatmul.mubr.f32.gmra.mxu0 %v2660
      %v2815 = vpop.f32.mrf.mxu0
      %v2816 = vadd.f32 0.0, %v2815
      %v2817 = vpop.f32.mrf.mxu0
      %2818 = vmatprep.mubr.f32.mxu0 0.0
      %2819 = vmatmul.mubr.f32.gmra.mxu0 %v2661
      %v2820 = vpop.f32.mrf.mxu0
      %v2821 = vadd.f32 0.0, %v2820
      %v2822 = vpop.f32.mrf.mxu0
      %2823 = vmatprep.mubr.f32.mxu0 0.0
      %2824 = vmatmul.mubr.f32.gmra.mxu0 %v2662
      %v2825 = vpop.f32.mrf.mxu0
      %v2826 = vadd.f32 0.0, %v2825
      %v2827 = vpop.f32.mrf.mxu0
      %2828 = vmatprep.mubr.f32.mxu0 0.0
      %2829 = vmatmul.mubr.f32.gmra.mxu0 %v2663
      %v2830 = vpop.f32.mrf.mxu0
      %v2831 = vadd.f32 0.0, %v2830
      %v2832 = vpop.f32.mrf.mxu0
      %2833 = vmatprep.mubr.f32.mxu0 0.0
      %2834 = vmatmul.mubr.f32.gmra.mxu0 %v2664
      %v2835 = vpop.f32.mrf.mxu0
      %v2836 = vadd.f32 0.0, %v2835
      %v2837 = vpop.f32.mrf.mxu0
      %2838 = vmatprep.mubr.f32.mxu0 0.0
      %2839 = vmatmul.mubr.f32.gmra.mxu0 %v2665
      %v2840 = vpop.f32.mrf.mxu0
      %v2841 = vadd.f32 0.0, %v2840
      %v2842 = vpop.f32.mrf.mxu0
      %2843 = vmatprep.mubr.f32.mxu0 0.0
      %2844 = vmatmul.mubr.f32.gmra.mxu0 %v2666
      %v2845 = vpop.f32.mrf.mxu0
      %v2846 = vadd.f32 0.0, %v2845
      %v2847 = vpop.f32.mrf.mxu0
      %2848 = vmatprep.mubr.f32.mxu0 0.0
      %2849 = vmatmul.mubr.f32.gmra.mxu0 %v2667
      %v2850 = vpop.f32.mrf.mxu0
      %v2851 = vadd.f32 0.0, %v2850
      %v2852 = vpop.f32.mrf.mxu0
      %2853 = vmatprep.mubr.f32.mxu0 0.0
      %2854 = vmatmul.mubr.f32.gmra.mxu0 %v2668
      %v2855 = vpop.f32.mrf.mxu0
      %v2856 = vadd.f32 0.0, %v2855
      %v2857 = vpop.f32.mrf.mxu0
      %2858 = vmatprep.mubr.f32.mxu0 0.0
      %2859 = vmatmul.mubr.f32.gmra.mxu0 %v2669
      %v2860 = vpop.f32.mrf.mxu0
      %v2861 = vadd.f32 0.0, %v2860
      %v2862 = vpop.f32.mrf.mxu0
      %2863 = vmatprep.mubr.f32.mxu0 0.0
      %2864 = vmatmul.mubr.f32.gmra.mxu0 %v2670
      %v2865 = vpop.f32.mrf.mxu0
      %v2866 = vadd.f32 0.0, %v2865
      %v2867 = vpop.f32.mrf.mxu0
      %2868 = vmatprep.mubr.f32.mxu0 0.0
      %2869 = vmatmul.mubr.f32.gmra.mxu0 %v2671
      %v2870 = vpop.f32.mrf.mxu0
      %v2871 = vadd.f32 0.0, %v2870
      %v2872 = vpop.f32.mrf.mxu0
      %2873 = vmatprep.mubr.f32.mxu0 0.0
      %2874 = vmatmul.mubr.f32.gmra.mxu0 %v2672
      %v2875 = vpop.f32.mrf.mxu0
      %v2876 = vadd.f32 0.0, %v2875
      %v2877 = vpop.f32.mrf.mxu0
      %2878 = vmatprep.mubr.f32.mxu0 0.0
      %2879 = vmatmul.mubr.f32.gmra.mxu0 %v2673
      %v2880 = vpop.f32.mrf.mxu0
      %v2881 = vadd.f32 0.0, %v2880
      %v2882 = vpop.f32.mrf.mxu0
      %2883 = vmatprep.mubr.f32.mxu0 0.0
      %2884 = vmatmul.mubr.f32.gmra.mxu0 %v2674
      %v2885 = vpop.f32.mrf.mxu0
      %v2886 = vadd.f32 0.0, %v2885
      %v2887 = vpop.f32.mrf.mxu0
      %2888 = vmatprep.mubr.f32.mxu0 0.0
      %2889 = vmatmul.mubr.f32.gmra.mxu0 %v2675
      %v2890 = vpop.f32.mrf.mxu0
      %v2891 = vadd.f32 0.0, %v2890
      %v2892 = vpop.f32.mrf.mxu0
      %2893 = vmatprep.mubr.f32.mxu0 0.0
      %2894 = vmatmul.mubr.f32.gmra.mxu0 %v2676
      %v2895 = vpop.f32.mrf.mxu0
      %v2896 = vadd.f32 0.0, %v2895
      %v2897 = vpop.f32.mrf.mxu0
      %2898 = vmatprep.mubr.f32.mxu0 0.0
      %2899 = vmatmul.mubr.f32.gmra.mxu0 %v2677
      %v2900 = vpop.f32.mrf.mxu0
      %v2901 = vadd.f32 0.0, %v2900
      %v2902 = vpop.f32.mrf.mxu0
      %2903 = vmatprep.mubr.f32.mxu0 0.0
      %2904 = vmatmul.mubr.f32.gmra.mxu0 %v2678
      %v2905 = vpop.f32.mrf.mxu0
      %v2906 = vadd.f32 0.0, %v2905
      %v2907 = vpop.f32.mrf.mxu0
      %2908 = vmatprep.mubr.f32.mxu0 0.0
      %2909 = vmatmul.mubr.f32.gmra.mxu0 %v2679
      %v2910 = vpop.f32.mrf.mxu0
      %v2911 = vadd.f32 0.0, %v2910
      %v2912 = vpop.f32.mrf.mxu0
      %2913 = vmatprep.mubr.f32.mxu0 0.0
      %2914 = vmatmul.mubr.f32.gmra.mxu0 %v2680
      %v2915 = vpop.f32.mrf.mxu0
      %v2916 = vadd.f32 0.0, %v2915
      %v2917 = vpop.f32.mrf.mxu0
      %2918 = vmatprep.mubr.f32.mxu0 0.0
      %2919 = vmatmul.mubr.f32.gmra.mxu0 %v2681
      %v2920 = vpop.f32.mrf.mxu0
      %v2921 = vadd.f32 0.0, %v2920
      %v2922 = vpop.f32.mrf.mxu0
      %2923 = vdwg.mxu0
      %v2924 = vsel %vm1910, %v2766, 0.0
      %v2925 = vsel %vm1911, %v2771, 0.0
      %v2926 = vsel %vm1912, %v2776, 0.0
      %v2927 = vsel %vm1913, %v2781, 0.0
      %v2928 = vsel %vm1914, %v2786, 0.0
      %v2929 = vsel %vm1915, %v2791, 0.0
      %v2930 = vsel %vm1916, %v2796, 0.0
      %v2931 = vsel %vm1917, %v2801, 0.0
      %v2932 = vsel %vm1918, %v2806, 0.0
      %v2933 = vsel %vm1919, %v2811, 0.0
      %v2934 = vsel %vm1920, %v2816, 0.0
      %v2935 = vsel %vm1921, %v2821, 0.0
      %v2936 = vsel %vm1922, %v2826, 0.0
      %v2937 = vsel %vm1923, %v2831, 0.0
      %v2938 = vsel %vm1924, %v2836, 0.0
      %v2939 = vsel %vm1925, %v2841, 0.0
      %v2940 = vsel %vm1926, %v2846, 0.0
      %v2941 = vsel %vm1927, %v2851, 0.0
      %v2942 = vsel %vm1928, %v2856, 0.0
      %v2943 = vsel %vm1929, %v2861, 0.0
      %v2944 = vsel %vm1930, %v2866, 0.0
      %v2945 = vsel %vm1931, %v2871, 0.0
      %v2946 = vsel %vm1932, %v2876, 0.0
      %v2947 = vsel %vm1933, %v2881, 0.0
      %v2948 = vsel %vm1934, %v2886, 0.0
      %v2949 = vsel %vm1935, %v2891, 0.0
      %v2950 = vsel %vm1936, %v2896, 0.0
      %v2951 = vsel %vm1937, %v2901, 0.0
      %v2952 = vsel %vm1938, %v2906, 0.0
      %v2953 = vsel %vm1939, %v2911, 0.0
      %v2954 = vsel %vm1940, %v2916, 0.0
      %v2955 = vsel %vm1941, %v2921, 0.0
      %v2956 = vadd.f32 %v2618, %v2924
      %v2957 = vadd.f32 %v2619, %v2925
      %v2958 = vadd.f32 %v2620, %v2926
      %v2959 = vadd.f32 %v2621, %v2927
      %v2960 = vadd.f32 %v2622, %v2928
      %v2961 = vadd.f32 %v2623, %v2929
      %v2962 = vadd.f32 %v2624, %v2930
      %v2963 = vadd.f32 %v2625, %v2931
      %v2964 = vadd.f32 %v2626, %v2932
      %v2965 = vadd.f32 %v2627, %v2933
      %v2966 = vadd.f32 %v2628, %v2934
      %v2967 = vadd.f32 %v2629, %v2935
      %v2968 = vadd.f32 %v2630, %v2936
      %v2969 = vadd.f32 %v2631, %v2937
      %v2970 = vadd.f32 %v2632, %v2938
      %v2971 = vadd.f32 %v2633, %v2939
      %v2972 = vadd.f32 %v2634, %v2940
      %v2973 = vadd.f32 %v2635, %v2941
      %v2974 = vadd.f32 %v2636, %v2942
      %v2975 = vadd.f32 %v2637, %v2943
      %v2976 = vadd.f32 %v2638, %v2944
      %v2977 = vadd.f32 %v2639, %v2945
      %v2978 = vadd.f32 %v2640, %v2946
      %v2979 = vadd.f32 %v2641, %v2947
      %v2980 = vadd.f32 %v2642, %v2948
      %v2981 = vadd.f32 %v2643, %v2949
      %v2982 = vadd.f32 %v2644, %v2950
      %v2983 = vadd.f32 %v2645, %v2951
      %v2984 = vadd.f32 %v2646, %v2952
      %v2985 = vadd.f32 %v2647, %v2953
      %v2986 = vadd.f32 %v2648, %v2954
      %v2987 = vadd.f32 %v2649, %v2955
      %v2988 = vld [vmem:[#allocation2 + $0x27] sm:$0xff]
      %v2989 = vld [vmem:[#allocation2 + $0x2f] sm:$0xff]
      %v2990 = vld [vmem:[#allocation2 + $0x37] sm:$0xff]
      %v2991 = vld [vmem:[#allocation2 + $0x3f] sm:$0xff]
      %v2992 = vld [vmem:[#allocation2 + $0x47] sm:$0xff]
      %v2993 = vld [vmem:[#allocation2 + $0x4f] sm:$0xff]
      %v2994 = vld [vmem:[#allocation2 + $0x57] sm:$0xff]
      %v2995 = vld [vmem:[#allocation2 + $0x5f] sm:$0xff]
      %v2996 = vld [vmem:[#allocation2 + $0x67] sm:$0xff]
      %v2997 = vld [vmem:[#allocation2 + $0x6f] sm:$0xff]
      %v2998 = vld [vmem:[#allocation2 + $0x77] sm:$0xff]
      %v2999 = vld [vmem:[#allocation2 + $0x7f] sm:$0xff]
      %v3000 = vld [vmem:[#allocation2 + $0x87] sm:$0xff]
      %v3001 = vld [vmem:[#allocation2 + $0x8f] sm:$0xff]
      %v3002 = vld [vmem:[#allocation2 + $0x97] sm:$0xff]
      %v3003 = vld [vmem:[#allocation2 + $0x9f] sm:$0xff]
      %v3004 = vld [vmem:[#allocation2 + $0xa7] sm:$0xff]
      %v3005 = vld [vmem:[#allocation2 + $0xaf] sm:$0xff]
      %v3006 = vld [vmem:[#allocation2 + $0xb7] sm:$0xff]
      %v3007 = vld [vmem:[#allocation2 + $0xbf] sm:$0xff]
      %v3008 = vld [vmem:[#allocation2 + $0xc7] sm:$0xff]
      %v3009 = vld [vmem:[#allocation2 + $0xcf] sm:$0xff]
      %v3010 = vld [vmem:[#allocation2 + $0xd7] sm:$0xff]
      %v3011 = vld [vmem:[#allocation2 + $0xdf] sm:$0xff]
      %v3012 = vld [vmem:[#allocation2 + $0xe7] sm:$0xff]
      %v3013 = vld [vmem:[#allocation2 + $0xef] sm:$0xff]
      %v3014 = vld [vmem:[#allocation2 + $0xf7] sm:$0xff]
      %v3015 = vld [vmem:[#allocation2 + $0xff] sm:$0xff]
      %v3016 = vld [vmem:[#allocation2 + $0x107] sm:$0xff]
      %v3017 = vld [vmem:[#allocation2 + $0x10f] sm:$0xff]
      %v3018 = vld [vmem:[#allocation2 + $0x117] sm:$0xff]
      %v3019 = vld [vmem:[#allocation2 + $0x11f] sm:$0xff]
      %s3020 = scalar_lea.vmem %s3, 768
      %v3021 = vld [vmem:[%s3020] sm:$0xff]
      %v3022 = vld [vmem:[%s3020 + $0x8] sm:$0xff]
      %v3023 = vld [vmem:[%s3020 + $0x10] sm:$0xff]
      %v3024 = vld [vmem:[%s3020 + $0x18] sm:$0xff]
      %v3025 = vld [vmem:[%s3020 + $0x20] sm:$0xff]
      %v3026 = vld [vmem:[%s3020 + $0x28] sm:$0xff]
      %v3027 = vld [vmem:[%s3020 + $0x30] sm:$0xff]
      %v3028 = vld [vmem:[%s3020 + $0x38] sm:$0xff]
      %v3029 = vld [vmem:[%s3020 + $0x40] sm:$0xff]
      %v3030 = vld [vmem:[%s3020 + $0x48] sm:$0xff]
      %v3031 = vld [vmem:[%s3020 + $0x50] sm:$0xff]
      %v3032 = vld [vmem:[%s3020 + $0x58] sm:$0xff]
      %v3033 = vld [vmem:[%s3020 + $0x60] sm:$0xff]
      %v3034 = vld [vmem:[%s3020 + $0x68] sm:$0xff]
      %v3035 = vld [vmem:[%s3020 + $0x70] sm:$0xff]
      %v3036 = vld [vmem:[%s3020 + $0x78] sm:$0xff]
      %3037 = vmatprep.subr.mxu0 0.0
      %3038 = vmatpush1.msra.mxu0 %v3036
      %3039 = vmatprep.subr.mxu0 0.0
      %3040 = vmatpush1.msra.mxu0 %v3035
      %3041 = vmatprep.subr.mxu0 0.0
      %3042 = vmatpush1.msra.mxu0 %v3034
      %3043 = vmatprep.subr.mxu0 0.0
      %3044 = vmatpush1.msra.mxu0 %v3033
      %3045 = vmatprep.subr.mxu0 0.0
      %3046 = vmatpush1.msra.mxu0 %v3032
      %3047 = vmatprep.subr.mxu0 0.0
      %3048 = vmatpush1.msra.mxu0 %v3031
      %3049 = vmatprep.subr.mxu0 0.0
      %3050 = vmatpush1.msra.mxu0 %v3030
      %3051 = vmatprep.subr.mxu0 0.0
      %3052 = vmatpush1.msra.mxu0 %v3029
      %3053 = vmatprep.subr.mxu0 0.0
      %3054 = vmatpush1.msra.mxu0 %v3028
      %3055 = vmatprep.subr.mxu0 0.0
      %3056 = vmatpush1.msra.mxu0 %v3027
      %3057 = vmatprep.subr.mxu0 0.0
      %3058 = vmatpush1.msra.mxu0 %v3026
      %3059 = vmatprep.subr.mxu0 0.0
      %3060 = vmatpush1.msra.mxu0 %v3025
      %3061 = vmatprep.subr.mxu0 0.0
      %3062 = vmatpush1.msra.mxu0 %v3024
      %3063 = vmatprep.subr.mxu0 0.0
      %3064 = vmatpush1.msra.mxu0 %v3023
      %3065 = vmatprep.subr.mxu0 0.0
      %3066 = vmatpush1.msra.mxu0 %v3022
      %3067 = vmatprep.subr.mxu0 0.0
      %3068 = vmatpush1.msra.mxu0 %v3021
      %3069 = vmatprep.subr.mxu0 0.0
      %3070 = vmatpush2.msra.mxu0 0.0
      %3071 = vmatprep.subr.mxu0 0.0
      %3072 = vmatpush2.msra.mxu0 0.0
      %3073 = vmatprep.subr.mxu0 0.0
      %3074 = vmatpush2.msra.mxu0 0.0
      %3075 = vmatprep.subr.mxu0 0.0
      %3076 = vmatpush2.msra.mxu0 0.0
      %3077 = vmatprep.subr.mxu0 0.0
      %3078 = vmatpush2.msra.mxu0 0.0
      %3079 = vmatprep.subr.mxu0 0.0
      %3080 = vmatpush2.msra.mxu0 0.0
      %3081 = vmatprep.subr.mxu0 0.0
      %3082 = vmatpush2.msra.mxu0 0.0
      %3083 = vmatprep.subr.mxu0 0.0
      %3084 = vmatpush2.msra.mxu0 0.0
      %3085 = vmatprep.subr.mxu0 0.0
      %3086 = vmatpush2.msra.mxu0 0.0
      %3087 = vmatprep.subr.mxu0 0.0
      %3088 = vmatpush2.msra.mxu0 0.0
      %3089 = vmatprep.subr.mxu0 0.0
      %3090 = vmatpush2.msra.mxu0 0.0
      %3091 = vmatprep.subr.mxu0 0.0
      %3092 = vmatpush2.msra.mxu0 0.0
      %3093 = vmatprep.subr.mxu0 0.0
      %3094 = vmatpush2.msra.mxu0 0.0
      %3095 = vmatprep.subr.mxu0 0.0
      %3096 = vmatpush2.msra.mxu0 0.0
      %3097 = vmatprep.subr.mxu0 0.0
      %3098 = vmatpush2.msra.mxu0 0.0
      %3099 = vmatprep.subr.mxu0 0.0
      %3100 = vmatpush2.msra.mxu0 0.0
      %3101 = vmatprep.mubr.f32.mxu0 0.0
      %3102 = vmatmul.mubr.f32.gmra.mxu0 %v2988
      %v3103 = vpop.f32.mrf.mxu0
      %v3104 = vadd.f32 0.0, %v3103
      %v3105 = vpop.f32.mrf.mxu0
      %3106 = vmatprep.mubr.f32.mxu0 0.0
      %3107 = vmatmul.mubr.f32.gmra.mxu0 %v2989
      %v3108 = vpop.f32.mrf.mxu0
      %v3109 = vadd.f32 0.0, %v3108
      %v3110 = vpop.f32.mrf.mxu0
      %3111 = vmatprep.mubr.f32.mxu0 0.0
      %3112 = vmatmul.mubr.f32.gmra.mxu0 %v2990
      %v3113 = vpop.f32.mrf.mxu0
      %v3114 = vadd.f32 0.0, %v3113
      %v3115 = vpop.f32.mrf.mxu0
      %3116 = vmatprep.mubr.f32.mxu0 0.0
      %3117 = vmatmul.mubr.f32.gmra.mxu0 %v2991
      %v3118 = vpop.f32.mrf.mxu0
      %v3119 = vadd.f32 0.0, %v3118
      %v3120 = vpop.f32.mrf.mxu0
      %3121 = vmatprep.mubr.f32.mxu0 0.0
      %3122 = vmatmul.mubr.f32.gmra.mxu0 %v2992
      %v3123 = vpop.f32.mrf.mxu0
      %v3124 = vadd.f32 0.0, %v3123
      %v3125 = vpop.f32.mrf.mxu0
      %3126 = vmatprep.mubr.f32.mxu0 0.0
      %3127 = vmatmul.mubr.f32.gmra.mxu0 %v2993
      %v3128 = vpop.f32.mrf.mxu0
      %v3129 = vadd.f32 0.0, %v3128
      %v3130 = vpop.f32.mrf.mxu0
      %3131 = vmatprep.mubr.f32.mxu0 0.0
      %3132 = vmatmul.mubr.f32.gmra.mxu0 %v2994
      %v3133 = vpop.f32.mrf.mxu0
      %v3134 = vadd.f32 0.0, %v3133
      %v3135 = vpop.f32.mrf.mxu0
      %3136 = vmatprep.mubr.f32.mxu0 0.0
      %3137 = vmatmul.mubr.f32.gmra.mxu0 %v2995
      %v3138 = vpop.f32.mrf.mxu0
      %v3139 = vadd.f32 0.0, %v3138
      %v3140 = vpop.f32.mrf.mxu0
      %3141 = vmatprep.mubr.f32.mxu0 0.0
      %3142 = vmatmul.mubr.f32.gmra.mxu0 %v2996
      %v3143 = vpop.f32.mrf.mxu0
      %v3144 = vadd.f32 0.0, %v3143
      %v3145 = vpop.f32.mrf.mxu0
      %3146 = vmatprep.mubr.f32.mxu0 0.0
      %3147 = vmatmul.mubr.f32.gmra.mxu0 %v2997
      %v3148 = vpop.f32.mrf.mxu0
      %v3149 = vadd.f32 0.0, %v3148
      %v3150 = vpop.f32.mrf.mxu0
      %3151 = vmatprep.mubr.f32.mxu0 0.0
      %3152 = vmatmul.mubr.f32.gmra.mxu0 %v2998
      %v3153 = vpop.f32.mrf.mxu0
      %v3154 = vadd.f32 0.0, %v3153
      %v3155 = vpop.f32.mrf.mxu0
      %3156 = vmatprep.mubr.f32.mxu0 0.0
      %3157 = vmatmul.mubr.f32.gmra.mxu0 %v2999
      %v3158 = vpop.f32.mrf.mxu0
      %v3159 = vadd.f32 0.0, %v3158
      %v3160 = vpop.f32.mrf.mxu0
      %3161 = vmatprep.mubr.f32.mxu0 0.0
      %3162 = vmatmul.mubr.f32.gmra.mxu0 %v3000
      %v3163 = vpop.f32.mrf.mxu0
      %v3164 = vadd.f32 0.0, %v3163
      %v3165 = vpop.f32.mrf.mxu0
      %3166 = vmatprep.mubr.f32.mxu0 0.0
      %3167 = vmatmul.mubr.f32.gmra.mxu0 %v3001
      %v3168 = vpop.f32.mrf.mxu0
      %v3169 = vadd.f32 0.0, %v3168
      %v3170 = vpop.f32.mrf.mxu0
      %3171 = vmatprep.mubr.f32.mxu0 0.0
      %3172 = vmatmul.mubr.f32.gmra.mxu0 %v3002
      %v3173 = vpop.f32.mrf.mxu0
      %v3174 = vadd.f32 0.0, %v3173
      %v3175 = vpop.f32.mrf.mxu0
      %3176 = vmatprep.mubr.f32.mxu0 0.0
      %3177 = vmatmul.mubr.f32.gmra.mxu0 %v3003
      %v3178 = vpop.f32.mrf.mxu0
      %v3179 = vadd.f32 0.0, %v3178
      %v3180 = vpop.f32.mrf.mxu0
      %3181 = vmatprep.mubr.f32.mxu0 0.0
      %3182 = vmatmul.mubr.f32.gmra.mxu0 %v3004
      %v3183 = vpop.f32.mrf.mxu0
      %v3184 = vadd.f32 0.0, %v3183
      %v3185 = vpop.f32.mrf.mxu0
      %3186 = vmatprep.mubr.f32.mxu0 0.0
      %3187 = vmatmul.mubr.f32.gmra.mxu0 %v3005
      %v3188 = vpop.f32.mrf.mxu0
      %v3189 = vadd.f32 0.0, %v3188
      %v3190 = vpop.f32.mrf.mxu0
      %3191 = vmatprep.mubr.f32.mxu0 0.0
      %3192 = vmatmul.mubr.f32.gmra.mxu0 %v3006
      %v3193 = vpop.f32.mrf.mxu0
      %v3194 = vadd.f32 0.0, %v3193
      %v3195 = vpop.f32.mrf.mxu0
      %3196 = vmatprep.mubr.f32.mxu0 0.0
      %3197 = vmatmul.mubr.f32.gmra.mxu0 %v3007
      %v3198 = vpop.f32.mrf.mxu0
      %v3199 = vadd.f32 0.0, %v3198
      %v3200 = vpop.f32.mrf.mxu0
      %3201 = vmatprep.mubr.f32.mxu0 0.0
      %3202 = vmatmul.mubr.f32.gmra.mxu0 %v3008
      %v3203 = vpop.f32.mrf.mxu0
      %v3204 = vadd.f32 0.0, %v3203
      %v3205 = vpop.f32.mrf.mxu0
      %3206 = vmatprep.mubr.f32.mxu0 0.0
      %3207 = vmatmul.mubr.f32.gmra.mxu0 %v3009
      %v3208 = vpop.f32.mrf.mxu0
      %v3209 = vadd.f32 0.0, %v3208
      %v3210 = vpop.f32.mrf.mxu0
      %3211 = vmatprep.mubr.f32.mxu0 0.0
      %3212 = vmatmul.mubr.f32.gmra.mxu0 %v3010
      %v3213 = vpop.f32.mrf.mxu0
      %v3214 = vadd.f32 0.0, %v3213
      %v3215 = vpop.f32.mrf.mxu0
      %3216 = vmatprep.mubr.f32.mxu0 0.0
      %3217 = vmatmul.mubr.f32.gmra.mxu0 %v3011
      %v3218 = vpop.f32.mrf.mxu0
      %v3219 = vadd.f32 0.0, %v3218
      %v3220 = vpop.f32.mrf.mxu0
      %3221 = vmatprep.mubr.f32.mxu0 0.0
      %3222 = vmatmul.mubr.f32.gmra.mxu0 %v3012
      %v3223 = vpop.f32.mrf.mxu0
      %v3224 = vadd.f32 0.0, %v3223
      %v3225 = vpop.f32.mrf.mxu0
      %3226 = vmatprep.mubr.f32.mxu0 0.0
      %3227 = vmatmul.mubr.f32.gmra.mxu0 %v3013
      %v3228 = vpop.f32.mrf.mxu0
      %v3229 = vadd.f32 0.0, %v3228
      %v3230 = vpop.f32.mrf.mxu0
      %3231 = vmatprep.mubr.f32.mxu0 0.0
      %3232 = vmatmul.mubr.f32.gmra.mxu0 %v3014
      %v3233 = vpop.f32.mrf.mxu0
      %v3234 = vadd.f32 0.0, %v3233
      %v3235 = vpop.f32.mrf.mxu0
      %3236 = vmatprep.mubr.f32.mxu0 0.0
      %3237 = vmatmul.mubr.f32.gmra.mxu0 %v3015
      %v3238 = vpop.f32.mrf.mxu0
      %v3239 = vadd.f32 0.0, %v3238
      %v3240 = vpop.f32.mrf.mxu0
      %3241 = vmatprep.mubr.f32.mxu0 0.0
      %3242 = vmatmul.mubr.f32.gmra.mxu0 %v3016
      %v3243 = vpop.f32.mrf.mxu0
      %v3244 = vadd.f32 0.0, %v3243
      %v3245 = vpop.f32.mrf.mxu0
      %3246 = vmatprep.mubr.f32.mxu0 0.0
      %3247 = vmatmul.mubr.f32.gmra.mxu0 %v3017
      %v3248 = vpop.f32.mrf.mxu0
      %v3249 = vadd.f32 0.0, %v3248
      %v3250 = vpop.f32.mrf.mxu0
      %3251 = vmatprep.mubr.f32.mxu0 0.0
      %3252 = vmatmul.mubr.f32.gmra.mxu0 %v3018
      %v3253 = vpop.f32.mrf.mxu0
      %v3254 = vadd.f32 0.0, %v3253
      %v3255 = vpop.f32.mrf.mxu0
      %3256 = vmatprep.mubr.f32.mxu0 0.0
      %3257 = vmatmul.mubr.f32.gmra.mxu0 %v3019
      %v3258 = vpop.f32.mrf.mxu0
      %v3259 = vadd.f32 0.0, %v3258
      %v3260 = vpop.f32.mrf.mxu0
      %3261 = vdwg.mxu0
      %v3262 = vsel %vm1202, %v3104, 0.0
      %v3263 = vsel %vm1203, %v3109, 0.0
      %v3264 = vsel %vm1204, %v3114, 0.0
      %v3265 = vsel %vm1205, %v3119, 0.0
      %v3266 = vsel %vm1206, %v3124, 0.0
      %v3267 = vsel %vm1207, %v3129, 0.0
      %v3268 = vsel %vm1208, %v3134, 0.0
      %v3269 = vsel %vm1209, %v3139, 0.0
      %v3270 = vsel %vm1210, %v3144, 0.0
      %v3271 = vsel %vm1211, %v3149, 0.0
      %v3272 = vsel %vm1212, %v3154, 0.0
      %v3273 = vsel %vm1213, %v3159, 0.0
      %v3274 = vsel %vm1214, %v3164, 0.0
      %v3275 = vsel %vm1215, %v3169, 0.0
      %v3276 = vsel %vm1216, %v3174, 0.0
      %v3277 = vsel %vm1217, %v3179, 0.0
      %v3278 = vsel %vm1218, %v3184, 0.0
      %v3279 = vsel %vm1219, %v3189, 0.0
      %v3280 = vsel %vm1220, %v3194, 0.0
      %v3281 = vsel %vm1221, %v3199, 0.0
      %v3282 = vsel %vm1222, %v3204, 0.0
      %v3283 = vsel %vm1223, %v3209, 0.0
      %v3284 = vsel %vm1224, %v3214, 0.0
      %v3285 = vsel %vm1225, %v3219, 0.0
      %v3286 = vsel %vm1226, %v3224, 0.0
      %v3287 = vsel %vm1227, %v3229, 0.0
      %v3288 = vsel %vm1228, %v3234, 0.0
      %v3289 = vsel %vm1229, %v3239, 0.0
      %v3290 = vsel %vm1230, %v3244, 0.0
      %v3291 = vsel %vm1231, %v3249, 0.0
      %v3292 = vsel %vm1232, %v3254, 0.0
      %v3293 = vsel %vm1233, %v3259, 0.0
      %v3294 = vadd.f32 %v2956, %v3262
      %v3295 = vadd.f32 %v2957, %v3263
      %v3296 = vadd.f32 %v2958, %v3264
      %v3297 = vadd.f32 %v2959, %v3265
      %v3298 = vadd.f32 %v2960, %v3266
      %v3299 = vadd.f32 %v2961, %v3267
      %v3300 = vadd.f32 %v2962, %v3268
      %v3301 = vadd.f32 %v2963, %v3269
      %v3302 = vadd.f32 %v2964, %v3270
      %v3303 = vadd.f32 %v2965, %v3271
      %v3304 = vadd.f32 %v2966, %v3272
      %v3305 = vadd.f32 %v2967, %v3273
      %v3306 = vadd.f32 %v2968, %v3274
      %v3307 = vadd.f32 %v2969, %v3275
      %v3308 = vadd.f32 %v2970, %v3276
      %v3309 = vadd.f32 %v2971, %v3277
      %v3310 = vadd.f32 %v2972, %v3278
      %v3311 = vadd.f32 %v2973, %v3279
      %v3312 = vadd.f32 %v2974, %v3280
      %v3313 = vadd.f32 %v2975, %v3281
      %v3314 = vadd.f32 %v2976, %v3282
      %v3315 = vadd.f32 %v2977, %v3283
      %v3316 = vadd.f32 %v2978, %v3284
      %v3317 = vadd.f32 %v2979, %v3285
      %v3318 = vadd.f32 %v2980, %v3286
      %v3319 = vadd.f32 %v2981, %v3287
      %v3320 = vadd.f32 %v2982, %v3288
      %v3321 = vadd.f32 %v2983, %v3289
      %v3322 = vadd.f32 %v2984, %v3290
      %v3323 = vadd.f32 %v2985, %v3291
      %v3324 = vadd.f32 %v2986, %v3292
      %v3325 = vadd.f32 %v2987, %v3293
      %v3326 = vld [vmem:[#allocation2 + $0x28] sm:$0xff]
      %v3327 = vld [vmem:[#allocation2 + $0x30] sm:$0xff]
      %v3328 = vld [vmem:[#allocation2 + $0x38] sm:$0xff]
      %v3329 = vld [vmem:[#allocation2 + $0x40] sm:$0xff]
      %v3330 = vld [vmem:[#allocation2 + $0x48] sm:$0xff]
      %v3331 = vld [vmem:[#allocation2 + $0x50] sm:$0xff]
      %v3332 = vld [vmem:[#allocation2 + $0x58] sm:$0xff]
      %v3333 = vld [vmem:[#allocation2 + $0x60] sm:$0xff]
      %v3334 = vld [vmem:[#allocation2 + $0x68] sm:$0xff]
      %v3335 = vld [vmem:[#allocation2 + $0x70] sm:$0xff]
      %v3336 = vld [vmem:[#allocation2 + $0x78] sm:$0xff]
      %v3337 = vld [vmem:[#allocation2 + $0x80] sm:$0xff]
      %v3338 = vld [vmem:[#allocation2 + $0x88] sm:$0xff]
      %v3339 = vld [vmem:[#allocation2 + $0x90] sm:$0xff]
      %v3340 = vld [vmem:[#allocation2 + $0x98] sm:$0xff]
      %v3341 = vld [vmem:[#allocation2 + $0xa0] sm:$0xff]
      %v3342 = vld [vmem:[#allocation2 + $0xa8] sm:$0xff]
      %v3343 = vld [vmem:[#allocation2 + $0xb0] sm:$0xff]
      %v3344 = vld [vmem:[#allocation2 + $0xb8] sm:$0xff]
      %v3345 = vld [vmem:[#allocation2 + $0xc0] sm:$0xff]
      %v3346 = vld [vmem:[#allocation2 + $0xc8] sm:$0xff]
      %v3347 = vld [vmem:[#allocation2 + $0xd0] sm:$0xff]
      %v3348 = vld [vmem:[#allocation2 + $0xd8] sm:$0xff]
      %v3349 = vld [vmem:[#allocation2 + $0xe0] sm:$0xff]
      %v3350 = vld [vmem:[#allocation2 + $0xe8] sm:$0xff]
      %v3351 = vld [vmem:[#allocation2 + $0xf0] sm:$0xff]
      %v3352 = vld [vmem:[#allocation2 + $0xf8] sm:$0xff]
      %v3353 = vld [vmem:[#allocation2 + $0x100] sm:$0xff]
      %v3354 = vld [vmem:[#allocation2 + $0x108] sm:$0xff]
      %v3355 = vld [vmem:[#allocation2 + $0x110] sm:$0xff]
      %v3356 = vld [vmem:[#allocation2 + $0x118] sm:$0xff]
      %v3357 = vld [vmem:[#allocation2 + $0x120] sm:$0xff]
      %s3358 = scalar_lea.vmem %s3, 896
      %v3359 = vld [vmem:[%s3358] sm:$0xff]
      %v3360 = vld [vmem:[%s3358 + $0x8] sm:$0xff]
      %v3361 = vld [vmem:[%s3358 + $0x10] sm:$0xff]
      %v3362 = vld [vmem:[%s3358 + $0x18] sm:$0xff]
      %v3363 = vld [vmem:[%s3358 + $0x20] sm:$0xff]
      %v3364 = vld [vmem:[%s3358 + $0x28] sm:$0xff]
      %v3365 = vld [vmem:[%s3358 + $0x30] sm:$0xff]
      %v3366 = vld [vmem:[%s3358 + $0x38] sm:$0xff]
      %v3367 = vld [vmem:[%s3358 + $0x40] sm:$0xff]
      %v3368 = vld [vmem:[%s3358 + $0x48] sm:$0xff]
      %v3369 = vld [vmem:[%s3358 + $0x50] sm:$0xff]
      %v3370 = vld [vmem:[%s3358 + $0x58] sm:$0xff]
      %v3371 = vld [vmem:[%s3358 + $0x60] sm:$0xff]
      %v3372 = vld [vmem:[%s3358 + $0x68] sm:$0xff]
      %v3373 = vld [vmem:[%s3358 + $0x70] sm:$0xff]
      %v3374 = vld [vmem:[%s3358 + $0x78] sm:$0xff]
      %3375 = vmatprep.subr.mxu0 0.0
      %3376 = vmatpush1.msra.mxu0 %v3374
      %3377 = vmatprep.subr.mxu0 0.0
      %3378 = vmatpush1.msra.mxu0 %v3373
      %3379 = vmatprep.subr.mxu0 0.0
      %3380 = vmatpush1.msra.mxu0 %v3372
      %3381 = vmatprep.subr.mxu0 0.0
      %3382 = vmatpush1.msra.mxu0 %v3371
      %3383 = vmatprep.subr.mxu0 0.0
      %3384 = vmatpush1.msra.mxu0 %v3370
      %3385 = vmatprep.subr.mxu0 0.0
      %3386 = vmatpush1.msra.mxu0 %v3369
      %3387 = vmatprep.subr.mxu0 0.0
      %3388 = vmatpush1.msra.mxu0 %v3368
      %3389 = vmatprep.subr.mxu0 0.0
      %3390 = vmatpush1.msra.mxu0 %v3367
      %3391 = vmatprep.subr.mxu0 0.0
      %3392 = vmatpush1.msra.mxu0 %v3366
      %3393 = vmatprep.subr.mxu0 0.0
      %3394 = vmatpush1.msra.mxu0 %v3365
      %3395 = vmatprep.subr.mxu0 0.0
      %3396 = vmatpush1.msra.mxu0 %v3364
      %3397 = vmatprep.subr.mxu0 0.0
      %3398 = vmatpush1.msra.mxu0 %v3363
      %3399 = vmatprep.subr.mxu0 0.0
      %3400 = vmatpush1.msra.mxu0 %v3362
      %3401 = vmatprep.subr.mxu0 0.0
      %3402 = vmatpush1.msra.mxu0 %v3361
      %3403 = vmatprep.subr.mxu0 0.0
      %3404 = vmatpush1.msra.mxu0 %v3360
      %3405 = vmatprep.subr.mxu0 0.0
      %3406 = vmatpush1.msra.mxu0 %v3359
      %3407 = vmatprep.subr.mxu0 0.0
      %3408 = vmatpush2.msra.mxu0 0.0
      %3409 = vmatprep.subr.mxu0 0.0
      %3410 = vmatpush2.msra.mxu0 0.0
      %3411 = vmatprep.subr.mxu0 0.0
      %3412 = vmatpush2.msra.mxu0 0.0
      %3413 = vmatprep.subr.mxu0 0.0
      %3414 = vmatpush2.msra.mxu0 0.0
      %3415 = vmatprep.subr.mxu0 0.0
      %3416 = vmatpush2.msra.mxu0 0.0
      %3417 = vmatprep.subr.mxu0 0.0
      %3418 = vmatpush2.msra.mxu0 0.0
      %3419 = vmatprep.subr.mxu0 0.0
      %3420 = vmatpush2.msra.mxu0 0.0
      %3421 = vmatprep.subr.mxu0 0.0
      %3422 = vmatpush2.msra.mxu0 0.0
      %3423 = vmatprep.subr.mxu0 0.0
      %3424 = vmatpush2.msra.mxu0 0.0
      %3425 = vmatprep.subr.mxu0 0.0
      %3426 = vmatpush2.msra.mxu0 0.0
      %3427 = vmatprep.subr.mxu0 0.0
      %3428 = vmatpush2.msra.mxu0 0.0
      %3429 = vmatprep.subr.mxu0 0.0
      %3430 = vmatpush2.msra.mxu0 0.0
      %3431 = vmatprep.subr.mxu0 0.0
      %3432 = vmatpush2.msra.mxu0 0.0
      %3433 = vmatprep.subr.mxu0 0.0
      %3434 = vmatpush2.msra.mxu0 0.0
      %3435 = vmatprep.subr.mxu0 0.0
      %3436 = vmatpush2.msra.mxu0 0.0
      %3437 = vmatprep.subr.mxu0 0.0
      %3438 = vmatpush2.msra.mxu0 0.0
      %3439 = vmatprep.mubr.f32.mxu0 0.0
      %3440 = vmatmul.mubr.f32.gmra.mxu0 %v3326
      %v3441 = vpop.f32.mrf.mxu0
      %v3442 = vadd.f32 0.0, %v3441
      %v3443 = vpop.f32.mrf.mxu0
      %3444 = vmatprep.mubr.f32.mxu0 0.0
      %3445 = vmatmul.mubr.f32.gmra.mxu0 %v3327
      %v3446 = vpop.f32.mrf.mxu0
      %v3447 = vadd.f32 0.0, %v3446
      %v3448 = vpop.f32.mrf.mxu0
      %3449 = vmatprep.mubr.f32.mxu0 0.0
      %3450 = vmatmul.mubr.f32.gmra.mxu0 %v3328
      %v3451 = vpop.f32.mrf.mxu0
      %v3452 = vadd.f32 0.0, %v3451
      %v3453 = vpop.f32.mrf.mxu0
      %3454 = vmatprep.mubr.f32.mxu0 0.0
      %3455 = vmatmul.mubr.f32.gmra.mxu0 %v3329
      %v3456 = vpop.f32.mrf.mxu0
      %v3457 = vadd.f32 0.0, %v3456
      %v3458 = vpop.f32.mrf.mxu0
      %3459 = vmatprep.mubr.f32.mxu0 0.0
      %3460 = vmatmul.mubr.f32.gmra.mxu0 %v3330
      %v3461 = vpop.f32.mrf.mxu0
      %v3462 = vadd.f32 0.0, %v3461
      %v3463 = vpop.f32.mrf.mxu0
      %3464 = vmatprep.mubr.f32.mxu0 0.0
      %3465 = vmatmul.mubr.f32.gmra.mxu0 %v3331
      %v3466 = vpop.f32.mrf.mxu0
      %v3467 = vadd.f32 0.0, %v3466
      %v3468 = vpop.f32.mrf.mxu0
      %3469 = vmatprep.mubr.f32.mxu0 0.0
      %3470 = vmatmul.mubr.f32.gmra.mxu0 %v3332
      %v3471 = vpop.f32.mrf.mxu0
      %v3472 = vadd.f32 0.0, %v3471
      %v3473 = vpop.f32.mrf.mxu0
      %3474 = vmatprep.mubr.f32.mxu0 0.0
      %3475 = vmatmul.mubr.f32.gmra.mxu0 %v3333
      %v3476 = vpop.f32.mrf.mxu0
      %v3477 = vadd.f32 0.0, %v3476
      %v3478 = vpop.f32.mrf.mxu0
      %3479 = vmatprep.mubr.f32.mxu0 0.0
      %3480 = vmatmul.mubr.f32.gmra.mxu0 %v3334
      %v3481 = vpop.f32.mrf.mxu0
      %v3482 = vadd.f32 0.0, %v3481
      %v3483 = vpop.f32.mrf.mxu0
      %3484 = vmatprep.mubr.f32.mxu0 0.0
      %3485 = vmatmul.mubr.f32.gmra.mxu0 %v3335
      %v3486 = vpop.f32.mrf.mxu0
      %v3487 = vadd.f32 0.0, %v3486
      %v3488 = vpop.f32.mrf.mxu0
      %3489 = vmatprep.mubr.f32.mxu0 0.0
      %3490 = vmatmul.mubr.f32.gmra.mxu0 %v3336
      %v3491 = vpop.f32.mrf.mxu0
      %v3492 = vadd.f32 0.0, %v3491
      %v3493 = vpop.f32.mrf.mxu0
      %3494 = vmatprep.mubr.f32.mxu0 0.0
      %3495 = vmatmul.mubr.f32.gmra.mxu0 %v3337
      %v3496 = vpop.f32.mrf.mxu0
      %v3497 = vadd.f32 0.0, %v3496
      %v3498 = vpop.f32.mrf.mxu0
      %3499 = vmatprep.mubr.f32.mxu0 0.0
      %3500 = vmatmul.mubr.f32.gmra.mxu0 %v3338
      %v3501 = vpop.f32.mrf.mxu0
      %v3502 = vadd.f32 0.0, %v3501
      %v3503 = vpop.f32.mrf.mxu0
      %3504 = vmatprep.mubr.f32.mxu0 0.0
      %3505 = vmatmul.mubr.f32.gmra.mxu0 %v3339
      %v3506 = vpop.f32.mrf.mxu0
      %v3507 = vadd.f32 0.0, %v3506
      %v3508 = vpop.f32.mrf.mxu0
      %3509 = vmatprep.mubr.f32.mxu0 0.0
      %3510 = vmatmul.mubr.f32.gmra.mxu0 %v3340
      %v3511 = vpop.f32.mrf.mxu0
      %v3512 = vadd.f32 0.0, %v3511
      %v3513 = vpop.f32.mrf.mxu0
      %3514 = vmatprep.mubr.f32.mxu0 0.0
      %3515 = vmatmul.mubr.f32.gmra.mxu0 %v3341
      %v3516 = vpop.f32.mrf.mxu0
      %v3517 = vadd.f32 0.0, %v3516
      %v3518 = vpop.f32.mrf.mxu0
      %3519 = vmatprep.mubr.f32.mxu0 0.0
      %3520 = vmatmul.mubr.f32.gmra.mxu0 %v3342
      %v3521 = vpop.f32.mrf.mxu0
      %v3522 = vadd.f32 0.0, %v3521
      %v3523 = vpop.f32.mrf.mxu0
      %3524 = vmatprep.mubr.f32.mxu0 0.0
      %3525 = vmatmul.mubr.f32.gmra.mxu0 %v3343
      %v3526 = vpop.f32.mrf.mxu0
      %v3527 = vadd.f32 0.0, %v3526
      %v3528 = vpop.f32.mrf.mxu0
      %3529 = vmatprep.mubr.f32.mxu0 0.0
      %3530 = vmatmul.mubr.f32.gmra.mxu0 %v3344
      %v3531 = vpop.f32.mrf.mxu0
      %v3532 = vadd.f32 0.0, %v3531
      %v3533 = vpop.f32.mrf.mxu0
      %3534 = vmatprep.mubr.f32.mxu0 0.0
      %3535 = vmatmul.mubr.f32.gmra.mxu0 %v3345
      %v3536 = vpop.f32.mrf.mxu0
      %v3537 = vadd.f32 0.0, %v3536
      %v3538 = vpop.f32.mrf.mxu0
      %3539 = vmatprep.mubr.f32.mxu0 0.0
      %3540 = vmatmul.mubr.f32.gmra.mxu0 %v3346
      %v3541 = vpop.f32.mrf.mxu0
      %v3542 = vadd.f32 0.0, %v3541
      %v3543 = vpop.f32.mrf.mxu0
      %3544 = vmatprep.mubr.f32.mxu0 0.0
      %3545 = vmatmul.mubr.f32.gmra.mxu0 %v3347
      %v3546 = vpop.f32.mrf.mxu0
      %v3547 = vadd.f32 0.0, %v3546
      %v3548 = vpop.f32.mrf.mxu0
      %3549 = vmatprep.mubr.f32.mxu0 0.0
      %3550 = vmatmul.mubr.f32.gmra.mxu0 %v3348
      %v3551 = vpop.f32.mrf.mxu0
      %v3552 = vadd.f32 0.0, %v3551
      %v3553 = vpop.f32.mrf.mxu0
      %3554 = vmatprep.mubr.f32.mxu0 0.0
      %3555 = vmatmul.mubr.f32.gmra.mxu0 %v3349
      %v3556 = vpop.f32.mrf.mxu0
      %v3557 = vadd.f32 0.0, %v3556
      %v3558 = vpop.f32.mrf.mxu0
      %3559 = vmatprep.mubr.f32.mxu0 0.0
      %3560 = vmatmul.mubr.f32.gmra.mxu0 %v3350
      %v3561 = vpop.f32.mrf.mxu0
      %v3562 = vadd.f32 0.0, %v3561
      %v3563 = vpop.f32.mrf.mxu0
      %3564 = vmatprep.mubr.f32.mxu0 0.0
      %3565 = vmatmul.mubr.f32.gmra.mxu0 %v3351
      %v3566 = vpop.f32.mrf.mxu0
      %v3567 = vadd.f32 0.0, %v3566
      %v3568 = vpop.f32.mrf.mxu0
      %3569 = vmatprep.mubr.f32.mxu0 0.0
      %3570 = vmatmul.mubr.f32.gmra.mxu0 %v3352
      %v3571 = vpop.f32.mrf.mxu0
      %v3572 = vadd.f32 0.0, %v3571
      %v3573 = vpop.f32.mrf.mxu0
      %3574 = vmatprep.mubr.f32.mxu0 0.0
      %3575 = vmatmul.mubr.f32.gmra.mxu0 %v3353
      %v3576 = vpop.f32.mrf.mxu0
      %v3577 = vadd.f32 0.0, %v3576
      %v3578 = vpop.f32.mrf.mxu0
      %3579 = vmatprep.mubr.f32.mxu0 0.0
      %3580 = vmatmul.mubr.f32.gmra.mxu0 %v3354
      %v3581 = vpop.f32.mrf.mxu0
      %v3582 = vadd.f32 0.0, %v3581
      %v3583 = vpop.f32.mrf.mxu0
      %3584 = vmatprep.mubr.f32.mxu0 0.0
      %3585 = vmatmul.mubr.f32.gmra.mxu0 %v3355
      %v3586 = vpop.f32.mrf.mxu0
      %v3587 = vadd.f32 0.0, %v3586
      %v3588 = vpop.f32.mrf.mxu0
      %3589 = vmatprep.mubr.f32.mxu0 0.0
      %3590 = vmatmul.mubr.f32.gmra.mxu0 %v3356
      %v3591 = vpop.f32.mrf.mxu0
      %v3592 = vadd.f32 0.0, %v3591
      %v3593 = vpop.f32.mrf.mxu0
      %3594 = vmatprep.mubr.f32.mxu0 0.0
      %3595 = vmatmul.mubr.f32.gmra.mxu0 %v3357
      %v3596 = vpop.f32.mrf.mxu0
      %v3597 = vadd.f32 0.0, %v3596
      %v3598 = vpop.f32.mrf.mxu0
      %3599 = vdwg.mxu0
      %v3600 = vadd.f32 %v3294, %v3442
      %v3601 = vadd.f32 %v3295, %v3447
      %v3602 = vadd.f32 %v3296, %v3452
      %v3603 = vadd.f32 %v3297, %v3457
      %v3604 = vadd.f32 %v3298, %v3462
      %v3605 = vadd.f32 %v3299, %v3467
      %v3606 = vadd.f32 %v3300, %v3472
      %v3607 = vadd.f32 %v3301, %v3477
      %v3608 = vadd.f32 %v3302, %v3482
      %v3609 = vadd.f32 %v3303, %v3487
      %v3610 = vadd.f32 %v3304, %v3492
      %v3611 = vadd.f32 %v3305, %v3497
      %v3612 = vadd.f32 %v3306, %v3502
      %v3613 = vadd.f32 %v3307, %v3507
      %v3614 = vadd.f32 %v3308, %v3512
      %v3615 = vadd.f32 %v3309, %v3517
      %v3616 = vadd.f32 %v3310, %v3522
      %v3617 = vadd.f32 %v3311, %v3527
      %v3618 = vadd.f32 %v3312, %v3532
      %v3619 = vadd.f32 %v3313, %v3537
      %v3620 = vadd.f32 %v3314, %v3542
      %v3621 = vadd.f32 %v3315, %v3547
      %v3622 = vadd.f32 %v3316, %v3552
      %v3623 = vadd.f32 %v3317, %v3557
      %v3624 = vadd.f32 %v3318, %v3562
      %v3625 = vadd.f32 %v3319, %v3567
      %v3626 = vadd.f32 %v3320, %v3572
      %v3627 = vadd.f32 %v3321, %v3577
      %v3628 = vadd.f32 %v3322, %v3582
      %v3629 = vadd.f32 %v3323, %v3587
      %v3630 = vadd.f32 %v3324, %v3592
      %v3631 = vadd.f32 %v3325, %v3597
      %v3632 = vld [vmem:[#allocation2 + $0x29] sm:$0xff]
      %v3633 = vld [vmem:[#allocation2 + $0x31] sm:$0xff]
      %v3634 = vld [vmem:[#allocation2 + $0x39] sm:$0xff]
      %v3635 = vld [vmem:[#allocation2 + $0x41] sm:$0xff]
      %v3636 = vld [vmem:[#allocation2 + $0x49] sm:$0xff]
      %v3637 = vld [vmem:[#allocation2 + $0x51] sm:$0xff]
      %v3638 = vld [vmem:[#allocation2 + $0x59] sm:$0xff]
      %v3639 = vld [vmem:[#allocation2 + $0x61] sm:$0xff]
      %v3640 = vld [vmem:[#allocation2 + $0x69] sm:$0xff]
      %v3641 = vld [vmem:[#allocation2 + $0x71] sm:$0xff]
      %v3642 = vld [vmem:[#allocation2 + $0x79] sm:$0xff]
      %v3643 = vld [vmem:[#allocation2 + $0x81] sm:$0xff]
      %v3644 = vld [vmem:[#allocation2 + $0x89] sm:$0xff]
      %v3645 = vld [vmem:[#allocation2 + $0x91] sm:$0xff]
      %v3646 = vld [vmem:[#allocation2 + $0x99] sm:$0xff]
      %v3647 = vld [vmem:[#allocation2 + $0xa1] sm:$0xff]
      %v3648 = vld [vmem:[#allocation2 + $0xa9] sm:$0xff]
      %v3649 = vld [vmem:[#allocation2 + $0xb1] sm:$0xff]
      %v3650 = vld [vmem:[#allocation2 + $0xb9] sm:$0xff]
      %v3651 = vld [vmem:[#allocation2 + $0xc1] sm:$0xff]
      %v3652 = vld [vmem:[#allocation2 + $0xc9] sm:$0xff]
      %v3653 = vld [vmem:[#allocation2 + $0xd1] sm:$0xff]
      %v3654 = vld [vmem:[#allocation2 + $0xd9] sm:$0xff]
      %v3655 = vld [vmem:[#allocation2 + $0xe1] sm:$0xff]
      %v3656 = vld [vmem:[#allocation2 + $0xe9] sm:$0xff]
      %v3657 = vld [vmem:[#allocation2 + $0xf1] sm:$0xff]
      %v3658 = vld [vmem:[#allocation2 + $0xf9] sm:$0xff]
      %v3659 = vld [vmem:[#allocation2 + $0x101] sm:$0xff]
      %v3660 = vld [vmem:[#allocation2 + $0x109] sm:$0xff]
      %v3661 = vld [vmem:[#allocation2 + $0x111] sm:$0xff]
      %v3662 = vld [vmem:[#allocation2 + $0x119] sm:$0xff]
      %v3663 = vld [vmem:[#allocation2 + $0x121] sm:$0xff]
      %s3664 = scalar_lea.vmem %s3, 1024
      %v3665 = vld [vmem:[%s3664] sm:$0xff]
      %v3666 = vld [vmem:[%s3664 + $0x8] sm:$0xff]
      %v3667 = vld [vmem:[%s3664 + $0x10] sm:$0xff]
      %v3668 = vld [vmem:[%s3664 + $0x18] sm:$0xff]
      %v3669 = vld [vmem:[%s3664 + $0x20] sm:$0xff]
      %v3670 = vld [vmem:[%s3664 + $0x28] sm:$0xff]
      %v3671 = vld [vmem:[%s3664 + $0x30] sm:$0xff]
      %v3672 = vld [vmem:[%s3664 + $0x38] sm:$0xff]
      %v3673 = vld [vmem:[%s3664 + $0x40] sm:$0xff]
      %v3674 = vld [vmem:[%s3664 + $0x48] sm:$0xff]
      %v3675 = vld [vmem:[%s3664 + $0x50] sm:$0xff]
      %v3676 = vld [vmem:[%s3664 + $0x58] sm:$0xff]
      %v3677 = vld [vmem:[%s3664 + $0x60] sm:$0xff]
      %v3678 = vld [vmem:[%s3664 + $0x68] sm:$0xff]
      %v3679 = vld [vmem:[%s3664 + $0x70] sm:$0xff]
      %v3680 = vld [vmem:[%s3664 + $0x78] sm:$0xff]
      %3681 = vmatprep.subr.mxu0 0.0
      %3682 = vmatpush1.msra.mxu0 %v3680
      %3683 = vmatprep.subr.mxu0 0.0
      %3684 = vmatpush1.msra.mxu0 %v3679
      %3685 = vmatprep.subr.mxu0 0.0
      %3686 = vmatpush1.msra.mxu0 %v3678
      %3687 = vmatprep.subr.mxu0 0.0
      %3688 = vmatpush1.msra.mxu0 %v3677
      %3689 = vmatprep.subr.mxu0 0.0
      %3690 = vmatpush1.msra.mxu0 %v3676
      %3691 = vmatprep.subr.mxu0 0.0
      %3692 = vmatpush1.msra.mxu0 %v3675
      %3693 = vmatprep.subr.mxu0 0.0
      %3694 = vmatpush1.msra.mxu0 %v3674
      %3695 = vmatprep.subr.mxu0 0.0
      %3696 = vmatpush1.msra.mxu0 %v3673
      %3697 = vmatprep.subr.mxu0 0.0
      %3698 = vmatpush1.msra.mxu0 %v3672
      %3699 = vmatprep.subr.mxu0 0.0
      %3700 = vmatpush1.msra.mxu0 %v3671
      %3701 = vmatprep.subr.mxu0 0.0
      %3702 = vmatpush1.msra.mxu0 %v3670
      %3703 = vmatprep.subr.mxu0 0.0
      %3704 = vmatpush1.msra.mxu0 %v3669
      %3705 = vmatprep.subr.mxu0 0.0
      %3706 = vmatpush1.msra.mxu0 %v3668
      %3707 = vmatprep.subr.mxu0 0.0
      %3708 = vmatpush1.msra.mxu0 %v3667
      %3709 = vmatprep.subr.mxu0 0.0
      %3710 = vmatpush1.msra.mxu0 %v3666
      %3711 = vmatprep.subr.mxu0 0.0
      %3712 = vmatpush1.msra.mxu0 %v3665
      %3713 = vmatprep.subr.mxu0 0.0
      %3714 = vmatpush2.msra.mxu0 0.0
      %3715 = vmatprep.subr.mxu0 0.0
      %3716 = vmatpush2.msra.mxu0 0.0
      %3717 = vmatprep.subr.mxu0 0.0
      %3718 = vmatpush2.msra.mxu0 0.0
      %3719 = vmatprep.subr.mxu0 0.0
      %3720 = vmatpush2.msra.mxu0 0.0
      %3721 = vmatprep.subr.mxu0 0.0
      %3722 = vmatpush2.msra.mxu0 0.0
      %3723 = vmatprep.subr.mxu0 0.0
      %3724 = vmatpush2.msra.mxu0 0.0
      %3725 = vmatprep.subr.mxu0 0.0
      %3726 = vmatpush2.msra.mxu0 0.0
      %3727 = vmatprep.subr.mxu0 0.0
      %3728 = vmatpush2.msra.mxu0 0.0
      %3729 = vmatprep.subr.mxu0 0.0
      %3730 = vmatpush2.msra.mxu0 0.0
      %3731 = vmatprep.subr.mxu0 0.0
      %3732 = vmatpush2.msra.mxu0 0.0
      %3733 = vmatprep.subr.mxu0 0.0
      %3734 = vmatpush2.msra.mxu0 0.0
      %3735 = vmatprep.subr.mxu0 0.0
      %3736 = vmatpush2.msra.mxu0 0.0
      %3737 = vmatprep.subr.mxu0 0.0
      %3738 = vmatpush2.msra.mxu0 0.0
      %3739 = vmatprep.subr.mxu0 0.0
      %3740 = vmatpush2.msra.mxu0 0.0
      %3741 = vmatprep.subr.mxu0 0.0
      %3742 = vmatpush2.msra.mxu0 0.0
      %3743 = vmatprep.subr.mxu0 0.0
      %3744 = vmatpush2.msra.mxu0 0.0
      %3745 = vmatprep.mubr.f32.mxu0 0.0
      %3746 = vmatmul.mubr.f32.gmra.mxu0 %v3632
      %v3747 = vpop.f32.mrf.mxu0
      %v3748 = vadd.f32 0.0, %v3747
      %v3749 = vpop.f32.mrf.mxu0
      %3750 = vmatprep.mubr.f32.mxu0 0.0
      %3751 = vmatmul.mubr.f32.gmra.mxu0 %v3633
      %v3752 = vpop.f32.mrf.mxu0
      %v3753 = vadd.f32 0.0, %v3752
      %v3754 = vpop.f32.mrf.mxu0
      %3755 = vmatprep.mubr.f32.mxu0 0.0
      %3756 = vmatmul.mubr.f32.gmra.mxu0 %v3634
      %v3757 = vpop.f32.mrf.mxu0
      %v3758 = vadd.f32 0.0, %v3757
      %v3759 = vpop.f32.mrf.mxu0
      %3760 = vmatprep.mubr.f32.mxu0 0.0
      %3761 = vmatmul.mubr.f32.gmra.mxu0 %v3635
      %v3762 = vpop.f32.mrf.mxu0
      %v3763 = vadd.f32 0.0, %v3762
      %v3764 = vpop.f32.mrf.mxu0
      %3765 = vmatprep.mubr.f32.mxu0 0.0
      %3766 = vmatmul.mubr.f32.gmra.mxu0 %v3636
      %v3767 = vpop.f32.mrf.mxu0
      %v3768 = vadd.f32 0.0, %v3767
      %v3769 = vpop.f32.mrf.mxu0
      %3770 = vmatprep.mubr.f32.mxu0 0.0
      %3771 = vmatmul.mubr.f32.gmra.mxu0 %v3637
      %v3772 = vpop.f32.mrf.mxu0
      %v3773 = vadd.f32 0.0, %v3772
      %v3774 = vpop.f32.mrf.mxu0
      %3775 = vmatprep.mubr.f32.mxu0 0.0
      %3776 = vmatmul.mubr.f32.gmra.mxu0 %v3638
      %v3777 = vpop.f32.mrf.mxu0
      %v3778 = vadd.f32 0.0, %v3777
      %v3779 = vpop.f32.mrf.mxu0
      %3780 = vmatprep.mubr.f32.mxu0 0.0
      %3781 = vmatmul.mubr.f32.gmra.mxu0 %v3639
      %v3782 = vpop.f32.mrf.mxu0
      %v3783 = vadd.f32 0.0, %v3782
      %v3784 = vpop.f32.mrf.mxu0
      %3785 = vmatprep.mubr.f32.mxu0 0.0
      %3786 = vmatmul.mubr.f32.gmra.mxu0 %v3640
      %v3787 = vpop.f32.mrf.mxu0
      %v3788 = vadd.f32 0.0, %v3787
      %v3789 = vpop.f32.mrf.mxu0
      %3790 = vmatprep.mubr.f32.mxu0 0.0
      %3791 = vmatmul.mubr.f32.gmra.mxu0 %v3641
      %v3792 = vpop.f32.mrf.mxu0
      %v3793 = vadd.f32 0.0, %v3792
      %v3794 = vpop.f32.mrf.mxu0
      %3795 = vmatprep.mubr.f32.mxu0 0.0
      %3796 = vmatmul.mubr.f32.gmra.mxu0 %v3642
      %v3797 = vpop.f32.mrf.mxu0
      %v3798 = vadd.f32 0.0, %v3797
      %v3799 = vpop.f32.mrf.mxu0
      %3800 = vmatprep.mubr.f32.mxu0 0.0
      %3801 = vmatmul.mubr.f32.gmra.mxu0 %v3643
      %v3802 = vpop.f32.mrf.mxu0
      %v3803 = vadd.f32 0.0, %v3802
      %v3804 = vpop.f32.mrf.mxu0
      %3805 = vmatprep.mubr.f32.mxu0 0.0
      %3806 = vmatmul.mubr.f32.gmra.mxu0 %v3644
      %v3807 = vpop.f32.mrf.mxu0
      %v3808 = vadd.f32 0.0, %v3807
      %v3809 = vpop.f32.mrf.mxu0
      %3810 = vmatprep.mubr.f32.mxu0 0.0
      %3811 = vmatmul.mubr.f32.gmra.mxu0 %v3645
      %v3812 = vpop.f32.mrf.mxu0
      %v3813 = vadd.f32 0.0, %v3812
      %v3814 = vpop.f32.mrf.mxu0
      %3815 = vmatprep.mubr.f32.mxu0 0.0
      %3816 = vmatmul.mubr.f32.gmra.mxu0 %v3646
      %v3817 = vpop.f32.mrf.mxu0
      %v3818 = vadd.f32 0.0, %v3817
      %v3819 = vpop.f32.mrf.mxu0
      %3820 = vmatprep.mubr.f32.mxu0 0.0
      %3821 = vmatmul.mubr.f32.gmra.mxu0 %v3647
      %v3822 = vpop.f32.mrf.mxu0
      %v3823 = vadd.f32 0.0, %v3822
      %v3824 = vpop.f32.mrf.mxu0
      %3825 = vmatprep.mubr.f32.mxu0 0.0
      %3826 = vmatmul.mubr.f32.gmra.mxu0 %v3648
      %v3827 = vpop.f32.mrf.mxu0
      %v3828 = vadd.f32 0.0, %v3827
      %v3829 = vpop.f32.mrf.mxu0
      %3830 = vmatprep.mubr.f32.mxu0 0.0
      %3831 = vmatmul.mubr.f32.gmra.mxu0 %v3649
      %v3832 = vpop.f32.mrf.mxu0
      %v3833 = vadd.f32 0.0, %v3832
      %v3834 = vpop.f32.mrf.mxu0
      %3835 = vmatprep.mubr.f32.mxu0 0.0
      %3836 = vmatmul.mubr.f32.gmra.mxu0 %v3650
      %v3837 = vpop.f32.mrf.mxu0
      %v3838 = vadd.f32 0.0, %v3837
      %v3839 = vpop.f32.mrf.mxu0
      %3840 = vmatprep.mubr.f32.mxu0 0.0
      %3841 = vmatmul.mubr.f32.gmra.mxu0 %v3651
      %v3842 = vpop.f32.mrf.mxu0
      %v3843 = vadd.f32 0.0, %v3842
      %v3844 = vpop.f32.mrf.mxu0
      %3845 = vmatprep.mubr.f32.mxu0 0.0
      %3846 = vmatmul.mubr.f32.gmra.mxu0 %v3652
      %v3847 = vpop.f32.mrf.mxu0
      %v3848 = vadd.f32 0.0, %v3847
      %v3849 = vpop.f32.mrf.mxu0
      %3850 = vmatprep.mubr.f32.mxu0 0.0
      %3851 = vmatmul.mubr.f32.gmra.mxu0 %v3653
      %v3852 = vpop.f32.mrf.mxu0
      %v3853 = vadd.f32 0.0, %v3852
      %v3854 = vpop.f32.mrf.mxu0
      %3855 = vmatprep.mubr.f32.mxu0 0.0
      %3856 = vmatmul.mubr.f32.gmra.mxu0 %v3654
      %v3857 = vpop.f32.mrf.mxu0
      %v3858 = vadd.f32 0.0, %v3857
      %v3859 = vpop.f32.mrf.mxu0
      %3860 = vmatprep.mubr.f32.mxu0 0.0
      %3861 = vmatmul.mubr.f32.gmra.mxu0 %v3655
      %v3862 = vpop.f32.mrf.mxu0
      %v3863 = vadd.f32 0.0, %v3862
      %v3864 = vpop.f32.mrf.mxu0
      %3865 = vmatprep.mubr.f32.mxu0 0.0
      %3866 = vmatmul.mubr.f32.gmra.mxu0 %v3656
      %v3867 = vpop.f32.mrf.mxu0
      %v3868 = vadd.f32 0.0, %v3867
      %v3869 = vpop.f32.mrf.mxu0
      %3870 = vmatprep.mubr.f32.mxu0 0.0
      %3871 = vmatmul.mubr.f32.gmra.mxu0 %v3657
      %v3872 = vpop.f32.mrf.mxu0
      %v3873 = vadd.f32 0.0, %v3872
      %v3874 = vpop.f32.mrf.mxu0
      %3875 = vmatprep.mubr.f32.mxu0 0.0
      %3876 = vmatmul.mubr.f32.gmra.mxu0 %v3658
      %v3877 = vpop.f32.mrf.mxu0
      %v3878 = vadd.f32 0.0, %v3877
      %v3879 = vpop.f32.mrf.mxu0
      %3880 = vmatprep.mubr.f32.mxu0 0.0
      %3881 = vmatmul.mubr.f32.gmra.mxu0 %v3659
      %v3882 = vpop.f32.mrf.mxu0
      %v3883 = vadd.f32 0.0, %v3882
      %v3884 = vpop.f32.mrf.mxu0
      %3885 = vmatprep.mubr.f32.mxu0 0.0
      %3886 = vmatmul.mubr.f32.gmra.mxu0 %v3660
      %v3887 = vpop.f32.mrf.mxu0
      %v3888 = vadd.f32 0.0, %v3887
      %v3889 = vpop.f32.mrf.mxu0
      %3890 = vmatprep.mubr.f32.mxu0 0.0
      %3891 = vmatmul.mubr.f32.gmra.mxu0 %v3661
      %v3892 = vpop.f32.mrf.mxu0
      %v3893 = vadd.f32 0.0, %v3892
      %v3894 = vpop.f32.mrf.mxu0
      %3895 = vmatprep.mubr.f32.mxu0 0.0
      %3896 = vmatmul.mubr.f32.gmra.mxu0 %v3662
      %v3897 = vpop.f32.mrf.mxu0
      %v3898 = vadd.f32 0.0, %v3897
      %v3899 = vpop.f32.mrf.mxu0
      %3900 = vmatprep.mubr.f32.mxu0 0.0
      %3901 = vmatmul.mubr.f32.gmra.mxu0 %v3663
      %v3902 = vpop.f32.mrf.mxu0
      %v3903 = vadd.f32 0.0, %v3902
      %v3904 = vpop.f32.mrf.mxu0
      %3905 = vdwg.mxu0
      %v3906 = vsel %vm1910, %v3748, 0.0
      %v3907 = vsel %vm1911, %v3753, 0.0
      %v3908 = vsel %vm1912, %v3758, 0.0
      %v3909 = vsel %vm1913, %v3763, 0.0
      %v3910 = vsel %vm1914, %v3768, 0.0
      %v3911 = vsel %vm1915, %v3773, 0.0
      %v3912 = vsel %vm1916, %v3778, 0.0
      %v3913 = vsel %vm1917, %v3783, 0.0
      %v3914 = vsel %vm1918, %v3788, 0.0
      %v3915 = vsel %vm1919, %v3793, 0.0
      %v3916 = vsel %vm1920, %v3798, 0.0
      %v3917 = vsel %vm1921, %v3803, 0.0
      %v3918 = vsel %vm1922, %v3808, 0.0
      %v3919 = vsel %vm1923, %v3813, 0.0
      %v3920 = vsel %vm1924, %v3818, 0.0
      %v3921 = vsel %vm1925, %v3823, 0.0
      %v3922 = vsel %vm1926, %v3828, 0.0
      %v3923 = vsel %vm1927, %v3833, 0.0
      %v3924 = vsel %vm1928, %v3838, 0.0
      %v3925 = vsel %vm1929, %v3843, 0.0
      %v3926 = vsel %vm1930, %v3848, 0.0
      %v3927 = vsel %vm1931, %v3853, 0.0
      %v3928 = vsel %vm1932, %v3858, 0.0
      %v3929 = vsel %vm1933, %v3863, 0.0
      %v3930 = vsel %vm1934, %v3868, 0.0
      %v3931 = vsel %vm1935, %v3873, 0.0
      %v3932 = vsel %vm1936, %v3878, 0.0
      %v3933 = vsel %vm1937, %v3883, 0.0
      %v3934 = vsel %vm1938, %v3888, 0.0
      %v3935 = vsel %vm1939, %v3893, 0.0
      %v3936 = vsel %vm1940, %v3898, 0.0
      %v3937 = vsel %vm1941, %v3903, 0.0
      %v3938 = vadd.f32 %v3600, %v3906
      %v3939 = vadd.f32 %v3601, %v3907
      %v3940 = vadd.f32 %v3602, %v3908
      %v3941 = vadd.f32 %v3603, %v3909
      %v3942 = vadd.f32 %v3604, %v3910
      %v3943 = vadd.f32 %v3605, %v3911
      %v3944 = vadd.f32 %v3606, %v3912
      %v3945 = vadd.f32 %v3607, %v3913
      %v3946 = vadd.f32 %v3608, %v3914
      %v3947 = vadd.f32 %v3609, %v3915
      %v3948 = vadd.f32 %v3610, %v3916
      %v3949 = vadd.f32 %v3611, %v3917
      %v3950 = vadd.f32 %v3612, %v3918
      %v3951 = vadd.f32 %v3613, %v3919
      %v3952 = vadd.f32 %v3614, %v3920
      %v3953 = vadd.f32 %v3615, %v3921
      %v3954 = vadd.f32 %v3616, %v3922
      %v3955 = vadd.f32 %v3617, %v3923
      %v3956 = vadd.f32 %v3618, %v3924
      %v3957 = vadd.f32 %v3619, %v3925
      %v3958 = vadd.f32 %v3620, %v3926
      %v3959 = vadd.f32 %v3621, %v3927
      %v3960 = vadd.f32 %v3622, %v3928
      %v3961 = vadd.f32 %v3623, %v3929
      %v3962 = vadd.f32 %v3624, %v3930
      %v3963 = vadd.f32 %v3625, %v3931
      %v3964 = vadd.f32 %v3626, %v3932
      %v3965 = vadd.f32 %v3627, %v3933
      %v3966 = vadd.f32 %v3628, %v3934
      %v3967 = vadd.f32 %v3629, %v3935
      %v3968 = vadd.f32 %v3630, %v3936
      %v3969 = vadd.f32 %v3631, %v3937
      %3970 = vst [vmem:[%s231] sm:$0xff] %v3938
      %3971 = vst [vmem:[%s231 + $0x8] sm:$0xff] %v3939
      %3972 = vst [vmem:[%s231 + $0x10] sm:$0xff] %v3940
      %3973 = vst [vmem:[%s231 + $0x18] sm:$0xff] %v3941
      %3974 = vst [vmem:[%s231 + $0x20] sm:$0xff] %v3942
      %3975 = vst [vmem:[%s231 + $0x28] sm:$0xff] %v3943
      %3976 = vst [vmem:[%s231 + $0x30] sm:$0xff] %v3944
      %3977 = vst [vmem:[%s231 + $0x38] sm:$0xff] %v3945
      %3978 = vst [vmem:[%s231 + $0x40] sm:$0xff] %v3946
      %3979 = vst [vmem:[%s231 + $0x48] sm:$0xff] %v3947
      %3980 = vst [vmem:[%s231 + $0x50] sm:$0xff] %v3948
      %3981 = vst [vmem:[%s231 + $0x58] sm:$0xff] %v3949
      %3982 = vst [vmem:[%s231 + $0x60] sm:$0xff] %v3950
      %3983 = vst [vmem:[%s231 + $0x68] sm:$0xff] %v3951
      %3984 = vst [vmem:[%s231 + $0x70] sm:$0xff] %v3952
      %3985 = vst [vmem:[%s231 + $0x78] sm:$0xff] %v3953
      %3986 = vst [vmem:[%s231 + $0x80] sm:$0xff] %v3954
      %3987 = vst [vmem:[%s231 + $0x88] sm:$0xff] %v3955
      %3988 = vst [vmem:[%s231 + $0x90] sm:$0xff] %v3956
      %3989 = vst [vmem:[%s231 + $0x98] sm:$0xff] %v3957
      %3990 = vst [vmem:[%s231 + $0xa0] sm:$0xff] %v3958
      %3991 = vst [vmem:[%s231 + $0xa8] sm:$0xff] %v3959
      %3992 = vst [vmem:[%s231 + $0xb0] sm:$0xff] %v3960
      %3993 = vst [vmem:[%s231 + $0xb8] sm:$0xff] %v3961
      %3994 = vst [vmem:[%s231 + $0xc0] sm:$0xff] %v3962
      %3995 = vst [vmem:[%s231 + $0xc8] sm:$0xff] %v3963
      %3996 = vst [vmem:[%s231 + $0xd0] sm:$0xff] %v3964
      %3997 = vst [vmem:[%s231 + $0xd8] sm:$0xff] %v3965
      %3998 = vst [vmem:[%s231 + $0xe0] sm:$0xff] %v3966
      %3999 = vst [vmem:[%s231 + $0xe8] sm:$0xff] %v3967
      %4000 = vst [vmem:[%s231 + $0xf0] sm:$0xff] %v3968
      %4001 = vst [vmem:[%s231 + $0xf8] sm:$0xff] %v3969
      %v4002 = vadd.f32 %v3938, %v3939
      %v4003 = vadd.f32 %v4002, %v3940
      %v4004 = vadd.f32 %v4003, %v3941
      %v4005 = vadd.f32 %v4004, %v3942
      %v4006 = vadd.f32 %v4005, %v3943
      %v4007 = vadd.f32 %v4006, %v3944
      %v4008 = vadd.f32 %v4007, %v3945
      %v4009 = vadd.f32 %v4008, %v3946
      %v4010 = vadd.f32 %v4009, %v3947
      %v4011 = vadd.f32 %v4010, %v3948
      %v4012 = vadd.f32 %v4011, %v3949
      %v4013 = vadd.f32 %v4012, %v3950
      %v4014 = vadd.f32 %v4013, %v3951
      %v4015 = vadd.f32 %v4014, %v3952
      %v4016 = vadd.f32 %v4015, %v3953
      %v4017 = vadd.f32 %v4016, %v3954
      %v4018 = vadd.f32 %v4017, %v3955
      %v4019 = vadd.f32 %v4018, %v3956
      %v4020 = vadd.f32 %v4019, %v3957
      %v4021 = vadd.f32 %v4020, %v3958
      %v4022 = vadd.f32 %v4021, %v3959
      %v4023 = vadd.f32 %v4022, %v3960
      %v4024 = vadd.f32 %v4023, %v3961
      %v4025 = vadd.f32 %v4024, %v3962
      %v4026 = vadd.f32 %v4025, %v3963
      %v4027 = vadd.f32 %v4026, %v3964
      %v4028 = vadd.f32 %v4027, %v3965
      %v4029 = vadd.f32 %v4028, %v3966
      %v4030 = vadd.f32 %v4029, %v3967
      %v4031 = vadd.f32 %v4030, %v3968
      %v4032 = vadd.f32 %v4031, %v3969
      %v4033 = vrot.slane %v4032, 4
      %v4034 = vadd.f32 %v4032, %v4033
      %v4035 = vrot.slane %v4034, 2
      %v4036 = vadd.f32 %v4034, %v4035
      %v4037 = vrot.slane %v4036, 1
      %v4038 = vadd.f32 %v4036, %v4037
      %4039 = vst [vmem:[%s235] sm:$0x1] %v4038
      %v4040 = vmul.f32 %v3938, %v3938
      %v4041 = vmul.f32 %v3939, %v3939
      %v4042 = vmul.f32 %v3940, %v3940
      %v4043 = vmul.f32 %v3941, %v3941
      %v4044 = vmul.f32 %v3942, %v3942
      %v4045 = vmul.f32 %v3943, %v3943
      %v4046 = vmul.f32 %v3944, %v3944
      %v4047 = vmul.f32 %v3945, %v3945
      %v4048 = vmul.f32 %v3946, %v3946
      %v4049 = vmul.f32 %v3947, %v3947
      %v4050 = vmul.f32 %v3948, %v3948
      %v4051 = vmul.f32 %v3949, %v3949
      %v4052 = vmul.f32 %v3950, %v3950
      %v4053 = vmul.f32 %v3951, %v3951
      %v4054 = vmul.f32 %v3952, %v3952
      %v4055 = vmul.f32 %v3953, %v3953
      %v4056 = vmul.f32 %v3954, %v3954
      %v4057 = vmul.f32 %v3955, %v3955
      %v4058 = vmul.f32 %v3956, %v3956
      %v4059 = vmul.f32 %v3957, %v3957
      %v4060 = vmul.f32 %v3958, %v3958
      %v4061 = vmul.f32 %v3959, %v3959
      %v4062 = vmul.f32 %v3960, %v3960
      %v4063 = vmul.f32 %v3961, %v3961
      %v4064 = vmul.f32 %v3962, %v3962
      %v4065 = vmul.f32 %v3963, %v3963
      %v4066 = vmul.f32 %v3964, %v3964
      %v4067 = vmul.f32 %v3965, %v3965
      %v4068 = vmul.f32 %v3966, %v3966
      %v4069 = vmul.f32 %v3967, %v3967
      %v4070 = vmul.f32 %v3968, %v3968
      %v4071 = vmul.f32 %v3969, %v3969
      %v4072 = vadd.f32 %v4040, %v4041
      %v4073 = vadd.f32 %v4072, %v4042
      %v4074 = vadd.f32 %v4073, %v4043
      %v4075 = vadd.f32 %v4074, %v4044
      %v4076 = vadd.f32 %v4075, %v4045
      %v4077 = vadd.f32 %v4076, %v4046
      %v4078 = vadd.f32 %v4077, %v4047
      %v4079 = vadd.f32 %v4078, %v4048
      %v4080 = vadd.f32 %v4079, %v4049
      %v4081 = vadd.f32 %v4080, %v4050
      %v4082 = vadd.f32 %v4081, %v4051
      %v4083 = vadd.f32 %v4082, %v4052
      %v4084 = vadd.f32 %v4083, %v4053
      %v4085 = vadd.f32 %v4084, %v4054
      %v4086 = vadd.f32 %v4085, %v4055
      %v4087 = vadd.f32 %v4086, %v4056
      %v4088 = vadd.f32 %v4087, %v4057
      %v4089 = vadd.f32 %v4088, %v4058
      %v4090 = vadd.f32 %v4089, %v4059
      %v4091 = vadd.f32 %v4090, %v4060
      %v4092 = vadd.f32 %v4091, %v4061
      %v4093 = vadd.f32 %v4092, %v4062
      %v4094 = vadd.f32 %v4093, %v4063
      %v4095 = vadd.f32 %v4094, %v4064
      %v4096 = vadd.f32 %v4095, %v4065
      %v4097 = vadd.f32 %v4096, %v4066
      %v4098 = vadd.f32 %v4097, %v4067
      %v4099 = vadd.f32 %v4098, %v4068
      %v4100 = vadd.f32 %v4099, %v4069
      %v4101 = vadd.f32 %v4100, %v4070
      %v4102 = vadd.f32 %v4101, %v4071
      %v4103 = vrot.slane %v4102, 4
      %v4104 = vadd.f32 %v4102, %v4103
      %v4105 = vrot.slane %v4104, 2
      %v4106 = vadd.f32 %v4104, %v4105
      %v4107 = vrot.slane %v4106, 1
      %v4108 = vadd.f32 %v4106, %v4107
      %4109 = vst [vmem:[%s235 + $0x1] sm:$0x1] %v4108
      %p4110 = scmp.lt.s32.totalorder %s17, 1
      %s4111 = scalar_select %p4110, %s17, 1
      %s4112 = smul.addr %s4111, 32
      %s4113 = smul.addr %s4112, 8
      %s4114 = scalar_lea.vmem %s4, %s4113
      %p4115 = scmp.lt.s32.totalorder %s17, 1
      %s4116 = scalar_select %p4115, %s17, 1
      %s4117 = smul.addr %s4116, 2
      %s4118 = scalar_lea.vmem %s5, %s4117
      // Predicated region
      $region37: #{bottleneck_forward.5} parent=35 // pred_check
        %p4119 = pneg %p124
      $region38: #{bottleneck_forward.5} parent=35 // pred_check_branch
        %4121 = sbr.rel (%p4119) target = $region40
      $region39: #{bottleneck_forward.5} parent=35 // pred_region
        _
      $region40: #{bottleneck_forward.5} parent=35 // pred_fallthru
        _
      // Predicated region
      $region41: #{bottleneck_forward.5} parent=35 // pred_check
        %p4122 = pneg %p150
      $region42: #{bottleneck_forward.5} parent=35 // pred_check_branch
        %4124 = sbr.rel (%p4122) target = $region44
      $region43: #{bottleneck_forward.5} parent=35 // pred_region
        _
      $region44: #{bottleneck_forward.5} parent=35 // pred_fallthru
        _
    $region36: #{bottleneck_forward.5} parent=5 // pred_fallthru
      _
    %p4125 = scmp.le.s32.totalorder 2, %s12
    // Predicated region
    $region45: #{bottleneck_forward.5} parent=5 // pred_check
      %p4126 = pneg %p4125
    $region46: #{bottleneck_forward.5} parent=5 // pred_check_branch
      %4128 = sbr.rel (%p4126) target = $region48
    $region47: #{bottleneck_forward.5} parent=5 // pred_region
      %s4129 = ssub.s32 %s12, 2
      // Predicated region
      $region49: #{bottleneck_forward.5} parent=47 // pred_check
        %p4130 = pneg %p130
      $region50: #{bottleneck_forward.5} parent=47 // pred_check_branch
        %4132 = sbr.rel (%p4130) target = $region52
      $region51: #{bottleneck_forward.5} parent=47 // pred_region
        %p4133 = scmp.lt.s32.totalorder %s18, 1
        %s4134 = scalar_select %p4133, %s18, 1
        %s4135 = smul.addr %s4134, 32
        %s4136 = smul.addr %s4135, 8
        %s4137 = scalar_lea.vmem %s4, %s4136
      $region52: #{bottleneck_forward.5} parent=47 // pred_fallthru
        _
      // Predicated region
      $region53: #{bottleneck_forward.5} parent=47 // pred_check
        %p4138 = pneg %p156
      $region54: #{bottleneck_forward.5} parent=47 // pred_check_branch
        %4140 = sbr.rel (%p4138) target = $region56
      $region55: #{bottleneck_forward.5} parent=47 // pred_region
        %p4141 = scmp.lt.s32.totalorder %s18, 1
        %s4142 = scalar_select %p4141, %s18, 1
        %s4143 = smul.addr %s4142, 2
        %s4144 = scalar_lea.vmem %s5, %s4143
      $region56: #{bottleneck_forward.5} parent=47 // pred_fallthru
        _
    $region48: #{bottleneck_forward.5} parent=5 // pred_fallthru
      _
  $region6: #{bottleneck_forward.5} parent=0 // loop_footer
    %s16 = sadd.s32 1, %s12
  $region7: #{bottleneck_forward.5} parent=0 // loop_footer_branch
    %11 = sbr.rel target = $region3
  $region8: #{bottleneck_forward.5} parent=0 // loop_exit
    _

</llo_original>
